<compile_context>
chip_gen: v7x
topology: tpu7x:2x2x1
jax: 0.10.0
libtpu: 0.0.40
codegen_flags: <defaults>
</compile_context>

<pallas_src>
import jax
import jax.numpy as jnp
from jax.experimental import pallas as pl
from jax.experimental.pallas import tpu as pltpu

BN_EPS = 1e-5
VMEM_LIMIT_BYTES = 48 * 1024 * 1024   # raised scoped-VMEM limit (defaults 16/32 MiB)
ROW_TILE = 8                          # output rows per grid step


def _compiler_params():
    return pltpu.CompilerParams(
        dimension_semantics=("parallel", "parallel"),
        vmem_limit_bytes=VMEM_LIMIT_BYTES)


def _pick_row_tile(h, target=ROW_TILE):
    t = min(h, target)
    while h % t:
        t -= 1
    return t


# ---------------------------------------------------------------------------
# Fused 3x3 conv (+ optional bias / activation) with one-pass BN partials.
# ---------------------------------------------------------------------------
def conv3x3(xs, w, *, stride=1, bias=None, act=None, compute_stats=False):
    """3x3 conv, padding=1, stride 1 or 2 (NHWC).

    xs : list of (N, H, W, Ci) maps treated as channel-concatenated
         (torch.cat(xs, 1)) WITHOUT materializing the concat.
    w  : (3, 3, sum(Ci), Cout) HWIO weights.
    Returns (y_raw (N,Ho,Wo,Cout) f32, per-tile stats (N,T,2,Cout) f32 or None).
    """
    N, H, W, _ = xs[0].shape
    cins = [int(x.shape[-1]) for x in xs]
    ctot = sum(cins)
    cout = int(w.shape[-1])
    ho = (H - 1) // stride + 1
    wo = (W - 1) // stride + 1
    th = _pick_row_tile(ho)
    T = ho // th
    wmat = w.reshape(9 * ctot, cout).astype(jnp.bfloat16)
    use_bias = bias is not None

    if stride == 1:
        # Overlapping row chunks (tile + 1-row zero halo top/bottom) so each
        # grid step DMAs exactly the rows its taps need; the 9 taps are formed
        # by in-VMEM slicing inside the kernel (no 9x im2col in HBM).
        th_in = th + 2
        wp = W + 2
        ridx = (jnp.arange(T) * th)[:, None] + jnp.arange(th_in)[None, :]
        ins = []
        for x in xs:
            xpad = jnp.pad(x.astype(jnp.bfloat16),
                           ((0, 0), (1, 1), (1, 1), (0, 0)))
            ins.append(xpad[:, ridx])                       # (N, T, th_in, wp, Ci)
        in_specs = [pl.BlockSpec((1, 1, th_in, wp, ci),
                                 lambda n, t: (n, t, 0, 0, 0)) for ci in cins]

        def make_patch(x_refs):
            xts = [r[0, 0] for r in x_refs]                 # (th_in, wp, Ci) bf16
            taps = []
            for ky in range(3):
                for kx in range(3):
                    for xt in xts:                          # cat(xs, C) channel order
                        taps.append(xt[ky:ky + th, kx:kx + wo, :])
            patch = jnp.concatenate(taps, axis=-1)          # (th, wo, 9*ctot)
            return patch.reshape(th * wo, 9 * ctot)
    else:
        # Stride-2 convs (the 2 cheapest layers): strided tap gather done once
        # in XLA (channel-concatenated patches, ~2.25x input bytes, far below
        # the old 9x im2col); kernel is a single big-K matmul.
        x = xs[0] if len(xs) == 1 else jnp.concatenate(xs, axis=-1)
        xpad = jnp.pad(x.astype(jnp.bfloat16), ((0, 0), (1, 1), (1, 1), (0, 0)))
        taps = [xpad[:, ky:ky + 2 * (ho - 1) + 1:2,
                     kx:kx + 2 * (wo - 1) + 1:2, :]
                for ky in range(3) for kx in range(3)]
        ins = [jnp.concatenate(taps, axis=-1)]              # (N, ho, wo, 9*ctot)
        in_specs = [pl.BlockSpec((1, th, wo, 9 * ctot),
                                 lambda n, t: (n, t, 0, 0))]

        def make_patch(x_refs):
            return x_refs[0][0].reshape(th * wo, 9 * ctot)

    n_in = len(ins)
    ins.append(wmat)                                        # resident across grid
    in_specs.append(pl.BlockSpec((9 * ctot, cout), lambda n, t: (0, 0)))
    if use_bias:
        ins.append(bias.reshape(1, cout).astype(jnp.float32))
        in_specs.append(pl.BlockSpec((1, cout), lambda n, t: (0, 0)))

    def kernel(*refs):
        x_refs = refs[:n_in]
        w_ref = refs[n_in]
        pos = n_in + 1
        b_ref = None
        if use_bias:
            b_ref = refs[pos]
            pos += 1
        y_ref = refs[pos]
        s_ref = refs[pos + 1] if compute_stats else None

        patch = make_patch(x_refs)                          # (th*wo, 9*ctot) bf16
        acc = jnp.dot(patch, w_ref[...],                    # one MXU matmul, f32 acc
                      preferred_element_type=jnp.float32)
        if use_bias:
            acc = acc + b_ref[...]
        if compute_stats:                                   # one-pass BN partials (f32)
            s_ref[0, 0] = jnp.concatenate(
                [jnp.sum(acc, axis=0, keepdims=True),
                 jnp.sum(acc * acc, axis=0, keepdims=True)], axis=0)
        if act == "relu":
            acc = jnp.maximum(acc, 0.0)
        elif act == "sigmoid":
            acc = jax.nn.sigmoid(acc)
        y_ref[0] = acc.reshape(th, wo, cout)

    out_shape = [jax.ShapeDtypeStruct((N, ho, wo, cout), jnp.float32)]
    out_specs = [pl.BlockSpec((1, th, wo, cout), lambda n, t: (n, t, 0, 0))]
    if compute_stats:
        out_shape.append(jax.ShapeDtypeStruct((N, T, 2, cout), jnp.float32))
        out_specs.append(pl.BlockSpec((1, 1, 2, cout), lambda n, t: (n, t, 0, 0)))

    outs = pl.pallas_call(
        kernel,
        grid=(N, T),
        in_specs=in_specs,
        out_specs=tuple(out_specs) if compute_stats else out_specs[0],
        out_shape=tuple(out_shape) if compute_stats else out_shape[0],
        compiler_params=_compiler_params(),
    )(*ins)
    if compute_stats:
        return outs[0], outs[1]
    return outs, None


def _bn_affine(stats_tiles, m, gamma, beta):
    """Reduce per-tile (sum, sumsq) -> per-channel scale/shift (training-mode
    BatchNorm, biased variance, eps=1e-5).  O(C) work, kept in f32."""
    s = jnp.sum(stats_tiles, axis=(0, 1))                   # (2, C)
    mean = s[0] / m
    var = jnp.maximum(s[1] / m - mean * mean, 0.0)
    inv = jax.lax.rsqrt(var + BN_EPS)
    scale = gamma * inv
    shift = beta - mean * scale
    return scale, shift


# ---------------------------------------------------------------------------
# BN-normalize + ReLU (tiled elementwise), bf16 output for the next conv.
# ---------------------------------------------------------------------------
def bn_act_relu(y, scale, shift):
    N, H, W, C = y.shape
    th = _pick_row_tile(H)
    T = H // th
    sc = scale.reshape(1, 1, 1, C).astype(jnp.float32)
    sh = shift.reshape(1, 1, 1, C).astype(jnp.float32)

    def kernel(y_ref, sc_ref, sh_ref, o_ref):
        o_ref[...] = jnp.maximum(
            y_ref[...] * sc_ref[...] + sh_ref[...], 0.0).astype(o_ref.dtype)

    return pl.pallas_call(
        kernel,
        grid=(N, T),
        in_specs=[pl.BlockSpec((1, th, W, C), lambda n, t: (n, t, 0, 0)),
                  pl.BlockSpec((1, 1, 1, C), lambda n, t: (0, 0, 0, 0)),
                  pl.BlockSpec((1, 1, 1, C), lambda n, t: (0, 0, 0, 0))],
        out_specs=pl.BlockSpec((1, th, W, C), lambda n, t: (n, t, 0, 0)),
        out_shape=jax.ShapeDtypeStruct((N, H, W, C), jnp.bfloat16),
        compiler_params=_compiler_params(),
    )(y, sc, sh)


# ---------------------------------------------------------------------------
# Fused BN + ReLU + bilinear 2x upsample (align_corners=False).
# Writes interleaved (N, H, 2, W, 2, C) so the final interleave is a free
# reshape (no extra HBM transpose pass).
# ---------------------------------------------------------------------------
def bn_relu_upsample2x(y, scale, shift):
    N, H, W, C = y.shape
    th = _pick_row_tile(H)
    T = H // th
    # 1-row edge-clamped halo, chunked so BlockSpec tiles never overlap.
    ypad = jnp.concatenate([y[:, :1], y, y[:, -1:]], axis=1)      # (N, H+2, W, C)
    ridx = (jnp.arange(T) * th)[:, None] + jnp.arange(th + 2)[None, :]
    ychunks = ypad[:, ridx]                                       # (N, T, th+2, W, C)
    sc = scale.reshape(1, 1, C).astype(jnp.float32)
    sh = shift.reshape(1, 1, C).astype(jnp.float32)

    def kernel(y_ref, sc_ref, sh_ref, o_ref):
        x = jnp.maximum(y_ref[0, 0] * sc_ref[...] + sh_ref[...], 0.0)  # BN+ReLU
        cen = x[1:th + 1]                                    # row i
        up = x[0:th]                                         # row i-1 (clamped)
        dn = x[2:th + 2]                                     # row i+1 (clamped)
        rows = jnp.stack([0.75 * cen + 0.25 * up,            # even output rows
                          0.75 * cen + 0.25 * dn], axis=1)   # odd output rows
        lf = jnp.concatenate([rows[:, :, :1], rows[:, :, :-1]], axis=2)
        rt = jnp.concatenate([rows[:, :, 1:], rows[:, :, -1:]], axis=2)
        out = jnp.stack([0.75 * rows + 0.25 * lf,            # even output cols
                         0.75 * rows + 0.25 * rt], axis=3)   # odd output cols
        o_ref[0] = out.astype(o_ref.dtype)                   # (th, 2, W, 2, C)

    up2 = pl.pallas_call(
        kernel,
        grid=(N, T),
        in_specs=[pl.BlockSpec((1, 1, th + 2, W, C), lambda n, t: (n, t, 0, 0, 0)),
                  pl.BlockSpec((1, 1, C), lambda n, t: (0, 0, 0)),
                  pl.BlockSpec((1, 1, C), lambda n, t: (0, 0, 0))],
        out_specs=pl.BlockSpec((1, th, 2, W, 2, C),
                               lambda n, t: (n, t, 0, 0, 0, 0)),
        out_shape=jax.ShapeDtypeStruct((N, H, 2, W, 2, C), jnp.bfloat16),
        compiler_params=_compiler_params(),
    )(ychunks, sc, sh)
    return up2.reshape(N, 2 * H, 2 * W, C)   # free: phases already interleaved


# ---------------------------------------------------------------------------
# Parameter construction (deterministic, synthetic)
# ---------------------------------------------------------------------------
def init_params(key, input_nc, output_nc, ngf):
    keys = iter(jax.random.split(key, 16))

    def conv_w(cin, cout):
        k = next(keys)
        fan_in = cin * 9
        return jax.random.normal(k, (3, 3, cin, cout), jnp.float32) / jnp.sqrt(
            jnp.float32(fan_in))

    def bn(c):  # PyTorch BatchNorm2d default init: weight=1, bias=0
        return jnp.ones((c,), jnp.float32), jnp.zeros((c,), jnp.float32)

    return {
        "down1": dict(w1=conv_w(input_nc, ngf), bn1=bn(ngf),
                      w2=conv_w(ngf, ngf), bn2=bn(ngf)),
        "down2": dict(w1=conv_w(ngf, ngf), bn1=bn(ngf),
                      w2=conv_w(ngf, ngf), bn2=bn(ngf)),
        "b": dict(w=conv_w(ngf, ngf), bn=bn(ngf)),
        "up2": dict(w1=conv_w(2 * ngf, ngf), bn1=bn(ngf),
                    w2=conv_w(ngf, ngf), bn2=bn(ngf)),
        "up1": dict(w1=conv_w(2 * ngf, ngf), bn1=bn(ngf),
                    w2=conv_w(ngf, ngf), bn2=bn(ngf),
                    w3=conv_w(ngf, output_nc),
                    b3=jnp.zeros((output_nc,), jnp.float32)),
    }


# ---------------------------------------------------------------------------
# Forward pass (mirrors Unet_struc.forward)
# ---------------------------------------------------------------------------
def unet_struc_forward(x_nchw, p):
    x = jnp.transpose(x_nchw, (0, 2, 3, 1)).astype(jnp.float32)  # NCHW -> NHWC

    def conv_bn(xs, w, gamma, beta, stride=1):
        y, stats = conv3x3(xs, w, stride=stride, compute_stats=True)
        m = y.shape[0] * y.shape[1] * y.shape[2]
        return y, _bn_affine(stats, m, gamma, beta)

    def down_block(xi, q):
        y1, (sc1, sh1) = conv_bn([xi], q["w1"], *q["bn1"], stride=2)
        a1 = bn_act_relu(y1, sc1, sh1)
        y2, (sc2, sh2) = conv_bn([a1], q["w2"], *q["bn2"], stride=1)
        return bn_relu_upsample2x(y2, sc2, sh2)     # BN+ReLU fused into upsample

    f1 = down_block(x, p["down1"])
    f2 = down_block(f1, p["down2"])

    yb, (scb, shb) = conv_bn([f2], p["b"]["w"], *p["b"]["bn"])
    b_out = bn_act_relu(yb, scb, shb)

    # f3 = cat(f2, b_out): never materialized; both maps feed the conv directly.
    y, (sc, sh) = conv_bn([f2, b_out], p["up2"]["w1"], *p["up2"]["bn1"])
    u2 = bn_act_relu(y, sc, sh)
    y, (sc, sh) = conv_bn([u2], p["up2"]["w2"], *p["up2"]["bn2"])
    u2 = bn_act_relu(y, sc, sh)

    # f4 = cat(f1, u2): never materialized.
    y, (sc, sh) = conv_bn([f1, u2], p["up1"]["w1"], *p["up1"]["bn1"])
    u1 = bn_act_relu(y, sc, sh)
    y, (sc, sh) = conv_bn([u1], p["up1"]["w2"], *p["up1"]["bn2"])
    u1 = bn_act_relu(y, sc, sh)

    # Final conv + bias + sigmoid, output channels padded to 128 for
    # lane-dense stores, sliced back to output_nc afterwards.
    out_nc = p["up1"]["w3"].shape[-1]
    cpad = ((out_nc + 127) // 128) * 128
    w3 = jnp.pad(p["up1"]["w3"], ((0, 0), (0, 0), (0, 0), (0, cpad - out_nc)))
    b3 = jnp.pad(p["up1"]["b3"], (0, cpad - out_nc))
    out, _ = conv3x3([u1], w3, stride=1, bias=b3, act="sigmoid",
                     compute_stats=False)
    out = out[..., :out_nc]
    return jnp.transpose(out, (0, 3, 1, 2))                      # NHWC -> NCHW


if __name__ == "__main__":
    # Small shapes consistent with the module (module is built with ngf=256;
    # shrunk to 32 here for the test — forward semantics are identical).
    N, input_nc, output_nc, ngf, H, W = 2, 3, 3, 32, 16, 16

    key = jax.random.PRNGKey(0)
    k_x, k_p = jax.random.split(key)
    x = jax.random.normal(k_x, (N, input_nc, H, W), jnp.float32)
    params = init_params(k_p, input_nc, output_nc, ngf)

    fwd = jax.jit(unet_struc_forward)
    out = jax.block_until_ready(fwd(x, params))

    assert out.shape == (N, output_nc, H, W)
    assert bool(jnp.all(jnp.isfinite(out)))
    assert bool(jnp.all((out >= 0.0) & (out <= 1.0)))   # sigmoid output range
    print("KERNEL_OK")
</pallas_src>

<mosaic_0001>
module attributes {stable_mosaic.version = 11 : i64} {
  func.func @kernel(%arg0: i32, %arg1: i32, %arg2: memref<1x8x8x27xbf16, #tpu.memory_space<vmem>>, %arg3: memref<27x32xbf16, #tpu.memory_space<vmem>>, %arg4: memref<1x8x8x32xf32, #tpu.memory_space<vmem>>, %arg5: memref<1x1x2x32xf32, #tpu.memory_space<vmem>>) attributes {dimension_semantics = [#tpu.dimension_semantics<parallel>, #tpu.dimension_semantics<parallel>], iteration_bounds = array<i64: 2, 1>, scalar_prefetch = 0 : i64, scratch_operands = 0 : i64, tpu.core_type = #tpu.core_type<tc>, window_params = [{transform_indices = @transform_0, window_bounds = array<i64: 1, 8, 8, 27>}, {pipeline_mode = #tpu.pipeline_mode<synchronous>, transform_indices = @transform_1, window_bounds = array<i64: 27, 32>}, {transform_indices = @transform_2, window_bounds = array<i64: 1, 8, 8, 32>}, {transform_indices = @transform_3, window_bounds = array<i64: 1, 1, 2, 32>}]} {
    %c0 = arith.constant 0 : index
    %c0_0 = arith.constant 0 : index
    %c0_1 = arith.constant 0 : index
    %c0_2 = arith.constant 0 : index
    %0 = vector.load %arg2[%c0, %c0_0, %c0_1, %c0_2] : memref<1x8x8x27xbf16, #tpu.memory_space<vmem>>, vector<1x8x8x27xbf16>
    %1 = vector.shape_cast %0 : vector<1x8x8x27xbf16> to vector<8x8x27xbf16>
    %2 = vector.shape_cast %1 : vector<8x8x27xbf16> to vector<64x27xbf16>
    %c0_3 = arith.constant 0 : index
    %c0_4 = arith.constant 0 : index
    %3 = vector.load %arg3[%c0_3, %c0_4] : memref<27x32xbf16, #tpu.memory_space<vmem>>, vector<27x32xbf16>
    %cst = arith.constant dense<0.000000e+00> : vector<64x32xf32>
    %4 = tpu.matmul %2, %3, %cst {dimension_numbers = #tpu.dot_dimension_numbers<[1], [0], [0], [1], [0, 0, 1, 1], [], []>} : vector<64x27xbf16>, vector<27x32xbf16>, vector<64x32xf32> -> vector<64x32xf32>
    %cst_5 = arith.constant dense<0.000000e+00> : vector<32xf32>
    %5 = vector.multi_reduction <add>, %4, %cst_5 [0] : vector<64x32xf32> to vector<32xf32>
    %6 = vector.shape_cast %5 : vector<32xf32> to vector<1x32xf32>
    %7 = arith.mulf %4, %4 : vector<64x32xf32>
    %cst_6 = arith.constant dense<0.000000e+00> : vector<32xf32>
    %8 = vector.multi_reduction <add>, %7, %cst_6 [0] : vector<64x32xf32> to vector<32xf32>
    %9 = vector.shape_cast %8 : vector<32xf32> to vector<1x32xf32>
    %10 = tpu.concatenate %6, %9 in 0 : vector<1x32xf32>, vector<1x32xf32> -> vector<2x32xf32>
    %c0_7 = arith.constant 0 : index
    %c0_8 = arith.constant 0 : index
    %c0_9 = arith.constant 0 : index
    %c0_10 = arith.constant 0 : index
    %11 = vector.load %arg5[%c0_7, %c0_8, %c0_9, %c0_10] : memref<1x1x2x32xf32, #tpu.memory_space<vmem>>, vector<1x1x2x32xf32>
    %12 = vector.shape_cast %11 : vector<1x1x2x32xf32> to vector<2x32xf32>
    %13 = vector.shape_cast %10 : vector<2x32xf32> to vector<1x1x2x32xf32>
    tpu.vector_store %arg5[%c0_7, %c0_8, %c0_9, %c0_10], %13 {strides = array<i32>} : memref<1x1x2x32xf32, #tpu.memory_space<vmem>>, vector<1x1x2x32xf32>,
    %14 = vector.shape_cast %4 : vector<64x32xf32> to vector<8x8x32xf32>
    %c0_11 = arith.constant 0 : index
    %c0_12 = arith.constant 0 : index
    %c0_13 = arith.constant 0 : index
    %c0_14 = arith.constant 0 : index
    %15 = vector.load %arg4[%c0_11, %c0_12, %c0_13, %c0_14] : memref<1x8x8x32xf32, #tpu.memory_space<vmem>>, vector<1x8x8x32xf32>
    %16 = vector.shape_cast %15 : vector<1x8x8x32xf32> to vector<8x8x32xf32>
    %17 = vector.shape_cast %14 : vector<8x8x32xf32> to vector<1x8x8x32xf32>
    tpu.vector_store %arg4[%c0_11, %c0_12, %c0_13, %c0_14], %17 {strides = array<i32>} : memref<1x8x8x32xf32, #tpu.memory_space<vmem>>, vector<1x8x8x32xf32>,
    return
  }
  func.func @transform_0(%arg0: i32, %arg1: i32) -> (i32, i32, i32, i32) {
    %c0_i32 = arith.constant 0 : i32
    %c0_i32_0 = arith.constant 0 : i32
    %c0_i32_1 = arith.constant 0 : i32
    return %arg0, %arg1, %c0_i32, %c0_i32_0 : i32, i32, i32, i32
  }
  func.func @transform_1(%arg0: i32, %arg1: i32) -> (i32, i32) {
    %c0_i32 = arith.constant 0 : i32
    %c0_i32_0 = arith.constant 0 : i32
    %c0_i32_1 = arith.constant 0 : i32
    return %c0_i32, %c0_i32_0 : i32, i32
  }
  func.func @transform_2(%arg0: i32, %arg1: i32) -> (i32, i32, i32, i32) {
    %c0_i32 = arith.constant 0 : i32
    %c0_i32_0 = arith.constant 0 : i32
    %c0_i32_1 = arith.constant 0 : i32
    return %arg0, %arg1, %c0_i32, %c0_i32_0 : i32, i32, i32, i32
  }
  func.func @transform_3(%arg0: i32, %arg1: i32) -> (i32, i32, i32, i32) {
    %c0_i32 = arith.constant 0 : i32
    %c0_i32_0 = arith.constant 0 : i32
    %c0_i32_1 = arith.constant 0 : i32
    return %arg0, %arg1, %c0_i32, %c0_i32_0 : i32, i32, i32, i32
  }
}

module attributes {stable_mosaic.version = 11 : i64} {
  func.func @kernel(%arg0: i32, %arg1: i32, %arg2: memref<1x8x8x32xf32, #tpu.memory_space<vmem>>, %arg3: memref<1x1x1x32xf32, #tpu.memory_space<vmem>>, %arg4: memref<1x1x1x32xf32, #tpu.memory_space<vmem>>, %arg5: memref<1x8x8x32xbf16, #tpu.memory_space<vmem>>) attributes {dimension_semantics = [#tpu.dimension_semantics<parallel>, #tpu.dimension_semantics<parallel>], iteration_bounds = array<i64: 2, 1>, scalar_prefetch = 0 : i64, scratch_operands = 0 : i64, tpu.core_type = #tpu.core_type<tc>, window_params = [{transform_indices = @transform_0, window_bounds = array<i64: 1, 8, 8, 32>}, {pipeline_mode = #tpu.pipeline_mode<synchronous>, transform_indices = @transform_1, window_bounds = array<i64: 1, 1, 1, 32>}, {pipeline_mode = #tpu.pipeline_mode<synchronous>, transform_indices = @transform_2, window_bounds = array<i64: 1, 1, 1, 32>}, {transform_indices = @transform_3, window_bounds = array<i64: 1, 8, 8, 32>}]} {
    %c0 = arith.constant 0 : index
    %c0_0 = arith.constant 0 : index
    %c0_1 = arith.constant 0 : index
    %c0_2 = arith.constant 0 : index
    %0 = vector.load %arg2[%c0, %c0_0, %c0_1, %c0_2] : memref<1x8x8x32xf32, #tpu.memory_space<vmem>>, vector<1x8x8x32xf32>
    %c0_3 = arith.constant 0 : index
    %c0_4 = arith.constant 0 : index
    %c0_5 = arith.constant 0 : index
    %c0_6 = arith.constant 0 : index
    %1 = vector.load %arg3[%c0_3, %c0_4, %c0_5, %c0_6] : memref<1x1x1x32xf32, #tpu.memory_space<vmem>>, vector<1x1x1x32xf32>
    %2 = vector.broadcast %1 : vector<1x1x1x32xf32> to vector<1x8x8x32xf32>
    %3 = arith.mulf %0, %2 : vector<1x8x8x32xf32>
    %c0_7 = arith.constant 0 : index
    %c0_8 = arith.constant 0 : index
    %c0_9 = arith.constant 0 : index
    %c0_10 = arith.constant 0 : index
    %4 = vector.load %arg4[%c0_7, %c0_8, %c0_9, %c0_10] : memref<1x1x1x32xf32, #tpu.memory_space<vmem>>, vector<1x1x1x32xf32>
    %5 = vector.broadcast %4 : vector<1x1x1x32xf32> to vector<1x8x8x32xf32>
    %6 = arith.addf %3, %5 : vector<1x8x8x32xf32>
    %cst = arith.constant 0.000000e+00 : f32
    %7 = vector.broadcast %cst : f32 to vector<1x8x8x32xf32>
    %8 = arith.maximumf %6, %7 : vector<1x8x8x32xf32>
    %9 = arith.truncf %8 : vector<1x8x8x32xf32> to vector<1x8x8x32xbf16>
    %c0_11 = arith.constant 0 : index
    %c0_12 = arith.constant 0 : index
    %c0_13 = arith.constant 0 : index
    %c0_14 = arith.constant 0 : index
    %10 = vector.load %arg5[%c0_11, %c0_12, %c0_13, %c0_14] : memref<1x8x8x32xbf16, #tpu.memory_space<vmem>>, vector<1x8x8x32xbf16>
    tpu.vector_store %arg5[%c0_11, %c0_12, %c0_13, %c0_14], %9 {strides = array<i32>} : memref<1x8x8x32xbf16, #tpu.memory_space<vmem>>, vector<1x8x8x32xbf16>,
    return
  }
  func.func @transform_0(%arg0: i32, %arg1: i32) -> (i32, i32, i32, i32) {
    %c0_i32 = arith.constant 0 : i32
    %c0_i32_0 = arith.constant 0 : i32
    %c0_i32_1 = arith.constant 0 : i32
    return %arg0, %arg1, %c0_i32, %c0_i32_0 : i32, i32, i32, i32
  }
  func.func @transform_1(%arg0: i32, %arg1: i32) -> (i32, i32, i32, i32) {
    %c0_i32 = arith.constant 0 : i32
    %c0_i32_0 = arith.constant 0 : i32
    %c0_i32_1 = arith.constant 0 : i32
    %c0_i32_2 = arith.constant 0 : i32
    %c0_i32_3 = arith.constant 0 : i32
    return %c0_i32, %c0_i32_0, %c0_i32_1, %c0_i32_2 : i32, i32, i32, i32
  }
  func.func @transform_2(%arg0: i32, %arg1: i32) -> (i32, i32, i32, i32) {
    %c0_i32 = arith.constant 0 : i32
    %c0_i32_0 = arith.constant 0 : i32
    %c0_i32_1 = arith.constant 0 : i32
    %c0_i32_2 = arith.constant 0 : i32
    %c0_i32_3 = arith.constant 0 : i32
    return %c0_i32, %c0_i32_0, %c0_i32_1, %c0_i32_2 : i32, i32, i32, i32
  }
  func.func @transform_3(%arg0: i32, %arg1: i32) -> (i32, i32, i32, i32) {
    %c0_i32 = arith.constant 0 : i32
    %c0_i32_0 = arith.constant 0 : i32
    %c0_i32_1 = arith.constant 0 : i32
    return %arg0, %arg1, %c0_i32, %c0_i32_0 : i32, i32, i32, i32
  }
}

module attributes {stable_mosaic.version = 11 : i64} {
  func.func @kernel(%arg0: i32, %arg1: i32, %arg2: memref<1x1x10x10x32xbf16, #tpu.memory_space<vmem>>, %arg3: memref<288x32xbf16, #tpu.memory_space<vmem>>, %arg4: memref<1x8x8x32xf32, #tpu.memory_space<vmem>>, %arg5: memref<1x1x2x32xf32, #tpu.memory_space<vmem>>) attributes {dimension_semantics = [#tpu.dimension_semantics<parallel>, #tpu.dimension_semantics<parallel>], iteration_bounds = array<i64: 2, 1>, scalar_prefetch = 0 : i64, scratch_operands = 0 : i64, tpu.core_type = #tpu.core_type<tc>, window_params = [{transform_indices = @transform_0, window_bounds = array<i64: 1, 1, 10, 10, 32>}, {pipeline_mode = #tpu.pipeline_mode<synchronous>, transform_indices = @transform_1, window_bounds = array<i64: 288, 32>}, {transform_indices = @transform_2, window_bounds = array<i64: 1, 8, 8, 32>}, {transform_indices = @transform_3, window_bounds = array<i64: 1, 1, 2, 32>}]} {
    %c0 = arith.constant 0 : index
    %c0_0 = arith.constant 0 : index
    %c0_1 = arith.constant 0 : index
    %c0_2 = arith.constant 0 : index
    %c0_3 = arith.constant 0 : index
    %0 = vector.load %arg2[%c0, %c0_0, %c0_1, %c0_2, %c0_3] : memref<1x1x10x10x32xbf16, #tpu.memory_space<vmem>>, vector<1x1x10x10x32xbf16>
    %1 = vector.shape_cast %0 : vector<1x1x10x10x32xbf16> to vector<10x10x32xbf16>
    %2 = vector.extract_strided_slice %1 {offsets = [0, 0, 0], sizes = [8, 8, 32], strides = [1, 1, 1]} : vector<10x10x32xbf16> to vector<8x8x32xbf16>
    %3 = vector.extract_strided_slice %1 {offsets = [0, 1, 0], sizes = [8, 8, 32], strides = [1, 1, 1]} : vector<10x10x32xbf16> to vector<8x8x32xbf16>
    %4 = vector.extract_strided_slice %1 {offsets = [0, 2, 0], sizes = [8, 8, 32], strides = [1, 1, 1]} : vector<10x10x32xbf16> to vector<8x8x32xbf16>
    %5 = vector.extract_strided_slice %1 {offsets = [1, 0, 0], sizes = [8, 8, 32], strides = [1, 1, 1]} : vector<10x10x32xbf16> to vector<8x8x32xbf16>
    %6 = vector.extract_strided_slice %1 {offsets = [1, 1, 0], sizes = [8, 8, 32], strides = [1, 1, 1]} : vector<10x10x32xbf16> to vector<8x8x32xbf16>
    %7 = vector.extract_strided_slice %1 {offsets = [1, 2, 0], sizes = [8, 8, 32], strides = [1, 1, 1]} : vector<10x10x32xbf16> to vector<8x8x32xbf16>
    %8 = vector.extract_strided_slice %1 {offsets = [2, 0, 0], sizes = [8, 8, 32], strides = [1, 1, 1]} : vector<10x10x32xbf16> to vector<8x8x32xbf16>
    %9 = vector.extract_strided_slice %1 {offsets = [2, 1, 0], sizes = [8, 8, 32], strides = [1, 1, 1]} : vector<10x10x32xbf16> to vector<8x8x32xbf16>
    %10 = vector.extract_strided_slice %1 {offsets = [2, 2, 0], sizes = [8, 8, 32], strides = [1, 1, 1]} : vector<10x10x32xbf16> to vector<8x8x32xbf16>
    %11 = tpu.concatenate %2, %3, %4, %5, %6, %7, %8, %9, %10 in 2 : vector<8x8x32xbf16>, vector<8x8x32xbf16>, vector<8x8x32xbf16>, vector<8x8x32xbf16>, vector<8x8x32xbf16>, vector<8x8x32xbf16>, vector<8x8x32xbf16>, vector<8x8x32xbf16>, vector<8x8x32xbf16> -> vector<8x8x288xbf16>
    %12 = vector.shape_cast %11 : vector<8x8x288xbf16> to vector<64x288xbf16>
    %c0_4 = arith.constant 0 : index
    %c0_5 = arith.constant 0 : index
    %13 = vector.load %arg3[%c0_4, %c0_5] : memref<288x32xbf16, #tpu.memory_space<vmem>>, vector<288x32xbf16>
    %cst = arith.constant dense<0.000000e+00> : vector<64x32xf32>
    %14 = tpu.matmul %12, %13, %cst {dimension_numbers = #tpu.dot_dimension_numbers<[1], [0], [0], [1], [0, 0, 1, 1], [], []>} : vector<64x288xbf16>, vector<288x32xbf16>, vector<64x32xf32> -> vector<64x32xf32>
    %cst_6 = arith.constant dense<0.000000e+00> : vector<32xf32>
    %15 = vector.multi_reduction <add>, %14, %cst_6 [0] : vector<64x32xf32> to vector<32xf32>
    %16 = vector.shape_cast %15 : vector<32xf32> to vector<1x32xf32>
    %17 = arith.mulf %14, %14 : vector<64x32xf32>
    %cst_7 = arith.constant dense<0.000000e+00> : vector<32xf32>
    %18 = vector.multi_reduction <add>, %17, %cst_7 [0] : vector<64x32xf32> to vector<32xf32>
    %19 = vector.shape_cast %18 : vector<32xf32> to vector<1x32xf32>
    %20 = tpu.concatenate %16, %19 in 0 : vector<1x32xf32>, vector<1x32xf32> -> vector<2x32xf32>
    %c0_8 = arith.constant 0 : index
    %c0_9 = arith.constant 0 : index
    %c0_10 = arith.constant 0 : index
    %c0_11 = arith.constant 0 : index
    %21 = vector.load %arg5[%c0_8, %c0_9, %c0_10, %c0_11] : memref<1x1x2x32xf32, #tpu.memory_space<vmem>>, vector<1x1x2x32xf32>
    %22 = vector.shape_cast %21 : vector<1x1x2x32xf32> to vector<2x32xf32>
    %23 = vector.shape_cast %20 : vector<2x32xf32> to vector<1x1x2x32xf32>
    tpu.vector_store %arg5[%c0_8, %c0_9, %c0_10, %c0_11], %23 {strides = array<i32>} : memref<1x1x2x32xf32, #tpu.memory_space<vmem>>, vector<1x1x2x32xf32>,
    %24 = vector.shape_cast %14 : vector<64x32xf32> to vector<8x8x32xf32>
    %c0_12 = arith.constant 0 : index
    %c0_13 = arith.constant 0 : index
    %c0_14 = arith.constant 0 : index
    %c0_15 = arith.constant 0 : index
    %25 = vector.load %arg4[%c0_12, %c0_13, %c0_14, %c0_15] : memref<1x8x8x32xf32, #tpu.memory_space<vmem>>, vector<1x8x8x32xf32>
    %26 = vector.shape_cast %25 : vector<1x8x8x32xf32> to vector<8x8x32xf32>
    %27 = vector.shape_cast %24 : vector<8x8x32xf32> to vector<1x8x8x32xf32>
    tpu.vector_store %arg4[%c0_12, %c0_13, %c0_14, %c0_15], %27 {strides = array<i32>} : memref<1x8x8x32xf32, #tpu.memory_space<vmem>>, vector<1x8x8x32xf32>,
    return
  }
  func.func @transform_0(%arg0: i32, %arg1: i32) -> (i32, i32, i32, i32, i32) {
    %c0_i32 = arith.constant 0 : i32
    %c0_i32_0 = arith.constant 0 : i32
    %c0_i32_1 = arith.constant 0 : i32
    %c0_i32_2 = arith.constant 0 : i32
    return %arg0, %arg1, %c0_i32, %c0_i32_0, %c0_i32_1 : i32, i32, i32, i32, i32
  }
  func.func @transform_1(%arg0: i32, %arg1: i32) -> (i32, i32) {
    %c0_i32 = arith.constant 0 : i32
    %c0_i32_0 = arith.constant 0 : i32
    %c0_i32_1 = arith.constant 0 : i32
    return %c0_i32, %c0_i32_0 : i32, i32
  }
  func.func @transform_2(%arg0: i32, %arg1: i32) -> (i32, i32, i32, i32) {
    %c0_i32 = arith.constant 0 : i32
    %c0_i32_0 = arith.constant 0 : i32
    %c0_i32_1 = arith.constant 0 : i32
    return %arg0, %arg1, %c0_i32, %c0_i32_0 : i32, i32, i32, i32
  }
  func.func @transform_3(%arg0: i32, %arg1: i32) -> (i32, i32, i32, i32) {
    %c0_i32 = arith.constant 0 : i32
    %c0_i32_0 = arith.constant 0 : i32
    %c0_i32_1 = arith.constant 0 : i32
    return %arg0, %arg1, %c0_i32, %c0_i32_0 : i32, i32, i32, i32
  }
}

module attributes {stable_mosaic.version = 11 : i64} {
  func.func @kernel(%arg0: i32, %arg1: i32, %arg2: memref<1x1x10x8x32xf32, #tpu.memory_space<vmem>>, %arg3: memref<1x1x32xf32, #tpu.memory_space<vmem>>, %arg4: memref<1x1x32xf32, #tpu.memory_space<vmem>>, %arg5: memref<1x8x2x8x2x32xbf16, #tpu.memory_space<vmem>>) attributes {dimension_semantics = [#tpu.dimension_semantics<parallel>, #tpu.dimension_semantics<parallel>], iteration_bounds = array<i64: 2, 1>, scalar_prefetch = 0 : i64, scratch_operands = 0 : i64, tpu.core_type = #tpu.core_type<tc>, window_params = [{transform_indices = @transform_0, window_bounds = array<i64: 1, 1, 10, 8, 32>}, {pipeline_mode = #tpu.pipeline_mode<synchronous>, transform_indices = @transform_1, window_bounds = array<i64: 1, 1, 32>}, {pipeline_mode = #tpu.pipeline_mode<synchronous>, transform_indices = @transform_2, window_bounds = array<i64: 1, 1, 32>}, {transform_indices = @transform_3, window_bounds = array<i64: 1, 8, 2, 8, 2, 32>}]} {
    %c0 = arith.constant 0 : index
    %c0_0 = arith.constant 0 : index
    %c0_1 = arith.constant 0 : index
    %c0_2 = arith.constant 0 : index
    %c0_3 = arith.constant 0 : index
    %0 = vector.load %arg2[%c0, %c0_0, %c0_1, %c0_2, %c0_3] : memref<1x1x10x8x32xf32, #tpu.memory_space<vmem>>, vector<1x1x10x8x32xf32>
    %1 = vector.shape_cast %0 : vector<1x1x10x8x32xf32> to vector<10x8x32xf32>
    %c0_4 = arith.constant 0 : index
    %c0_5 = arith.constant 0 : index
    %c0_6 = arith.constant 0 : index
    %2 = vector.load %arg3[%c0_4, %c0_5, %c0_6] : memref<1x1x32xf32, #tpu.memory_space<vmem>>, vector<1x1x32xf32>
    %3 = vector.broadcast %2 : vector<1x1x32xf32> to vector<10x8x32xf32>
    %4 = arith.mulf %1, %3 : vector<10x8x32xf32>
    %c0_7 = arith.constant 0 : index
    %c0_8 = arith.constant 0 : index
    %c0_9 = arith.constant 0 : index
    %5 = vector.load %arg4[%c0_7, %c0_8, %c0_9] : memref<1x1x32xf32, #tpu.memory_space<vmem>>, vector<1x1x32xf32>
    %6 = vector.broadcast %5 : vector<1x1x32xf32> to vector<10x8x32xf32>
    %7 = arith.addf %4, %6 : vector<10x8x32xf32>
    %cst = arith.constant 0.000000e+00 : f32
    %8 = vector.broadcast %cst : f32 to vector<10x8x32xf32>
    %9 = arith.maximumf %7, %8 : vector<10x8x32xf32>
    %10 = vector.extract_strided_slice %9 {offsets = [1, 0, 0], sizes = [8, 8, 32], strides = [1, 1, 1]} : vector<10x8x32xf32> to vector<8x8x32xf32>
    %11 = vector.extract_strided_slice %9 {offsets = [0, 0, 0], sizes = [8, 8, 32], strides = [1, 1, 1]} : vector<10x8x32xf32> to vector<8x8x32xf32>
    %12 = vector.extract_strided_slice %9 {offsets = [2, 0, 0], sizes = [8, 8, 32], strides = [1, 1, 1]} : vector<10x8x32xf32> to vector<8x8x32xf32>
    %cst_10 = arith.constant 7.500000e-01 : f32
    %13 = vector.broadcast %cst_10 : f32 to vector<8x8x32xf32>
    %14 = arith.mulf %13, %10 : vector<8x8x32xf32>
    %cst_11 = arith.constant 2.500000e-01 : f32
    %15 = vector.broadcast %cst_11 : f32 to vector<8x8x32xf32>
    %16 = arith.mulf %15, %11 : vector<8x8x32xf32>
    %17 = arith.addf %14, %16 : vector<8x8x32xf32>
    %cst_12 = arith.constant 7.500000e-01 : f32
    %18 = vector.broadcast %cst_12 : f32 to vector<8x8x32xf32>
    %19 = arith.mulf %18, %10 : vector<8x8x32xf32>
    %cst_13 = arith.constant 2.500000e-01 : f32
    %20 = vector.broadcast %cst_13 : f32 to vector<8x8x32xf32>
    %21 = arith.mulf %20, %12 : vector<8x8x32xf32>
    %22 = arith.addf %19, %21 : vector<8x8x32xf32>
    %23 = vector.shape_cast %17 : vector<8x8x32xf32> to vector<8x1x8x32xf32>
    %24 = vector.shape_cast %22 : vector<8x8x32xf32> to vector<8x1x8x32xf32>
    %25 = tpu.concatenate %23, %24 in 1 : vector<8x1x8x32xf32>, vector<8x1x8x32xf32> -> vector<8x2x8x32xf32>
    %26 = vector.extract_strided_slice %25 {offsets = [0, 0, 0, 0], sizes = [8, 2, 1, 32], strides = [1, 1, 1, 1]} : vector<8x2x8x32xf32> to vector<8x2x1x32xf32>
    %27 = vector.extract_strided_slice %25 {offsets = [0, 0, 0, 0], sizes = [8, 2, 7, 32], strides = [1, 1, 1, 1]} : vector<8x2x8x32xf32> to vector<8x2x7x32xf32>
    %28 = tpu.concatenate %26, %27 in 2 : vector<8x2x1x32xf32>, vector<8x2x7x32xf32> -> vector<8x2x8x32xf32>
    %29 = vector.extract_strided_slice %25 {offsets = [0, 0, 1, 0], sizes = [8, 2, 7, 32], strides = [1, 1, 1, 1]} : vector<8x2x8x32xf32> to vector<8x2x7x32xf32>
    %30 = vector.extract_strided_slice %25 {offsets = [0, 0, 7, 0], sizes = [8, 2, 1, 32], strides = [1, 1, 1, 1]} : vector<8x2x8x32xf32> to vector<8x2x1x32xf32>
    %31 = tpu.concatenate %29, %30 in 2 : vector<8x2x7x32xf32>, vector<8x2x1x32xf32> -> vector<8x2x8x32xf32>
    %cst_14 = arith.constant 7.500000e-01 : f32
    %32 = vector.broadcast %cst_14 : f32 to vector<8x2x8x32xf32>
    %33 = arith.mulf %32, %25 : vector<8x2x8x32xf32>
    %cst_15 = arith.constant 2.500000e-01 : f32
    %34 = vector.broadcast %cst_15 : f32 to vector<8x2x8x32xf32>
    %35 = arith.mulf %34, %28 : vector<8x2x8x32xf32>
    %36 = arith.addf %33, %35 : vector<8x2x8x32xf32>
    %cst_16 = arith.constant 7.500000e-01 : f32
    %37 = vector.broadcast %cst_16 : f32 to vector<8x2x8x32xf32>
    %38 = arith.mulf %37, %25 : vector<8x2x8x32xf32>
    %cst_17 = arith.constant 2.500000e-01 : f32
    %39 = vector.broadcast %cst_17 : f32 to vector<8x2x8x32xf32>
    %40 = arith.mulf %39, %31 : vector<8x2x8x32xf32>
    %41 = arith.addf %38, %40 : vector<8x2x8x32xf32>
    %42 = vector.shape_cast %36 : vector<8x2x8x32xf32> to vector<8x2x8x1x32xf32>
    %43 = vector.shape_cast %41 : vector<8x2x8x32xf32> to vector<8x2x8x1x32xf32>
    %44 = tpu.concatenate %42, %43 in 3 : vector<8x2x8x1x32xf32>, vector<8x2x8x1x32xf32> -> vector<8x2x8x2x32xf32>
    %45 = arith.truncf %44 : vector<8x2x8x2x32xf32> to vector<8x2x8x2x32xbf16>
    %c0_18 = arith.constant 0 : index
    %c0_19 = arith.constant 0 : index
    %c0_20 = arith.constant 0 : index
    %c0_21 = arith.constant 0 : index
    %c0_22 = arith.constant 0 : index
    %c0_23 = arith.constant 0 : index
    %46 = vector.load %arg5[%c0_18, %c0_19, %c0_20, %c0_21, %c0_22, %c0_23] : memref<1x8x2x8x2x32xbf16, #tpu.memory_space<vmem>>, vector<1x8x2x8x2x32xbf16>
    %47 = vector.shape_cast %46 : vector<1x8x2x8x2x32xbf16> to vector<8x2x8x2x32xbf16>
    %48 = vector.shape_cast %45 : vector<8x2x8x2x32xbf16> to vector<1x8x2x8x2x32xbf16>
    tpu.vector_store %arg5[%c0_18, %c0_19, %c0_20, %c0_21, %c0_22, %c0_23], %48 {strides = array<i32>} : memref<1x8x2x8x2x32xbf16, #tpu.memory_space<vmem>>, vector<1x8x2x8x2x32xbf16>,
    return
  }
  func.func @transform_0(%arg0: i32, %arg1: i32) -> (i32, i32, i32, i32, i32) {
    %c0_i32 = arith.constant 0 : i32
    %c0_i32_0 = arith.constant 0 : i32
    %c0_i32_1 = arith.constant 0 : i32
    %c0_i32_2 = arith.constant 0 : i32
    return %arg0, %arg1, %c0_i32, %c0_i32_0, %c0_i32_1 : i32, i32, i32, i32, i32
  }
  func.func @transform_1(%arg0: i32, %arg1: i32) -> (i32, i32, i32) {
    %c0_i32 = arith.constant 0 : i32
    %c0_i32_0 = arith.constant 0 : i32
    %c0_i32_1 = arith.constant 0 : i32
    %c0_i32_2 = arith.constant 0 : i32
    return %c0_i32, %c0_i32_0, %c0_i32_1 : i32, i32, i32
  }
  func.func @transform_2(%arg0: i32, %arg1: i32) -> (i32, i32, i32) {
    %c0_i32 = arith.constant 0 : i32
    %c0_i32_0 = arith.constant 0 : i32
    %c0_i32_1 = arith.constant 0 : i32
    %c0_i32_2 = arith.constant 0 : i32
    return %c0_i32, %c0_i32_0, %c0_i32_1 : i32, i32, i32
  }
  func.func @transform_3(%arg0: i32, %arg1: i32) -> (i32, i32, i32, i32, i32, i32) {
    %c0_i32 = arith.constant 0 : i32
    %c0_i32_0 = arith.constant 0 : i32
    %c0_i32_1 = arith.constant 0 : i32
    %c0_i32_2 = arith.constant 0 : i32
    %c0_i32_3 = arith.constant 0 : i32
    return %arg0, %arg1, %c0_i32, %c0_i32_0, %c0_i32_1, %c0_i32_2 : i32, i32, i32, i32, i32, i32
  }
}

module attributes {stable_mosaic.version = 11 : i64} {
  func.func @kernel(%arg0: i32, %arg1: i32, %arg2: memref<1x8x8x288xbf16, #tpu.memory_space<vmem>>, %arg3: memref<288x32xbf16, #tpu.memory_space<vmem>>, %arg4: memref<1x8x8x32xf32, #tpu.memory_space<vmem>>, %arg5: memref<1x1x2x32xf32, #tpu.memory_space<vmem>>) attributes {dimension_semantics = [#tpu.dimension_semantics<parallel>, #tpu.dimension_semantics<parallel>], iteration_bounds = array<i64: 2, 1>, scalar_prefetch = 0 : i64, scratch_operands = 0 : i64, tpu.core_type = #tpu.core_type<tc>, window_params = [{transform_indices = @transform_0, window_bounds = array<i64: 1, 8, 8, 288>}, {pipeline_mode = #tpu.pipeline_mode<synchronous>, transform_indices = @transform_1, window_bounds = array<i64: 288, 32>}, {transform_indices = @transform_2, window_bounds = array<i64: 1, 8, 8, 32>}, {transform_indices = @transform_3, window_bounds = array<i64: 1, 1, 2, 32>}]} {
    %c0 = arith.constant 0 : index
    %c0_0 = arith.constant 0 : index
    %c0_1 = arith.constant 0 : index
    %c0_2 = arith.constant 0 : index
    %0 = vector.load %arg2[%c0, %c0_0, %c0_1, %c0_2] : memref<1x8x8x288xbf16, #tpu.memory_space<vmem>>, vector<1x8x8x288xbf16>
    %1 = vector.shape_cast %0 : vector<1x8x8x288xbf16> to vector<8x8x288xbf16>
    %2 = vector.shape_cast %1 : vector<8x8x288xbf16> to vector<64x288xbf16>
    %c0_3 = arith.constant 0 : index
    %c0_4 = arith.constant 0 : index
    %3 = vector.load %arg3[%c0_3, %c0_4] : memref<288x32xbf16, #tpu.memory_space<vmem>>, vector<288x32xbf16>
    %cst = arith.constant dense<0.000000e+00> : vector<64x32xf32>
    %4 = tpu.matmul %2, %3, %cst {dimension_numbers = #tpu.dot_dimension_numbers<[1], [0], [0], [1], [0, 0, 1, 1], [], []>} : vector<64x288xbf16>, vector<288x32xbf16>, vector<64x32xf32> -> vector<64x32xf32>
    %cst_5 = arith.constant dense<0.000000e+00> : vector<32xf32>
    %5 = vector.multi_reduction <add>, %4, %cst_5 [0] : vector<64x32xf32> to vector<32xf32>
    %6 = vector.shape_cast %5 : vector<32xf32> to vector<1x32xf32>
    %7 = arith.mulf %4, %4 : vector<64x32xf32>
    %cst_6 = arith.constant dense<0.000000e+00> : vector<32xf32>
    %8 = vector.multi_reduction <add>, %7, %cst_6 [0] : vector<64x32xf32> to vector<32xf32>
    %9 = vector.shape_cast %8 : vector<32xf32> to vector<1x32xf32>
    %10 = tpu.concatenate %6, %9 in 0 : vector<1x32xf32>, vector<1x32xf32> -> vector<2x32xf32>
    %c0_7 = arith.constant 0 : index
    %c0_8 = arith.constant 0 : index
    %c0_9 = arith.constant 0 : index
    %c0_10 = arith.constant 0 : index
    %11 = vector.load %arg5[%c0_7, %c0_8, %c0_9, %c0_10] : memref<1x1x2x32xf32, #tpu.memory_space<vmem>>, vector<1x1x2x32xf32>
    %12 = vector.shape_cast %11 : vector<1x1x2x32xf32> to vector<2x32xf32>
    %13 = vector.shape_cast %10 : vector<2x32xf32> to vector<1x1x2x32xf32>
    tpu.vector_store %arg5[%c0_7, %c0_8, %c0_9, %c0_10], %13 {strides = array<i32>} : memref<1x1x2x32xf32, #tpu.memory_space<vmem>>, vector<1x1x2x32xf32>,
    %14 = vector.shape_cast %4 : vector<64x32xf32> to vector<8x8x32xf32>
    %c0_11 = arith.constant 0 : index
    %c0_12 = arith.constant 0 : index
    %c0_13 = arith.constant 0 : index
    %c0_14 = arith.constant 0 : index
    %15 = vector.load %arg4[%c0_11, %c0_12, %c0_13, %c0_14] : memref<1x8x8x32xf32, #tpu.memory_space<vmem>>, vector<1x8x8x32xf32>
    %16 = vector.shape_cast %15 : vector<1x8x8x32xf32> to vector<8x8x32xf32>
    %17 = vector.shape_cast %14 : vector<8x8x32xf32> to vector<1x8x8x32xf32>
    tpu.vector_store %arg4[%c0_11, %c0_12, %c0_13, %c0_14], %17 {strides = array<i32>} : memref<1x8x8x32xf32, #tpu.memory_space<vmem>>, vector<1x8x8x32xf32>,
    return
  }
  func.func @transform_0(%arg0: i32, %arg1: i32) -> (i32, i32, i32, i32) {
    %c0_i32 = arith.constant 0 : i32
    %c0_i32_0 = arith.constant 0 : i32
    %c0_i32_1 = arith.constant 0 : i32
    return %arg0, %arg1, %c0_i32, %c0_i32_0 : i32, i32, i32, i32
  }
  func.func @transform_1(%arg0: i32, %arg1: i32) -> (i32, i32) {
    %c0_i32 = arith.constant 0 : i32
    %c0_i32_0 = arith.constant 0 : i32
    %c0_i32_1 = arith.constant 0 : i32
    return %c0_i32, %c0_i32_0 : i32, i32
  }
  func.func @transform_2(%arg0: i32, %arg1: i32) -> (i32, i32, i32, i32) {
    %c0_i32 = arith.constant 0 : i32
    %c0_i32_0 = arith.constant 0 : i32
    %c0_i32_1 = arith.constant 0 : i32
    return %arg0, %arg1, %c0_i32, %c0_i32_0 : i32, i32, i32, i32
  }
  func.func @transform_3(%arg0: i32, %arg1: i32) -> (i32, i32, i32, i32) {
    %c0_i32 = arith.constant 0 : i32
    %c0_i32_0 = arith.constant 0 : i32
    %c0_i32_1 = arith.constant 0 : i32
    return %arg0, %arg1, %c0_i32, %c0_i32_0 : i32, i32, i32, i32
  }
}

module attributes {stable_mosaic.version = 11 : i64} {
  func.func @kernel(%arg0: i32, %arg1: i32, %arg2: memref<1x1x10x18x32xbf16, #tpu.memory_space<vmem>>, %arg3: memref<288x32xbf16, #tpu.memory_space<vmem>>, %arg4: memref<1x8x16x32xf32, #tpu.memory_space<vmem>>, %arg5: memref<1x1x2x32xf32, #tpu.memory_space<vmem>>) attributes {dimension_semantics = [#tpu.dimension_semantics<parallel>, #tpu.dimension_semantics<parallel>], iteration_bounds = array<i64: 2, 2>, scalar_prefetch = 0 : i64, scratch_operands = 0 : i64, tpu.core_type = #tpu.core_type<tc>, window_params = [{transform_indices = @transform_0, window_bounds = array<i64: 1, 1, 10, 18, 32>}, {pipeline_mode = #tpu.pipeline_mode<synchronous>, transform_indices = @transform_1, window_bounds = array<i64: 288, 32>}, {transform_indices = @transform_2, window_bounds = array<i64: 1, 8, 16, 32>}, {transform_indices = @transform_3, window_bounds = array<i64: 1, 1, 2, 32>}]} {
    %c0 = arith.constant 0 : index
    %c0_0 = arith.constant 0 : index
    %c0_1 = arith.constant 0 : index
    %c0_2 = arith.constant 0 : index
    %c0_3 = arith.constant 0 : index
    %0 = vector.load %arg2[%c0, %c0_0, %c0_1, %c0_2, %c0_3] : memref<1x1x10x18x32xbf16, #tpu.memory_space<vmem>>, vector<1x1x10x18x32xbf16>
    %1 = vector.shape_cast %0 : vector<1x1x10x18x32xbf16> to vector<10x18x32xbf16>
    %2 = vector.extract_strided_slice %1 {offsets = [0, 0, 0], sizes = [8, 16, 32], strides = [1, 1, 1]} : vector<10x18x32xbf16> to vector<8x16x32xbf16>
    %3 = vector.extract_strided_slice %1 {offsets = [0, 1, 0], sizes = [8, 16, 32], strides = [1, 1, 1]} : vector<10x18x32xbf16> to vector<8x16x32xbf16>
    %4 = vector.extract_strided_slice %1 {offsets = [0, 2, 0], sizes = [8, 16, 32], strides = [1, 1, 1]} : vector<10x18x32xbf16> to vector<8x16x32xbf16>
    %5 = vector.extract_strided_slice %1 {offsets = [1, 0, 0], sizes = [8, 16, 32], strides = [1, 1, 1]} : vector<10x18x32xbf16> to vector<8x16x32xbf16>
    %6 = vector.extract_strided_slice %1 {offsets = [1, 1, 0], sizes = [8, 16, 32], strides = [1, 1, 1]} : vector<10x18x32xbf16> to vector<8x16x32xbf16>
    %7 = vector.extract_strided_slice %1 {offsets = [1, 2, 0], sizes = [8, 16, 32], strides = [1, 1, 1]} : vector<10x18x32xbf16> to vector<8x16x32xbf16>
    %8 = vector.extract_strided_slice %1 {offsets = [2, 0, 0], sizes = [8, 16, 32], strides = [1, 1, 1]} : vector<10x18x32xbf16> to vector<8x16x32xbf16>
    %9 = vector.extract_strided_slice %1 {offsets = [2, 1, 0], sizes = [8, 16, 32], strides = [1, 1, 1]} : vector<10x18x32xbf16> to vector<8x16x32xbf16>
    %10 = vector.extract_strided_slice %1 {offsets = [2, 2, 0], sizes = [8, 16, 32], strides = [1, 1, 1]} : vector<10x18x32xbf16> to vector<8x16x32xbf16>
    %11 = tpu.concatenate %2, %3, %4, %5, %6, %7, %8, %9, %10 in 2 : vector<8x16x32xbf16>, vector<8x16x32xbf16>, vector<8x16x32xbf16>, vector<8x16x32xbf16>, vector<8x16x32xbf16>, vector<8x16x32xbf16>, vector<8x16x32xbf16>, vector<8x16x32xbf16>, vector<8x16x32xbf16> -> vector<8x16x288xbf16>
    %12 = vector.shape_cast %11 : vector<8x16x288xbf16> to vector<128x288xbf16>
    %c0_4 = arith.constant 0 : index
    %c0_5 = arith.constant 0 : index
    %13 = vector.load %arg3[%c0_4, %c0_5] : memref<288x32xbf16, #tpu.memory_space<vmem>>, vector<288x32xbf16>
    %cst = arith.constant dense<0.000000e+00> : vector<128x32xf32>
    %14 = tpu.matmul %12, %13, %cst {dimension_numbers = #tpu.dot_dimension_numbers<[1], [0], [0], [1], [0, 0, 1, 1], [], []>} : vector<128x288xbf16>, vector<288x32xbf16>, vector<128x32xf32> -> vector<128x32xf32>
    %cst_6 = arith.constant dense<0.000000e+00> : vector<32xf32>
    %15 = vector.multi_reduction <add>, %14, %cst_6 [0] : vector<128x32xf32> to vector<32xf32>
    %16 = vector.shape_cast %15 : vector<32xf32> to vector<1x32xf32>
    %17 = arith.mulf %14, %14 : vector<128x32xf32>
    %cst_7 = arith.constant dense<0.000000e+00> : vector<32xf32>
    %18 = vector.multi_reduction <add>, %17, %cst_7 [0] : vector<128x32xf32> to vector<32xf32>
    %19 = vector.shape_cast %18 : vector<32xf32> to vector<1x32xf32>
    %20 = tpu.concatenate %16, %19 in 0 : vector<1x32xf32>, vector<1x32xf32> -> vector<2x32xf32>
    %c0_8 = arith.constant 0 : index
    %c0_9 = arith.constant 0 : index
    %c0_10 = arith.constant 0 : index
    %c0_11 = arith.constant 0 : index
    %21 = vector.load %arg5[%c0_8, %c0_9, %c0_10, %c0_11] : memref<1x1x2x32xf32, #tpu.memory_space<vmem>>, vector<1x1x2x32xf32>
    %22 = vector.shape_cast %21 : vector<1x1x2x32xf32> to vector<2x32xf32>
    %23 = vector.shape_cast %20 : vector<2x32xf32> to vector<1x1x2x32xf32>
    tpu.vector_store %arg5[%c0_8, %c0_9, %c0_10, %c0_11], %23 {strides = array<i32>} : memref<1x1x2x32xf32, #tpu.memory_space<vmem>>, vector<1x1x2x32xf32>,
    %24 = vector.shape_cast %14 : vector<128x32xf32> to vector<8x16x32xf32>
    %c0_12 = arith.constant 0 : index
    %c0_13 = arith.constant 0 : index
    %c0_14 = arith.constant 0 : index
    %c0_15 = arith.constant 0 : index
    %25 = vector.load %arg4[%c0_12, %c0_13, %c0_14, %c0_15] : memref<1x8x16x32xf32, #tpu.memory_space<vmem>>, vector<1x8x16x32xf32>
    %26 = vector.shape_cast %25 : vector<1x8x16x32xf32> to vector<8x16x32xf32>
    %27 = vector.shape_cast %24 : vector<8x16x32xf32> to vector<1x8x16x32xf32>
    tpu.vector_store %arg4[%c0_12, %c0_13, %c0_14, %c0_15], %27 {strides = array<i32>} : memref<1x8x16x32xf32, #tpu.memory_space<vmem>>, vector<1x8x16x32xf32>,
    return
  }
  func.func @transform_0(%arg0: i32, %arg1: i32) -> (i32, i32, i32, i32, i32) {
    %c0_i32 = arith.constant 0 : i32
    %c0_i32_0 = arith.constant 0 : i32
    %c0_i32_1 = arith.constant 0 : i32
    %c0_i32_2 = arith.constant 0 : i32
    return %arg0, %arg1, %c0_i32, %c0_i32_0, %c0_i32_1 : i32, i32, i32, i32, i32
  }
  func.func @transform_1(%arg0: i32, %arg1: i32) -> (i32, i32) {
    %c0_i32 = arith.constant 0 : i32
    %c0_i32_0 = arith.constant 0 : i32
    %c0_i32_1 = arith.constant 0 : i32
    return %c0_i32, %c0_i32_0 : i32, i32
  }
  func.func @transform_2(%arg0: i32, %arg1: i32) -> (i32, i32, i32, i32) {
    %c0_i32 = arith.constant 0 : i32
    %c0_i32_0 = arith.constant 0 : i32
    %c0_i32_1 = arith.constant 0 : i32
    return %arg0, %arg1, %c0_i32, %c0_i32_0 : i32, i32, i32, i32
  }
  func.func @transform_3(%arg0: i32, %arg1: i32) -> (i32, i32, i32, i32) {
    %c0_i32 = arith.constant 0 : i32
    %c0_i32_0 = arith.constant 0 : i32
    %c0_i32_1 = arith.constant 0 : i32
    return %arg0, %arg1, %c0_i32, %c0_i32_0 : i32, i32, i32, i32
  }
}

module attributes {stable_mosaic.version = 11 : i64} {
  func.func @kernel(%arg0: i32, %arg1: i32, %arg2: memref<1x8x16x32xf32, #tpu.memory_space<vmem>>, %arg3: memref<1x1x1x32xf32, #tpu.memory_space<vmem>>, %arg4: memref<1x1x1x32xf32, #tpu.memory_space<vmem>>, %arg5: memref<1x8x16x32xbf16, #tpu.memory_space<vmem>>) attributes {dimension_semantics = [#tpu.dimension_semantics<parallel>, #tpu.dimension_semantics<parallel>], iteration_bounds = array<i64: 2, 2>, scalar_prefetch = 0 : i64, scratch_operands = 0 : i64, tpu.core_type = #tpu.core_type<tc>, window_params = [{transform_indices = @transform_0, window_bounds = array<i64: 1, 8, 16, 32>}, {pipeline_mode = #tpu.pipeline_mode<synchronous>, transform_indices = @transform_1, window_bounds = array<i64: 1, 1, 1, 32>}, {pipeline_mode = #tpu.pipeline_mode<synchronous>, transform_indices = @transform_2, window_bounds = array<i64: 1, 1, 1, 32>}, {transform_indices = @transform_3, window_bounds = array<i64: 1, 8, 16, 32>}]} {
    %c0 = arith.constant 0 : index
    %c0_0 = arith.constant 0 : index
    %c0_1 = arith.constant 0 : index
    %c0_2 = arith.constant 0 : index
    %0 = vector.load %arg2[%c0, %c0_0, %c0_1, %c0_2] : memref<1x8x16x32xf32, #tpu.memory_space<vmem>>, vector<1x8x16x32xf32>
    %c0_3 = arith.constant 0 : index
    %c0_4 = arith.constant 0 : index
    %c0_5 = arith.constant 0 : index
    %c0_6 = arith.constant 0 : index
    %1 = vector.load %arg3[%c0_3, %c0_4, %c0_5, %c0_6] : memref<1x1x1x32xf32, #tpu.memory_space<vmem>>, vector<1x1x1x32xf32>
    %2 = vector.broadcast %1 : vector<1x1x1x32xf32> to vector<1x8x16x32xf32>
    %3 = arith.mulf %0, %2 : vector<1x8x16x32xf32>
    %c0_7 = arith.constant 0 : index
    %c0_8 = arith.constant 0 : index
    %c0_9 = arith.constant 0 : index
    %c0_10 = arith.constant 0 : index
    %4 = vector.load %arg4[%c0_7, %c0_8, %c0_9, %c0_10] : memref<1x1x1x32xf32, #tpu.memory_space<vmem>>, vector<1x1x1x32xf32>
    %5 = vector.broadcast %4 : vector<1x1x1x32xf32> to vector<1x8x16x32xf32>
    %6 = arith.addf %3, %5 : vector<1x8x16x32xf32>
    %cst = arith.constant 0.000000e+00 : f32
    %7 = vector.broadcast %cst : f32 to vector<1x8x16x32xf32>
    %8 = arith.maximumf %6, %7 : vector<1x8x16x32xf32>
    %9 = arith.truncf %8 : vector<1x8x16x32xf32> to vector<1x8x16x32xbf16>
    %c0_11 = arith.constant 0 : index
    %c0_12 = arith.constant 0 : index
    %c0_13 = arith.constant 0 : index
    %c0_14 = arith.constant 0 : index
    %10 = vector.load %arg5[%c0_11, %c0_12, %c0_13, %c0_14] : memref<1x8x16x32xbf16, #tpu.memory_space<vmem>>, vector<1x8x16x32xbf16>
    tpu.vector_store %arg5[%c0_11, %c0_12, %c0_13, %c0_14], %9 {strides = array<i32>} : memref<1x8x16x32xbf16, #tpu.memory_space<vmem>>, vector<1x8x16x32xbf16>,
    return
  }
  func.func @transform_0(%arg0: i32, %arg1: i32) -> (i32, i32, i32, i32) {
    %c0_i32 = arith.constant 0 : i32
    %c0_i32_0 = arith.constant 0 : i32
    %c0_i32_1 = arith.constant 0 : i32
    return %arg0, %arg1, %c0_i32, %c0_i32_0 : i32, i32, i32, i32
  }
  func.func @transform_1(%arg0: i32, %arg1: i32) -> (i32, i32, i32, i32) {
    %c0_i32 = arith.constant 0 : i32
    %c0_i32_0 = arith.constant 0 : i32
    %c0_i32_1 = arith.constant 0 : i32
    %c0_i32_2 = arith.constant 0 : i32
    %c0_i32_3 = arith.constant 0 : i32
    return %c0_i32, %c0_i32_0, %c0_i32_1, %c0_i32_2 : i32, i32, i32, i32
  }
  func.func @transform_2(%arg0: i32, %arg1: i32) -> (i32, i32, i32, i32) {
    %c0_i32 = arith.constant 0 : i32
    %c0_i32_0 = arith.constant 0 : i32
    %c0_i32_1 = arith.constant 0 : i32
    %c0_i32_2 = arith.constant 0 : i32
    %c0_i32_3 = arith.constant 0 : i32
    return %c0_i32, %c0_i32_0, %c0_i32_1, %c0_i32_2 : i32, i32, i32, i32
  }
  func.func @transform_3(%arg0: i32, %arg1: i32) -> (i32, i32, i32, i32) {
    %c0_i32 = arith.constant 0 : i32
    %c0_i32_0 = arith.constant 0 : i32
    %c0_i32_1 = arith.constant 0 : i32
    return %arg0, %arg1, %c0_i32, %c0_i32_0 : i32, i32, i32, i32
  }
}

module attributes {stable_mosaic.version = 11 : i64} {
  func.func @kernel(%arg0: i32, %arg1: i32, %arg2: memref<1x1x10x18x32xbf16, #tpu.memory_space<vmem>>, %arg3: memref<1x1x10x18x32xbf16, #tpu.memory_space<vmem>>, %arg4: memref<576x32xbf16, #tpu.memory_space<vmem>>, %arg5: memref<1x8x16x32xf32, #tpu.memory_space<vmem>>, %arg6: memref<1x1x2x32xf32, #tpu.memory_space<vmem>>) attributes {dimension_semantics = [#tpu.dimension_semantics<parallel>, #tpu.dimension_semantics<parallel>], iteration_bounds = array<i64: 2, 2>, scalar_prefetch = 0 : i64, scratch_operands = 0 : i64, tpu.core_type = #tpu.core_type<tc>, window_params = [{transform_indices = @transform_0, window_bounds = array<i64: 1, 1, 10, 18, 32>}, {transform_indices = @transform_1, window_bounds = array<i64: 1, 1, 10, 18, 32>}, {pipeline_mode = #tpu.pipeline_mode<synchronous>, transform_indices = @transform_2, window_bounds = array<i64: 576, 32>}, {transform_indices = @transform_3, window_bounds = array<i64: 1, 8, 16, 32>}, {transform_indices = @transform_4, window_bounds = array<i64: 1, 1, 2, 32>}]} {
    %c0 = arith.constant 0 : index
    %c0_0 = arith.constant 0 : index
    %c0_1 = arith.constant 0 : index
    %c0_2 = arith.constant 0 : index
    %c0_3 = arith.constant 0 : index
    %0 = vector.load %arg2[%c0, %c0_0, %c0_1, %c0_2, %c0_3] : memref<1x1x10x18x32xbf16, #tpu.memory_space<vmem>>, vector<1x1x10x18x32xbf16>
    %1 = vector.shape_cast %0 : vector<1x1x10x18x32xbf16> to vector<10x18x32xbf16>
    %c0_4 = arith.constant 0 : index
    %c0_5 = arith.constant 0 : index
    %c0_6 = arith.constant 0 : index
    %c0_7 = arith.constant 0 : index
    %c0_8 = arith.constant 0 : index
    %2 = vector.load %arg3[%c0_4, %c0_5, %c0_6, %c0_7, %c0_8] : memref<1x1x10x18x32xbf16, #tpu.memory_space<vmem>>, vector<1x1x10x18x32xbf16>
    %3 = vector.shape_cast %2 : vector<1x1x10x18x32xbf16> to vector<10x18x32xbf16>
    %4 = vector.extract_strided_slice %1 {offsets = [0, 0, 0], sizes = [8, 16, 32], strides = [1, 1, 1]} : vector<10x18x32xbf16> to vector<8x16x32xbf16>
    %5 = vector.extract_strided_slice %3 {offsets = [0, 0, 0], sizes = [8, 16, 32], strides = [1, 1, 1]} : vector<10x18x32xbf16> to vector<8x16x32xbf16>
    %6 = vector.extract_strided_slice %1 {offsets = [0, 1, 0], sizes = [8, 16, 32], strides = [1, 1, 1]} : vector<10x18x32xbf16> to vector<8x16x32xbf16>
    %7 = vector.extract_strided_slice %3 {offsets = [0, 1, 0], sizes = [8, 16, 32], strides = [1, 1, 1]} : vector<10x18x32xbf16> to vector<8x16x32xbf16>
    %8 = vector.extract_strided_slice %1 {offsets = [0, 2, 0], sizes = [8, 16, 32], strides = [1, 1, 1]} : vector<10x18x32xbf16> to vector<8x16x32xbf16>
    %9 = vector.extract_strided_slice %3 {offsets = [0, 2, 0], sizes = [8, 16, 32], strides = [1, 1, 1]} : vector<10x18x32xbf16> to vector<8x16x32xbf16>
    %10 = vector.extract_strided_slice %1 {offsets = [1, 0, 0], sizes = [8, 16, 32], strides = [1, 1, 1]} : vector<10x18x32xbf16> to vector<8x16x32xbf16>
    %11 = vector.extract_strided_slice %3 {offsets = [1, 0, 0], sizes = [8, 16, 32], strides = [1, 1, 1]} : vector<10x18x32xbf16> to vector<8x16x32xbf16>
    %12 = vector.extract_strided_slice %1 {offsets = [1, 1, 0], sizes = [8, 16, 32], strides = [1, 1, 1]} : vector<10x18x32xbf16> to vector<8x16x32xbf16>
    %13 = vector.extract_strided_slice %3 {offsets = [1, 1, 0], sizes = [8, 16, 32], strides = [1, 1, 1]} : vector<10x18x32xbf16> to vector<8x16x32xbf16>
    %14 = vector.extract_strided_slice %1 {offsets = [1, 2, 0], sizes = [8, 16, 32], strides = [1, 1, 1]} : vector<10x18x32xbf16> to vector<8x16x32xbf16>
    %15 = vector.extract_strided_slice %3 {offsets = [1, 2, 0], sizes = [8, 16, 32], strides = [1, 1, 1]} : vector<10x18x32xbf16> to vector<8x16x32xbf16>
    %16 = vector.extract_strided_slice %1 {offsets = [2, 0, 0], sizes = [8, 16, 32], strides = [1, 1, 1]} : vector<10x18x32xbf16> to vector<8x16x32xbf16>
    %17 = vector.extract_strided_slice %3 {offsets = [2, 0, 0], sizes = [8, 16, 32], strides = [1, 1, 1]} : vector<10x18x32xbf16> to vector<8x16x32xbf16>
    %18 = vector.extract_strided_slice %1 {offsets = [2, 1, 0], sizes = [8, 16, 32], strides = [1, 1, 1]} : vector<10x18x32xbf16> to vector<8x16x32xbf16>
    %19 = vector.extract_strided_slice %3 {offsets = [2, 1, 0], sizes = [8, 16, 32], strides = [1, 1, 1]} : vector<10x18x32xbf16> to vector<8x16x32xbf16>
    %20 = vector.extract_strided_slice %1 {offsets = [2, 2, 0], sizes = [8, 16, 32], strides = [1, 1, 1]} : vector<10x18x32xbf16> to vector<8x16x32xbf16>
    %21 = vector.extract_strided_slice %3 {offsets = [2, 2, 0], sizes = [8, 16, 32], strides = [1, 1, 1]} : vector<10x18x32xbf16> to vector<8x16x32xbf16>
    %22 = tpu.concatenate %4, %5, %6, %7, %8, %9, %10, %11, %12, %13, %14, %15, %16, %17, %18, %19 in 2 : vector<8x16x32xbf16>, vector<8x16x32xbf16>, vector<8x16x32xbf16>, vector<8x16x32xbf16>, vector<8x16x32xbf16>, vector<8x16x32xbf16>, vector<8x16x32xbf16>, vector<8x16x32xbf16>, vector<8x16x32xbf16>, vector<8x16x32xbf16>, vector<8x16x32xbf16>, vector<8x16x32xbf16>, vector<8x16x32xbf16>, vector<8x16x32xbf16>, vector<8x16x32xbf16>, vector<8x16x32xbf16> -> vector<8x16x512xbf16>
    %23 = tpu.concatenate %20, %21 in 2 : vector<8x16x32xbf16>, vector<8x16x32xbf16> -> vector<8x16x64xbf16>
    %24 = tpu.concatenate %22, %23 in 2 : vector<8x16x512xbf16>, vector<8x16x64xbf16> -> vector<8x16x576xbf16>
    %25 = vector.shape_cast %24 : vector<8x16x576xbf16> to vector<128x576xbf16>
    %c0_9 = arith.constant 0 : index
    %c0_10 = arith.constant 0 : index
    %26 = vector.load %arg4[%c0_9, %c0_10] : memref<576x32xbf16, #tpu.memory_space<vmem>>, vector<576x32xbf16>
    %cst = arith.constant dense<0.000000e+00> : vector<128x32xf32>
    %27 = tpu.matmul %25, %26, %cst {dimension_numbers = #tpu.dot_dimension_numbers<[1], [0], [0], [1], [0, 0, 1, 1], [], []>} : vector<128x576xbf16>, vector<576x32xbf16>, vector<128x32xf32> -> vector<128x32xf32>
    %cst_11 = arith.constant dense<0.000000e+00> : vector<32xf32>
    %28 = vector.multi_reduction <add>, %27, %cst_11 [0] : vector<128x32xf32> to vector<32xf32>
    %29 = vector.shape_cast %28 : vector<32xf32> to vector<1x32xf32>
    %30 = arith.mulf %27, %27 : vector<128x32xf32>
    %cst_12 = arith.constant dense<0.000000e+00> : vector<32xf32>
    %31 = vector.multi_reduction <add>, %30, %cst_12 [0] : vector<128x32xf32> to vector<32xf32>
    %32 = vector.shape_cast %31 : vector<32xf32> to vector<1x32xf32>
    %33 = tpu.concatenate %29, %32 in 0 : vector<1x32xf32>, vector<1x32xf32> -> vector<2x32xf32>
    %c0_13 = arith.constant 0 : index
    %c0_14 = arith.constant 0 : index
    %c0_15 = arith.constant 0 : index
    %c0_16 = arith.constant 0 : index
    %34 = vector.load %arg6[%c0_13, %c0_14, %c0_15, %c0_16] : memref<1x1x2x32xf32, #tpu.memory_space<vmem>>, vector<1x1x2x32xf32>
    %35 = vector.shape_cast %34 : vector<1x1x2x32xf32> to vector<2x32xf32>
    %36 = vector.shape_cast %33 : vector<2x32xf32> to vector<1x1x2x32xf32>
    tpu.vector_store %arg6[%c0_13, %c0_14, %c0_15, %c0_16], %36 {strides = array<i32>} : memref<1x1x2x32xf32, #tpu.memory_space<vmem>>, vector<1x1x2x32xf32>,
    %37 = vector.shape_cast %27 : vector<128x32xf32> to vector<8x16x32xf32>
    %c0_17 = arith.constant 0 : index
    %c0_18 = arith.constant 0 : index
    %c0_19 = arith.constant 0 : index
    %c0_20 = arith.constant 0 : index
    %38 = vector.load %arg5[%c0_17, %c0_18, %c0_19, %c0_20] : memref<1x8x16x32xf32, #tpu.memory_space<vmem>>, vector<1x8x16x32xf32>
    %39 = vector.shape_cast %38 : vector<1x8x16x32xf32> to vector<8x16x32xf32>
    %40 = vector.shape_cast %37 : vector<8x16x32xf32> to vector<1x8x16x32xf32>
    tpu.vector_store %arg5[%c0_17, %c0_18, %c0_19, %c0_20], %40 {strides = array<i32>} : memref<1x8x16x32xf32, #tpu.memory_space<vmem>>, vector<1x8x16x32xf32>,
    return
  }
  func.func @transform_0(%arg0: i32, %arg1: i32) -> (i32, i32, i32, i32, i32) {
    %c0_i32 = arith.constant 0 : i32
    %c0_i32_0 = arith.constant 0 : i32
    %c0_i32_1 = arith.constant 0 : i32
    %c0_i32_2 = arith.constant 0 : i32
    return %arg0, %arg1, %c0_i32, %c0_i32_0, %c0_i32_1 : i32, i32, i32, i32, i32
  }
  func.func @transform_1(%arg0: i32, %arg1: i32) -> (i32, i32, i32, i32, i32) {
    %c0_i32 = arith.constant 0 : i32
    %c0_i32_0 = arith.constant 0 : i32
    %c0_i32_1 = arith.constant 0 : i32
    %c0_i32_2 = arith.constant 0 : i32
    return %arg0, %arg1, %c0_i32, %c0_i32_0, %c0_i32_1 : i32, i32, i32, i32, i32
  }
  func.func @transform_2(%arg0: i32, %arg1: i32) -> (i32, i32) {
    %c0_i32 = arith.constant 0 : i32
    %c0_i32_0 = arith.constant 0 : i32
    %c0_i32_1 = arith.constant 0 : i32
    return %c0_i32, %c0_i32_0 : i32, i32
  }
  func.func @transform_3(%arg0: i32, %arg1: i32) -> (i32, i32, i32, i32) {
    %c0_i32 = arith.constant 0 : i32
    %c0_i32_0 = arith.constant 0 : i32
    %c0_i32_1 = arith.constant 0 : i32
    return %arg0, %arg1, %c0_i32, %c0_i32_0 : i32, i32, i32, i32
  }
  func.func @transform_4(%arg0: i32, %arg1: i32) -> (i32, i32, i32, i32) {
    %c0_i32 = arith.constant 0 : i32
    %c0_i32_0 = arith.constant 0 : i32
    %c0_i32_1 = arith.constant 0 : i32
    return %arg0, %arg1, %c0_i32, %c0_i32_0 : i32, i32, i32, i32
  }
}

module attributes {stable_mosaic.version = 11 : i64} {
  func.func @kernel(%arg0: i32, %arg1: i32, %arg2: memref<1x1x10x18x32xbf16, #tpu.memory_space<vmem>>, %arg3: memref<288x128xbf16, #tpu.memory_space<vmem>>, %arg4: memref<1x128xf32, #tpu.memory_space<vmem>>, %arg5: memref<1x8x16x128xf32, #tpu.memory_space<vmem>>) attributes {dimension_semantics = [#tpu.dimension_semantics<parallel>, #tpu.dimension_semantics<parallel>], iteration_bounds = array<i64: 2, 2>, scalar_prefetch = 0 : i64, scratch_operands = 0 : i64, tpu.core_type = #tpu.core_type<tc>, window_params = [{transform_indices = @transform_0, window_bounds = array<i64: 1, 1, 10, 18, 32>}, {pipeline_mode = #tpu.pipeline_mode<synchronous>, transform_indices = @transform_1, window_bounds = array<i64: 288, 128>}, {pipeline_mode = #tpu.pipeline_mode<synchronous>, transform_indices = @transform_2, window_bounds = array<i64: 1, 128>}, {transform_indices = @transform_3, window_bounds = array<i64: 1, 8, 16, 128>}]} {
    %c0 = arith.constant 0 : index
    %c0_0 = arith.constant 0 : index
    %c0_1 = arith.constant 0 : index
    %c0_2 = arith.constant 0 : index
    %c0_3 = arith.constant 0 : index
    %0 = vector.load %arg2[%c0, %c0_0, %c0_1, %c0_2, %c0_3] : memref<1x1x10x18x32xbf16, #tpu.memory_space<vmem>>, vector<1x1x10x18x32xbf16>
    %1 = vector.shape_cast %0 : vector<1x1x10x18x32xbf16> to vector<10x18x32xbf16>
    %2 = vector.extract_strided_slice %1 {offsets = [0, 0, 0], sizes = [8, 16, 32], strides = [1, 1, 1]} : vector<10x18x32xbf16> to vector<8x16x32xbf16>
    %3 = vector.extract_strided_slice %1 {offsets = [0, 1, 0], sizes = [8, 16, 32], strides = [1, 1, 1]} : vector<10x18x32xbf16> to vector<8x16x32xbf16>
    %4 = vector.extract_strided_slice %1 {offsets = [0, 2, 0], sizes = [8, 16, 32], strides = [1, 1, 1]} : vector<10x18x32xbf16> to vector<8x16x32xbf16>
    %5 = vector.extract_strided_slice %1 {offsets = [1, 0, 0], sizes = [8, 16, 32], strides = [1, 1, 1]} : vector<10x18x32xbf16> to vector<8x16x32xbf16>
    %6 = vector.extract_strided_slice %1 {offsets = [1, 1, 0], sizes = [8, 16, 32], strides = [1, 1, 1]} : vector<10x18x32xbf16> to vector<8x16x32xbf16>
    %7 = vector.extract_strided_slice %1 {offsets = [1, 2, 0], sizes = [8, 16, 32], strides = [1, 1, 1]} : vector<10x18x32xbf16> to vector<8x16x32xbf16>
    %8 = vector.extract_strided_slice %1 {offsets = [2, 0, 0], sizes = [8, 16, 32], strides = [1, 1, 1]} : vector<10x18x32xbf16> to vector<8x16x32xbf16>
    %9 = vector.extract_strided_slice %1 {offsets = [2, 1, 0], sizes = [8, 16, 32], strides = [1, 1, 1]} : vector<10x18x32xbf16> to vector<8x16x32xbf16>
    %10 = vector.extract_strided_slice %1 {offsets = [2, 2, 0], sizes = [8, 16, 32], strides = [1, 1, 1]} : vector<10x18x32xbf16> to vector<8x16x32xbf16>
    %11 = tpu.concatenate %2, %3, %4, %5, %6, %7, %8, %9, %10 in 2 : vector<8x16x32xbf16>, vector<8x16x32xbf16>, vector<8x16x32xbf16>, vector<8x16x32xbf16>, vector<8x16x32xbf16>, vector<8x16x32xbf16>, vector<8x16x32xbf16>, vector<8x16x32xbf16>, vector<8x16x32xbf16> -> vector<8x16x288xbf16>
    %12 = vector.shape_cast %11 : vector<8x16x288xbf16> to vector<128x288xbf16>
    %c0_4 = arith.constant 0 : index
    %c0_5 = arith.constant 0 : index
    %13 = vector.load %arg3[%c0_4, %c0_5] : memref<288x128xbf16, #tpu.memory_space<vmem>>, vector<288x128xbf16>
    %cst = arith.constant dense<0.000000e+00> : vector<128x128xf32>
    %14 = tpu.matmul %12, %13, %cst {dimension_numbers = #tpu.dot_dimension_numbers<[1], [0], [0], [1], [0, 0, 1, 1], [], []>} : vector<128x288xbf16>, vector<288x128xbf16>, vector<128x128xf32> -> vector<128x128xf32>
    %c0_6 = arith.constant 0 : index
    %c0_7 = arith.constant 0 : index
    %15 = vector.load %arg4[%c0_6, %c0_7] : memref<1x128xf32, #tpu.memory_space<vmem>>, vector<1x128xf32>
    %16 = vector.broadcast %15 : vector<1x128xf32> to vector<128x128xf32>
    %17 = arith.addf %14, %16 : vector<128x128xf32>
    %18 = arith.negf %17 : vector<128x128xf32>
    %19 = math.exp %18 : vector<128x128xf32>
    %cst_8 = arith.constant 1.000000e+00 : f32
    %20 = vector.broadcast %cst_8 : f32 to vector<128x128xf32>
    %21 = arith.addf %20, %19 : vector<128x128xf32>
    %22 = arith.divf %20, %21 : vector<128x128xf32>
    %23 = vector.shape_cast %22 : vector<128x128xf32> to vector<8x16x128xf32>
    %c0_9 = arith.constant 0 : index
    %c0_10 = arith.constant 0 : index
    %c0_11 = arith.constant 0 : index
    %c0_12 = arith.constant 0 : index
    %24 = vector.load %arg5[%c0_9, %c0_10, %c0_11, %c0_12] : memref<1x8x16x128xf32, #tpu.memory_space<vmem>>, vector<1x8x16x128xf32>
    %25 = vector.shape_cast %24 : vector<1x8x16x128xf32> to vector<8x16x128xf32>
    %26 = vector.shape_cast %23 : vector<8x16x128xf32> to vector<1x8x16x128xf32>
    tpu.vector_store %arg5[%c0_9, %c0_10, %c0_11, %c0_12], %26 {strides = array<i32>} : memref<1x8x16x128xf32, #tpu.memory_space<vmem>>, vector<1x8x16x128xf32>,
    return
  }
  func.func @transform_0(%arg0: i32, %arg1: i32) -> (i32, i32, i32, i32, i32) {
    %c0_i32 = arith.constant 0 : i32
    %c0_i32_0 = arith.constant 0 : i32
    %c0_i32_1 = arith.constant 0 : i32
    %c0_i32_2 = arith.constant 0 : i32
    return %arg0, %arg1, %c0_i32, %c0_i32_0, %c0_i32_1 : i32, i32, i32, i32, i32
  }
  func.func @transform_1(%arg0: i32, %arg1: i32) -> (i32, i32) {
    %c0_i32 = arith.constant 0 : i32
    %c0_i32_0 = arith.constant 0 : i32
    %c0_i32_1 = arith.constant 0 : i32
    return %c0_i32, %c0_i32_0 : i32, i32
  }
  func.func @transform_2(%arg0: i32, %arg1: i32) -> (i32, i32) {
    %c0_i32 = arith.constant 0 : i32
    %c0_i32_0 = arith.constant 0 : i32
    %c0_i32_1 = arith.constant 0 : i32
    return %c0_i32, %c0_i32_0 : i32, i32
  }
  func.func @transform_3(%arg0: i32, %arg1: i32) -> (i32, i32, i32, i32) {
    %c0_i32 = arith.constant 0 : i32
    %c0_i32_0 = arith.constant 0 : i32
    %c0_i32_1 = arith.constant 0 : i32
    return %arg0, %arg1, %c0_i32, %c0_i32_0 : i32, i32, i32, i32
  }
}

</mosaic_0001>

<llo_original>
// kernel: unet_struc_forward.20
$region0: #{unet_struc_forward.20}
  #allocation0 [shape = 'u32[]', space=smem, size = 0x4, offset = 0x4, fixed_abs, tag = 'smem constant byte address 0x4 - core index']
  #allocation1 [shape = 'u32[144,128]{1,0:T(1,128)}', space=vmem, size = 0x12000, scoped, tag = 'internal scratch']
  %s0 = inlined_call_operand.vmem [shape: f32[2,8,8,32], index: 0, kind: input, shape index: {}]
  %s1 = inlined_call_operand.vmem [shape: f32[1,1,1,32], index: 1, kind: input, shape index: {}]
  %s2 = inlined_call_operand.vmem [shape: f32[1,1,1,32], index: 2, kind: input, shape index: {}]
  %s3 = inlined_call_operand.vmem [shape: bf16[2,8,8,32], index: 3, kind: output, shape index: {}]
  %s4 = sld [smem:[#allocation0]]
  $region45: #{unet_struc_forward.20} parent=0
    _
  %s6 = ssub.s32 1, %s4
  %s7 = scalar_select 0, %s6, %s4
  loop: start=0, step=1, limit=4
  $region2: #{unet_struc_forward.20} parent=0 // loop_pre_header
    _
  $region3: #{unet_struc_forward.20} parent=0 // loop_header
    %s9 = sphi 0, %s13
    %p10 = scmp.ge.s32.totalorder %s9, 4
    %s16 = sphi 0, %s28
    %s17 = sphi 0, %s24
    %s18 = sphi 0, %s16
    %s19 = sphi 0, %s17
    %s20 = sphi 0, %s18
    %s21 = sphi 0, %s19
    %s33 = sphi 0, %s35
    %s36 = sphi 0, %s33
    %s37 = sphi 0, %s36
    %s53 = sphi 0, %s37
    %s57 = sphi 0, %s57
    %s59 = sphi 0, %s57
    %s60 = sphi 0, %s59
    %s74 = sphi 0, %s60
    %s78 = sphi 0, %s78
    %s80 = sphi 0, %s78
    %s81 = sphi 0, %s80
    %s95 = sphi 0, %s81
    %s103 = sphi 0, %s105
    %s106 = sphi 0, %s103
    %s107 = sphi 0, %s106
    %s123 = sphi 0, %s107
  $region4: #{unet_struc_forward.20} parent=0 // loop_header_branch
    %12 = sbr.rel (%p10) target = $region8
  $region5: #{unet_struc_forward.20} parent=0 // loop_body
    %s14 = ssub.s32 %s9, 1
    %s15 = ssub.s32 %s9, 2
    %s22 = sadd.s32 1, %s17
    %p23 = scmp.ge.s32.totalorder %s22, 1
    %s24 = scalar_select %p23, 0, %s22
    %s25 = sadd.s32 1, %s16
    %s26 = scalar_select %p23, %s25, %s16
    %p27 = scmp.ge.s32.totalorder %s26, 2
    %s28 = scalar_select %p27, 0, %s26
    %s29 = ssub.s32 %s16, %s28
    %s30 = ssub.s32 %s17, %s24
    %s31 = sor.u32 %s29, %s30
    %p32 = scmp.eq.s32.totalorder %s31, 0
    %s34 = sadd.s32 %s33, 1
    %s35 = scalar_select %p32, %s33, %s34
    %p38 = pneg %p32
    %p39 = scmp.eq.s32.totalorder %s9, 1
    %p40 = por %p38, %p39
    %p41 = scmp.ne.s32.totalorder %s33, %s36
    %p42 = scmp.eq.s32.totalorder %s9, 0
    %p43 = por %p41, %p42
    %p44 = scmp.ne.s32.totalorder %s33, %s36
    %p45 = scmp.eq.s32.totalorder %s14, 1
    %p46 = por %p44, %p45
    %p47 = scmp.ne.s32.totalorder %s36, %s37
    %p48 = scmp.eq.s32.totalorder %s14, 0
    %p49 = por %p47, %p48
    %p50 = scmp.ne.s32.totalorder %s36, %s37
    %p51 = scmp.eq.s32.totalorder %s15, 1
    %p52 = por %p50, %p51
    %p54 = scmp.ne.s32.totalorder %s37, %s53
    %p55 = scmp.eq.s32.totalorder %s15, 0
    %p56 = por %p54, %p55
    %s58 = sadd.s32 %s57, 1
    %p61 = scmp.eq.s32.totalorder %s9, 1
    %p62 = scmp.ne.s32.totalorder %s57, %s59
    %p63 = scmp.eq.s32.totalorder %s9, 0
    %p64 = por %p62, %p63
    %p65 = scmp.ne.s32.totalorder %s57, %s59
    %p66 = scmp.eq.s32.totalorder %s14, 1
    %p67 = por %p65, %p66
    %p68 = scmp.ne.s32.totalorder %s59, %s60
    %p69 = scmp.eq.s32.totalorder %s14, 0
    %p70 = por %p68, %p69
    %p71 = scmp.ne.s32.totalorder %s59, %s60
    %p72 = scmp.eq.s32.totalorder %s15, 1
    %p73 = por %p71, %p72
    %p75 = scmp.ne.s32.totalorder %s60, %s74
    %p76 = scmp.eq.s32.totalorder %s15, 0
    %p77 = por %p75, %p76
    %s79 = sadd.s32 %s78, 1
    %p82 = scmp.eq.s32.totalorder %s9, 1
    %p83 = scmp.ne.s32.totalorder %s78, %s80
    %p84 = scmp.eq.s32.totalorder %s9, 0
    %p85 = por %p83, %p84
    %p86 = scmp.ne.s32.totalorder %s78, %s80
    %p87 = scmp.eq.s32.totalorder %s14, 1
    %p88 = por %p86, %p87
    %p89 = scmp.ne.s32.totalorder %s80, %s81
    %p90 = scmp.eq.s32.totalorder %s14, 0
    %p91 = por %p89, %p90
    %p92 = scmp.ne.s32.totalorder %s80, %s81
    %p93 = scmp.eq.s32.totalorder %s15, 1
    %p94 = por %p92, %p93
    %p96 = scmp.ne.s32.totalorder %s81, %s95
    %p97 = scmp.eq.s32.totalorder %s15, 0
    %p98 = por %p96, %p97
    %s99 = ssub.s32 %s16, %s28
    %s100 = ssub.s32 %s17, %s24
    %s101 = sor.u32 %s99, %s100
    %p102 = scmp.eq.s32.totalorder %s101, 0
    %s104 = sadd.s32 %s103, 1
    %s105 = scalar_select %p102, %s103, %s104
    %p108 = pneg %p102
    %p109 = scmp.eq.s32.totalorder %s9, 1
    %p110 = por %p108, %p109
    %p111 = scmp.ne.s32.totalorder %s103, %s106
    %p112 = scmp.eq.s32.totalorder %s9, 0
    %p113 = por %p111, %p112
    %p114 = scmp.ne.s32.totalorder %s103, %s106
    %p115 = scmp.eq.s32.totalorder %s14, 1
    %p116 = por %p114, %p115
    %p117 = scmp.ne.s32.totalorder %s106, %s107
    %p118 = scmp.eq.s32.totalorder %s14, 0
    %p119 = por %p117, %p118
    %p120 = scmp.ne.s32.totalorder %s106, %s107
    %p121 = scmp.eq.s32.totalorder %s15, 1
    %p122 = por %p120, %p121
    %p124 = scmp.ne.s32.totalorder %s107, %s123
    %p125 = scmp.eq.s32.totalorder %s15, 0
    %p126 = por %p124, %p125
    %p127 = scmp.le.s32.totalorder 1, %s9
    %p128 = scmp.lt.s32.totalorder %s9, 3
    %p129 = pnand %p127, %p128
    %p130 = pneg %p129
    // Predicated region
    $region9: #{unet_struc_forward.20} parent=5 // pred_check
      _
    $region10: #{unet_struc_forward.20} parent=5 // pred_check_branch
      %132 = sbr.rel (%p129) target = $region12
    $region11: #{unet_struc_forward.20} parent=5 // pred_region
      %s133 = ssub.s32 %s9, 1
      // Predicated region
      $region13: #{unet_struc_forward.20} parent=11 // pred_check
        %p134 = pneg %p70
      $region14: #{unet_struc_forward.20} parent=11 // pred_check_branch
        %136 = sbr.rel (%p134) target = $region16
      $region15: #{unet_struc_forward.20} parent=11 // pred_region
        _
      $region16: #{unet_struc_forward.20} parent=11 // pred_fallthru
        _
      // Predicated region
      $region17: #{unet_struc_forward.20} parent=11 // pred_check
        %p137 = pneg %p91
      $region18: #{unet_struc_forward.20} parent=11 // pred_check_branch
        %139 = sbr.rel (%p137) target = $region20
      $region19: #{unet_struc_forward.20} parent=11 // pred_region
        _
      $region20: #{unet_struc_forward.20} parent=11 // pred_fallthru
        _
    $region12: #{unet_struc_forward.20} parent=5 // pred_fallthru
      _
    %p140 = scmp.lt.s32.totalorder %s9, 2
    // Predicated region
    $region21: #{unet_struc_forward.20} parent=5 // pred_check
      %p141 = pneg %p140
    $region22: #{unet_struc_forward.20} parent=5 // pred_check_branch
      %143 = sbr.rel (%p141) target = $region24
    $region23: #{unet_struc_forward.20} parent=5 // pred_region
      // Predicated region
      $region25: #{unet_struc_forward.20} parent=23 // pred_check
        %p144 = pneg %p43
      $region26: #{unet_struc_forward.20} parent=23 // pred_check_branch
        %146 = sbr.rel (%p144) target = $region28
      $region27: #{unet_struc_forward.20} parent=23 // pred_region
        %s147 = smul.u32 8, %s17
        %p148 = scmp.lt.s32.totalorder %s16, 1
        %s149 = scalar_select %p148, %s16, 1
        %p150 = scmp.lt.s32.totalorder %s147, 7
        %s151 = scalar_select %p150, %s147, 7
        %s152 = smul.addr %s149, 8
        %s153 = sadd.s32 %s151, %s152
        %s154 = smul.addr %s153, 8
        %s155 = scalar_lea.vmem %s0, %s154
        %s156 = smul.u32 8, %s17
      $region28: #{unet_struc_forward.20} parent=23 // pred_fallthru
        _
    $region24: #{unet_struc_forward.20} parent=5 // pred_fallthru
      _
    %p157 = scmp.le.s32.totalorder 1, %s9
    %p158 = scmp.lt.s32.totalorder %s9, 3
    %p159 = pnand %p157, %p158
    %p160 = pneg %p159
    // Predicated region
    $region29: #{unet_struc_forward.20} parent=5 // pred_check
      _
    $region30: #{unet_struc_forward.20} parent=5 // pred_check_branch
      %162 = sbr.rel (%p159) target = $region32
    $region31: #{unet_struc_forward.20} parent=5 // pred_region
      %s163 = ssub.s32 %s9, 1
      %s164 = smul.u32 8, %s19
      %p165 = scmp.lt.s32.totalorder %s18, 1
      %s166 = scalar_select %p165, %s18, 1
      %p167 = scmp.lt.s32.totalorder %s164, 7
      %s168 = scalar_select %p167, %s164, 7
      %s169 = smul.addr %s166, 8
      %s170 = sadd.s32 %s168, %s169
      %s171 = smul.addr %s170, 8
      %s172 = scalar_lea.vmem %s0, %s171
      %p173 = pneg %p49
      %p174 = pneg %p46
      %p175 = pneg %p70
      %p176 = pneg %p67
      %p177 = pneg %p91
      %p178 = pneg %p88
      %p179 = pneg %p119
      %p180 = pneg %p116
      %s181 = smul.u32 8, %s19
      %p182 = scmp.lt.s32.totalorder %s18, 1
      %s183 = scalar_select %p182, %s18, 1
      %p184 = scmp.lt.s32.totalorder %s181, 7
      %s185 = scalar_select %p184, %s181, 7
      %s186 = smul.addr %s183, 8
      %s187 = sadd.s32 %s185, %s186
      %s188 = smul.addr %s187, 4
      %s189 = scalar_lea.vmem %s3, %s188
      %s190 = smul.u32 8, %s19
      %p191 = scmp.lt.s32.totalorder %s18, 1
      %s192 = scalar_select %p191, %s18, 1
      %p193 = scmp.lt.s32.totalorder %s190, 7
      %s194 = scalar_select %p193, %s190, 7
      %s195 = smul.addr %s192, 8
      %s196 = sadd.s32 %s194, %s195
      %s197 = smul.addr %s196, 8
      %s198 = scalar_lea.vmem %s0, %s197
      %s199 = smul.u32 8, %s19
      %s200 = smul.u32 8, %s19
      %p201 = scmp.lt.s32.totalorder %s18, 1
      %s202 = scalar_select %p201, %s18, 1
      %p203 = scmp.lt.s32.totalorder %s200, 7
      %s204 = scalar_select %p203, %s200, 7
      %s205 = smul.addr %s202, 8
      %s206 = sadd.s32 %s204, %s205
      %s207 = smul.addr %s206, 4
      %s208 = scalar_lea.vmem %s3, %s207
      %s209 = smul.u32 8, %s19
      %v210 = vld [vmem:[%s198] sm:$0xff]
      %v211 = vld [vmem:[%s198 + $0x8] sm:$0xff]
      %v212 = vld [vmem:[%s198 + $0x10] sm:$0xff]
      %v213 = vld [vmem:[%s198 + $0x18] sm:$0xff]
      %v214 = vld [vmem:[%s198 + $0x20] sm:$0xff]
      %v215 = vld [vmem:[%s198 + $0x28] sm:$0xff]
      %v216 = vld [vmem:[%s198 + $0x30] sm:$0xff]
      %v217 = vld [vmem:[%s198 + $0x38] sm:$0xff]
      %v218 = vld [vmem:[%s1] sm:$0x1]
      %v220 = vlaneseq
      %v221 = vshrl.u32 %v220, 7
      %v222 = vsub.s32 0, %v221
      %v223 = vrot.slane %v218, %v222
      %v225 = vmul.f32 %v210, %v223
      %v226 = vmul.f32 %v211, %v223
      %v227 = vmul.f32 %v212, %v223
      %v228 = vmul.f32 %v213, %v223
      %v229 = vmul.f32 %v214, %v223
      %v230 = vmul.f32 %v215, %v223
      %v231 = vmul.f32 %v216, %v223
      %v232 = vmul.f32 %v217, %v223
      %v233 = vld [vmem:[%s2] sm:$0x1]
      %v235 = vlaneseq
      %v236 = vshrl.u32 %v235, 7
      %v237 = vsub.s32 0, %v236
      %v238 = vrot.slane %v233, %v237
      %v240 = vadd.f32 %v225, %v238
      %v241 = vadd.f32 %v226, %v238
      %v242 = vadd.f32 %v227, %v238
      %v243 = vadd.f32 %v228, %v238
      %v244 = vadd.f32 %v229, %v238
      %v245 = vadd.f32 %v230, %v238
      %v246 = vadd.f32 %v231, %v238
      %v247 = vadd.f32 %v232, %v238
      %v248 = vmax.f32 %v240, 0.0
      %v249 = vmax.f32 %v241, 0.0
      %v250 = vmax.f32 %v242, 0.0
      %v251 = vmax.f32 %v243, 0.0
      %v252 = vmax.f32 %v244, 0.0
      %v253 = vmax.f32 %v245, 0.0
      %v254 = vmax.f32 %v246, 0.0
      %v255 = vmax.f32 %v247, 0.0
      %v256 = vpack.c.bf16 %v248, %v248
      %v257 = vpack.c.bf16 %v249, %v249
      %v258 = vpack.c.bf16 %v250, %v250
      %v259 = vpack.c.bf16 %v251, %v251
      %v260 = vpack.c.bf16 %v252, %v252
      %v261 = vpack.c.bf16 %v253, %v253
      %v262 = vpack.c.bf16 %v254, %v254
      %v263 = vpack.c.bf16 %v255, %v255
      %vm264 = vcmask 257024
      %265 = vst.msk [vmem:[%s208] sm:$0xf] %vm264, %v256
      %266 = vst.msk [vmem:[%s208 + $0x4] sm:$0xf] %vm264, %v257
      %267 = vst.msk [vmem:[%s208 + $0x8] sm:$0xf] %vm264, %v258
      %268 = vst.msk [vmem:[%s208 + $0xc] sm:$0xf] %vm264, %v259
      %269 = vst.msk [vmem:[%s208 + $0x10] sm:$0xf] %vm264, %v260
      %270 = vst.msk [vmem:[%s208 + $0x14] sm:$0xf] %vm264, %v261
      %271 = vst.msk [vmem:[%s208 + $0x18] sm:$0xf] %vm264, %v262
      %272 = vst.msk [vmem:[%s208 + $0x1c] sm:$0xf] %vm264, %v263
      %s273 = smul.u32 8, %s19
      %p274 = scmp.lt.s32.totalorder %s18, 1
      %s275 = scalar_select %p274, %s18, 1
      %p276 = scmp.lt.s32.totalorder %s273, 7
      %s277 = scalar_select %p276, %s273, 7
      %s278 = smul.addr %s275, 8
      %s279 = sadd.s32 %s277, %s278
      %s280 = smul.addr %s279, 4
      %s281 = scalar_lea.vmem %s3, %s280
      // Predicated region
      $region33: #{unet_struc_forward.20} parent=31 // pred_check
        %p282 = pneg %p116
      $region34: #{unet_struc_forward.20} parent=31 // pred_check_branch
        %284 = sbr.rel (%p282) target = $region36
      $region35: #{unet_struc_forward.20} parent=31 // pred_region
        %s285 = smul.u32 8, %s19
      $region36: #{unet_struc_forward.20} parent=31 // pred_fallthru
        _
    $region32: #{unet_struc_forward.20} parent=5 // pred_fallthru
      _
    %p286 = scmp.le.s32.totalorder 2, %s9
    // Predicated region
    $region37: #{unet_struc_forward.20} parent=5 // pred_check
      %p287 = pneg %p286
    $region38: #{unet_struc_forward.20} parent=5 // pred_check_branch
      %289 = sbr.rel (%p287) target = $region40
    $region39: #{unet_struc_forward.20} parent=5 // pred_region
      %s290 = ssub.s32 %s9, 2
      // Predicated region
      $region41: #{unet_struc_forward.20} parent=39 // pred_check
        %p291 = pneg %p122
      $region42: #{unet_struc_forward.20} parent=39 // pred_check_branch
        %293 = sbr.rel (%p291) target = $region44
      $region43: #{unet_struc_forward.20} parent=39 // pred_region
        %s294 = smul.u32 8, %s21
        %p295 = scmp.lt.s32.totalorder %s20, 1
        %s296 = scalar_select %p295, %s20, 1
        %p297 = scmp.lt.s32.totalorder %s294, 7
        %s298 = scalar_select %p297, %s294, 7
        %s299 = smul.addr %s296, 8
        %s300 = sadd.s32 %s298, %s299
        %s301 = smul.addr %s300, 4
        %s302 = scalar_lea.vmem %s3, %s301
      $region44: #{unet_struc_forward.20} parent=39 // pred_fallthru
        _
    $region40: #{unet_struc_forward.20} parent=5 // pred_fallthru
      _
  $region6: #{unet_struc_forward.20} parent=0 // loop_footer
    %s13 = sadd.s32 1, %s9
  $region7: #{unet_struc_forward.20} parent=0 // loop_footer_branch
    %8 = sbr.rel target = $region3
  $region8: #{unet_struc_forward.20} parent=0 // loop_exit
    _

// kernel: unet_struc_forward.19
$region0: #{unet_struc_forward.19}
  #allocation0 [shape = 'u32[]', space=smem, size = 0x4, offset = 0x4, fixed_abs, tag = 'smem constant byte address 0x4 - core index']
  #allocation1 [shape = 'u32[144,128]{1,0:T(1,128)}', space=vmem, size = 0x12000, scoped, tag = 'internal scratch']
  %s0 = inlined_call_operand.vmem [shape: bf16[2,8,8,27], index: 0, kind: input, shape index: {}]
  %s1 = inlined_call_operand.vmem [shape: bf16[27,32], index: 1, kind: input, shape index: {}]
  %s2 = inlined_call_operand.vmem [shape: f32[2,8,8,32], index: 2, kind: output, shape index: {0}]
  %s3 = inlined_call_operand.vmem [shape: f32[2,1,2,32], index: 3, kind: output, shape index: {1}]
  %4 = xla_tuple %s2, %s3
  %s5 = sld [smem:[#allocation0]]
  $region49: #{unet_struc_forward.19} parent=0
    _
  %s7 = ssub.s32 1, %s5
  %s8 = scalar_select 0, %s7, %s5
  loop: start=0, step=1, limit=4
  $region2: #{unet_struc_forward.19} parent=0 // loop_pre_header
    _
  $region3: #{unet_struc_forward.19} parent=0 // loop_header
    %s10 = sphi 0, %s14
    %p11 = scmp.ge.s32.totalorder %s10, 4
    %s17 = sphi 0, %s29
    %s18 = sphi 0, %s25
    %s19 = sphi 0, %s17
    %s20 = sphi 0, %s18
    %s21 = sphi 0, %s19
    %s22 = sphi 0, %s20
    %s34 = sphi 0, %s36
    %s37 = sphi 0, %s34
    %s38 = sphi 0, %s37
    %s54 = sphi 0, %s38
    %s58 = sphi 0, %s58
    %s60 = sphi 0, %s58
    %s61 = sphi 0, %s60
    %s75 = sphi 0, %s61
    %s83 = sphi 0, %s85
    %s86 = sphi 0, %s83
    %s87 = sphi 0, %s86
    %s103 = sphi 0, %s87
    %s111 = sphi 0, %s113
    %s114 = sphi 0, %s111
    %s115 = sphi 0, %s114
    %s131 = sphi 0, %s115
  $region4: #{unet_struc_forward.19} parent=0 // loop_header_branch
    %13 = sbr.rel (%p11) target = $region8
  $region5: #{unet_struc_forward.19} parent=0 // loop_body
    %s15 = ssub.s32 %s10, 1
    %s16 = ssub.s32 %s10, 2
    %s23 = sadd.s32 1, %s18
    %p24 = scmp.ge.s32.totalorder %s23, 1
    %s25 = scalar_select %p24, 0, %s23
    %s26 = sadd.s32 1, %s17
    %s27 = scalar_select %p24, %s26, %s17
    %p28 = scmp.ge.s32.totalorder %s27, 2
    %s29 = scalar_select %p28, 0, %s27
    %s30 = ssub.s32 %s17, %s29
    %s31 = ssub.s32 %s18, %s25
    %s32 = sor.u32 %s30, %s31
    %p33 = scmp.eq.s32.totalorder %s32, 0
    %s35 = sadd.s32 %s34, 1
    %s36 = scalar_select %p33, %s34, %s35
    %p39 = pneg %p33
    %p40 = scmp.eq.s32.totalorder %s10, 1
    %p41 = por %p39, %p40
    %p42 = scmp.ne.s32.totalorder %s34, %s37
    %p43 = scmp.eq.s32.totalorder %s10, 0
    %p44 = por %p42, %p43
    %p45 = scmp.ne.s32.totalorder %s34, %s37
    %p46 = scmp.eq.s32.totalorder %s15, 1
    %p47 = por %p45, %p46
    %p48 = scmp.ne.s32.totalorder %s37, %s38
    %p49 = scmp.eq.s32.totalorder %s15, 0
    %p50 = por %p48, %p49
    %p51 = scmp.ne.s32.totalorder %s37, %s38
    %p52 = scmp.eq.s32.totalorder %s16, 1
    %p53 = por %p51, %p52
    %p55 = scmp.ne.s32.totalorder %s38, %s54
    %p56 = scmp.eq.s32.totalorder %s16, 0
    %p57 = por %p55, %p56
    %s59 = sadd.s32 %s58, 1
    %p62 = scmp.eq.s32.totalorder %s10, 1
    %p63 = scmp.ne.s32.totalorder %s58, %s60
    %p64 = scmp.eq.s32.totalorder %s10, 0
    %p65 = por %p63, %p64
    %p66 = scmp.ne.s32.totalorder %s58, %s60
    %p67 = scmp.eq.s32.totalorder %s15, 1
    %p68 = por %p66, %p67
    %p69 = scmp.ne.s32.totalorder %s60, %s61
    %p70 = scmp.eq.s32.totalorder %s15, 0
    %p71 = por %p69, %p70
    %p72 = scmp.ne.s32.totalorder %s60, %s61
    %p73 = scmp.eq.s32.totalorder %s16, 1
    %p74 = por %p72, %p73
    %p76 = scmp.ne.s32.totalorder %s61, %s75
    %p77 = scmp.eq.s32.totalorder %s16, 0
    %p78 = por %p76, %p77
    %s79 = ssub.s32 %s17, %s29
    %s80 = ssub.s32 %s18, %s25
    %s81 = sor.u32 %s79, %s80
    %p82 = scmp.eq.s32.totalorder %s81, 0
    %s84 = sadd.s32 %s83, 1
    %s85 = scalar_select %p82, %s83, %s84
    %p88 = pneg %p82
    %p89 = scmp.eq.s32.totalorder %s10, 1
    %p90 = por %p88, %p89
    %p91 = scmp.ne.s32.totalorder %s83, %s86
    %p92 = scmp.eq.s32.totalorder %s10, 0
    %p93 = por %p91, %p92
    %p94 = scmp.ne.s32.totalorder %s83, %s86
    %p95 = scmp.eq.s32.totalorder %s15, 1
    %p96 = por %p94, %p95
    %p97 = scmp.ne.s32.totalorder %s86, %s87
    %p98 = scmp.eq.s32.totalorder %s15, 0
    %p99 = por %p97, %p98
    %p100 = scmp.ne.s32.totalorder %s86, %s87
    %p101 = scmp.eq.s32.totalorder %s16, 1
    %p102 = por %p100, %p101
    %p104 = scmp.ne.s32.totalorder %s87, %s103
    %p105 = scmp.eq.s32.totalorder %s16, 0
    %p106 = por %p104, %p105
    %s107 = ssub.s32 %s17, %s29
    %s108 = ssub.s32 %s18, %s25
    %s109 = sor.u32 %s107, %s108
    %p110 = scmp.eq.s32.totalorder %s109, 0
    %s112 = sadd.s32 %s111, 1
    %s113 = scalar_select %p110, %s111, %s112
    %p116 = pneg %p110
    %p117 = scmp.eq.s32.totalorder %s10, 1
    %p118 = por %p116, %p117
    %p119 = scmp.ne.s32.totalorder %s111, %s114
    %p120 = scmp.eq.s32.totalorder %s10, 0
    %p121 = por %p119, %p120
    %p122 = scmp.ne.s32.totalorder %s111, %s114
    %p123 = scmp.eq.s32.totalorder %s15, 1
    %p124 = por %p122, %p123
    %p125 = scmp.ne.s32.totalorder %s114, %s115
    %p126 = scmp.eq.s32.totalorder %s15, 0
    %p127 = por %p125, %p126
    %p128 = scmp.ne.s32.totalorder %s114, %s115
    %p129 = scmp.eq.s32.totalorder %s16, 1
    %p130 = por %p128, %p129
    %p132 = scmp.ne.s32.totalorder %s115, %s131
    %p133 = scmp.eq.s32.totalorder %s16, 0
    %p134 = por %p132, %p133
    %p135 = scmp.le.s32.totalorder 1, %s10
    %p136 = scmp.lt.s32.totalorder %s10, 3
    %p137 = pnand %p135, %p136
    %p138 = pneg %p137
    // Predicated region
    $region9: #{unet_struc_forward.19} parent=5 // pred_check
      _
    $region10: #{unet_struc_forward.19} parent=5 // pred_check_branch
      %140 = sbr.rel (%p137) target = $region12
    $region11: #{unet_struc_forward.19} parent=5 // pred_region
      %s141 = ssub.s32 %s10, 1
      // Predicated region
      $region13: #{unet_struc_forward.19} parent=11 // pred_check
        %p142 = pneg %p71
      $region14: #{unet_struc_forward.19} parent=11 // pred_check_branch
        %144 = sbr.rel (%p142) target = $region16
      $region15: #{unet_struc_forward.19} parent=11 // pred_region
        _
      $region16: #{unet_struc_forward.19} parent=11 // pred_fallthru
        _
    $region12: #{unet_struc_forward.19} parent=5 // pred_fallthru
      _
    %p145 = scmp.lt.s32.totalorder %s10, 2
    // Predicated region
    $region17: #{unet_struc_forward.19} parent=5 // pred_check
      %p146 = pneg %p145
    $region18: #{unet_struc_forward.19} parent=5 // pred_check_branch
      %148 = sbr.rel (%p146) target = $region20
    $region19: #{unet_struc_forward.19} parent=5 // pred_region
      // Predicated region
      $region21: #{unet_struc_forward.19} parent=19 // pred_check
        %p149 = pneg %p44
      $region22: #{unet_struc_forward.19} parent=19 // pred_check_branch
        %151 = sbr.rel (%p149) target = $region24
      $region23: #{unet_struc_forward.19} parent=19 // pred_region
        %s152 = smul.u32 8, %s18
        %p153 = scmp.lt.s32.totalorder %s17, 1
        %s154 = scalar_select %p153, %s17, 1
        %p155 = scmp.lt.s32.totalorder %s152, 7
        %s156 = scalar_select %p155, %s152, 7
        %s157 = smul.addr %s154, 8
        %s158 = sadd.s32 %s156, %s157
        %s159 = smul.addr %s158, 4
        %s160 = scalar_lea.vmem %s0, %s159
        %s161 = smul.u32 8, %s18
      $region24: #{unet_struc_forward.19} parent=19 // pred_fallthru
        _
    $region20: #{unet_struc_forward.19} parent=5 // pred_fallthru
      _
    %p162 = scmp.le.s32.totalorder 1, %s10
    %p163 = scmp.lt.s32.totalorder %s10, 3
    %p164 = pnand %p162, %p163
    %p165 = pneg %p164
    // Predicated region
    $region25: #{unet_struc_forward.19} parent=5 // pred_check
      _
    $region26: #{unet_struc_forward.19} parent=5 // pred_check_branch
      %167 = sbr.rel (%p164) target = $region28
    $region27: #{unet_struc_forward.19} parent=5 // pred_region
      %s168 = ssub.s32 %s10, 1
      %s169 = smul.u32 8, %s20
      %p170 = scmp.lt.s32.totalorder %s19, 1
      %s171 = scalar_select %p170, %s19, 1
      %p172 = scmp.lt.s32.totalorder %s169, 7
      %s173 = scalar_select %p172, %s169, 7
      %s174 = smul.addr %s171, 8
      %s175 = sadd.s32 %s173, %s174
      %s176 = smul.addr %s175, 4
      %s177 = scalar_lea.vmem %s0, %s176
      %p178 = pneg %p50
      %p179 = pneg %p47
      %p180 = pneg %p71
      %p181 = pneg %p68
      %p182 = pneg %p99
      %p183 = pneg %p96
      %s184 = smul.u32 8, %s20
      %p185 = scmp.lt.s32.totalorder %s19, 1
      %s186 = scalar_select %p185, %s19, 1
      %p187 = scmp.lt.s32.totalorder %s184, 7
      %s188 = scalar_select %p187, %s184, 7
      %s189 = smul.addr %s186, 8
      %s190 = sadd.s32 %s188, %s189
      %s191 = smul.addr %s190, 8
      %s192 = scalar_lea.vmem %s2, %s191
      %p193 = pneg %p127
      %p194 = pneg %p124
      %p195 = scmp.lt.s32.totalorder %s19, 1
      %s196 = scalar_select %p195, %s19, 1
      %p197 = scmp.lt.s32.totalorder %s20, 0
      %s198 = scalar_select %p197, %s20, 0
      %s199 = sadd.s32 %s198, %s196
      %s200 = smul.addr %s199, 2
      %s201 = scalar_lea.vmem %s3, %s200
      %s202 = smul.u32 8, %s20
      %p203 = scmp.lt.s32.totalorder %s19, 1
      %s204 = scalar_select %p203, %s19, 1
      %p205 = scmp.lt.s32.totalorder %s202, 7
      %s206 = scalar_select %p205, %s202, 7
      %s207 = smul.addr %s204, 8
      %s208 = sadd.s32 %s206, %s207
      %s209 = smul.addr %s208, 4
      %s210 = scalar_lea.vmem %s0, %s209
      %s211 = smul.u32 8, %s20
      %s212 = smul.u32 8, %s20
      %p213 = scmp.lt.s32.totalorder %s19, 1
      %s214 = scalar_select %p213, %s19, 1
      %p215 = scmp.lt.s32.totalorder %s212, 7
      %s216 = scalar_select %p215, %s212, 7
      %s217 = smul.addr %s214, 8
      %s218 = sadd.s32 %s216, %s217
      %s219 = smul.addr %s218, 8
      %s220 = scalar_lea.vmem %s2, %s219
      %s221 = smul.u32 8, %s20
      %p222 = scmp.lt.s32.totalorder %s19, 1
      %s223 = scalar_select %p222, %s19, 1
      %p224 = scmp.lt.s32.totalorder %s20, 0
      %s225 = scalar_select %p224, %s20, 0
      %s226 = sadd.s32 %s225, %s223
      %s227 = smul.addr %s226, 2
      %s228 = scalar_lea.vmem %s3, %s227
      %v230 = vld [vmem:[%s210] sm:$0xf]
      %v231 = vld [vmem:[%s210 + $0x4] sm:$0xf]
      %v232 = vld [vmem:[%s210 + $0x8] sm:$0xf]
      %v233 = vld [vmem:[%s210 + $0xc] sm:$0xf]
      %v234 = vld [vmem:[%s210 + $0x10] sm:$0xf]
      %v235 = vld [vmem:[%s210 + $0x14] sm:$0xf]
      %v236 = vld [vmem:[%s210 + $0x18] sm:$0xf]
      %v237 = vld [vmem:[%s210 + $0x1c] sm:$0xf]
      %v238 = vld [vmem:[%s1] sm:$0xf]
      %v239 = vld [vmem:[%s1 + $0x4] sm:$0xf]
      %v240 = vld [vmem:[%s1 + $0x8] sm:$0xf]
      %v241 = vld [vmem:[%s1 + $0xc] sm:$0x3]
      %v250 = vunpack.c.l.b16 %v230
      %v251 = vunpack.c.l.b16 %v231
      %v252 = vunpack.c.l.b16 %v232
      %v253 = vunpack.c.l.b16 %v233
      %v254 = vunpack.c.l.b16 %v234
      %v255 = vunpack.c.l.b16 %v235
      %v256 = vunpack.c.l.b16 %v236
      %v257 = vunpack.c.l.b16 %v237
      %v258 = vpack.c.b16 %v251, %v250
      %v259 = vpack.c.b16 %v253, %v252
      %v260 = vpack.c.b16 %v255, %v254
      %v261 = vpack.c.b16 %v257, %v256
      %v266 = vunpack.c.l.b16 %v238
      %v267 = vunpack.c.l.b16 %v239
      %v268 = vunpack.c.l.b16 %v240
      %v269 = vunpack.c.l.b16 %v241
      %v270 = vpack.c.b16 %v267, %v266
      %v271 = vpack.c.b16 %v269, %v268
      %vm273 = vcmask 220160
      %v275 = vsel %vm273, %v258, 0
      %v278 = vsel %vm273, %v259, 0
      %v281 = vsel %vm273, %v260, 0
      %v284 = vsel %vm273, %v261, 0
      %vm286 = vcmask 1044480
      %vm287 = vcmask 1045504
      %v288 = vsel %vm286, 4294967295, 65535
      %v289 = vsel %vm287, %v288, 0
      %v291 = vand.u32 %v271, %v289
      %293 = vmatprep.subr.bf16.mxu0 0
      %294 = vmatpush1.bf16.msra.mxu0 %v270
      %295 = vmatprep.subr.bf16.mxu0 0
      %296 = vmatpush1.bf16.msra.mxu0 %v291
      %297 = vmatprep.subr.bf16.mxu0 0
      %298 = vmatpush1.bf16.msra.mxu0 0
      %299 = vmatprep.subr.bf16.mxu0 0
      %300 = vmatpush1.bf16.msra.mxu0 0
      %301 = vmatprep.subr.bf16.mxu0 0
      %302 = vmatpush1.bf16.msra.mxu0 0
      %303 = vmatprep.subr.bf16.mxu0 0
      %304 = vmatpush1.bf16.msra.mxu0 0
      %305 = vmatprep.subr.bf16.mxu0 0
      %306 = vmatpush1.bf16.msra.mxu0 0
      %307 = vmatprep.subr.bf16.mxu0 0
      %308 = vmatpush1.bf16.msra.mxu0 0
      %309 = vmatprep.subr.bf16.mxu0 0
      %310 = vmatpush1.bf16.msra.mxu0 0
      %311 = vmatprep.subr.bf16.mxu0 0
      %312 = vmatpush1.bf16.msra.mxu0 0
      %313 = vmatprep.subr.bf16.mxu0 0
      %314 = vmatpush1.bf16.msra.mxu0 0
      %315 = vmatprep.subr.bf16.mxu0 0
      %316 = vmatpush1.bf16.msra.mxu0 0
      %317 = vmatprep.subr.bf16.mxu0 0
      %318 = vmatpush1.bf16.msra.mxu0 0
      %319 = vmatprep.subr.bf16.mxu0 0
      %320 = vmatpush1.bf16.msra.mxu0 0
      %321 = vmatprep.subr.bf16.mxu0 0
      %322 = vmatpush1.bf16.msra.mxu0 0
      %323 = vmatprep.subr.bf16.mxu0 0
      %324 = vmatpush1.bf16.msra.mxu0 0
      %325 = vmatprep.mubr.bf16.mxu0 0
      %326 = vmatmul.mubr.bf16.gmra.mrb[0].mxu0 %v275
      %v327 = vpop.f32.mrb[0].mxu0
      %v328 = vadd.f32 0.0, %v327
      %v329 = vpop.f32.mrb[0].mxu0
      %v330 = vpop.f32.mrb[0].mxu0
      %v331 = vadd.f32 0.0, %v330
      %v332 = vpop.f32.mrb[0].mxu0
      %333 = vmatprep.mubr.bf16.mxu0 0
      %334 = vmatmul.mubr.bf16.gmra.mrb[0].mxu0 %v278
      %v335 = vpop.f32.mrb[0].mxu0
      %v336 = vadd.f32 0.0, %v335
      %v337 = vpop.f32.mrb[0].mxu0
      %v338 = vpop.f32.mrb[0].mxu0
      %v339 = vadd.f32 0.0, %v338
      %v340 = vpop.f32.mrb[0].mxu0
      %341 = vmatprep.mubr.bf16.mxu0 0
      %342 = vmatmul.mubr.bf16.gmra.mrb[0].mxu0 %v281
      %v343 = vpop.f32.mrb[0].mxu0
      %v344 = vadd.f32 0.0, %v343
      %v345 = vpop.f32.mrb[0].mxu0
      %v346 = vpop.f32.mrb[0].mxu0
      %v347 = vadd.f32 0.0, %v346
      %v348 = vpop.f32.mrb[0].mxu0
      %349 = vmatprep.mubr.bf16.mxu0 0
      %350 = vmatmul.mubr.bf16.gmra.mrb[0].mxu0 %v284
      %v351 = vpop.f32.mrb[0].mxu0
      %v352 = vadd.f32 0.0, %v351
      %v353 = vpop.f32.mrb[0].mxu0
      %v354 = vpop.f32.mrb[0].mxu0
      %v355 = vadd.f32 0.0, %v354
      %v356 = vpop.f32.mrb[0].mxu0
      %357 = vdwg.mxu0
      %vm358 = vcmask 261120
      %v359 = vsel %vm358, %v328, 0.0
      %v360 = vsel %vm358, %v331, 0.0
      %v361 = vadd.f32 %v359, %v360
      %v362 = vsel %vm358, %v336, 0.0
      %v363 = vadd.f32 %v361, %v362
      %v364 = vsel %vm358, %v339, 0.0
      %v365 = vadd.f32 %v363, %v364
      %v366 = vsel %vm358, %v344, 0.0
      %v367 = vadd.f32 %v365, %v366
      %v368 = vsel %vm358, %v347, 0.0
      %v369 = vadd.f32 %v367, %v368
      %v370 = vsel %vm358, %v352, 0.0
      %v371 = vadd.f32 %v369, %v370
      %v372 = vsel %vm358, %v355, 0.0
      %v373 = vadd.f32 %v371, %v372
      %v374 = vrot.slane %v373, 4
      %v375 = vadd.f32 %v373, %v374
      %v376 = vrot.slane %v375, 2
      %v377 = vadd.f32 %v375, %v376
      %v378 = vrot.slane %v377, 1
      %v379 = vadd.f32 %v377, %v378
      %v380 = vmul.f32 %v328, %v328
      %v381 = vmul.f32 %v331, %v331
      %v382 = vmul.f32 %v336, %v336
      %v383 = vmul.f32 %v339, %v339
      %v384 = vmul.f32 %v344, %v344
      %v385 = vmul.f32 %v347, %v347
      %v386 = vmul.f32 %v352, %v352
      %v387 = vmul.f32 %v355, %v355
      %v388 = vsel %vm358, %v380, 0.0
      %v389 = vsel %vm358, %v381, 0.0
      %v390 = vadd.f32 %v388, %v389
      %v391 = vsel %vm358, %v382, 0.0
      %v392 = vadd.f32 %v390, %v391
      %v393 = vsel %vm358, %v383, 0.0
      %v394 = vadd.f32 %v392, %v393
      %v395 = vsel %vm358, %v384, 0.0
      %v396 = vadd.f32 %v394, %v395
      %v397 = vsel %vm358, %v385, 0.0
      %v398 = vadd.f32 %v396, %v397
      %v399 = vsel %vm358, %v386, 0.0
      %v400 = vadd.f32 %v398, %v399
      %v401 = vsel %vm358, %v387, 0.0
      %v402 = vadd.f32 %v400, %v401
      %v403 = vrot.slane %v402, 4
      %v404 = vadd.f32 %v402, %v403
      %v405 = vrot.slane %v404, 2
      %v406 = vadd.f32 %v404, %v405
      %v407 = vrot.slane %v406, 1
      %v408 = vadd.f32 %v406, %v407
      %vm409 = vcmask 1040384
      %v410 = vsel %vm409, %v379, %v408
      %vm411 = vcmask 254976
      %412 = vst.msk [vmem:[%s228] sm:$0x3] %vm411, %v410
      %413 = vst.msk [vmem:[%s220] sm:$0xff] %vm358, %v328
      %414 = vst.msk [vmem:[%s220 + $0x8] sm:$0xff] %vm358, %v331
      %415 = vst.msk [vmem:[%s220 + $0x10] sm:$0xff] %vm358, %v336
      %416 = vst.msk [vmem:[%s220 + $0x18] sm:$0xff] %vm358, %v339
      %417 = vst.msk [vmem:[%s220 + $0x20] sm:$0xff] %vm358, %v344
      %418 = vst.msk [vmem:[%s220 + $0x28] sm:$0xff] %vm358, %v347
      %419 = vst.msk [vmem:[%s220 + $0x30] sm:$0xff] %vm358, %v352
      %420 = vst.msk [vmem:[%s220 + $0x38] sm:$0xff] %vm358, %v355
      %s421 = smul.u32 8, %s20
      %p422 = scmp.lt.s32.totalorder %s19, 1
      %s423 = scalar_select %p422, %s19, 1
      %p424 = scmp.lt.s32.totalorder %s421, 7
      %s425 = scalar_select %p424, %s421, 7
      %s426 = smul.addr %s423, 8
      %s427 = sadd.s32 %s425, %s426
      %s428 = smul.addr %s427, 8
      %s429 = scalar_lea.vmem %s2, %s428
      %p430 = scmp.lt.s32.totalorder %s19, 1
      %s431 = scalar_select %p430, %s19, 1
      %p432 = scmp.lt.s32.totalorder %s20, 0
      %s433 = scalar_select %p432, %s20, 0
      %s434 = sadd.s32 %s433, %s431
      %s435 = smul.addr %s434, 2
      %s436 = scalar_lea.vmem %s3, %s435
      // Predicated region
      $region29: #{unet_struc_forward.19} parent=27 // pred_check
        %p437 = pneg %p96
      $region30: #{unet_struc_forward.19} parent=27 // pred_check_branch
        %439 = sbr.rel (%p437) target = $region32
      $region31: #{unet_struc_forward.19} parent=27 // pred_region
        %s440 = smul.u32 8, %s20
      $region32: #{unet_struc_forward.19} parent=27 // pred_fallthru
        _
      // Predicated region
      $region33: #{unet_struc_forward.19} parent=27 // pred_check
        %p441 = pneg %p124
      $region34: #{unet_struc_forward.19} parent=27 // pred_check_branch
        %443 = sbr.rel (%p441) target = $region36
      $region35: #{unet_struc_forward.19} parent=27 // pred_region
        _
      $region36: #{unet_struc_forward.19} parent=27 // pred_fallthru
        _
    $region28: #{unet_struc_forward.19} parent=5 // pred_fallthru
      _
    %p444 = scmp.le.s32.totalorder 2, %s10
    // Predicated region
    $region37: #{unet_struc_forward.19} parent=5 // pred_check
      %p445 = pneg %p444
    $region38: #{unet_struc_forward.19} parent=5 // pred_check_branch
      %447 = sbr.rel (%p445) target = $region40
    $region39: #{unet_struc_forward.19} parent=5 // pred_region
      %s448 = ssub.s32 %s10, 2
      // Predicated region
      $region41: #{unet_struc_forward.19} parent=39 // pred_check
        %p449 = pneg %p102
      $region42: #{unet_struc_forward.19} parent=39 // pred_check_branch
        %451 = sbr.rel (%p449) target = $region44
      $region43: #{unet_struc_forward.19} parent=39 // pred_region
        %s452 = smul.u32 8, %s22
        %p453 = scmp.lt.s32.totalorder %s21, 1
        %s454 = scalar_select %p453, %s21, 1
        %p455 = scmp.lt.s32.totalorder %s452, 7
        %s456 = scalar_select %p455, %s452, 7
        %s457 = smul.addr %s454, 8
        %s458 = sadd.s32 %s456, %s457
        %s459 = smul.addr %s458, 8
        %s460 = scalar_lea.vmem %s2, %s459
      $region44: #{unet_struc_forward.19} parent=39 // pred_fallthru
        _
      // Predicated region
      $region45: #{unet_struc_forward.19} parent=39 // pred_check
        %p461 = pneg %p130
      $region46: #{unet_struc_forward.19} parent=39 // pred_check_branch
        %463 = sbr.rel (%p461) target = $region48
      $region47: #{unet_struc_forward.19} parent=39 // pred_region
        %p464 = scmp.lt.s32.totalorder %s21, 1
        %s465 = scalar_select %p464, %s21, 1
        %p466 = scmp.lt.s32.totalorder %s22, 0
        %s467 = scalar_select %p466, %s22, 0
        %s468 = sadd.s32 %s467, %s465
        %s469 = smul.addr %s468, 2
        %s470 = scalar_lea.vmem %s3, %s469
      $region48: #{unet_struc_forward.19} parent=39 // pred_fallthru
        _
    $region40: #{unet_struc_forward.19} parent=5 // pred_fallthru
      _
  $region6: #{unet_struc_forward.19} parent=0 // loop_footer
    %s14 = sadd.s32 1, %s10
  $region7: #{unet_struc_forward.19} parent=0 // loop_footer_branch
    %9 = sbr.rel target = $region3
  $region8: #{unet_struc_forward.19} parent=0 // loop_exit
    _

// kernel: unet_struc_forward.21
$region0: #{unet_struc_forward.21}
  #allocation0 [shape = 'u32[]', space=smem, size = 0x4, offset = 0x4, fixed_abs, tag = 'smem constant byte address 0x4 - core index']
  #allocation1 [shape = 'u32[144,128]{1,0:T(1,128)}', space=vmem, size = 0x12000, scoped, tag = 'internal scratch']
  %s0 = inlined_call_operand.vmem [shape: bf16[2,1,10,10,32], index: 0, kind: input, shape index: {}]
  %s1 = inlined_call_operand.vmem [shape: bf16[288,32], index: 1, kind: input, shape index: {}]
  %s2 = inlined_call_operand.vmem [shape: f32[2,8,8,32], index: 2, kind: output, shape index: {0}]
  %s3 = inlined_call_operand.vmem [shape: f32[2,1,2,32], index: 3, kind: output, shape index: {1}]
  %4 = xla_tuple %s2, %s3
  %s5 = sld [smem:[#allocation0]]
  $region49: #{unet_struc_forward.21} parent=0
    _
  %s7 = ssub.s32 1, %s5
  %s8 = scalar_select 0, %s7, %s5
  loop: start=0, step=1, limit=4
  $region2: #{unet_struc_forward.21} parent=0 // loop_pre_header
    _
  $region3: #{unet_struc_forward.21} parent=0 // loop_header
    %s10 = sphi 0, %s14
    %p11 = scmp.ge.s32.totalorder %s10, 4
    %s17 = sphi 0, %s29
    %s18 = sphi 0, %s25
    %s19 = sphi 0, %s17
    %s20 = sphi 0, %s18
    %s21 = sphi 0, %s19
    %s22 = sphi 0, %s20
    %s34 = sphi 0, %s36
    %s37 = sphi 0, %s34
    %s38 = sphi 0, %s37
    %s54 = sphi 0, %s38
    %s58 = sphi 0, %s58
    %s60 = sphi 0, %s58
    %s61 = sphi 0, %s60
    %s75 = sphi 0, %s61
    %s83 = sphi 0, %s85
    %s86 = sphi 0, %s83
    %s87 = sphi 0, %s86
    %s103 = sphi 0, %s87
    %s111 = sphi 0, %s113
    %s114 = sphi 0, %s111
    %s115 = sphi 0, %s114
    %s131 = sphi 0, %s115
  $region4: #{unet_struc_forward.21} parent=0 // loop_header_branch
    %13 = sbr.rel (%p11) target = $region8
  $region5: #{unet_struc_forward.21} parent=0 // loop_body
    %s15 = ssub.s32 %s10, 1
    %s16 = ssub.s32 %s10, 2
    %s23 = sadd.s32 1, %s18
    %p24 = scmp.ge.s32.totalorder %s23, 1
    %s25 = scalar_select %p24, 0, %s23
    %s26 = sadd.s32 1, %s17
    %s27 = scalar_select %p24, %s26, %s17
    %p28 = scmp.ge.s32.totalorder %s27, 2
    %s29 = scalar_select %p28, 0, %s27
    %s30 = ssub.s32 %s17, %s29
    %s31 = ssub.s32 %s18, %s25
    %s32 = sor.u32 %s30, %s31
    %p33 = scmp.eq.s32.totalorder %s32, 0
    %s35 = sadd.s32 %s34, 1
    %s36 = scalar_select %p33, %s34, %s35
    %p39 = pneg %p33
    %p40 = scmp.eq.s32.totalorder %s10, 1
    %p41 = por %p39, %p40
    %p42 = scmp.ne.s32.totalorder %s34, %s37
    %p43 = scmp.eq.s32.totalorder %s10, 0
    %p44 = por %p42, %p43
    %p45 = scmp.ne.s32.totalorder %s34, %s37
    %p46 = scmp.eq.s32.totalorder %s15, 1
    %p47 = por %p45, %p46
    %p48 = scmp.ne.s32.totalorder %s37, %s38
    %p49 = scmp.eq.s32.totalorder %s15, 0
    %p50 = por %p48, %p49
    %p51 = scmp.ne.s32.totalorder %s37, %s38
    %p52 = scmp.eq.s32.totalorder %s16, 1
    %p53 = por %p51, %p52
    %p55 = scmp.ne.s32.totalorder %s38, %s54
    %p56 = scmp.eq.s32.totalorder %s16, 0
    %p57 = por %p55, %p56
    %s59 = sadd.s32 %s58, 1
    %p62 = scmp.eq.s32.totalorder %s10, 1
    %p63 = scmp.ne.s32.totalorder %s58, %s60
    %p64 = scmp.eq.s32.totalorder %s10, 0
    %p65 = por %p63, %p64
    %p66 = scmp.ne.s32.totalorder %s58, %s60
    %p67 = scmp.eq.s32.totalorder %s15, 1
    %p68 = por %p66, %p67
    %p69 = scmp.ne.s32.totalorder %s60, %s61
    %p70 = scmp.eq.s32.totalorder %s15, 0
    %p71 = por %p69, %p70
    %p72 = scmp.ne.s32.totalorder %s60, %s61
    %p73 = scmp.eq.s32.totalorder %s16, 1
    %p74 = por %p72, %p73
    %p76 = scmp.ne.s32.totalorder %s61, %s75
    %p77 = scmp.eq.s32.totalorder %s16, 0
    %p78 = por %p76, %p77
    %s79 = ssub.s32 %s17, %s29
    %s80 = ssub.s32 %s18, %s25
    %s81 = sor.u32 %s79, %s80
    %p82 = scmp.eq.s32.totalorder %s81, 0
    %s84 = sadd.s32 %s83, 1
    %s85 = scalar_select %p82, %s83, %s84
    %p88 = pneg %p82
    %p89 = scmp.eq.s32.totalorder %s10, 1
    %p90 = por %p88, %p89
    %p91 = scmp.ne.s32.totalorder %s83, %s86
    %p92 = scmp.eq.s32.totalorder %s10, 0
    %p93 = por %p91, %p92
    %p94 = scmp.ne.s32.totalorder %s83, %s86
    %p95 = scmp.eq.s32.totalorder %s15, 1
    %p96 = por %p94, %p95
    %p97 = scmp.ne.s32.totalorder %s86, %s87
    %p98 = scmp.eq.s32.totalorder %s15, 0
    %p99 = por %p97, %p98
    %p100 = scmp.ne.s32.totalorder %s86, %s87
    %p101 = scmp.eq.s32.totalorder %s16, 1
    %p102 = por %p100, %p101
    %p104 = scmp.ne.s32.totalorder %s87, %s103
    %p105 = scmp.eq.s32.totalorder %s16, 0
    %p106 = por %p104, %p105
    %s107 = ssub.s32 %s17, %s29
    %s108 = ssub.s32 %s18, %s25
    %s109 = sor.u32 %s107, %s108
    %p110 = scmp.eq.s32.totalorder %s109, 0
    %s112 = sadd.s32 %s111, 1
    %s113 = scalar_select %p110, %s111, %s112
    %p116 = pneg %p110
    %p117 = scmp.eq.s32.totalorder %s10, 1
    %p118 = por %p116, %p117
    %p119 = scmp.ne.s32.totalorder %s111, %s114
    %p120 = scmp.eq.s32.totalorder %s10, 0
    %p121 = por %p119, %p120
    %p122 = scmp.ne.s32.totalorder %s111, %s114
    %p123 = scmp.eq.s32.totalorder %s15, 1
    %p124 = por %p122, %p123
    %p125 = scmp.ne.s32.totalorder %s114, %s115
    %p126 = scmp.eq.s32.totalorder %s15, 0
    %p127 = por %p125, %p126
    %p128 = scmp.ne.s32.totalorder %s114, %s115
    %p129 = scmp.eq.s32.totalorder %s16, 1
    %p130 = por %p128, %p129
    %p132 = scmp.ne.s32.totalorder %s115, %s131
    %p133 = scmp.eq.s32.totalorder %s16, 0
    %p134 = por %p132, %p133
    %p135 = scmp.le.s32.totalorder 1, %s10
    %p136 = scmp.lt.s32.totalorder %s10, 3
    %p137 = pnand %p135, %p136
    %p138 = pneg %p137
    // Predicated region
    $region9: #{unet_struc_forward.21} parent=5 // pred_check
      _
    $region10: #{unet_struc_forward.21} parent=5 // pred_check_branch
      %140 = sbr.rel (%p137) target = $region12
    $region11: #{unet_struc_forward.21} parent=5 // pred_region
      %s141 = ssub.s32 %s10, 1
      // Predicated region
      $region13: #{unet_struc_forward.21} parent=11 // pred_check
        %p142 = pneg %p71
      $region14: #{unet_struc_forward.21} parent=11 // pred_check_branch
        %144 = sbr.rel (%p142) target = $region16
      $region15: #{unet_struc_forward.21} parent=11 // pred_region
        _
      $region16: #{unet_struc_forward.21} parent=11 // pred_fallthru
        _
    $region12: #{unet_struc_forward.21} parent=5 // pred_fallthru
      _
    %p145 = scmp.lt.s32.totalorder %s10, 2
    // Predicated region
    $region17: #{unet_struc_forward.21} parent=5 // pred_check
      %p146 = pneg %p145
    $region18: #{unet_struc_forward.21} parent=5 // pred_check_branch
      %148 = sbr.rel (%p146) target = $region20
    $region19: #{unet_struc_forward.21} parent=5 // pred_region
      // Predicated region
      $region21: #{unet_struc_forward.21} parent=19 // pred_check
        %p149 = pneg %p44
      $region22: #{unet_struc_forward.21} parent=19 // pred_check_branch
        %151 = sbr.rel (%p149) target = $region24
      $region23: #{unet_struc_forward.21} parent=19 // pred_region
        %p152 = scmp.lt.s32.totalorder %s17, 1
        %s153 = scalar_select %p152, %s17, 1
        %p154 = scmp.lt.s32.totalorder %s18, 0
        %s155 = scalar_select %p154, %s18, 0
        %s156 = smul.addr %s155, 20
        %s157 = smul.addr %s153, 20
        %s158 = sadd.s32 %s156, %s157
        %s159 = smul.addr %s158, 4
        %s160 = scalar_lea.vmem %s0, %s159
      $region24: #{unet_struc_forward.21} parent=19 // pred_fallthru
        _
    $region20: #{unet_struc_forward.21} parent=5 // pred_fallthru
      _
    %p161 = scmp.le.s32.totalorder 1, %s10
    %p162 = scmp.lt.s32.totalorder %s10, 3
    %p163 = pnand %p161, %p162
    %p164 = pneg %p163
    // Predicated region
    $region25: #{unet_struc_forward.21} parent=5 // pred_check
      _
    $region26: #{unet_struc_forward.21} parent=5 // pred_check_branch
      %166 = sbr.rel (%p163) target = $region28
    $region27: #{unet_struc_forward.21} parent=5 // pred_region
      %s167 = ssub.s32 %s10, 1
      %p168 = scmp.lt.s32.totalorder %s19, 1
      %s169 = scalar_select %p168, %s19, 1
      %p170 = scmp.lt.s32.totalorder %s20, 0
      %s171 = scalar_select %p170, %s20, 0
      %s172 = smul.addr %s171, 20
      %s173 = smul.addr %s169, 20
      %s174 = sadd.s32 %s172, %s173
      %s175 = smul.addr %s174, 4
      %s176 = scalar_lea.vmem %s0, %s175
      %p177 = pneg %p50
      %p178 = pneg %p47
      %p179 = pneg %p71
      %p180 = pneg %p68
      %p181 = pneg %p99
      %p182 = pneg %p96
      %s183 = smul.u32 8, %s20
      %p184 = scmp.lt.s32.totalorder %s19, 1
      %s185 = scalar_select %p184, %s19, 1
      %p186 = scmp.lt.s32.totalorder %s183, 7
      %s187 = scalar_select %p186, %s183, 7
      %s188 = smul.addr %s185, 8
      %s189 = sadd.s32 %s187, %s188
      %s190 = smul.addr %s189, 8
      %s191 = scalar_lea.vmem %s2, %s190
      %p192 = pneg %p127
      %p193 = pneg %p124
      %p194 = scmp.lt.s32.totalorder %s19, 1
      %s195 = scalar_select %p194, %s19, 1
      %p196 = scmp.lt.s32.totalorder %s20, 0
      %s197 = scalar_select %p196, %s20, 0
      %s198 = sadd.s32 %s197, %s195
      %s199 = smul.addr %s198, 2
      %s200 = scalar_lea.vmem %s3, %s199
      %p201 = scmp.lt.s32.totalorder %s19, 1
      %s202 = scalar_select %p201, %s19, 1
      %p203 = scmp.lt.s32.totalorder %s20, 0
      %s204 = scalar_select %p203, %s20, 0
      %s205 = smul.addr %s204, 20
      %s206 = smul.addr %s202, 20
      %s207 = sadd.s32 %s205, %s206
      %s208 = smul.addr %s207, 4
      %s209 = scalar_lea.vmem %s0, %s208
      %s210 = smul.u32 8, %s20
      %p211 = scmp.lt.s32.totalorder %s19, 1
      %s212 = scalar_select %p211, %s19, 1
      %p213 = scmp.lt.s32.totalorder %s210, 7
      %s214 = scalar_select %p213, %s210, 7
      %s215 = smul.addr %s212, 8
      %s216 = sadd.s32 %s214, %s215
      %s217 = smul.addr %s216, 8
      %s218 = scalar_lea.vmem %s2, %s217
      %s219 = smul.u32 8, %s20
      %p220 = scmp.lt.s32.totalorder %s19, 1
      %s221 = scalar_select %p220, %s19, 1
      %p222 = scmp.lt.s32.totalorder %s20, 0
      %s223 = scalar_select %p222, %s20, 0
      %s224 = sadd.s32 %s223, %s221
      %s225 = smul.addr %s224, 2
      %s226 = scalar_lea.vmem %s3, %s225
      %v228 = vld [vmem:[%s209] sm:$0xf]
      %v229 = vld [vmem:[%s209 + $0x4] sm:$0x1]
      %v230 = vld [vmem:[%s209 + $0x8] sm:$0xf]
      %v231 = vld [vmem:[%s209 + $0xc] sm:$0x1]
      %v232 = vld [vmem:[%s209 + $0x10] sm:$0xf]
      %v233 = vld [vmem:[%s209 + $0x14] sm:$0x1]
      %v234 = vld [vmem:[%s209 + $0x18] sm:$0xf]
      %v235 = vld [vmem:[%s209 + $0x1c] sm:$0x1]
      %v236 = vld [vmem:[%s209 + $0x20] sm:$0xf]
      %v237 = vld [vmem:[%s209 + $0x24] sm:$0x1]
      %v238 = vld [vmem:[%s209 + $0x28] sm:$0xf]
      %v239 = vld [vmem:[%s209 + $0x2c] sm:$0x1]
      %v240 = vld [vmem:[%s209 + $0x30] sm:$0xf]
      %v241 = vld [vmem:[%s209 + $0x34] sm:$0x1]
      %v242 = vld [vmem:[%s209 + $0x38] sm:$0xf]
      %v243 = vld [vmem:[%s209 + $0x3c] sm:$0x1]
      %v244 = vld [vmem:[%s209 + $0x40] sm:$0xf]
      %v245 = vld [vmem:[%s209 + $0x44] sm:$0x1]
      %v246 = vld [vmem:[%s209 + $0x48] sm:$0xf]
      %v247 = vld [vmem:[%s209 + $0x4c] sm:$0x1]
      %v264 = vunpack.c.l.b16 %v228
      %v265 = vunpack.c.l.b16 %v229
      %v266 = vunpack.c.l.b16 %v230
      %v267 = vunpack.c.l.b16 %v231
      %v268 = vunpack.c.l.b16 %v232
      %v269 = vunpack.c.l.b16 %v233
      %v270 = vunpack.c.l.b16 %v234
      %v271 = vunpack.c.l.b16 %v235
      %v272 = vunpack.c.l.b16 %v236
      %v273 = vunpack.c.l.b16 %v237
      %v274 = vunpack.c.l.b16 %v238
      %v275 = vunpack.c.l.b16 %v239
      %v276 = vunpack.c.l.b16 %v240
      %v277 = vunpack.c.l.b16 %v241
      %v278 = vunpack.c.l.b16 %v242
      %v279 = vunpack.c.l.b16 %v243
      %v280 = vpack.c.b16 %v265, %v264
      %v281 = vpack.c.b16 %v267, %v266
      %v282 = vpack.c.b16 %v269, %v268
      %v283 = vpack.c.b16 %v271, %v270
      %v284 = vpack.c.b16 %v273, %v272
      %v285 = vpack.c.b16 %v275, %v274
      %v286 = vpack.c.b16 %v277, %v276
      %v287 = vpack.c.b16 %v279, %v278
      %v289 = vshrl.u32 %v280, 16
      %v291 = vshll.u32 %v280, 16
      %v293 = vrot.slane %v291, 1
      %v294 = vor.u32 %v289, %v293
      %v296 = vshrl.u32 %v281, 16
      %v298 = vshll.u32 %v281, 16
      %v300 = vrot.slane %v298, 1
      %v301 = vor.u32 %v296, %v300
      %v303 = vshrl.u32 %v282, 16
      %v305 = vshll.u32 %v282, 16
      %v307 = vrot.slane %v305, 1
      %v308 = vor.u32 %v303, %v307
      %v310 = vshrl.u32 %v283, 16
      %v312 = vshll.u32 %v283, 16
      %v314 = vrot.slane %v312, 1
      %v315 = vor.u32 %v310, %v314
      %v317 = vshrl.u32 %v284, 16
      %v319 = vshll.u32 %v284, 16
      %v321 = vrot.slane %v319, 1
      %v322 = vor.u32 %v317, %v321
      %v324 = vshrl.u32 %v285, 16
      %v326 = vshll.u32 %v285, 16
      %v328 = vrot.slane %v326, 1
      %v329 = vor.u32 %v324, %v328
      %v331 = vshrl.u32 %v286, 16
      %v333 = vshll.u32 %v286, 16
      %v335 = vrot.slane %v333, 1
      %v336 = vor.u32 %v331, %v335
      %v338 = vshrl.u32 %v287, 16
      %v340 = vshll.u32 %v287, 16
      %v342 = vrot.slane %v340, 1
      %v343 = vor.u32 %v338, %v342
      %344 = vrot.lane.b32.xlu0 %v294, 32
      %v345 = vpop.permute.xlu0 %344
      %346 = vrot.lane.b32.xlu0 %v301, 32
      %v347 = vpop.permute.xlu0 %346
      %348 = vrot.lane.b32.xlu0 %v308, 32
      %v349 = vpop.permute.xlu0 %348
      %350 = vrot.lane.b32.xlu0 %v315, 32
      %v351 = vpop.permute.xlu0 %350
      %352 = vrot.lane.b32.xlu0 %v322, 32
      %v353 = vpop.permute.xlu0 %352
      %354 = vrot.lane.b32.xlu0 %v329, 32
      %v355 = vpop.permute.xlu0 %354
      %356 = vrot.lane.b32.xlu0 %v336, 32
      %v357 = vpop.permute.xlu0 %356
      %358 = vrot.lane.b32.xlu0 %v343, 32
      %v359 = vpop.permute.xlu0 %358
      %v360 = vrot.slane %v280, 1
      %v361 = vrot.slane %v281, 1
      %v362 = vrot.slane %v282, 1
      %v363 = vrot.slane %v283, 1
      %v364 = vrot.slane %v284, 1
      %v365 = vrot.slane %v285, 1
      %v366 = vrot.slane %v286, 1
      %v367 = vrot.slane %v287, 1
      %368 = vrot.lane.b32.xlu0 %v360, 64
      %v369 = vpop.permute.xlu0 %368
      %370 = vrot.lane.b32.xlu0 %v361, 64
      %v371 = vpop.permute.xlu0 %370
      %372 = vrot.lane.b32.xlu0 %v362, 64
      %v373 = vpop.permute.xlu0 %372
      %374 = vrot.lane.b32.xlu0 %v363, 64
      %v375 = vpop.permute.xlu0 %374
      %376 = vrot.lane.b32.xlu0 %v364, 64
      %v377 = vpop.permute.xlu0 %376
      %378 = vrot.lane.b32.xlu0 %v365, 64
      %v379 = vpop.permute.xlu0 %378
      %380 = vrot.lane.b32.xlu0 %v366, 64
      %v381 = vpop.permute.xlu0 %380
      %382 = vrot.lane.b32.xlu0 %v367, 64
      %v383 = vpop.permute.xlu0 %382
      %v385 = vunpack.c.l.b16 %v244
      %v386 = vpack.c.b16 %v266, %v266
      %v387 = vpack.c.b16 %v268, %v268
      %v388 = vpack.c.b16 %v270, %v270
      %v389 = vpack.c.b16 %v272, %v272
      %v390 = vpack.c.b16 %v274, %v274
      %v391 = vpack.c.b16 %v276, %v276
      %v392 = vpack.c.b16 %v278, %v278
      %v393 = vpack.c.b16 %v385, %v385
      %394 = vrot.lane.b32.xlu0 %v386, 96
      %v395 = vpop.permute.xlu0 %394
      %396 = vrot.lane.b32.xlu0 %v387, 96
      %v397 = vpop.permute.xlu0 %396
      %398 = vrot.lane.b32.xlu0 %v388, 96
      %v399 = vpop.permute.xlu0 %398
      %400 = vrot.lane.b32.xlu0 %v389, 96
      %v401 = vpop.permute.xlu0 %400
      %402 = vrot.lane.b32.xlu0 %v390, 96
      %v403 = vpop.permute.xlu0 %402
      %404 = vrot.lane.b32.xlu0 %v391, 96
      %v405 = vpop.permute.xlu0 %404
      %406 = vrot.lane.b32.xlu0 %v392, 96
      %v407 = vpop.permute.xlu0 %406
      %408 = vrot.lane.b32.xlu0 %v393, 96
      %v409 = vpop.permute.xlu0 %408
      %v411 = vunpack.c.l.b16 %v245
      %v412 = vpack.c.b16 %v411, %v385
      %v414 = vshrl.u32 %v412, 16
      %v416 = vshll.u32 %v412, 16
      %v418 = vrot.slane %v416, 1
      %v419 = vor.u32 %v414, %v418
      %v420 = vrot.slane %v412, 1
      %421 = vrot.lane.b32.xlu0 %v361, 32
      %v422 = vpop.permute.xlu0 %421
      %423 = vrot.lane.b32.xlu0 %v362, 32
      %v424 = vpop.permute.xlu0 %423
      %425 = vrot.lane.b32.xlu0 %v363, 32
      %v426 = vpop.permute.xlu0 %425
      %427 = vrot.lane.b32.xlu0 %v364, 32
      %v428 = vpop.permute.xlu0 %427
      %429 = vrot.lane.b32.xlu0 %v365, 32
      %v430 = vpop.permute.xlu0 %429
      %431 = vrot.lane.b32.xlu0 %v366, 32
      %v432 = vpop.permute.xlu0 %431
      %433 = vrot.lane.b32.xlu0 %v367, 32
      %v434 = vpop.permute.xlu0 %433
      %435 = vrot.lane.b32.xlu0 %v420, 32
      %v436 = vpop.permute.xlu0 %435
      %v438 = vunpack.c.l.b16 %v246
      %v439 = vpack.c.b16 %v438, %v438
      %440 = vrot.lane.b32.xlu0 %v387, 64
      %v441 = vpop.permute.xlu0 %440
      %442 = vrot.lane.b32.xlu0 %v388, 64
      %v443 = vpop.permute.xlu0 %442
      %444 = vrot.lane.b32.xlu0 %v389, 64
      %v445 = vpop.permute.xlu0 %444
      %446 = vrot.lane.b32.xlu0 %v390, 64
      %v447 = vpop.permute.xlu0 %446
      %448 = vrot.lane.b32.xlu0 %v391, 64
      %v449 = vpop.permute.xlu0 %448
      %450 = vrot.lane.b32.xlu0 %v392, 64
      %v451 = vpop.permute.xlu0 %450
      %452 = vrot.lane.b32.xlu0 %v393, 64
      %v453 = vpop.permute.xlu0 %452
      %454 = vrot.lane.b32.xlu0 %v439, 64
      %v455 = vpop.permute.xlu0 %454
      %v457 = vunpack.c.l.b16 %v247
      %v458 = vpack.c.b16 %v457, %v438
      %v460 = vshrl.u32 %v458, 16
      %v462 = vshll.u32 %v458, 16
      %v464 = vrot.slane %v462, 1
      %v465 = vor.u32 %v460, %v464
      %466 = vrot.lane.b32.xlu0 %v308, 96
      %v467 = vpop.permute.xlu0 %466
      %468 = vrot.lane.b32.xlu0 %v315, 96
      %v469 = vpop.permute.xlu0 %468
      %470 = vrot.lane.b32.xlu0 %v322, 96
      %v471 = vpop.permute.xlu0 %470
      %472 = vrot.lane.b32.xlu0 %v329, 96
      %v473 = vpop.permute.xlu0 %472
      %474 = vrot.lane.b32.xlu0 %v336, 96
      %v475 = vpop.permute.xlu0 %474
      %476 = vrot.lane.b32.xlu0 %v343, 96
      %v477 = vpop.permute.xlu0 %476
      %478 = vrot.lane.b32.xlu0 %v419, 96
      %v479 = vpop.permute.xlu0 %478
      %480 = vrot.lane.b32.xlu0 %v465, 96
      %v481 = vpop.permute.xlu0 %480
      %v482 = vrot.slane %v458, 1
      %vm483 = vcmask 261120
      %v486 = vsel %vm483, %v228, %v345
      %v489 = vsel %vm483, %v230, %v347
      %v492 = vsel %vm483, %v232, %v349
      %v495 = vsel %vm483, %v234, %v351
      %v498 = vsel %vm483, %v236, %v353
      %v501 = vsel %vm483, %v238, %v355
      %v504 = vsel %vm483, %v240, %v357
      %v507 = vsel %vm483, %v242, %v359
      %vm508 = vcmask 523264
      %v510 = vsel %vm508, %v486, %v369
      %v512 = vsel %vm508, %v489, %v371
      %v514 = vsel %vm508, %v492, %v373
      %v516 = vsel %vm508, %v495, %v375
      %v518 = vsel %vm508, %v498, %v377
      %v520 = vsel %vm508, %v501, %v379
      %v522 = vsel %vm508, %v504, %v381
      %v524 = vsel %vm508, %v507, %v383
      %vm525 = vcmask 785408
      %v527 = vsel %vm525, %v510, %v395
      %v529 = vsel %vm525, %v512, %v397
      %v531 = vsel %vm525, %v514, %v399
      %v533 = vsel %vm525, %v516, %v401
      %v535 = vsel %vm525, %v518, %v403
      %v537 = vsel %vm525, %v520, %v405
      %v539 = vsel %vm525, %v522, %v407
      %v541 = vsel %vm525, %v524, %v409
      %v544 = vsel %vm483, %v301, %v422
      %v547 = vsel %vm483, %v308, %v424
      %v550 = vsel %vm483, %v315, %v426
      %v553 = vsel %vm483, %v322, %v428
      %v556 = vsel %vm483, %v329, %v430
      %v559 = vsel %vm483, %v336, %v432
      %v562 = vsel %vm483, %v343, %v434
      %v565 = vsel %vm483, %v419, %v436
      %v567 = vsel %vm508, %v544, %v441
      %v569 = vsel %vm508, %v547, %v443
      %v571 = vsel %vm508, %v550, %v445
      %v573 = vsel %vm508, %v553, %v447
      %v575 = vsel %vm508, %v556, %v449
      %v577 = vsel %vm508, %v559, %v451
      %v579 = vsel %vm508, %v562, %v453
      %v581 = vsel %vm508, %v565, %v455
      %v583 = vsel %vm525, %v567, %v467
      %v585 = vsel %vm525, %v569, %v469
      %v587 = vsel %vm525, %v571, %v471
      %v589 = vsel %vm525, %v573, %v473
      %v591 = vsel %vm525, %v575, %v475
      %v593 = vsel %vm525, %v577, %v477
      %v595 = vsel %vm525, %v579, %v479
      %v597 = vsel %vm525, %v581, %v481
      %v614 = vunpack.c.l.b16 %v527
      %v615 = vunpack.c.l.b16 %v583
      %v616 = vunpack.c.l.b16 %v362
      %v617 = vunpack.c.l.b16 %v529
      %v618 = vunpack.c.l.b16 %v585
      %v619 = vunpack.c.l.b16 %v363
      %v620 = vunpack.c.l.b16 %v531
      %v621 = vunpack.c.l.b16 %v587
      %v622 = vunpack.c.l.b16 %v364
      %v623 = vunpack.c.l.b16 %v533
      %v624 = vunpack.c.l.b16 %v589
      %v625 = vunpack.c.l.b16 %v365
      %v626 = vunpack.c.l.b16 %v535
      %v627 = vunpack.c.l.b16 %v591
      %v628 = vunpack.c.l.b16 %v366
      %v629 = vunpack.c.l.b16 %v537
      %v630 = vunpack.c.l.b16 %v593
      %v631 = vunpack.c.l.b16 %v367
      %v632 = vunpack.c.l.b16 %v539
      %v633 = vunpack.c.l.b16 %v595
      %v634 = vunpack.c.l.b16 %v420
      %v635 = vunpack.c.l.b16 %v541
      %v636 = vunpack.c.l.b16 %v597
      %v637 = vunpack.c.l.b16 %v482
      %v638 = vld [vmem:[%s1] sm:$0xf]
      %v639 = vld [vmem:[%s1 + $0x4] sm:$0xf]
      %v640 = vld [vmem:[%s1 + $0x8] sm:$0xf]
      %v641 = vld [vmem:[%s1 + $0xc] sm:$0xf]
      %v642 = vld [vmem:[%s1 + $0x10] sm:$0xf]
      %v643 = vld [vmem:[%s1 + $0x14] sm:$0xf]
      %v644 = vld [vmem:[%s1 + $0x18] sm:$0xf]
      %v645 = vld [vmem:[%s1 + $0x1c] sm:$0xf]
      %v646 = vld [vmem:[%s1 + $0x20] sm:$0xf]
      %v647 = vld [vmem:[%s1 + $0x24] sm:$0xf]
      %v648 = vld [vmem:[%s1 + $0x28] sm:$0xf]
      %v649 = vld [vmem:[%s1 + $0x2c] sm:$0xf]
      %v650 = vld [vmem:[%s1 + $0x30] sm:$0xf]
      %v651 = vld [vmem:[%s1 + $0x34] sm:$0xf]
      %v652 = vld [vmem:[%s1 + $0x38] sm:$0xf]
      %v653 = vld [vmem:[%s1 + $0x3c] sm:$0xf]
      %v654 = vld [vmem:[%s1 + $0x40] sm:$0xf]
      %v655 = vld [vmem:[%s1 + $0x44] sm:$0xf]
      %v656 = vld [vmem:[%s1 + $0x48] sm:$0xf]
      %v657 = vld [vmem:[%s1 + $0x4c] sm:$0xf]
      %v658 = vld [vmem:[%s1 + $0x50] sm:$0xf]
      %v659 = vld [vmem:[%s1 + $0x54] sm:$0xf]
      %v660 = vld [vmem:[%s1 + $0x58] sm:$0xf]
      %v661 = vld [vmem:[%s1 + $0x5c] sm:$0xf]
      %v662 = vld [vmem:[%s1 + $0x60] sm:$0xf]
      %v663 = vld [vmem:[%s1 + $0x64] sm:$0xf]
      %v664 = vld [vmem:[%s1 + $0x68] sm:$0xf]
      %v665 = vld [vmem:[%s1 + $0x6c] sm:$0xf]
      %v666 = vld [vmem:[%s1 + $0x70] sm:$0xf]
      %v667 = vld [vmem:[%s1 + $0x74] sm:$0xf]
      %v668 = vld [vmem:[%s1 + $0x78] sm:$0xf]
      %v669 = vld [vmem:[%s1 + $0x7c] sm:$0xf]
      %v670 = vld [vmem:[%s1 + $0x80] sm:$0xf]
      %v671 = vld [vmem:[%s1 + $0x84] sm:$0xf]
      %v672 = vld [vmem:[%s1 + $0x88] sm:$0xf]
      %v673 = vld [vmem:[%s1 + $0x8c] sm:$0xf]
      %v674 = vpack.c.b16 %v617, %v614
      %v675 = vpack.c.b16 %v618, %v615
      %v676 = vpack.c.b16 %v619, %v616
      %v677 = vpack.c.b16 %v623, %v620
      %v678 = vpack.c.b16 %v624, %v621
      %v679 = vpack.c.b16 %v625, %v622
      %v680 = vpack.c.b16 %v629, %v626
      %v681 = vpack.c.b16 %v630, %v627
      %v682 = vpack.c.b16 %v631, %v628
      %v683 = vpack.c.b16 %v635, %v632
      %v684 = vpack.c.b16 %v636, %v633
      %v685 = vpack.c.b16 %v637, %v634
      %v730 = vunpack.c.l.b16 %v638
      %v731 = vunpack.c.l.b16 %v639
      %v732 = vunpack.c.l.b16 %v640
      %v733 = vunpack.c.l.b16 %v641
      %v734 = vunpack.c.l.b16 %v642
      %v735 = vunpack.c.l.b16 %v643
      %v736 = vunpack.c.l.b16 %v644
      %v737 = vunpack.c.l.b16 %v645
      %v738 = vunpack.c.l.b16 %v646
      %v739 = vunpack.c.l.b16 %v647
      %v740 = vunpack.c.l.b16 %v648
      %v741 = vunpack.c.l.b16 %v649
      %v742 = vunpack.c.l.b16 %v650
      %v743 = vunpack.c.l.b16 %v651
      %v744 = vunpack.c.l.b16 %v652
      %v745 = vunpack.c.l.b16 %v653
      %v746 = vunpack.c.l.b16 %v654
      %v747 = vunpack.c.l.b16 %v655
      %v748 = vunpack.c.l.b16 %v656
      %v749 = vunpack.c.l.b16 %v657
      %v750 = vunpack.c.l.b16 %v658
      %v751 = vunpack.c.l.b16 %v659
      %v752 = vunpack.c.l.b16 %v660
      %v753 = vunpack.c.l.b16 %v661
      %v754 = vunpack.c.l.b16 %v662
      %v755 = vunpack.c.l.b16 %v663
      %v756 = vunpack.c.l.b16 %v664
      %v757 = vunpack.c.l.b16 %v665
      %v758 = vunpack.c.l.b16 %v666
      %v759 = vunpack.c.l.b16 %v667
      %v760 = vunpack.c.l.b16 %v668
      %v761 = vunpack.c.l.b16 %v669
      %v762 = vunpack.c.l.b16 %v670
      %v763 = vunpack.c.l.b16 %v671
      %v764 = vunpack.c.l.b16 %v672
      %v765 = vunpack.c.l.b16 %v673
      %v766 = vpack.c.b16 %v731, %v730
      %v767 = vpack.c.b16 %v733, %v732
      %v768 = vpack.c.b16 %v735, %v734
      %v769 = vpack.c.b16 %v737, %v736
      %v770 = vpack.c.b16 %v739, %v738
      %v771 = vpack.c.b16 %v741, %v740
      %v772 = vpack.c.b16 %v743, %v742
      %v773 = vpack.c.b16 %v745, %v744
      %v774 = vpack.c.b16 %v747, %v746
      %v775 = vpack.c.b16 %v749, %v748
      %v776 = vpack.c.b16 %v751, %v750
      %v777 = vpack.c.b16 %v753, %v752
      %v778 = vpack.c.b16 %v755, %v754
      %v779 = vpack.c.b16 %v757, %v756
      %v780 = vpack.c.b16 %v759, %v758
      %v781 = vpack.c.b16 %v761, %v760
      %v782 = vpack.c.b16 %v763, %v762
      %v783 = vpack.c.b16 %v765, %v764
      %v803 = vsel %vm483, %v676, 0
      %v806 = vsel %vm483, %v679, 0
      %v809 = vsel %vm483, %v682, 0
      %v812 = vsel %vm483, %v685, 0
      %814 = vmatprep.subr.bf16.mxu0 0
      %815 = vmatpush1.bf16.msra.mxu0 %v766
      %816 = vmatprep.subr.bf16.mxu0 0
      %817 = vmatpush1.bf16.msra.mxu0 %v767
      %818 = vmatprep.subr.bf16.mxu0 0
      %819 = vmatpush1.bf16.msra.mxu0 %v768
      %820 = vmatprep.subr.bf16.mxu0 0
      %821 = vmatpush1.bf16.msra.mxu0 %v769
      %822 = vmatprep.subr.bf16.mxu0 0
      %823 = vmatpush1.bf16.msra.mxu0 %v770
      %824 = vmatprep.subr.bf16.mxu0 0
      %825 = vmatpush1.bf16.msra.mxu0 %v771
      %826 = vmatprep.subr.bf16.mxu0 0
      %827 = vmatpush1.bf16.msra.mxu0 %v772
      %828 = vmatprep.subr.bf16.mxu0 0
      %829 = vmatpush1.bf16.msra.mxu0 %v773
      %830 = vmatprep.subr.bf16.mxu0 0
      %831 = vmatpush1.bf16.msra.mxu0 %v774
      %832 = vmatprep.subr.bf16.mxu0 0
      %833 = vmatpush1.bf16.msra.mxu0 %v775
      %834 = vmatprep.subr.bf16.mxu0 0
      %835 = vmatpush1.bf16.msra.mxu0 %v776
      %836 = vmatprep.subr.bf16.mxu0 0
      %837 = vmatpush1.bf16.msra.mxu0 %v777
      %838 = vmatprep.subr.bf16.mxu0 0
      %839 = vmatpush1.bf16.msra.mxu0 %v778
      %840 = vmatprep.subr.bf16.mxu0 0
      %841 = vmatpush1.bf16.msra.mxu0 %v779
      %842 = vmatprep.subr.bf16.mxu0 0
      %843 = vmatpush1.bf16.msra.mxu0 %v780
      %844 = vmatprep.subr.bf16.mxu0 0
      %845 = vmatpush1.bf16.msra.mxu0 %v781
      %846 = vmatprep.mubr.bf16.mxu0 %v675
      %847 = vmatmul.mubr.bf16.gmra.mrb[0].mxu0 %v674
      %v848 = vpop.f32.mrb[0].mxu0
      %v849 = vadd.f32 0.0, %v848
      %v850 = vpop.f32.mrb[0].mxu0
      %v851 = vpop.f32.mrb[0].mxu0
      %v852 = vadd.f32 0.0, %v851
      %v853 = vpop.f32.mrb[0].mxu0
      %854 = vmatprep.mubr.bf16.mxu0 %v678
      %855 = vmatmul.mubr.bf16.gmra.mrb[0].mxu0 %v677
      %v856 = vpop.f32.mrb[0].mxu0
      %v857 = vadd.f32 0.0, %v856
      %v858 = vpop.f32.mrb[0].mxu0
      %v859 = vpop.f32.mrb[0].mxu0
      %v860 = vadd.f32 0.0, %v859
      %v861 = vpop.f32.mrb[0].mxu0
      %862 = vmatprep.mubr.bf16.mxu0 %v681
      %863 = vmatmul.mubr.bf16.gmra.mrb[0].mxu0 %v680
      %v864 = vpop.f32.mrb[0].mxu0
      %v865 = vadd.f32 0.0, %v864
      %v866 = vpop.f32.mrb[0].mxu0
      %v867 = vpop.f32.mrb[0].mxu0
      %v868 = vadd.f32 0.0, %v867
      %v869 = vpop.f32.mrb[0].mxu0
      %870 = vmatprep.mubr.bf16.mxu0 %v684
      %871 = vmatmul.mubr.bf16.gmra.mrb[0].mxu0 %v683
      %v872 = vpop.f32.mrb[0].mxu0
      %v873 = vadd.f32 0.0, %v872
      %v874 = vpop.f32.mrb[0].mxu0
      %v875 = vpop.f32.mrb[0].mxu0
      %v876 = vadd.f32 0.0, %v875
      %v877 = vpop.f32.mrb[0].mxu0
      %878 = vdwg.mxu0
      %879 = vmatprep.subr.bf16.mxu0 0
      %880 = vmatpush1.bf16.msra.mxu0 %v782
      %881 = vmatprep.subr.bf16.mxu0 0
      %882 = vmatpush1.bf16.msra.mxu0 %v783
      %883 = vmatprep.subr.bf16.mxu0 0
      %884 = vmatpush1.bf16.msra.mxu0 0
      %885 = vmatprep.subr.bf16.mxu0 0
      %886 = vmatpush1.bf16.msra.mxu0 0
      %887 = vmatprep.subr.bf16.mxu0 0
      %888 = vmatpush1.bf16.msra.mxu0 0
      %889 = vmatprep.subr.bf16.mxu0 0
      %890 = vmatpush1.bf16.msra.mxu0 0
      %891 = vmatprep.subr.bf16.mxu0 0
      %892 = vmatpush1.bf16.msra.mxu0 0
      %893 = vmatprep.subr.bf16.mxu0 0
      %894 = vmatpush1.bf16.msra.mxu0 0
      %895 = vmatprep.subr.bf16.mxu0 0
      %896 = vmatpush1.bf16.msra.mxu0 0
      %897 = vmatprep.subr.bf16.mxu0 0
      %898 = vmatpush1.bf16.msra.mxu0 0
      %899 = vmatprep.subr.bf16.mxu0 0
      %900 = vmatpush1.bf16.msra.mxu0 0
      %901 = vmatprep.subr.bf16.mxu0 0
      %902 = vmatpush1.bf16.msra.mxu0 0
      %903 = vmatprep.subr.bf16.mxu0 0
      %904 = vmatpush1.bf16.msra.mxu0 0
      %905 = vmatprep.subr.bf16.mxu0 0
      %906 = vmatpush1.bf16.msra.mxu0 0
      %907 = vmatprep.subr.bf16.mxu0 0
      %908 = vmatpush1.bf16.msra.mxu0 0
      %909 = vmatprep.subr.bf16.mxu0 0
      %910 = vmatpush1.bf16.msra.mxu0 0
      %911 = vmatprep.mubr.bf16.mxu0 0
      %912 = vmatmul.mubr.bf16.gmra.mrb[0].mxu0 %v803
      %v913 = vpop.f32.mrb[0].mxu0
      %v914 = vadd.f32 %v849, %v913
      %v915 = vpop.f32.mrb[0].mxu0
      %v916 = vpop.f32.mrb[0].mxu0
      %v917 = vadd.f32 %v852, %v916
      %v918 = vpop.f32.mrb[0].mxu0
      %919 = vmatprep.mubr.bf16.mxu0 0
      %920 = vmatmul.mubr.bf16.gmra.mrb[0].mxu0 %v806
      %v921 = vpop.f32.mrb[0].mxu0
      %v922 = vadd.f32 %v857, %v921
      %v923 = vpop.f32.mrb[0].mxu0
      %v924 = vpop.f32.mrb[0].mxu0
      %v925 = vadd.f32 %v860, %v924
      %v926 = vpop.f32.mrb[0].mxu0
      %927 = vmatprep.mubr.bf16.mxu0 0
      %928 = vmatmul.mubr.bf16.gmra.mrb[0].mxu0 %v809
      %v929 = vpop.f32.mrb[0].mxu0
      %v930 = vadd.f32 %v865, %v929
      %v931 = vpop.f32.mrb[0].mxu0
      %v932 = vpop.f32.mrb[0].mxu0
      %v933 = vadd.f32 %v868, %v932
      %v934 = vpop.f32.mrb[0].mxu0
      %935 = vmatprep.mubr.bf16.mxu0 0
      %936 = vmatmul.mubr.bf16.gmra.mrb[0].mxu0 %v812
      %v937 = vpop.f32.mrb[0].mxu0
      %v938 = vadd.f32 %v873, %v937
      %v939 = vpop.f32.mrb[0].mxu0
      %v940 = vpop.f32.mrb[0].mxu0
      %v941 = vadd.f32 %v876, %v940
      %v942 = vpop.f32.mrb[0].mxu0
      %943 = vdwg.mxu0
      %v944 = vsel %vm483, %v914, 0.0
      %v945 = vsel %vm483, %v917, 0.0
      %v946 = vadd.f32 %v944, %v945
      %v947 = vsel %vm483, %v922, 0.0
      %v948 = vadd.f32 %v946, %v947
      %v949 = vsel %vm483, %v925, 0.0
      %v950 = vadd.f32 %v948, %v949
      %v951 = vsel %vm483, %v930, 0.0
      %v952 = vadd.f32 %v950, %v951
      %v953 = vsel %vm483, %v933, 0.0
      %v954 = vadd.f32 %v952, %v953
      %v955 = vsel %vm483, %v938, 0.0
      %v956 = vadd.f32 %v954, %v955
      %v957 = vsel %vm483, %v941, 0.0
      %v958 = vadd.f32 %v956, %v957
      %v959 = vrot.slane %v958, 4
      %v960 = vadd.f32 %v958, %v959
      %v961 = vrot.slane %v960, 2
      %v962 = vadd.f32 %v960, %v961
      %v963 = vrot.slane %v962, 1
      %v964 = vadd.f32 %v962, %v963
      %v965 = vmul.f32 %v914, %v914
      %v966 = vmul.f32 %v917, %v917
      %v967 = vmul.f32 %v922, %v922
      %v968 = vmul.f32 %v925, %v925
      %v969 = vmul.f32 %v930, %v930
      %v970 = vmul.f32 %v933, %v933
      %v971 = vmul.f32 %v938, %v938
      %v972 = vmul.f32 %v941, %v941
      %v973 = vsel %vm483, %v965, 0.0
      %v974 = vsel %vm483, %v966, 0.0
      %v975 = vadd.f32 %v973, %v974
      %v976 = vsel %vm483, %v967, 0.0
      %v977 = vadd.f32 %v975, %v976
      %v978 = vsel %vm483, %v968, 0.0
      %v979 = vadd.f32 %v977, %v978
      %v980 = vsel %vm483, %v969, 0.0
      %v981 = vadd.f32 %v979, %v980
      %v982 = vsel %vm483, %v970, 0.0
      %v983 = vadd.f32 %v981, %v982
      %v984 = vsel %vm483, %v971, 0.0
      %v985 = vadd.f32 %v983, %v984
      %v986 = vsel %vm483, %v972, 0.0
      %v987 = vadd.f32 %v985, %v986
      %v988 = vrot.slane %v987, 4
      %v989 = vadd.f32 %v987, %v988
      %v990 = vrot.slane %v989, 2
      %v991 = vadd.f32 %v989, %v990
      %v992 = vrot.slane %v991, 1
      %v993 = vadd.f32 %v991, %v992
      %vm994 = vcmask 1040384
      %v995 = vsel %vm994, %v964, %v993
      %vm996 = vcmask 254976
      %997 = vst.msk [vmem:[%s226] sm:$0x3] %vm996, %v995
      %998 = vst.msk [vmem:[%s218] sm:$0xff] %vm483, %v914
      %999 = vst.msk [vmem:[%s218 + $0x8] sm:$0xff] %vm483, %v917
      %1000 = vst.msk [vmem:[%s218 + $0x10] sm:$0xff] %vm483, %v922
      %1001 = vst.msk [vmem:[%s218 + $0x18] sm:$0xff] %vm483, %v925
      %1002 = vst.msk [vmem:[%s218 + $0x20] sm:$0xff] %vm483, %v930
      %1003 = vst.msk [vmem:[%s218 + $0x28] sm:$0xff] %vm483, %v933
      %1004 = vst.msk [vmem:[%s218 + $0x30] sm:$0xff] %vm483, %v938
      %1005 = vst.msk [vmem:[%s218 + $0x38] sm:$0xff] %vm483, %v941
      %s1006 = smul.u32 8, %s20
      %p1007 = scmp.lt.s32.totalorder %s19, 1
      %s1008 = scalar_select %p1007, %s19, 1
      %p1009 = scmp.lt.s32.totalorder %s1006, 7
      %s1010 = scalar_select %p1009, %s1006, 7
      %s1011 = smul.addr %s1008, 8
      %s1012 = sadd.s32 %s1010, %s1011
      %s1013 = smul.addr %s1012, 8
      %s1014 = scalar_lea.vmem %s2, %s1013
      %p1015 = scmp.lt.s32.totalorder %s19, 1
      %s1016 = scalar_select %p1015, %s19, 1
      %p1017 = scmp.lt.s32.totalorder %s20, 0
      %s1018 = scalar_select %p1017, %s20, 0
      %s1019 = sadd.s32 %s1018, %s1016
      %s1020 = smul.addr %s1019, 2
      %s1021 = scalar_lea.vmem %s3, %s1020
      // Predicated region
      $region29: #{unet_struc_forward.21} parent=27 // pred_check
        %p1022 = pneg %p96
      $region30: #{unet_struc_forward.21} parent=27 // pred_check_branch
        %1024 = sbr.rel (%p1022) target = $region32
      $region31: #{unet_struc_forward.21} parent=27 // pred_region
        %s1025 = smul.u32 8, %s20
      $region32: #{unet_struc_forward.21} parent=27 // pred_fallthru
        _
      // Predicated region
      $region33: #{unet_struc_forward.21} parent=27 // pred_check
        %p1026 = pneg %p124
      $region34: #{unet_struc_forward.21} parent=27 // pred_check_branch
        %1028 = sbr.rel (%p1026) target = $region36
      $region35: #{unet_struc_forward.21} parent=27 // pred_region
        _
      $region36: #{unet_struc_forward.21} parent=27 // pred_fallthru
        _
    $region28: #{unet_struc_forward.21} parent=5 // pred_fallthru
      _
    %p1029 = scmp.le.s32.totalorder 2, %s10
    // Predicated region
    $region37: #{unet_struc_forward.21} parent=5 // pred_check
      %p1030 = pneg %p1029
    $region38: #{unet_struc_forward.21} parent=5 // pred_check_branch
      %1032 = sbr.rel (%p1030) target = $region40
    $region39: #{unet_struc_forward.21} parent=5 // pred_region
      %s1033 = ssub.s32 %s10, 2
      // Predicated region
      $region41: #{unet_struc_forward.21} parent=39 // pred_check
        %p1034 = pneg %p102
      $region42: #{unet_struc_forward.21} parent=39 // pred_check_branch
        %1036 = sbr.rel (%p1034) target = $region44
      $region43: #{unet_struc_forward.21} parent=39 // pred_region
        %s1037 = smul.u32 8, %s22
        %p1038 = scmp.lt.s32.totalorder %s21, 1
        %s1039 = scalar_select %p1038, %s21, 1
        %p1040 = scmp.lt.s32.totalorder %s1037, 7
        %s1041 = scalar_select %p1040, %s1037, 7
        %s1042 = smul.addr %s1039, 8
        %s1043 = sadd.s32 %s1041, %s1042
        %s1044 = smul.addr %s1043, 8
        %s1045 = scalar_lea.vmem %s2, %s1044
      $region44: #{unet_struc_forward.21} parent=39 // pred_fallthru
        _
      // Predicated region
      $region45: #{unet_struc_forward.21} parent=39 // pred_check
        %p1046 = pneg %p130
      $region46: #{unet_struc_forward.21} parent=39 // pred_check_branch
        %1048 = sbr.rel (%p1046) target = $region48
      $region47: #{unet_struc_forward.21} parent=39 // pred_region
        %p1049 = scmp.lt.s32.totalorder %s21, 1
        %s1050 = scalar_select %p1049, %s21, 1
        %p1051 = scmp.lt.s32.totalorder %s22, 0
        %s1052 = scalar_select %p1051, %s22, 0
        %s1053 = sadd.s32 %s1052, %s1050
        %s1054 = smul.addr %s1053, 2
        %s1055 = scalar_lea.vmem %s3, %s1054
      $region48: #{unet_struc_forward.21} parent=39 // pred_fallthru
        _
    $region40: #{unet_struc_forward.21} parent=5 // pred_fallthru
      _
  $region6: #{unet_struc_forward.21} parent=0 // loop_footer
    %s14 = sadd.s32 1, %s10
  $region7: #{unet_struc_forward.21} parent=0 // loop_footer_branch
    %9 = sbr.rel target = $region3
  $region8: #{unet_struc_forward.21} parent=0 // loop_exit
    _

// kernel: unet_struc_forward.22
$region0: #{unet_struc_forward.22}
  #allocation0 [shape = 'u32[]', space=smem, size = 0x4, offset = 0x4, fixed_abs, tag = 'smem constant byte address 0x4 - core index']
  #allocation1 [shape = 'u32[144,128]{1,0:T(1,128)}', space=vmem, size = 0x12000, scoped, tag = 'internal scratch']
  %s0 = inlined_call_operand.vmem [shape: f32[2,1,10,8,32], index: 0, kind: input, shape index: {}]
  %s1 = inlined_call_operand.vmem [shape: f32[1,1,32], index: 1, kind: input, shape index: {}]
  %s2 = inlined_call_operand.vmem [shape: f32[1,1,32], index: 2, kind: input, shape index: {}]
  %s3 = inlined_call_operand.vmem [shape: bf16[2,8,2,8,2,32], index: 3, kind: output, shape index: {}]
  %s4 = sld [smem:[#allocation0]]
  $region45: #{unet_struc_forward.22} parent=0
    _
  %s6 = ssub.s32 1, %s4
  %s7 = scalar_select 0, %s6, %s4
  loop: start=0, step=1, limit=4
  $region2: #{unet_struc_forward.22} parent=0 // loop_pre_header
    _
  $region3: #{unet_struc_forward.22} parent=0 // loop_header
    %s9 = sphi 0, %s13
    %p10 = scmp.ge.s32.totalorder %s9, 4
    %s16 = sphi 0, %s28
    %s17 = sphi 0, %s24
    %s18 = sphi 0, %s16
    %s19 = sphi 0, %s17
    %s20 = sphi 0, %s18
    %s21 = sphi 0, %s19
    %s33 = sphi 0, %s35
    %s36 = sphi 0, %s33
    %s37 = sphi 0, %s36
    %s53 = sphi 0, %s37
    %s57 = sphi 0, %s57
    %s59 = sphi 0, %s57
    %s60 = sphi 0, %s59
    %s74 = sphi 0, %s60
    %s78 = sphi 0, %s78
    %s80 = sphi 0, %s78
    %s81 = sphi 0, %s80
    %s95 = sphi 0, %s81
    %s103 = sphi 0, %s105
    %s106 = sphi 0, %s103
    %s107 = sphi 0, %s106
    %s123 = sphi 0, %s107
  $region4: #{unet_struc_forward.22} parent=0 // loop_header_branch
    %12 = sbr.rel (%p10) target = $region8
  $region5: #{unet_struc_forward.22} parent=0 // loop_body
    %s14 = ssub.s32 %s9, 1
    %s15 = ssub.s32 %s9, 2
    %s22 = sadd.s32 1, %s17
    %p23 = scmp.ge.s32.totalorder %s22, 1
    %s24 = scalar_select %p23, 0, %s22
    %s25 = sadd.s32 1, %s16
    %s26 = scalar_select %p23, %s25, %s16
    %p27 = scmp.ge.s32.totalorder %s26, 2
    %s28 = scalar_select %p27, 0, %s26
    %s29 = ssub.s32 %s16, %s28
    %s30 = ssub.s32 %s17, %s24
    %s31 = sor.u32 %s29, %s30
    %p32 = scmp.eq.s32.totalorder %s31, 0
    %s34 = sadd.s32 %s33, 1
    %s35 = scalar_select %p32, %s33, %s34
    %p38 = pneg %p32
    %p39 = scmp.eq.s32.totalorder %s9, 1
    %p40 = por %p38, %p39
    %p41 = scmp.ne.s32.totalorder %s33, %s36
    %p42 = scmp.eq.s32.totalorder %s9, 0
    %p43 = por %p41, %p42
    %p44 = scmp.ne.s32.totalorder %s33, %s36
    %p45 = scmp.eq.s32.totalorder %s14, 1
    %p46 = por %p44, %p45
    %p47 = scmp.ne.s32.totalorder %s36, %s37
    %p48 = scmp.eq.s32.totalorder %s14, 0
    %p49 = por %p47, %p48
    %p50 = scmp.ne.s32.totalorder %s36, %s37
    %p51 = scmp.eq.s32.totalorder %s15, 1
    %p52 = por %p50, %p51
    %p54 = scmp.ne.s32.totalorder %s37, %s53
    %p55 = scmp.eq.s32.totalorder %s15, 0
    %p56 = por %p54, %p55
    %s58 = sadd.s32 %s57, 1
    %p61 = scmp.eq.s32.totalorder %s9, 1
    %p62 = scmp.ne.s32.totalorder %s57, %s59
    %p63 = scmp.eq.s32.totalorder %s9, 0
    %p64 = por %p62, %p63
    %p65 = scmp.ne.s32.totalorder %s57, %s59
    %p66 = scmp.eq.s32.totalorder %s14, 1
    %p67 = por %p65, %p66
    %p68 = scmp.ne.s32.totalorder %s59, %s60
    %p69 = scmp.eq.s32.totalorder %s14, 0
    %p70 = por %p68, %p69
    %p71 = scmp.ne.s32.totalorder %s59, %s60
    %p72 = scmp.eq.s32.totalorder %s15, 1
    %p73 = por %p71, %p72
    %p75 = scmp.ne.s32.totalorder %s60, %s74
    %p76 = scmp.eq.s32.totalorder %s15, 0
    %p77 = por %p75, %p76
    %s79 = sadd.s32 %s78, 1
    %p82 = scmp.eq.s32.totalorder %s9, 1
    %p83 = scmp.ne.s32.totalorder %s78, %s80
    %p84 = scmp.eq.s32.totalorder %s9, 0
    %p85 = por %p83, %p84
    %p86 = scmp.ne.s32.totalorder %s78, %s80
    %p87 = scmp.eq.s32.totalorder %s14, 1
    %p88 = por %p86, %p87
    %p89 = scmp.ne.s32.totalorder %s80, %s81
    %p90 = scmp.eq.s32.totalorder %s14, 0
    %p91 = por %p89, %p90
    %p92 = scmp.ne.s32.totalorder %s80, %s81
    %p93 = scmp.eq.s32.totalorder %s15, 1
    %p94 = por %p92, %p93
    %p96 = scmp.ne.s32.totalorder %s81, %s95
    %p97 = scmp.eq.s32.totalorder %s15, 0
    %p98 = por %p96, %p97
    %s99 = ssub.s32 %s16, %s28
    %s100 = ssub.s32 %s17, %s24
    %s101 = sor.u32 %s99, %s100
    %p102 = scmp.eq.s32.totalorder %s101, 0
    %s104 = sadd.s32 %s103, 1
    %s105 = scalar_select %p102, %s103, %s104
    %p108 = pneg %p102
    %p109 = scmp.eq.s32.totalorder %s9, 1
    %p110 = por %p108, %p109
    %p111 = scmp.ne.s32.totalorder %s103, %s106
    %p112 = scmp.eq.s32.totalorder %s9, 0
    %p113 = por %p111, %p112
    %p114 = scmp.ne.s32.totalorder %s103, %s106
    %p115 = scmp.eq.s32.totalorder %s14, 1
    %p116 = por %p114, %p115
    %p117 = scmp.ne.s32.totalorder %s106, %s107
    %p118 = scmp.eq.s32.totalorder %s14, 0
    %p119 = por %p117, %p118
    %p120 = scmp.ne.s32.totalorder %s106, %s107
    %p121 = scmp.eq.s32.totalorder %s15, 1
    %p122 = por %p120, %p121
    %p124 = scmp.ne.s32.totalorder %s107, %s123
    %p125 = scmp.eq.s32.totalorder %s15, 0
    %p126 = por %p124, %p125
    %p127 = scmp.le.s32.totalorder 1, %s9
    %p128 = scmp.lt.s32.totalorder %s9, 3
    %p129 = pnand %p127, %p128
    %p130 = pneg %p129
    // Predicated region
    $region9: #{unet_struc_forward.22} parent=5 // pred_check
      _
    $region10: #{unet_struc_forward.22} parent=5 // pred_check_branch
      %132 = sbr.rel (%p129) target = $region12
    $region11: #{unet_struc_forward.22} parent=5 // pred_region
      %s133 = ssub.s32 %s9, 1
      // Predicated region
      $region13: #{unet_struc_forward.22} parent=11 // pred_check
        %p134 = pneg %p70
      $region14: #{unet_struc_forward.22} parent=11 // pred_check_branch
        %136 = sbr.rel (%p134) target = $region16
      $region15: #{unet_struc_forward.22} parent=11 // pred_region
        _
      $region16: #{unet_struc_forward.22} parent=11 // pred_fallthru
        _
      // Predicated region
      $region17: #{unet_struc_forward.22} parent=11 // pred_check
        %p137 = pneg %p91
      $region18: #{unet_struc_forward.22} parent=11 // pred_check_branch
        %139 = sbr.rel (%p137) target = $region20
      $region19: #{unet_struc_forward.22} parent=11 // pred_region
        _
      $region20: #{unet_struc_forward.22} parent=11 // pred_fallthru
        _
    $region12: #{unet_struc_forward.22} parent=5 // pred_fallthru
      _
    %p140 = scmp.lt.s32.totalorder %s9, 2
    // Predicated region
    $region21: #{unet_struc_forward.22} parent=5 // pred_check
      %p141 = pneg %p140
    $region22: #{unet_struc_forward.22} parent=5 // pred_check_branch
      %143 = sbr.rel (%p141) target = $region24
    $region23: #{unet_struc_forward.22} parent=5 // pred_region
      // Predicated region
      $region25: #{unet_struc_forward.22} parent=23 // pred_check
        %p144 = pneg %p43
      $region26: #{unet_struc_forward.22} parent=23 // pred_check_branch
        %146 = sbr.rel (%p144) target = $region28
      $region27: #{unet_struc_forward.22} parent=23 // pred_region
        %p147 = scmp.lt.s32.totalorder %s16, 1
        %s148 = scalar_select %p147, %s16, 1
        %p149 = scmp.lt.s32.totalorder %s17, 0
        %s150 = scalar_select %p149, %s17, 0
        %s151 = smul.addr %s150, 10
        %s152 = smul.addr %s148, 10
        %s153 = sadd.s32 %s151, %s152
        %s154 = smul.addr %s153, 8
        %s155 = scalar_lea.vmem %s0, %s154
      $region28: #{unet_struc_forward.22} parent=23 // pred_fallthru
        _
    $region24: #{unet_struc_forward.22} parent=5 // pred_fallthru
      _
    %p156 = scmp.le.s32.totalorder 1, %s9
    %p157 = scmp.lt.s32.totalorder %s9, 3
    %p158 = pnand %p156, %p157
    %p159 = pneg %p158
    // Predicated region
    $region29: #{unet_struc_forward.22} parent=5 // pred_check
      _
    $region30: #{unet_struc_forward.22} parent=5 // pred_check_branch
      %161 = sbr.rel (%p158) target = $region32
    $region31: #{unet_struc_forward.22} parent=5 // pred_region
      %s162 = ssub.s32 %s9, 1
      %p163 = scmp.lt.s32.totalorder %s18, 1
      %s164 = scalar_select %p163, %s18, 1
      %p165 = scmp.lt.s32.totalorder %s19, 0
      %s166 = scalar_select %p165, %s19, 0
      %s167 = smul.addr %s166, 10
      %s168 = smul.addr %s164, 10
      %s169 = sadd.s32 %s167, %s168
      %s170 = smul.addr %s169, 8
      %s171 = scalar_lea.vmem %s0, %s170
      %p172 = pneg %p49
      %p173 = pneg %p46
      %p174 = pneg %p70
      %p175 = pneg %p67
      %p176 = pneg %p91
      %p177 = pneg %p88
      %p178 = pneg %p119
      %p179 = pneg %p116
      %s180 = smul.u32 8, %s19
      %p181 = scmp.lt.s32.totalorder %s18, 1
      %s182 = scalar_select %p181, %s18, 1
      %p183 = scmp.lt.s32.totalorder %s180, 7
      %s184 = scalar_select %p183, %s180, 7
      %s185 = smul.addr %s184, 16
      %s186 = smul.addr %s182, 128
      %s187 = sadd.s32 %s185, %s186
      %s188 = scalar_lea.vmem %s3, %s187
      %p189 = scmp.lt.s32.totalorder %s18, 1
      %s190 = scalar_select %p189, %s18, 1
      %p191 = scmp.lt.s32.totalorder %s19, 0
      %s192 = scalar_select %p191, %s19, 0
      %s193 = smul.addr %s192, 10
      %s194 = smul.addr %s190, 10
      %s195 = sadd.s32 %s193, %s194
      %s196 = smul.addr %s195, 8
      %s197 = scalar_lea.vmem %s0, %s196
      %s198 = smul.u32 8, %s19
      %p199 = scmp.lt.s32.totalorder %s18, 1
      %s200 = scalar_select %p199, %s18, 1
      %p201 = scmp.lt.s32.totalorder %s198, 7
      %s202 = scalar_select %p201, %s198, 7
      %s203 = smul.addr %s202, 16
      %s204 = smul.addr %s200, 128
      %s205 = sadd.s32 %s203, %s204
      %s206 = scalar_lea.vmem %s3, %s205
      %s207 = smul.u32 8, %s19
      %v208 = vld [vmem:[%s197] sm:$0xff]
      %v209 = vld [vmem:[%s197 + $0x8] sm:$0xff]
      %v210 = vld [vmem:[%s197 + $0x10] sm:$0xff]
      %v211 = vld [vmem:[%s197 + $0x18] sm:$0xff]
      %v212 = vld [vmem:[%s197 + $0x20] sm:$0xff]
      %v213 = vld [vmem:[%s197 + $0x28] sm:$0xff]
      %v214 = vld [vmem:[%s197 + $0x30] sm:$0xff]
      %v215 = vld [vmem:[%s197 + $0x38] sm:$0xff]
      %v216 = vld [vmem:[%s197 + $0x40] sm:$0xff]
      %v217 = vld [vmem:[%s197 + $0x48] sm:$0xff]
      %v218 = vld [vmem:[%s1] sm:$0x1]
      %v220 = vlaneseq
      %v221 = vshrl.u32 %v220, 7
      %v222 = vsub.s32 0, %v221
      %v223 = vrot.slane %v218, %v222
      %v225 = vmul.f32 %v208, %v223
      %v226 = vmul.f32 %v209, %v223
      %v227 = vmul.f32 %v210, %v223
      %v228 = vmul.f32 %v211, %v223
      %v229 = vmul.f32 %v212, %v223
      %v230 = vmul.f32 %v213, %v223
      %v231 = vmul.f32 %v214, %v223
      %v232 = vmul.f32 %v215, %v223
      %v233 = vmul.f32 %v216, %v223
      %v234 = vmul.f32 %v217, %v223
      %v235 = vld [vmem:[%s2] sm:$0x1]
      %v237 = vlaneseq
      %v238 = vshrl.u32 %v237, 7
      %v239 = vsub.s32 0, %v238
      %v240 = vrot.slane %v235, %v239
      %v242 = vadd.f32 %v225, %v240
      %v243 = vadd.f32 %v226, %v240
      %v244 = vadd.f32 %v227, %v240
      %v245 = vadd.f32 %v228, %v240
      %v246 = vadd.f32 %v229, %v240
      %v247 = vadd.f32 %v230, %v240
      %v248 = vadd.f32 %v231, %v240
      %v249 = vadd.f32 %v232, %v240
      %v250 = vadd.f32 %v233, %v240
      %v251 = vadd.f32 %v234, %v240
      %v252 = vmax.f32 %v242, 0.0
      %v253 = vmax.f32 %v243, 0.0
      %v254 = vmax.f32 %v244, 0.0
      %v255 = vmax.f32 %v245, 0.0
      %v256 = vmax.f32 %v246, 0.0
      %v257 = vmax.f32 %v247, 0.0
      %v258 = vmax.f32 %v248, 0.0
      %v259 = vmax.f32 %v249, 0.0
      %v260 = vmax.f32 %v250, 0.0
      %v261 = vmax.f32 %v251, 0.0
      %v262 = vmul.f32 %v253, 0.75
      %v263 = vmul.f32 %v254, 0.75
      %v264 = vmul.f32 %v255, 0.75
      %v265 = vmul.f32 %v256, 0.75
      %v266 = vmul.f32 %v257, 0.75
      %v267 = vmul.f32 %v258, 0.75
      %v268 = vmul.f32 %v259, 0.75
      %v269 = vmul.f32 %v260, 0.75
      %v270 = vmul.f32 %v252, 0.25
      %v271 = vmul.f32 %v253, 0.25
      %v272 = vmul.f32 %v254, 0.25
      %v273 = vmul.f32 %v255, 0.25
      %v274 = vmul.f32 %v256, 0.25
      %v275 = vmul.f32 %v257, 0.25
      %v276 = vmul.f32 %v258, 0.25
      %v277 = vmul.f32 %v259, 0.25
      %v278 = vadd.f32 %v262, %v270
      %v279 = vadd.f32 %v263, %v271
      %v280 = vadd.f32 %v264, %v272
      %v281 = vadd.f32 %v265, %v273
      %v282 = vadd.f32 %v266, %v274
      %v283 = vadd.f32 %v267, %v275
      %v284 = vadd.f32 %v268, %v276
      %v285 = vadd.f32 %v269, %v277
      %v286 = vmul.f32 %v260, 0.25
      %v287 = vmul.f32 %v261, 0.25
      %v288 = vadd.f32 %v262, %v272
      %v289 = vadd.f32 %v263, %v273
      %v290 = vadd.f32 %v264, %v274
      %v291 = vadd.f32 %v265, %v275
      %v292 = vadd.f32 %v266, %v276
      %v293 = vadd.f32 %v267, %v277
      %v294 = vadd.f32 %v268, %v286
      %v295 = vadd.f32 %v269, %v287
      %v312 = vrot.slane %v278, 7
      %v313 = vrot.slane %v288, 7
      %v314 = vrot.slane %v279, 7
      %v315 = vrot.slane %v289, 7
      %v316 = vrot.slane %v280, 7
      %v317 = vrot.slane %v290, 7
      %v318 = vrot.slane %v281, 7
      %v319 = vrot.slane %v291, 7
      %v320 = vrot.slane %v282, 7
      %v321 = vrot.slane %v292, 7
      %v322 = vrot.slane %v283, 7
      %v323 = vrot.slane %v293, 7
      %v324 = vrot.slane %v284, 7
      %v325 = vrot.slane %v294, 7
      %v326 = vrot.slane %v285, 7
      %v327 = vrot.slane %v295, 7
      %vm344 = vcmask 1040384
      %v345 = vsel %vm344, %v278, %v312
      %v346 = vsel %vm344, %v288, %v313
      %v347 = vsel %vm344, %v279, %v314
      %v348 = vsel %vm344, %v289, %v315
      %v349 = vsel %vm344, %v280, %v316
      %v350 = vsel %vm344, %v290, %v317
      %v351 = vsel %vm344, %v281, %v318
      %v352 = vsel %vm344, %v291, %v319
      %v353 = vsel %vm344, %v282, %v320
      %v354 = vsel %vm344, %v292, %v321
      %v355 = vsel %vm344, %v283, %v322
      %v356 = vsel %vm344, %v293, %v323
      %v357 = vsel %vm344, %v284, %v324
      %v358 = vsel %vm344, %v294, %v325
      %v359 = vsel %vm344, %v285, %v326
      %v360 = vsel %vm344, %v295, %v327
      %v361 = vrot.slane %v278, 1
      %v362 = vrot.slane %v288, 1
      %v363 = vrot.slane %v279, 1
      %v364 = vrot.slane %v289, 1
      %v365 = vrot.slane %v280, 1
      %v366 = vrot.slane %v290, 1
      %v367 = vrot.slane %v281, 1
      %v368 = vrot.slane %v291, 1
      %v369 = vrot.slane %v282, 1
      %v370 = vrot.slane %v292, 1
      %v371 = vrot.slane %v283, 1
      %v372 = vrot.slane %v293, 1
      %v373 = vrot.slane %v284, 1
      %v374 = vrot.slane %v294, 1
      %v375 = vrot.slane %v285, 1
      %v376 = vrot.slane %v295, 1
      %vm393 = vcmask 1046528
      %v394 = vsel %vm393, %v361, %v278
      %v395 = vsel %vm393, %v362, %v288
      %v396 = vsel %vm393, %v363, %v279
      %v397 = vsel %vm393, %v364, %v289
      %v398 = vsel %vm393, %v365, %v280
      %v399 = vsel %vm393, %v366, %v290
      %v400 = vsel %vm393, %v367, %v281
      %v401 = vsel %vm393, %v368, %v291
      %v402 = vsel %vm393, %v369, %v282
      %v403 = vsel %vm393, %v370, %v292
      %v404 = vsel %vm393, %v371, %v283
      %v405 = vsel %vm393, %v372, %v293
      %v406 = vsel %vm393, %v373, %v284
      %v407 = vsel %vm393, %v374, %v294
      %v408 = vsel %vm393, %v375, %v285
      %v409 = vsel %vm393, %v376, %v295
      %v410 = vmul.f32 %v278, 0.75
      %v411 = vmul.f32 %v288, 0.75
      %v412 = vmul.f32 %v279, 0.75
      %v413 = vmul.f32 %v289, 0.75
      %v414 = vmul.f32 %v280, 0.75
      %v415 = vmul.f32 %v290, 0.75
      %v416 = vmul.f32 %v281, 0.75
      %v417 = vmul.f32 %v291, 0.75
      %v418 = vmul.f32 %v282, 0.75
      %v419 = vmul.f32 %v292, 0.75
      %v420 = vmul.f32 %v283, 0.75
      %v421 = vmul.f32 %v293, 0.75
      %v422 = vmul.f32 %v284, 0.75
      %v423 = vmul.f32 %v294, 0.75
      %v424 = vmul.f32 %v285, 0.75
      %v425 = vmul.f32 %v295, 0.75
      %v426 = vmul.f32 %v345, 0.25
      %v427 = vmul.f32 %v346, 0.25
      %v428 = vmul.f32 %v347, 0.25
      %v429 = vmul.f32 %v348, 0.25
      %v430 = vmul.f32 %v349, 0.25
      %v431 = vmul.f32 %v350, 0.25
      %v432 = vmul.f32 %v351, 0.25
      %v433 = vmul.f32 %v352, 0.25
      %v434 = vmul.f32 %v353, 0.25
      %v435 = vmul.f32 %v354, 0.25
      %v436 = vmul.f32 %v355, 0.25
      %v437 = vmul.f32 %v356, 0.25
      %v438 = vmul.f32 %v357, 0.25
      %v439 = vmul.f32 %v358, 0.25
      %v440 = vmul.f32 %v359, 0.25
      %v441 = vmul.f32 %v360, 0.25
      %v442 = vadd.f32 %v410, %v426
      %v443 = vadd.f32 %v411, %v427
      %v444 = vadd.f32 %v412, %v428
      %v445 = vadd.f32 %v413, %v429
      %v446 = vadd.f32 %v414, %v430
      %v447 = vadd.f32 %v415, %v431
      %v448 = vadd.f32 %v416, %v432
      %v449 = vadd.f32 %v417, %v433
      %v450 = vadd.f32 %v418, %v434
      %v451 = vadd.f32 %v419, %v435
      %v452 = vadd.f32 %v420, %v436
      %v453 = vadd.f32 %v421, %v437
      %v454 = vadd.f32 %v422, %v438
      %v455 = vadd.f32 %v423, %v439
      %v456 = vadd.f32 %v424, %v440
      %v457 = vadd.f32 %v425, %v441
      %v458 = vmul.f32 %v394, 0.25
      %v459 = vmul.f32 %v395, 0.25
      %v460 = vmul.f32 %v396, 0.25
      %v461 = vmul.f32 %v397, 0.25
      %v462 = vmul.f32 %v398, 0.25
      %v463 = vmul.f32 %v399, 0.25
      %v464 = vmul.f32 %v400, 0.25
      %v465 = vmul.f32 %v401, 0.25
      %v466 = vmul.f32 %v402, 0.25
      %v467 = vmul.f32 %v403, 0.25
      %v468 = vmul.f32 %v404, 0.25
      %v469 = vmul.f32 %v405, 0.25
      %v470 = vmul.f32 %v406, 0.25
      %v471 = vmul.f32 %v407, 0.25
      %v472 = vmul.f32 %v408, 0.25
      %v473 = vmul.f32 %v409, 0.25
      %v474 = vadd.f32 %v410, %v458
      %v475 = vadd.f32 %v411, %v459
      %v476 = vadd.f32 %v412, %v460
      %v477 = vadd.f32 %v413, %v461
      %v478 = vadd.f32 %v414, %v462
      %v479 = vadd.f32 %v415, %v463
      %v480 = vadd.f32 %v416, %v464
      %v481 = vadd.f32 %v417, %v465
      %v482 = vadd.f32 %v418, %v466
      %v483 = vadd.f32 %v419, %v467
      %v484 = vadd.f32 %v420, %v468
      %v485 = vadd.f32 %v421, %v469
      %v486 = vadd.f32 %v422, %v470
      %v487 = vadd.f32 %v423, %v471
      %v488 = vadd.f32 %v424, %v472
      %v489 = vadd.f32 %v425, %v473
      %v506 = vcombine.high %v442, %v442
      %v508 = vunpack.c.l.s4 1966171168
      %v509 = vunpack.c.0.s8 %v508
      %v510 = vlaneseq
      %v511 = vshrl.u32 %v510, 7
      %v512 = vsub.s32 %v509, %v511
      %v513 = vrot.slane %v442, %v512
      %v515 = vunpack.c.l.s4 1966171168
      %v516 = vunpack.c.0.s8 %v515
      %v517 = vlaneseq
      %v518 = vshrl.u32 %v517, 7
      %v519 = vsub.s32 %v516, %v518
      %v520 = vrot.slane %v506, %v519
      %v521 = vcombine.high %v513, %v513
      %v522 = vcombine.high %v520, %v520
      %v524 = vunpack.c.l.s4 1966171168
      %v525 = vunpack.c.0.s8 %v524
      %v526 = vlaneseq
      %v527 = vshrl.u32 %v526, 7
      %v528 = vsub.s32 %v525, %v527
      %v529 = vrot.slane %v513, %v528
      %v531 = vunpack.c.l.s4 1966171168
      %v532 = vunpack.c.0.s8 %v531
      %v533 = vlaneseq
      %v534 = vshrl.u32 %v533, 7
      %v535 = vsub.s32 %v532, %v534
      %v536 = vrot.slane %v520, %v535
      %v538 = vunpack.c.l.s4 1966171168
      %v539 = vunpack.c.0.s8 %v538
      %v540 = vlaneseq
      %v541 = vshrl.u32 %v540, 7
      %v542 = vsub.s32 %v539, %v541
      %v543 = vrot.slane %v521, %v542
      %v545 = vunpack.c.l.s4 1966171168
      %v546 = vunpack.c.0.s8 %v545
      %v547 = vlaneseq
      %v548 = vshrl.u32 %v547, 7
      %v549 = vsub.s32 %v546, %v548
      %v550 = vrot.slane %v522, %v549
      %v551 = vcombine.high %v529, %v529
      %v552 = vcombine.high %v536, %v536
      %v553 = vcombine.high %v543, %v543
      %v554 = vcombine.high %v550, %v550
      %v555 = vcombine.high %v443, %v443
      %v557 = vunpack.c.l.s4 1966171168
      %v558 = vunpack.c.0.s8 %v557
      %v559 = vlaneseq
      %v560 = vshrl.u32 %v559, 7
      %v561 = vsub.s32 %v558, %v560
      %v562 = vrot.slane %v443, %v561
      %v564 = vunpack.c.l.s4 1966171168
      %v565 = vunpack.c.0.s8 %v564
      %v566 = vlaneseq
      %v567 = vshrl.u32 %v566, 7
      %v568 = vsub.s32 %v565, %v567
      %v569 = vrot.slane %v555, %v568
      %v570 = vcombine.high %v562, %v562
      %v571 = vcombine.high %v569, %v569
      %v573 = vunpack.c.l.s4 1966171168
      %v574 = vunpack.c.0.s8 %v573
      %v575 = vlaneseq
      %v576 = vshrl.u32 %v575, 7
      %v577 = vsub.s32 %v574, %v576
      %v578 = vrot.slane %v562, %v577
      %v580 = vunpack.c.l.s4 1966171168
      %v581 = vunpack.c.0.s8 %v580
      %v582 = vlaneseq
      %v583 = vshrl.u32 %v582, 7
      %v584 = vsub.s32 %v581, %v583
      %v585 = vrot.slane %v569, %v584
      %v587 = vunpack.c.l.s4 1966171168
      %v588 = vunpack.c.0.s8 %v587
      %v589 = vlaneseq
      %v590 = vshrl.u32 %v589, 7
      %v591 = vsub.s32 %v588, %v590
      %v592 = vrot.slane %v570, %v591
      %v594 = vunpack.c.l.s4 1966171168
      %v595 = vunpack.c.0.s8 %v594
      %v596 = vlaneseq
      %v597 = vshrl.u32 %v596, 7
      %v598 = vsub.s32 %v595, %v597
      %v599 = vrot.slane %v571, %v598
      %v600 = vcombine.high %v578, %v578
      %v601 = vcombine.high %v585, %v585
      %v602 = vcombine.high %v592, %v592
      %v603 = vcombine.high %v599, %v599
      %v604 = vcombine.high %v444, %v444
      %v606 = vunpack.c.l.s4 1966171168
      %v607 = vunpack.c.0.s8 %v606
      %v608 = vlaneseq
      %v609 = vshrl.u32 %v608, 7
      %v610 = vsub.s32 %v607, %v609
      %v611 = vrot.slane %v444, %v610
      %v613 = vunpack.c.l.s4 1966171168
      %v614 = vunpack.c.0.s8 %v613
      %v615 = vlaneseq
      %v616 = vshrl.u32 %v615, 7
      %v617 = vsub.s32 %v614, %v616
      %v618 = vrot.slane %v604, %v617
      %v619 = vcombine.high %v611, %v611
      %v620 = vcombine.high %v618, %v618
      %v622 = vunpack.c.l.s4 1966171168
      %v623 = vunpack.c.0.s8 %v622
      %v624 = vlaneseq
      %v625 = vshrl.u32 %v624, 7
      %v626 = vsub.s32 %v623, %v625
      %v627 = vrot.slane %v611, %v626
      %v629 = vunpack.c.l.s4 1966171168
      %v630 = vunpack.c.0.s8 %v629
      %v631 = vlaneseq
      %v632 = vshrl.u32 %v631, 7
      %v633 = vsub.s32 %v630, %v632
      %v634 = vrot.slane %v618, %v633
      %v636 = vunpack.c.l.s4 1966171168
      %v637 = vunpack.c.0.s8 %v636
      %v638 = vlaneseq
      %v639 = vshrl.u32 %v638, 7
      %v640 = vsub.s32 %v637, %v639
      %v641 = vrot.slane %v619, %v640
      %v643 = vunpack.c.l.s4 1966171168
      %v644 = vunpack.c.0.s8 %v643
      %v645 = vlaneseq
      %v646 = vshrl.u32 %v645, 7
      %v647 = vsub.s32 %v644, %v646
      %v648 = vrot.slane %v620, %v647
      %v649 = vcombine.high %v627, %v627
      %v650 = vcombine.high %v634, %v634
      %v651 = vcombine.high %v641, %v641
      %v652 = vcombine.high %v648, %v648
      %v653 = vcombine.high %v445, %v445
      %v655 = vunpack.c.l.s4 1966171168
      %v656 = vunpack.c.0.s8 %v655
      %v657 = vlaneseq
      %v658 = vshrl.u32 %v657, 7
      %v659 = vsub.s32 %v656, %v658
      %v660 = vrot.slane %v445, %v659
      %v662 = vunpack.c.l.s4 1966171168
      %v663 = vunpack.c.0.s8 %v662
      %v664 = vlaneseq
      %v665 = vshrl.u32 %v664, 7
      %v666 = vsub.s32 %v663, %v665
      %v667 = vrot.slane %v653, %v666
      %v668 = vcombine.high %v660, %v660
      %v669 = vcombine.high %v667, %v667
      %v671 = vunpack.c.l.s4 1966171168
      %v672 = vunpack.c.0.s8 %v671
      %v673 = vlaneseq
      %v674 = vshrl.u32 %v673, 7
      %v675 = vsub.s32 %v672, %v674
      %v676 = vrot.slane %v660, %v675
      %v678 = vunpack.c.l.s4 1966171168
      %v679 = vunpack.c.0.s8 %v678
      %v680 = vlaneseq
      %v681 = vshrl.u32 %v680, 7
      %v682 = vsub.s32 %v679, %v681
      %v683 = vrot.slane %v667, %v682
      %v685 = vunpack.c.l.s4 1966171168
      %v686 = vunpack.c.0.s8 %v685
      %v687 = vlaneseq
      %v688 = vshrl.u32 %v687, 7
      %v689 = vsub.s32 %v686, %v688
      %v690 = vrot.slane %v668, %v689
      %v692 = vunpack.c.l.s4 1966171168
      %v693 = vunpack.c.0.s8 %v692
      %v694 = vlaneseq
      %v695 = vshrl.u32 %v694, 7
      %v696 = vsub.s32 %v693, %v695
      %v697 = vrot.slane %v669, %v696
      %v698 = vcombine.high %v676, %v676
      %v699 = vcombine.high %v683, %v683
      %v700 = vcombine.high %v690, %v690
      %v701 = vcombine.high %v697, %v697
      %v702 = vcombine.high %v446, %v446
      %v704 = vunpack.c.l.s4 1966171168
      %v705 = vunpack.c.0.s8 %v704
      %v706 = vlaneseq
      %v707 = vshrl.u32 %v706, 7
      %v708 = vsub.s32 %v705, %v707
      %v709 = vrot.slane %v446, %v708
      %v711 = vunpack.c.l.s4 1966171168
      %v712 = vunpack.c.0.s8 %v711
      %v713 = vlaneseq
      %v714 = vshrl.u32 %v713, 7
      %v715 = vsub.s32 %v712, %v714
      %v716 = vrot.slane %v702, %v715
      %v717 = vcombine.high %v709, %v709
      %v718 = vcombine.high %v716, %v716
      %v720 = vunpack.c.l.s4 1966171168
      %v721 = vunpack.c.0.s8 %v720
      %v722 = vlaneseq
      %v723 = vshrl.u32 %v722, 7
      %v724 = vsub.s32 %v721, %v723
      %v725 = vrot.slane %v709, %v724
      %v727 = vunpack.c.l.s4 1966171168
      %v728 = vunpack.c.0.s8 %v727
      %v729 = vlaneseq
      %v730 = vshrl.u32 %v729, 7
      %v731 = vsub.s32 %v728, %v730
      %v732 = vrot.slane %v716, %v731
      %v734 = vunpack.c.l.s4 1966171168
      %v735 = vunpack.c.0.s8 %v734
      %v736 = vlaneseq
      %v737 = vshrl.u32 %v736, 7
      %v738 = vsub.s32 %v735, %v737
      %v739 = vrot.slane %v717, %v738
      %v741 = vunpack.c.l.s4 1966171168
      %v742 = vunpack.c.0.s8 %v741
      %v743 = vlaneseq
      %v744 = vshrl.u32 %v743, 7
      %v745 = vsub.s32 %v742, %v744
      %v746 = vrot.slane %v718, %v745
      %v747 = vcombine.high %v725, %v725
      %v748 = vcombine.high %v732, %v732
      %v749 = vcombine.high %v739, %v739
      %v750 = vcombine.high %v746, %v746
      %v751 = vcombine.high %v447, %v447
      %v753 = vunpack.c.l.s4 1966171168
      %v754 = vunpack.c.0.s8 %v753
      %v755 = vlaneseq
      %v756 = vshrl.u32 %v755, 7
      %v757 = vsub.s32 %v754, %v756
      %v758 = vrot.slane %v447, %v757
      %v760 = vunpack.c.l.s4 1966171168
      %v761 = vunpack.c.0.s8 %v760
      %v762 = vlaneseq
      %v763 = vshrl.u32 %v762, 7
      %v764 = vsub.s32 %v761, %v763
      %v765 = vrot.slane %v751, %v764
      %v766 = vcombine.high %v758, %v758
      %v767 = vcombine.high %v765, %v765
      %v769 = vunpack.c.l.s4 1966171168
      %v770 = vunpack.c.0.s8 %v769
      %v771 = vlaneseq
      %v772 = vshrl.u32 %v771, 7
      %v773 = vsub.s32 %v770, %v772
      %v774 = vrot.slane %v758, %v773
      %v776 = vunpack.c.l.s4 1966171168
      %v777 = vunpack.c.0.s8 %v776
      %v778 = vlaneseq
      %v779 = vshrl.u32 %v778, 7
      %v780 = vsub.s32 %v777, %v779
      %v781 = vrot.slane %v765, %v780
      %v783 = vunpack.c.l.s4 1966171168
      %v784 = vunpack.c.0.s8 %v783
      %v785 = vlaneseq
      %v786 = vshrl.u32 %v785, 7
      %v787 = vsub.s32 %v784, %v786
      %v788 = vrot.slane %v766, %v787
      %v790 = vunpack.c.l.s4 1966171168
      %v791 = vunpack.c.0.s8 %v790
      %v792 = vlaneseq
      %v793 = vshrl.u32 %v792, 7
      %v794 = vsub.s32 %v791, %v793
      %v795 = vrot.slane %v767, %v794
      %v796 = vcombine.high %v774, %v774
      %v797 = vcombine.high %v781, %v781
      %v798 = vcombine.high %v788, %v788
      %v799 = vcombine.high %v795, %v795
      %v800 = vcombine.high %v448, %v448
      %v802 = vunpack.c.l.s4 1966171168
      %v803 = vunpack.c.0.s8 %v802
      %v804 = vlaneseq
      %v805 = vshrl.u32 %v804, 7
      %v806 = vsub.s32 %v803, %v805
      %v807 = vrot.slane %v448, %v806
      %v809 = vunpack.c.l.s4 1966171168
      %v810 = vunpack.c.0.s8 %v809
      %v811 = vlaneseq
      %v812 = vshrl.u32 %v811, 7
      %v813 = vsub.s32 %v810, %v812
      %v814 = vrot.slane %v800, %v813
      %v815 = vcombine.high %v807, %v807
      %v816 = vcombine.high %v814, %v814
      %v818 = vunpack.c.l.s4 1966171168
      %v819 = vunpack.c.0.s8 %v818
      %v820 = vlaneseq
      %v821 = vshrl.u32 %v820, 7
      %v822 = vsub.s32 %v819, %v821
      %v823 = vrot.slane %v807, %v822
      %v825 = vunpack.c.l.s4 1966171168
      %v826 = vunpack.c.0.s8 %v825
      %v827 = vlaneseq
      %v828 = vshrl.u32 %v827, 7
      %v829 = vsub.s32 %v826, %v828
      %v830 = vrot.slane %v814, %v829
      %v832 = vunpack.c.l.s4 1966171168
      %v833 = vunpack.c.0.s8 %v832
      %v834 = vlaneseq
      %v835 = vshrl.u32 %v834, 7
      %v836 = vsub.s32 %v833, %v835
      %v837 = vrot.slane %v815, %v836
      %v839 = vunpack.c.l.s4 1966171168
      %v840 = vunpack.c.0.s8 %v839
      %v841 = vlaneseq
      %v842 = vshrl.u32 %v841, 7
      %v843 = vsub.s32 %v840, %v842
      %v844 = vrot.slane %v816, %v843
      %v845 = vcombine.high %v823, %v823
      %v846 = vcombine.high %v830, %v830
      %v847 = vcombine.high %v837, %v837
      %v848 = vcombine.high %v844, %v844
      %v849 = vcombine.high %v449, %v449
      %v851 = vunpack.c.l.s4 1966171168
      %v852 = vunpack.c.0.s8 %v851
      %v853 = vlaneseq
      %v854 = vshrl.u32 %v853, 7
      %v855 = vsub.s32 %v852, %v854
      %v856 = vrot.slane %v449, %v855
      %v858 = vunpack.c.l.s4 1966171168
      %v859 = vunpack.c.0.s8 %v858
      %v860 = vlaneseq
      %v861 = vshrl.u32 %v860, 7
      %v862 = vsub.s32 %v859, %v861
      %v863 = vrot.slane %v849, %v862
      %v864 = vcombine.high %v856, %v856
      %v865 = vcombine.high %v863, %v863
      %v867 = vunpack.c.l.s4 1966171168
      %v868 = vunpack.c.0.s8 %v867
      %v869 = vlaneseq
      %v870 = vshrl.u32 %v869, 7
      %v871 = vsub.s32 %v868, %v870
      %v872 = vrot.slane %v856, %v871
      %v874 = vunpack.c.l.s4 1966171168
      %v875 = vunpack.c.0.s8 %v874
      %v876 = vlaneseq
      %v877 = vshrl.u32 %v876, 7
      %v878 = vsub.s32 %v875, %v877
      %v879 = vrot.slane %v863, %v878
      %v881 = vunpack.c.l.s4 1966171168
      %v882 = vunpack.c.0.s8 %v881
      %v883 = vlaneseq
      %v884 = vshrl.u32 %v883, 7
      %v885 = vsub.s32 %v882, %v884
      %v886 = vrot.slane %v864, %v885
      %v888 = vunpack.c.l.s4 1966171168
      %v889 = vunpack.c.0.s8 %v888
      %v890 = vlaneseq
      %v891 = vshrl.u32 %v890, 7
      %v892 = vsub.s32 %v889, %v891
      %v893 = vrot.slane %v865, %v892
      %v894 = vcombine.high %v872, %v872
      %v895 = vcombine.high %v879, %v879
      %v896 = vcombine.high %v886, %v886
      %v897 = vcombine.high %v893, %v893
      %v898 = vcombine.high %v450, %v450
      %v900 = vunpack.c.l.s4 1966171168
      %v901 = vunpack.c.0.s8 %v900
      %v902 = vlaneseq
      %v903 = vshrl.u32 %v902, 7
      %v904 = vsub.s32 %v901, %v903
      %v905 = vrot.slane %v450, %v904
      %v907 = vunpack.c.l.s4 1966171168
      %v908 = vunpack.c.0.s8 %v907
      %v909 = vlaneseq
      %v910 = vshrl.u32 %v909, 7
      %v911 = vsub.s32 %v908, %v910
      %v912 = vrot.slane %v898, %v911
      %v913 = vcombine.high %v905, %v905
      %v914 = vcombine.high %v912, %v912
      %v916 = vunpack.c.l.s4 1966171168
      %v917 = vunpack.c.0.s8 %v916
      %v918 = vlaneseq
      %v919 = vshrl.u32 %v918, 7
      %v920 = vsub.s32 %v917, %v919
      %v921 = vrot.slane %v905, %v920
      %v923 = vunpack.c.l.s4 1966171168
      %v924 = vunpack.c.0.s8 %v923
      %v925 = vlaneseq
      %v926 = vshrl.u32 %v925, 7
      %v927 = vsub.s32 %v924, %v926
      %v928 = vrot.slane %v912, %v927
      %v930 = vunpack.c.l.s4 1966171168
      %v931 = vunpack.c.0.s8 %v930
      %v932 = vlaneseq
      %v933 = vshrl.u32 %v932, 7
      %v934 = vsub.s32 %v931, %v933
      %v935 = vrot.slane %v913, %v934
      %v937 = vunpack.c.l.s4 1966171168
      %v938 = vunpack.c.0.s8 %v937
      %v939 = vlaneseq
      %v940 = vshrl.u32 %v939, 7
      %v941 = vsub.s32 %v938, %v940
      %v942 = vrot.slane %v914, %v941
      %v943 = vcombine.high %v921, %v921
      %v944 = vcombine.high %v928, %v928
      %v945 = vcombine.high %v935, %v935
      %v946 = vcombine.high %v942, %v942
      %v947 = vcombine.high %v451, %v451
      %v949 = vunpack.c.l.s4 1966171168
      %v950 = vunpack.c.0.s8 %v949
      %v951 = vlaneseq
      %v952 = vshrl.u32 %v951, 7
      %v953 = vsub.s32 %v950, %v952
      %v954 = vrot.slane %v451, %v953
      %v956 = vunpack.c.l.s4 1966171168
      %v957 = vunpack.c.0.s8 %v956
      %v958 = vlaneseq
      %v959 = vshrl.u32 %v958, 7
      %v960 = vsub.s32 %v957, %v959
      %v961 = vrot.slane %v947, %v960
      %v962 = vcombine.high %v954, %v954
      %v963 = vcombine.high %v961, %v961
      %v965 = vunpack.c.l.s4 1966171168
      %v966 = vunpack.c.0.s8 %v965
      %v967 = vlaneseq
      %v968 = vshrl.u32 %v967, 7
      %v969 = vsub.s32 %v966, %v968
      %v970 = vrot.slane %v954, %v969
      %v972 = vunpack.c.l.s4 1966171168
      %v973 = vunpack.c.0.s8 %v972
      %v974 = vlaneseq
      %v975 = vshrl.u32 %v974, 7
      %v976 = vsub.s32 %v973, %v975
      %v977 = vrot.slane %v961, %v976
      %v979 = vunpack.c.l.s4 1966171168
      %v980 = vunpack.c.0.s8 %v979
      %v981 = vlaneseq
      %v982 = vshrl.u32 %v981, 7
      %v983 = vsub.s32 %v980, %v982
      %v984 = vrot.slane %v962, %v983
      %v986 = vunpack.c.l.s4 1966171168
      %v987 = vunpack.c.0.s8 %v986
      %v988 = vlaneseq
      %v989 = vshrl.u32 %v988, 7
      %v990 = vsub.s32 %v987, %v989
      %v991 = vrot.slane %v963, %v990
      %v992 = vcombine.high %v970, %v970
      %v993 = vcombine.high %v977, %v977
      %v994 = vcombine.high %v984, %v984
      %v995 = vcombine.high %v991, %v991
      %v996 = vcombine.high %v452, %v452
      %v998 = vunpack.c.l.s4 1966171168
      %v999 = vunpack.c.0.s8 %v998
      %v1000 = vlaneseq
      %v1001 = vshrl.u32 %v1000, 7
      %v1002 = vsub.s32 %v999, %v1001
      %v1003 = vrot.slane %v452, %v1002
      %v1005 = vunpack.c.l.s4 1966171168
      %v1006 = vunpack.c.0.s8 %v1005
      %v1007 = vlaneseq
      %v1008 = vshrl.u32 %v1007, 7
      %v1009 = vsub.s32 %v1006, %v1008
      %v1010 = vrot.slane %v996, %v1009
      %v1011 = vcombine.high %v1003, %v1003
      %v1012 = vcombine.high %v1010, %v1010
      %v1014 = vunpack.c.l.s4 1966171168
      %v1015 = vunpack.c.0.s8 %v1014
      %v1016 = vlaneseq
      %v1017 = vshrl.u32 %v1016, 7
      %v1018 = vsub.s32 %v1015, %v1017
      %v1019 = vrot.slane %v1003, %v1018
      %v1021 = vunpack.c.l.s4 1966171168
      %v1022 = vunpack.c.0.s8 %v1021
      %v1023 = vlaneseq
      %v1024 = vshrl.u32 %v1023, 7
      %v1025 = vsub.s32 %v1022, %v1024
      %v1026 = vrot.slane %v1010, %v1025
      %v1028 = vunpack.c.l.s4 1966171168
      %v1029 = vunpack.c.0.s8 %v1028
      %v1030 = vlaneseq
      %v1031 = vshrl.u32 %v1030, 7
      %v1032 = vsub.s32 %v1029, %v1031
      %v1033 = vrot.slane %v1011, %v1032
      %v1035 = vunpack.c.l.s4 1966171168
      %v1036 = vunpack.c.0.s8 %v1035
      %v1037 = vlaneseq
      %v1038 = vshrl.u32 %v1037, 7
      %v1039 = vsub.s32 %v1036, %v1038
      %v1040 = vrot.slane %v1012, %v1039
      %v1041 = vcombine.high %v1019, %v1019
      %v1042 = vcombine.high %v1026, %v1026
      %v1043 = vcombine.high %v1033, %v1033
      %v1044 = vcombine.high %v1040, %v1040
      %v1045 = vcombine.high %v453, %v453
      %v1047 = vunpack.c.l.s4 1966171168
      %v1048 = vunpack.c.0.s8 %v1047
      %v1049 = vlaneseq
      %v1050 = vshrl.u32 %v1049, 7
      %v1051 = vsub.s32 %v1048, %v1050
      %v1052 = vrot.slane %v453, %v1051
      %v1054 = vunpack.c.l.s4 1966171168
      %v1055 = vunpack.c.0.s8 %v1054
      %v1056 = vlaneseq
      %v1057 = vshrl.u32 %v1056, 7
      %v1058 = vsub.s32 %v1055, %v1057
      %v1059 = vrot.slane %v1045, %v1058
      %v1060 = vcombine.high %v1052, %v1052
      %v1061 = vcombine.high %v1059, %v1059
      %v1063 = vunpack.c.l.s4 1966171168
      %v1064 = vunpack.c.0.s8 %v1063
      %v1065 = vlaneseq
      %v1066 = vshrl.u32 %v1065, 7
      %v1067 = vsub.s32 %v1064, %v1066
      %v1068 = vrot.slane %v1052, %v1067
      %v1070 = vunpack.c.l.s4 1966171168
      %v1071 = vunpack.c.0.s8 %v1070
      %v1072 = vlaneseq
      %v1073 = vshrl.u32 %v1072, 7
      %v1074 = vsub.s32 %v1071, %v1073
      %v1075 = vrot.slane %v1059, %v1074
      %v1077 = vunpack.c.l.s4 1966171168
      %v1078 = vunpack.c.0.s8 %v1077
      %v1079 = vlaneseq
      %v1080 = vshrl.u32 %v1079, 7
      %v1081 = vsub.s32 %v1078, %v1080
      %v1082 = vrot.slane %v1060, %v1081
      %v1084 = vunpack.c.l.s4 1966171168
      %v1085 = vunpack.c.0.s8 %v1084
      %v1086 = vlaneseq
      %v1087 = vshrl.u32 %v1086, 7
      %v1088 = vsub.s32 %v1085, %v1087
      %v1089 = vrot.slane %v1061, %v1088
      %v1090 = vcombine.high %v1068, %v1068
      %v1091 = vcombine.high %v1075, %v1075
      %v1092 = vcombine.high %v1082, %v1082
      %v1093 = vcombine.high %v1089, %v1089
      %v1094 = vcombine.high %v454, %v454
      %v1096 = vunpack.c.l.s4 1966171168
      %v1097 = vunpack.c.0.s8 %v1096
      %v1098 = vlaneseq
      %v1099 = vshrl.u32 %v1098, 7
      %v1100 = vsub.s32 %v1097, %v1099
      %v1101 = vrot.slane %v454, %v1100
      %v1103 = vunpack.c.l.s4 1966171168
      %v1104 = vunpack.c.0.s8 %v1103
      %v1105 = vlaneseq
      %v1106 = vshrl.u32 %v1105, 7
      %v1107 = vsub.s32 %v1104, %v1106
      %v1108 = vrot.slane %v1094, %v1107
      %v1109 = vcombine.high %v1101, %v1101
      %v1110 = vcombine.high %v1108, %v1108
      %v1112 = vunpack.c.l.s4 1966171168
      %v1113 = vunpack.c.0.s8 %v1112
      %v1114 = vlaneseq
      %v1115 = vshrl.u32 %v1114, 7
      %v1116 = vsub.s32 %v1113, %v1115
      %v1117 = vrot.slane %v1101, %v1116
      %v1119 = vunpack.c.l.s4 1966171168
      %v1120 = vunpack.c.0.s8 %v1119
      %v1121 = vlaneseq
      %v1122 = vshrl.u32 %v1121, 7
      %v1123 = vsub.s32 %v1120, %v1122
      %v1124 = vrot.slane %v1108, %v1123
      %v1126 = vunpack.c.l.s4 1966171168
      %v1127 = vunpack.c.0.s8 %v1126
      %v1128 = vlaneseq
      %v1129 = vshrl.u32 %v1128, 7
      %v1130 = vsub.s32 %v1127, %v1129
      %v1131 = vrot.slane %v1109, %v1130
      %v1133 = vunpack.c.l.s4 1966171168
      %v1134 = vunpack.c.0.s8 %v1133
      %v1135 = vlaneseq
      %v1136 = vshrl.u32 %v1135, 7
      %v1137 = vsub.s32 %v1134, %v1136
      %v1138 = vrot.slane %v1110, %v1137
      %v1139 = vcombine.high %v1117, %v1117
      %v1140 = vcombine.high %v1124, %v1124
      %v1141 = vcombine.high %v1131, %v1131
      %v1142 = vcombine.high %v1138, %v1138
      %v1143 = vcombine.high %v455, %v455
      %v1145 = vunpack.c.l.s4 1966171168
      %v1146 = vunpack.c.0.s8 %v1145
      %v1147 = vlaneseq
      %v1148 = vshrl.u32 %v1147, 7
      %v1149 = vsub.s32 %v1146, %v1148
      %v1150 = vrot.slane %v455, %v1149
      %v1152 = vunpack.c.l.s4 1966171168
      %v1153 = vunpack.c.0.s8 %v1152
      %v1154 = vlaneseq
      %v1155 = vshrl.u32 %v1154, 7
      %v1156 = vsub.s32 %v1153, %v1155
      %v1157 = vrot.slane %v1143, %v1156
      %v1158 = vcombine.high %v1150, %v1150
      %v1159 = vcombine.high %v1157, %v1157
      %v1161 = vunpack.c.l.s4 1966171168
      %v1162 = vunpack.c.0.s8 %v1161
      %v1163 = vlaneseq
      %v1164 = vshrl.u32 %v1163, 7
      %v1165 = vsub.s32 %v1162, %v1164
      %v1166 = vrot.slane %v1150, %v1165
      %v1168 = vunpack.c.l.s4 1966171168
      %v1169 = vunpack.c.0.s8 %v1168
      %v1170 = vlaneseq
      %v1171 = vshrl.u32 %v1170, 7
      %v1172 = vsub.s32 %v1169, %v1171
      %v1173 = vrot.slane %v1157, %v1172
      %v1175 = vunpack.c.l.s4 1966171168
      %v1176 = vunpack.c.0.s8 %v1175
      %v1177 = vlaneseq
      %v1178 = vshrl.u32 %v1177, 7
      %v1179 = vsub.s32 %v1176, %v1178
      %v1180 = vrot.slane %v1158, %v1179
      %v1182 = vunpack.c.l.s4 1966171168
      %v1183 = vunpack.c.0.s8 %v1182
      %v1184 = vlaneseq
      %v1185 = vshrl.u32 %v1184, 7
      %v1186 = vsub.s32 %v1183, %v1185
      %v1187 = vrot.slane %v1159, %v1186
      %v1188 = vcombine.high %v1166, %v1166
      %v1189 = vcombine.high %v1173, %v1173
      %v1190 = vcombine.high %v1180, %v1180
      %v1191 = vcombine.high %v1187, %v1187
      %v1192 = vcombine.high %v456, %v456
      %v1194 = vunpack.c.l.s4 1966171168
      %v1195 = vunpack.c.0.s8 %v1194
      %v1196 = vlaneseq
      %v1197 = vshrl.u32 %v1196, 7
      %v1198 = vsub.s32 %v1195, %v1197
      %v1199 = vrot.slane %v456, %v1198
      %v1201 = vunpack.c.l.s4 1966171168
      %v1202 = vunpack.c.0.s8 %v1201
      %v1203 = vlaneseq
      %v1204 = vshrl.u32 %v1203, 7
      %v1205 = vsub.s32 %v1202, %v1204
      %v1206 = vrot.slane %v1192, %v1205
      %v1207 = vcombine.high %v1199, %v1199
      %v1208 = vcombine.high %v1206, %v1206
      %v1210 = vunpack.c.l.s4 1966171168
      %v1211 = vunpack.c.0.s8 %v1210
      %v1212 = vlaneseq
      %v1213 = vshrl.u32 %v1212, 7
      %v1214 = vsub.s32 %v1211, %v1213
      %v1215 = vrot.slane %v1199, %v1214
      %v1217 = vunpack.c.l.s4 1966171168
      %v1218 = vunpack.c.0.s8 %v1217
      %v1219 = vlaneseq
      %v1220 = vshrl.u32 %v1219, 7
      %v1221 = vsub.s32 %v1218, %v1220
      %v1222 = vrot.slane %v1206, %v1221
      %v1224 = vunpack.c.l.s4 1966171168
      %v1225 = vunpack.c.0.s8 %v1224
      %v1226 = vlaneseq
      %v1227 = vshrl.u32 %v1226, 7
      %v1228 = vsub.s32 %v1225, %v1227
      %v1229 = vrot.slane %v1207, %v1228
      %v1231 = vunpack.c.l.s4 1966171168
      %v1232 = vunpack.c.0.s8 %v1231
      %v1233 = vlaneseq
      %v1234 = vshrl.u32 %v1233, 7
      %v1235 = vsub.s32 %v1232, %v1234
      %v1236 = vrot.slane %v1208, %v1235
      %v1237 = vcombine.high %v1215, %v1215
      %v1238 = vcombine.high %v1222, %v1222
      %v1239 = vcombine.high %v1229, %v1229
      %v1240 = vcombine.high %v1236, %v1236
      %v1241 = vcombine.high %v457, %v457
      %v1243 = vunpack.c.l.s4 1966171168
      %v1244 = vunpack.c.0.s8 %v1243
      %v1245 = vlaneseq
      %v1246 = vshrl.u32 %v1245, 7
      %v1247 = vsub.s32 %v1244, %v1246
      %v1248 = vrot.slane %v457, %v1247
      %v1250 = vunpack.c.l.s4 1966171168
      %v1251 = vunpack.c.0.s8 %v1250
      %v1252 = vlaneseq
      %v1253 = vshrl.u32 %v1252, 7
      %v1254 = vsub.s32 %v1251, %v1253
      %v1255 = vrot.slane %v1241, %v1254
      %v1256 = vcombine.high %v1248, %v1248
      %v1257 = vcombine.high %v1255, %v1255
      %v1259 = vunpack.c.l.s4 1966171168
      %v1260 = vunpack.c.0.s8 %v1259
      %v1261 = vlaneseq
      %v1262 = vshrl.u32 %v1261, 7
      %v1263 = vsub.s32 %v1260, %v1262
      %v1264 = vrot.slane %v1248, %v1263
      %v1266 = vunpack.c.l.s4 1966171168
      %v1267 = vunpack.c.0.s8 %v1266
      %v1268 = vlaneseq
      %v1269 = vshrl.u32 %v1268, 7
      %v1270 = vsub.s32 %v1267, %v1269
      %v1271 = vrot.slane %v1255, %v1270
      %v1273 = vunpack.c.l.s4 1966171168
      %v1274 = vunpack.c.0.s8 %v1273
      %v1275 = vlaneseq
      %v1276 = vshrl.u32 %v1275, 7
      %v1277 = vsub.s32 %v1274, %v1276
      %v1278 = vrot.slane %v1256, %v1277
      %v1280 = vunpack.c.l.s4 1966171168
      %v1281 = vunpack.c.0.s8 %v1280
      %v1282 = vlaneseq
      %v1283 = vshrl.u32 %v1282, 7
      %v1284 = vsub.s32 %v1281, %v1283
      %v1285 = vrot.slane %v1257, %v1284
      %v1286 = vcombine.high %v1264, %v1264
      %v1287 = vcombine.high %v1271, %v1271
      %v1288 = vcombine.high %v1278, %v1278
      %v1289 = vcombine.high %v1285, %v1285
      %v1434 = vcombine.high %v474, %v474
      %v1436 = vunpack.c.l.s4 1966171168
      %v1437 = vunpack.c.0.s8 %v1436
      %v1438 = vlaneseq
      %v1439 = vshrl.u32 %v1438, 7
      %v1440 = vsub.s32 %v1437, %v1439
      %v1441 = vrot.slane %v474, %v1440
      %v1443 = vunpack.c.l.s4 1966171168
      %v1444 = vunpack.c.0.s8 %v1443
      %v1445 = vlaneseq
      %v1446 = vshrl.u32 %v1445, 7
      %v1447 = vsub.s32 %v1444, %v1446
      %v1448 = vrot.slane %v1434, %v1447
      %v1449 = vcombine.high %v1441, %v1441
      %v1450 = vcombine.high %v1448, %v1448
      %v1452 = vunpack.c.l.s4 1966171168
      %v1453 = vunpack.c.0.s8 %v1452
      %v1454 = vlaneseq
      %v1455 = vshrl.u32 %v1454, 7
      %v1456 = vsub.s32 %v1453, %v1455
      %v1457 = vrot.slane %v1441, %v1456
      %v1459 = vunpack.c.l.s4 1966171168
      %v1460 = vunpack.c.0.s8 %v1459
      %v1461 = vlaneseq
      %v1462 = vshrl.u32 %v1461, 7
      %v1463 = vsub.s32 %v1460, %v1462
      %v1464 = vrot.slane %v1448, %v1463
      %v1466 = vunpack.c.l.s4 1966171168
      %v1467 = vunpack.c.0.s8 %v1466
      %v1468 = vlaneseq
      %v1469 = vshrl.u32 %v1468, 7
      %v1470 = vsub.s32 %v1467, %v1469
      %v1471 = vrot.slane %v1449, %v1470
      %v1473 = vunpack.c.l.s4 1966171168
      %v1474 = vunpack.c.0.s8 %v1473
      %v1475 = vlaneseq
      %v1476 = vshrl.u32 %v1475, 7
      %v1477 = vsub.s32 %v1474, %v1476
      %v1478 = vrot.slane %v1450, %v1477
      %v1479 = vcombine.high %v1457, %v1457
      %v1480 = vcombine.high %v1464, %v1464
      %v1481 = vcombine.high %v1471, %v1471
      %v1482 = vcombine.high %v1478, %v1478
      %v1483 = vcombine.high %v475, %v475
      %v1485 = vunpack.c.l.s4 1966171168
      %v1486 = vunpack.c.0.s8 %v1485
      %v1487 = vlaneseq
      %v1488 = vshrl.u32 %v1487, 7
      %v1489 = vsub.s32 %v1486, %v1488
      %v1490 = vrot.slane %v475, %v1489
      %v1492 = vunpack.c.l.s4 1966171168
      %v1493 = vunpack.c.0.s8 %v1492
      %v1494 = vlaneseq
      %v1495 = vshrl.u32 %v1494, 7
      %v1496 = vsub.s32 %v1493, %v1495
      %v1497 = vrot.slane %v1483, %v1496
      %v1498 = vcombine.high %v1490, %v1490
      %v1499 = vcombine.high %v1497, %v1497
      %v1501 = vunpack.c.l.s4 1966171168
      %v1502 = vunpack.c.0.s8 %v1501
      %v1503 = vlaneseq
      %v1504 = vshrl.u32 %v1503, 7
      %v1505 = vsub.s32 %v1502, %v1504
      %v1506 = vrot.slane %v1490, %v1505
      %v1508 = vunpack.c.l.s4 1966171168
      %v1509 = vunpack.c.0.s8 %v1508
      %v1510 = vlaneseq
      %v1511 = vshrl.u32 %v1510, 7
      %v1512 = vsub.s32 %v1509, %v1511
      %v1513 = vrot.slane %v1497, %v1512
      %v1515 = vunpack.c.l.s4 1966171168
      %v1516 = vunpack.c.0.s8 %v1515
      %v1517 = vlaneseq
      %v1518 = vshrl.u32 %v1517, 7
      %v1519 = vsub.s32 %v1516, %v1518
      %v1520 = vrot.slane %v1498, %v1519
      %v1522 = vunpack.c.l.s4 1966171168
      %v1523 = vunpack.c.0.s8 %v1522
      %v1524 = vlaneseq
      %v1525 = vshrl.u32 %v1524, 7
      %v1526 = vsub.s32 %v1523, %v1525
      %v1527 = vrot.slane %v1499, %v1526
      %v1528 = vcombine.high %v1506, %v1506
      %v1529 = vcombine.high %v1513, %v1513
      %v1530 = vcombine.high %v1520, %v1520
      %v1531 = vcombine.high %v1527, %v1527
      %v1532 = vcombine.high %v476, %v476
      %v1534 = vunpack.c.l.s4 1966171168
      %v1535 = vunpack.c.0.s8 %v1534
      %v1536 = vlaneseq
      %v1537 = vshrl.u32 %v1536, 7
      %v1538 = vsub.s32 %v1535, %v1537
      %v1539 = vrot.slane %v476, %v1538
      %v1541 = vunpack.c.l.s4 1966171168
      %v1542 = vunpack.c.0.s8 %v1541
      %v1543 = vlaneseq
      %v1544 = vshrl.u32 %v1543, 7
      %v1545 = vsub.s32 %v1542, %v1544
      %v1546 = vrot.slane %v1532, %v1545
      %v1547 = vcombine.high %v1539, %v1539
      %v1548 = vcombine.high %v1546, %v1546
      %v1550 = vunpack.c.l.s4 1966171168
      %v1551 = vunpack.c.0.s8 %v1550
      %v1552 = vlaneseq
      %v1553 = vshrl.u32 %v1552, 7
      %v1554 = vsub.s32 %v1551, %v1553
      %v1555 = vrot.slane %v1539, %v1554
      %v1557 = vunpack.c.l.s4 1966171168
      %v1558 = vunpack.c.0.s8 %v1557
      %v1559 = vlaneseq
      %v1560 = vshrl.u32 %v1559, 7
      %v1561 = vsub.s32 %v1558, %v1560
      %v1562 = vrot.slane %v1546, %v1561
      %v1564 = vunpack.c.l.s4 1966171168
      %v1565 = vunpack.c.0.s8 %v1564
      %v1566 = vlaneseq
      %v1567 = vshrl.u32 %v1566, 7
      %v1568 = vsub.s32 %v1565, %v1567
      %v1569 = vrot.slane %v1547, %v1568
      %v1571 = vunpack.c.l.s4 1966171168
      %v1572 = vunpack.c.0.s8 %v1571
      %v1573 = vlaneseq
      %v1574 = vshrl.u32 %v1573, 7
      %v1575 = vsub.s32 %v1572, %v1574
      %v1576 = vrot.slane %v1548, %v1575
      %v1577 = vcombine.high %v1555, %v1555
      %v1578 = vcombine.high %v1562, %v1562
      %v1579 = vcombine.high %v1569, %v1569
      %v1580 = vcombine.high %v1576, %v1576
      %v1581 = vcombine.high %v477, %v477
      %v1583 = vunpack.c.l.s4 1966171168
      %v1584 = vunpack.c.0.s8 %v1583
      %v1585 = vlaneseq
      %v1586 = vshrl.u32 %v1585, 7
      %v1587 = vsub.s32 %v1584, %v1586
      %v1588 = vrot.slane %v477, %v1587
      %v1590 = vunpack.c.l.s4 1966171168
      %v1591 = vunpack.c.0.s8 %v1590
      %v1592 = vlaneseq
      %v1593 = vshrl.u32 %v1592, 7
      %v1594 = vsub.s32 %v1591, %v1593
      %v1595 = vrot.slane %v1581, %v1594
      %v1596 = vcombine.high %v1588, %v1588
      %v1597 = vcombine.high %v1595, %v1595
      %v1599 = vunpack.c.l.s4 1966171168
      %v1600 = vunpack.c.0.s8 %v1599
      %v1601 = vlaneseq
      %v1602 = vshrl.u32 %v1601, 7
      %v1603 = vsub.s32 %v1600, %v1602
      %v1604 = vrot.slane %v1588, %v1603
      %v1606 = vunpack.c.l.s4 1966171168
      %v1607 = vunpack.c.0.s8 %v1606
      %v1608 = vlaneseq
      %v1609 = vshrl.u32 %v1608, 7
      %v1610 = vsub.s32 %v1607, %v1609
      %v1611 = vrot.slane %v1595, %v1610
      %v1613 = vunpack.c.l.s4 1966171168
      %v1614 = vunpack.c.0.s8 %v1613
      %v1615 = vlaneseq
      %v1616 = vshrl.u32 %v1615, 7
      %v1617 = vsub.s32 %v1614, %v1616
      %v1618 = vrot.slane %v1596, %v1617
      %v1620 = vunpack.c.l.s4 1966171168
      %v1621 = vunpack.c.0.s8 %v1620
      %v1622 = vlaneseq
      %v1623 = vshrl.u32 %v1622, 7
      %v1624 = vsub.s32 %v1621, %v1623
      %v1625 = vrot.slane %v1597, %v1624
      %v1626 = vcombine.high %v1604, %v1604
      %v1627 = vcombine.high %v1611, %v1611
      %v1628 = vcombine.high %v1618, %v1618
      %v1629 = vcombine.high %v1625, %v1625
      %v1630 = vcombine.high %v478, %v478
      %v1632 = vunpack.c.l.s4 1966171168
      %v1633 = vunpack.c.0.s8 %v1632
      %v1634 = vlaneseq
      %v1635 = vshrl.u32 %v1634, 7
      %v1636 = vsub.s32 %v1633, %v1635
      %v1637 = vrot.slane %v478, %v1636
      %v1639 = vunpack.c.l.s4 1966171168
      %v1640 = vunpack.c.0.s8 %v1639
      %v1641 = vlaneseq
      %v1642 = vshrl.u32 %v1641, 7
      %v1643 = vsub.s32 %v1640, %v1642
      %v1644 = vrot.slane %v1630, %v1643
      %v1645 = vcombine.high %v1637, %v1637
      %v1646 = vcombine.high %v1644, %v1644
      %v1648 = vunpack.c.l.s4 1966171168
      %v1649 = vunpack.c.0.s8 %v1648
      %v1650 = vlaneseq
      %v1651 = vshrl.u32 %v1650, 7
      %v1652 = vsub.s32 %v1649, %v1651
      %v1653 = vrot.slane %v1637, %v1652
      %v1655 = vunpack.c.l.s4 1966171168
      %v1656 = vunpack.c.0.s8 %v1655
      %v1657 = vlaneseq
      %v1658 = vshrl.u32 %v1657, 7
      %v1659 = vsub.s32 %v1656, %v1658
      %v1660 = vrot.slane %v1644, %v1659
      %v1662 = vunpack.c.l.s4 1966171168
      %v1663 = vunpack.c.0.s8 %v1662
      %v1664 = vlaneseq
      %v1665 = vshrl.u32 %v1664, 7
      %v1666 = vsub.s32 %v1663, %v1665
      %v1667 = vrot.slane %v1645, %v1666
      %v1669 = vunpack.c.l.s4 1966171168
      %v1670 = vunpack.c.0.s8 %v1669
      %v1671 = vlaneseq
      %v1672 = vshrl.u32 %v1671, 7
      %v1673 = vsub.s32 %v1670, %v1672
      %v1674 = vrot.slane %v1646, %v1673
      %v1675 = vcombine.high %v1653, %v1653
      %v1676 = vcombine.high %v1660, %v1660
      %v1677 = vcombine.high %v1667, %v1667
      %v1678 = vcombine.high %v1674, %v1674
      %v1679 = vcombine.high %v479, %v479
      %v1681 = vunpack.c.l.s4 1966171168
      %v1682 = vunpack.c.0.s8 %v1681
      %v1683 = vlaneseq
      %v1684 = vshrl.u32 %v1683, 7
      %v1685 = vsub.s32 %v1682, %v1684
      %v1686 = vrot.slane %v479, %v1685
      %v1688 = vunpack.c.l.s4 1966171168
      %v1689 = vunpack.c.0.s8 %v1688
      %v1690 = vlaneseq
      %v1691 = vshrl.u32 %v1690, 7
      %v1692 = vsub.s32 %v1689, %v1691
      %v1693 = vrot.slane %v1679, %v1692
      %v1694 = vcombine.high %v1686, %v1686
      %v1695 = vcombine.high %v1693, %v1693
      %v1697 = vunpack.c.l.s4 1966171168
      %v1698 = vunpack.c.0.s8 %v1697
      %v1699 = vlaneseq
      %v1700 = vshrl.u32 %v1699, 7
      %v1701 = vsub.s32 %v1698, %v1700
      %v1702 = vrot.slane %v1686, %v1701
      %v1704 = vunpack.c.l.s4 1966171168
      %v1705 = vunpack.c.0.s8 %v1704
      %v1706 = vlaneseq
      %v1707 = vshrl.u32 %v1706, 7
      %v1708 = vsub.s32 %v1705, %v1707
      %v1709 = vrot.slane %v1693, %v1708
      %v1711 = vunpack.c.l.s4 1966171168
      %v1712 = vunpack.c.0.s8 %v1711
      %v1713 = vlaneseq
      %v1714 = vshrl.u32 %v1713, 7
      %v1715 = vsub.s32 %v1712, %v1714
      %v1716 = vrot.slane %v1694, %v1715
      %v1718 = vunpack.c.l.s4 1966171168
      %v1719 = vunpack.c.0.s8 %v1718
      %v1720 = vlaneseq
      %v1721 = vshrl.u32 %v1720, 7
      %v1722 = vsub.s32 %v1719, %v1721
      %v1723 = vrot.slane %v1695, %v1722
      %v1724 = vcombine.high %v1702, %v1702
      %v1725 = vcombine.high %v1709, %v1709
      %v1726 = vcombine.high %v1716, %v1716
      %v1727 = vcombine.high %v1723, %v1723
      %v1728 = vcombine.high %v480, %v480
      %v1730 = vunpack.c.l.s4 1966171168
      %v1731 = vunpack.c.0.s8 %v1730
      %v1732 = vlaneseq
      %v1733 = vshrl.u32 %v1732, 7
      %v1734 = vsub.s32 %v1731, %v1733
      %v1735 = vrot.slane %v480, %v1734
      %v1737 = vunpack.c.l.s4 1966171168
      %v1738 = vunpack.c.0.s8 %v1737
      %v1739 = vlaneseq
      %v1740 = vshrl.u32 %v1739, 7
      %v1741 = vsub.s32 %v1738, %v1740
      %v1742 = vrot.slane %v1728, %v1741
      %v1743 = vcombine.high %v1735, %v1735
      %v1744 = vcombine.high %v1742, %v1742
      %v1746 = vunpack.c.l.s4 1966171168
      %v1747 = vunpack.c.0.s8 %v1746
      %v1748 = vlaneseq
      %v1749 = vshrl.u32 %v1748, 7
      %v1750 = vsub.s32 %v1747, %v1749
      %v1751 = vrot.slane %v1735, %v1750
      %v1753 = vunpack.c.l.s4 1966171168
      %v1754 = vunpack.c.0.s8 %v1753
      %v1755 = vlaneseq
      %v1756 = vshrl.u32 %v1755, 7
      %v1757 = vsub.s32 %v1754, %v1756
      %v1758 = vrot.slane %v1742, %v1757
      %v1760 = vunpack.c.l.s4 1966171168
      %v1761 = vunpack.c.0.s8 %v1760
      %v1762 = vlaneseq
      %v1763 = vshrl.u32 %v1762, 7
      %v1764 = vsub.s32 %v1761, %v1763
      %v1765 = vrot.slane %v1743, %v1764
      %v1767 = vunpack.c.l.s4 1966171168
      %v1768 = vunpack.c.0.s8 %v1767
      %v1769 = vlaneseq
      %v1770 = vshrl.u32 %v1769, 7
      %v1771 = vsub.s32 %v1768, %v1770
      %v1772 = vrot.slane %v1744, %v1771
      %v1773 = vcombine.high %v1751, %v1751
      %v1774 = vcombine.high %v1758, %v1758
      %v1775 = vcombine.high %v1765, %v1765
      %v1776 = vcombine.high %v1772, %v1772
      %v1777 = vcombine.high %v481, %v481
      %v1779 = vunpack.c.l.s4 1966171168
      %v1780 = vunpack.c.0.s8 %v1779
      %v1781 = vlaneseq
      %v1782 = vshrl.u32 %v1781, 7
      %v1783 = vsub.s32 %v1780, %v1782
      %v1784 = vrot.slane %v481, %v1783
      %v1786 = vunpack.c.l.s4 1966171168
      %v1787 = vunpack.c.0.s8 %v1786
      %v1788 = vlaneseq
      %v1789 = vshrl.u32 %v1788, 7
      %v1790 = vsub.s32 %v1787, %v1789
      %v1791 = vrot.slane %v1777, %v1790
      %v1792 = vcombine.high %v1784, %v1784
      %v1793 = vcombine.high %v1791, %v1791
      %v1795 = vunpack.c.l.s4 1966171168
      %v1796 = vunpack.c.0.s8 %v1795
      %v1797 = vlaneseq
      %v1798 = vshrl.u32 %v1797, 7
      %v1799 = vsub.s32 %v1796, %v1798
      %v1800 = vrot.slane %v1784, %v1799
      %v1802 = vunpack.c.l.s4 1966171168
      %v1803 = vunpack.c.0.s8 %v1802
      %v1804 = vlaneseq
      %v1805 = vshrl.u32 %v1804, 7
      %v1806 = vsub.s32 %v1803, %v1805
      %v1807 = vrot.slane %v1791, %v1806
      %v1809 = vunpack.c.l.s4 1966171168
      %v1810 = vunpack.c.0.s8 %v1809
      %v1811 = vlaneseq
      %v1812 = vshrl.u32 %v1811, 7
      %v1813 = vsub.s32 %v1810, %v1812
      %v1814 = vrot.slane %v1792, %v1813
      %v1816 = vunpack.c.l.s4 1966171168
      %v1817 = vunpack.c.0.s8 %v1816
      %v1818 = vlaneseq
      %v1819 = vshrl.u32 %v1818, 7
      %v1820 = vsub.s32 %v1817, %v1819
      %v1821 = vrot.slane %v1793, %v1820
      %v1822 = vcombine.high %v1800, %v1800
      %v1823 = vcombine.high %v1807, %v1807
      %v1824 = vcombine.high %v1814, %v1814
      %v1825 = vcombine.high %v1821, %v1821
      %v1826 = vcombine.high %v482, %v482
      %v1828 = vunpack.c.l.s4 1966171168
      %v1829 = vunpack.c.0.s8 %v1828
      %v1830 = vlaneseq
      %v1831 = vshrl.u32 %v1830, 7
      %v1832 = vsub.s32 %v1829, %v1831
      %v1833 = vrot.slane %v482, %v1832
      %v1835 = vunpack.c.l.s4 1966171168
      %v1836 = vunpack.c.0.s8 %v1835
      %v1837 = vlaneseq
      %v1838 = vshrl.u32 %v1837, 7
      %v1839 = vsub.s32 %v1836, %v1838
      %v1840 = vrot.slane %v1826, %v1839
      %v1841 = vcombine.high %v1833, %v1833
      %v1842 = vcombine.high %v1840, %v1840
      %v1844 = vunpack.c.l.s4 1966171168
      %v1845 = vunpack.c.0.s8 %v1844
      %v1846 = vlaneseq
      %v1847 = vshrl.u32 %v1846, 7
      %v1848 = vsub.s32 %v1845, %v1847
      %v1849 = vrot.slane %v1833, %v1848
      %v1851 = vunpack.c.l.s4 1966171168
      %v1852 = vunpack.c.0.s8 %v1851
      %v1853 = vlaneseq
      %v1854 = vshrl.u32 %v1853, 7
      %v1855 = vsub.s32 %v1852, %v1854
      %v1856 = vrot.slane %v1840, %v1855
      %v1858 = vunpack.c.l.s4 1966171168
      %v1859 = vunpack.c.0.s8 %v1858
      %v1860 = vlaneseq
      %v1861 = vshrl.u32 %v1860, 7
      %v1862 = vsub.s32 %v1859, %v1861
      %v1863 = vrot.slane %v1841, %v1862
      %v1865 = vunpack.c.l.s4 1966171168
      %v1866 = vunpack.c.0.s8 %v1865
      %v1867 = vlaneseq
      %v1868 = vshrl.u32 %v1867, 7
      %v1869 = vsub.s32 %v1866, %v1868
      %v1870 = vrot.slane %v1842, %v1869
      %v1871 = vcombine.high %v1849, %v1849
      %v1872 = vcombine.high %v1856, %v1856
      %v1873 = vcombine.high %v1863, %v1863
      %v1874 = vcombine.high %v1870, %v1870
      %v1875 = vcombine.high %v483, %v483
      %v1877 = vunpack.c.l.s4 1966171168
      %v1878 = vunpack.c.0.s8 %v1877
      %v1879 = vlaneseq
      %v1880 = vshrl.u32 %v1879, 7
      %v1881 = vsub.s32 %v1878, %v1880
      %v1882 = vrot.slane %v483, %v1881
      %v1884 = vunpack.c.l.s4 1966171168
      %v1885 = vunpack.c.0.s8 %v1884
      %v1886 = vlaneseq
      %v1887 = vshrl.u32 %v1886, 7
      %v1888 = vsub.s32 %v1885, %v1887
      %v1889 = vrot.slane %v1875, %v1888
      %v1890 = vcombine.high %v1882, %v1882
      %v1891 = vcombine.high %v1889, %v1889
      %v1893 = vunpack.c.l.s4 1966171168
      %v1894 = vunpack.c.0.s8 %v1893
      %v1895 = vlaneseq
      %v1896 = vshrl.u32 %v1895, 7
      %v1897 = vsub.s32 %v1894, %v1896
      %v1898 = vrot.slane %v1882, %v1897
      %v1900 = vunpack.c.l.s4 1966171168
      %v1901 = vunpack.c.0.s8 %v1900
      %v1902 = vlaneseq
      %v1903 = vshrl.u32 %v1902, 7
      %v1904 = vsub.s32 %v1901, %v1903
      %v1905 = vrot.slane %v1889, %v1904
      %v1907 = vunpack.c.l.s4 1966171168
      %v1908 = vunpack.c.0.s8 %v1907
      %v1909 = vlaneseq
      %v1910 = vshrl.u32 %v1909, 7
      %v1911 = vsub.s32 %v1908, %v1910
      %v1912 = vrot.slane %v1890, %v1911
      %v1914 = vunpack.c.l.s4 1966171168
      %v1915 = vunpack.c.0.s8 %v1914
      %v1916 = vlaneseq
      %v1917 = vshrl.u32 %v1916, 7
      %v1918 = vsub.s32 %v1915, %v1917
      %v1919 = vrot.slane %v1891, %v1918
      %v1920 = vcombine.high %v1898, %v1898
      %v1921 = vcombine.high %v1905, %v1905
      %v1922 = vcombine.high %v1912, %v1912
      %v1923 = vcombine.high %v1919, %v1919
      %v1924 = vcombine.high %v484, %v484
      %v1926 = vunpack.c.l.s4 1966171168
      %v1927 = vunpack.c.0.s8 %v1926
      %v1928 = vlaneseq
      %v1929 = vshrl.u32 %v1928, 7
      %v1930 = vsub.s32 %v1927, %v1929
      %v1931 = vrot.slane %v484, %v1930
      %v1933 = vunpack.c.l.s4 1966171168
      %v1934 = vunpack.c.0.s8 %v1933
      %v1935 = vlaneseq
      %v1936 = vshrl.u32 %v1935, 7
      %v1937 = vsub.s32 %v1934, %v1936
      %v1938 = vrot.slane %v1924, %v1937
      %v1939 = vcombine.high %v1931, %v1931
      %v1940 = vcombine.high %v1938, %v1938
      %v1942 = vunpack.c.l.s4 1966171168
      %v1943 = vunpack.c.0.s8 %v1942
      %v1944 = vlaneseq
      %v1945 = vshrl.u32 %v1944, 7
      %v1946 = vsub.s32 %v1943, %v1945
      %v1947 = vrot.slane %v1931, %v1946
      %v1949 = vunpack.c.l.s4 1966171168
      %v1950 = vunpack.c.0.s8 %v1949
      %v1951 = vlaneseq
      %v1952 = vshrl.u32 %v1951, 7
      %v1953 = vsub.s32 %v1950, %v1952
      %v1954 = vrot.slane %v1938, %v1953
      %v1956 = vunpack.c.l.s4 1966171168
      %v1957 = vunpack.c.0.s8 %v1956
      %v1958 = vlaneseq
      %v1959 = vshrl.u32 %v1958, 7
      %v1960 = vsub.s32 %v1957, %v1959
      %v1961 = vrot.slane %v1939, %v1960
      %v1963 = vunpack.c.l.s4 1966171168
      %v1964 = vunpack.c.0.s8 %v1963
      %v1965 = vlaneseq
      %v1966 = vshrl.u32 %v1965, 7
      %v1967 = vsub.s32 %v1964, %v1966
      %v1968 = vrot.slane %v1940, %v1967
      %v1969 = vcombine.high %v1947, %v1947
      %v1970 = vcombine.high %v1954, %v1954
      %v1971 = vcombine.high %v1961, %v1961
      %v1972 = vcombine.high %v1968, %v1968
      %v1973 = vcombine.high %v485, %v485
      %v1975 = vunpack.c.l.s4 1966171168
      %v1976 = vunpack.c.0.s8 %v1975
      %v1977 = vlaneseq
      %v1978 = vshrl.u32 %v1977, 7
      %v1979 = vsub.s32 %v1976, %v1978
      %v1980 = vrot.slane %v485, %v1979
      %v1982 = vunpack.c.l.s4 1966171168
      %v1983 = vunpack.c.0.s8 %v1982
      %v1984 = vlaneseq
      %v1985 = vshrl.u32 %v1984, 7
      %v1986 = vsub.s32 %v1983, %v1985
      %v1987 = vrot.slane %v1973, %v1986
      %v1988 = vcombine.high %v1980, %v1980
      %v1989 = vcombine.high %v1987, %v1987
      %v1991 = vunpack.c.l.s4 1966171168
      %v1992 = vunpack.c.0.s8 %v1991
      %v1993 = vlaneseq
      %v1994 = vshrl.u32 %v1993, 7
      %v1995 = vsub.s32 %v1992, %v1994
      %v1996 = vrot.slane %v1980, %v1995
      %v1998 = vunpack.c.l.s4 1966171168
      %v1999 = vunpack.c.0.s8 %v1998
      %v2000 = vlaneseq
      %v2001 = vshrl.u32 %v2000, 7
      %v2002 = vsub.s32 %v1999, %v2001
      %v2003 = vrot.slane %v1987, %v2002
      %v2005 = vunpack.c.l.s4 1966171168
      %v2006 = vunpack.c.0.s8 %v2005
      %v2007 = vlaneseq
      %v2008 = vshrl.u32 %v2007, 7
      %v2009 = vsub.s32 %v2006, %v2008
      %v2010 = vrot.slane %v1988, %v2009
      %v2012 = vunpack.c.l.s4 1966171168
      %v2013 = vunpack.c.0.s8 %v2012
      %v2014 = vlaneseq
      %v2015 = vshrl.u32 %v2014, 7
      %v2016 = vsub.s32 %v2013, %v2015
      %v2017 = vrot.slane %v1989, %v2016
      %v2018 = vcombine.high %v1996, %v1996
      %v2019 = vcombine.high %v2003, %v2003
      %v2020 = vcombine.high %v2010, %v2010
      %v2021 = vcombine.high %v2017, %v2017
      %v2022 = vcombine.high %v486, %v486
      %v2024 = vunpack.c.l.s4 1966171168
      %v2025 = vunpack.c.0.s8 %v2024
      %v2026 = vlaneseq
      %v2027 = vshrl.u32 %v2026, 7
      %v2028 = vsub.s32 %v2025, %v2027
      %v2029 = vrot.slane %v486, %v2028
      %v2031 = vunpack.c.l.s4 1966171168
      %v2032 = vunpack.c.0.s8 %v2031
      %v2033 = vlaneseq
      %v2034 = vshrl.u32 %v2033, 7
      %v2035 = vsub.s32 %v2032, %v2034
      %v2036 = vrot.slane %v2022, %v2035
      %v2037 = vcombine.high %v2029, %v2029
      %v2038 = vcombine.high %v2036, %v2036
      %v2040 = vunpack.c.l.s4 1966171168
      %v2041 = vunpack.c.0.s8 %v2040
      %v2042 = vlaneseq
      %v2043 = vshrl.u32 %v2042, 7
      %v2044 = vsub.s32 %v2041, %v2043
      %v2045 = vrot.slane %v2029, %v2044
      %v2047 = vunpack.c.l.s4 1966171168
      %v2048 = vunpack.c.0.s8 %v2047
      %v2049 = vlaneseq
      %v2050 = vshrl.u32 %v2049, 7
      %v2051 = vsub.s32 %v2048, %v2050
      %v2052 = vrot.slane %v2036, %v2051
      %v2054 = vunpack.c.l.s4 1966171168
      %v2055 = vunpack.c.0.s8 %v2054
      %v2056 = vlaneseq
      %v2057 = vshrl.u32 %v2056, 7
      %v2058 = vsub.s32 %v2055, %v2057
      %v2059 = vrot.slane %v2037, %v2058
      %v2061 = vunpack.c.l.s4 1966171168
      %v2062 = vunpack.c.0.s8 %v2061
      %v2063 = vlaneseq
      %v2064 = vshrl.u32 %v2063, 7
      %v2065 = vsub.s32 %v2062, %v2064
      %v2066 = vrot.slane %v2038, %v2065
      %v2067 = vcombine.high %v2045, %v2045
      %v2068 = vcombine.high %v2052, %v2052
      %v2069 = vcombine.high %v2059, %v2059
      %v2070 = vcombine.high %v2066, %v2066
      %v2071 = vcombine.high %v487, %v487
      %v2073 = vunpack.c.l.s4 1966171168
      %v2074 = vunpack.c.0.s8 %v2073
      %v2075 = vlaneseq
      %v2076 = vshrl.u32 %v2075, 7
      %v2077 = vsub.s32 %v2074, %v2076
      %v2078 = vrot.slane %v487, %v2077
      %v2080 = vunpack.c.l.s4 1966171168
      %v2081 = vunpack.c.0.s8 %v2080
      %v2082 = vlaneseq
      %v2083 = vshrl.u32 %v2082, 7
      %v2084 = vsub.s32 %v2081, %v2083
      %v2085 = vrot.slane %v2071, %v2084
      %v2086 = vcombine.high %v2078, %v2078
      %v2087 = vcombine.high %v2085, %v2085
      %v2089 = vunpack.c.l.s4 1966171168
      %v2090 = vunpack.c.0.s8 %v2089
      %v2091 = vlaneseq
      %v2092 = vshrl.u32 %v2091, 7
      %v2093 = vsub.s32 %v2090, %v2092
      %v2094 = vrot.slane %v2078, %v2093
      %v2096 = vunpack.c.l.s4 1966171168
      %v2097 = vunpack.c.0.s8 %v2096
      %v2098 = vlaneseq
      %v2099 = vshrl.u32 %v2098, 7
      %v2100 = vsub.s32 %v2097, %v2099
      %v2101 = vrot.slane %v2085, %v2100
      %v2103 = vunpack.c.l.s4 1966171168
      %v2104 = vunpack.c.0.s8 %v2103
      %v2105 = vlaneseq
      %v2106 = vshrl.u32 %v2105, 7
      %v2107 = vsub.s32 %v2104, %v2106
      %v2108 = vrot.slane %v2086, %v2107
      %v2110 = vunpack.c.l.s4 1966171168
      %v2111 = vunpack.c.0.s8 %v2110
      %v2112 = vlaneseq
      %v2113 = vshrl.u32 %v2112, 7
      %v2114 = vsub.s32 %v2111, %v2113
      %v2115 = vrot.slane %v2087, %v2114
      %v2116 = vcombine.high %v2094, %v2094
      %v2117 = vcombine.high %v2101, %v2101
      %v2118 = vcombine.high %v2108, %v2108
      %v2119 = vcombine.high %v2115, %v2115
      %v2120 = vcombine.high %v488, %v488
      %v2122 = vunpack.c.l.s4 1966171168
      %v2123 = vunpack.c.0.s8 %v2122
      %v2124 = vlaneseq
      %v2125 = vshrl.u32 %v2124, 7
      %v2126 = vsub.s32 %v2123, %v2125
      %v2127 = vrot.slane %v488, %v2126
      %v2129 = vunpack.c.l.s4 1966171168
      %v2130 = vunpack.c.0.s8 %v2129
      %v2131 = vlaneseq
      %v2132 = vshrl.u32 %v2131, 7
      %v2133 = vsub.s32 %v2130, %v2132
      %v2134 = vrot.slane %v2120, %v2133
      %v2135 = vcombine.high %v2127, %v2127
      %v2136 = vcombine.high %v2134, %v2134
      %v2138 = vunpack.c.l.s4 1966171168
      %v2139 = vunpack.c.0.s8 %v2138
      %v2140 = vlaneseq
      %v2141 = vshrl.u32 %v2140, 7
      %v2142 = vsub.s32 %v2139, %v2141
      %v2143 = vrot.slane %v2127, %v2142
      %v2145 = vunpack.c.l.s4 1966171168
      %v2146 = vunpack.c.0.s8 %v2145
      %v2147 = vlaneseq
      %v2148 = vshrl.u32 %v2147, 7
      %v2149 = vsub.s32 %v2146, %v2148
      %v2150 = vrot.slane %v2134, %v2149
      %v2152 = vunpack.c.l.s4 1966171168
      %v2153 = vunpack.c.0.s8 %v2152
      %v2154 = vlaneseq
      %v2155 = vshrl.u32 %v2154, 7
      %v2156 = vsub.s32 %v2153, %v2155
      %v2157 = vrot.slane %v2135, %v2156
      %v2159 = vunpack.c.l.s4 1966171168
      %v2160 = vunpack.c.0.s8 %v2159
      %v2161 = vlaneseq
      %v2162 = vshrl.u32 %v2161, 7
      %v2163 = vsub.s32 %v2160, %v2162
      %v2164 = vrot.slane %v2136, %v2163
      %v2165 = vcombine.high %v2143, %v2143
      %v2166 = vcombine.high %v2150, %v2150
      %v2167 = vcombine.high %v2157, %v2157
      %v2168 = vcombine.high %v2164, %v2164
      %v2169 = vcombine.high %v489, %v489
      %v2171 = vunpack.c.l.s4 1966171168
      %v2172 = vunpack.c.0.s8 %v2171
      %v2173 = vlaneseq
      %v2174 = vshrl.u32 %v2173, 7
      %v2175 = vsub.s32 %v2172, %v2174
      %v2176 = vrot.slane %v489, %v2175
      %v2178 = vunpack.c.l.s4 1966171168
      %v2179 = vunpack.c.0.s8 %v2178
      %v2180 = vlaneseq
      %v2181 = vshrl.u32 %v2180, 7
      %v2182 = vsub.s32 %v2179, %v2181
      %v2183 = vrot.slane %v2169, %v2182
      %v2184 = vcombine.high %v2176, %v2176
      %v2185 = vcombine.high %v2183, %v2183
      %v2187 = vunpack.c.l.s4 1966171168
      %v2188 = vunpack.c.0.s8 %v2187
      %v2189 = vlaneseq
      %v2190 = vshrl.u32 %v2189, 7
      %v2191 = vsub.s32 %v2188, %v2190
      %v2192 = vrot.slane %v2176, %v2191
      %v2194 = vunpack.c.l.s4 1966171168
      %v2195 = vunpack.c.0.s8 %v2194
      %v2196 = vlaneseq
      %v2197 = vshrl.u32 %v2196, 7
      %v2198 = vsub.s32 %v2195, %v2197
      %v2199 = vrot.slane %v2183, %v2198
      %v2201 = vunpack.c.l.s4 1966171168
      %v2202 = vunpack.c.0.s8 %v2201
      %v2203 = vlaneseq
      %v2204 = vshrl.u32 %v2203, 7
      %v2205 = vsub.s32 %v2202, %v2204
      %v2206 = vrot.slane %v2184, %v2205
      %v2208 = vunpack.c.l.s4 1966171168
      %v2209 = vunpack.c.0.s8 %v2208
      %v2210 = vlaneseq
      %v2211 = vshrl.u32 %v2210, 7
      %v2212 = vsub.s32 %v2209, %v2211
      %v2213 = vrot.slane %v2185, %v2212
      %v2214 = vcombine.high %v2192, %v2192
      %v2215 = vcombine.high %v2199, %v2199
      %v2216 = vcombine.high %v2206, %v2206
      %v2217 = vcombine.high %v2213, %v2213
      %v2218 = vlaneseq
      %v2219 = vshrl.u32 %v2218, 7
      %v2220 = vsub.s32 0, %v2219
      %v2221 = vrot.slane %v1457, %v2220
      %v2222 = vlaneseq
      %v2223 = vshrl.u32 %v2222, 7
      %v2224 = vsub.s32 0, %v2223
      %v2225 = vrot.slane %v1471, %v2224
      %v2226 = vlaneseq
      %v2227 = vshrl.u32 %v2226, 7
      %v2228 = vsub.s32 0, %v2227
      %v2229 = vrot.slane %v1479, %v2228
      %v2230 = vlaneseq
      %v2231 = vshrl.u32 %v2230, 7
      %v2232 = vsub.s32 0, %v2231
      %v2233 = vrot.slane %v1481, %v2232
      %v2234 = vlaneseq
      %v2235 = vshrl.u32 %v2234, 7
      %v2236 = vsub.s32 0, %v2235
      %v2237 = vrot.slane %v1464, %v2236
      %v2238 = vlaneseq
      %v2239 = vshrl.u32 %v2238, 7
      %v2240 = vsub.s32 0, %v2239
      %v2241 = vrot.slane %v1478, %v2240
      %v2242 = vlaneseq
      %v2243 = vshrl.u32 %v2242, 7
      %v2244 = vsub.s32 0, %v2243
      %v2245 = vrot.slane %v1480, %v2244
      %v2246 = vlaneseq
      %v2247 = vshrl.u32 %v2246, 7
      %v2248 = vsub.s32 0, %v2247
      %v2249 = vrot.slane %v1482, %v2248
      %v2250 = vlaneseq
      %v2251 = vshrl.u32 %v2250, 7
      %v2252 = vsub.s32 0, %v2251
      %v2253 = vrot.slane %v1506, %v2252
      %v2254 = vlaneseq
      %v2255 = vshrl.u32 %v2254, 7
      %v2256 = vsub.s32 0, %v2255
      %v2257 = vrot.slane %v1520, %v2256
      %v2258 = vlaneseq
      %v2259 = vshrl.u32 %v2258, 7
      %v2260 = vsub.s32 0, %v2259
      %v2261 = vrot.slane %v1528, %v2260
      %v2262 = vlaneseq
      %v2263 = vshrl.u32 %v2262, 7
      %v2264 = vsub.s32 0, %v2263
      %v2265 = vrot.slane %v1530, %v2264
      %v2266 = vlaneseq
      %v2267 = vshrl.u32 %v2266, 7
      %v2268 = vsub.s32 0, %v2267
      %v2269 = vrot.slane %v1513, %v2268
      %v2270 = vlaneseq
      %v2271 = vshrl.u32 %v2270, 7
      %v2272 = vsub.s32 0, %v2271
      %v2273 = vrot.slane %v1527, %v2272
      %v2274 = vlaneseq
      %v2275 = vshrl.u32 %v2274, 7
      %v2276 = vsub.s32 0, %v2275
      %v2277 = vrot.slane %v1529, %v2276
      %v2278 = vlaneseq
      %v2279 = vshrl.u32 %v2278, 7
      %v2280 = vsub.s32 0, %v2279
      %v2281 = vrot.slane %v1531, %v2280
      %v2282 = vlaneseq
      %v2283 = vshrl.u32 %v2282, 7
      %v2284 = vsub.s32 0, %v2283
      %v2285 = vrot.slane %v1555, %v2284
      %v2286 = vlaneseq
      %v2287 = vshrl.u32 %v2286, 7
      %v2288 = vsub.s32 0, %v2287
      %v2289 = vrot.slane %v1569, %v2288
      %v2290 = vlaneseq
      %v2291 = vshrl.u32 %v2290, 7
      %v2292 = vsub.s32 0, %v2291
      %v2293 = vrot.slane %v1577, %v2292
      %v2294 = vlaneseq
      %v2295 = vshrl.u32 %v2294, 7
      %v2296 = vsub.s32 0, %v2295
      %v2297 = vrot.slane %v1579, %v2296
      %v2298 = vlaneseq
      %v2299 = vshrl.u32 %v2298, 7
      %v2300 = vsub.s32 0, %v2299
      %v2301 = vrot.slane %v1562, %v2300
      %v2302 = vlaneseq
      %v2303 = vshrl.u32 %v2302, 7
      %v2304 = vsub.s32 0, %v2303
      %v2305 = vrot.slane %v1576, %v2304
      %v2306 = vlaneseq
      %v2307 = vshrl.u32 %v2306, 7
      %v2308 = vsub.s32 0, %v2307
      %v2309 = vrot.slane %v1578, %v2308
      %v2310 = vlaneseq
      %v2311 = vshrl.u32 %v2310, 7
      %v2312 = vsub.s32 0, %v2311
      %v2313 = vrot.slane %v1580, %v2312
      %v2314 = vlaneseq
      %v2315 = vshrl.u32 %v2314, 7
      %v2316 = vsub.s32 0, %v2315
      %v2317 = vrot.slane %v1604, %v2316
      %v2318 = vlaneseq
      %v2319 = vshrl.u32 %v2318, 7
      %v2320 = vsub.s32 0, %v2319
      %v2321 = vrot.slane %v1618, %v2320
      %v2322 = vlaneseq
      %v2323 = vshrl.u32 %v2322, 7
      %v2324 = vsub.s32 0, %v2323
      %v2325 = vrot.slane %v1626, %v2324
      %v2326 = vlaneseq
      %v2327 = vshrl.u32 %v2326, 7
      %v2328 = vsub.s32 0, %v2327
      %v2329 = vrot.slane %v1628, %v2328
      %v2330 = vlaneseq
      %v2331 = vshrl.u32 %v2330, 7
      %v2332 = vsub.s32 0, %v2331
      %v2333 = vrot.slane %v1611, %v2332
      %v2334 = vlaneseq
      %v2335 = vshrl.u32 %v2334, 7
      %v2336 = vsub.s32 0, %v2335
      %v2337 = vrot.slane %v1625, %v2336
      %v2338 = vlaneseq
      %v2339 = vshrl.u32 %v2338, 7
      %v2340 = vsub.s32 0, %v2339
      %v2341 = vrot.slane %v1627, %v2340
      %v2342 = vlaneseq
      %v2343 = vshrl.u32 %v2342, 7
      %v2344 = vsub.s32 0, %v2343
      %v2345 = vrot.slane %v1629, %v2344
      %v2346 = vlaneseq
      %v2347 = vshrl.u32 %v2346, 7
      %v2348 = vsub.s32 0, %v2347
      %v2349 = vrot.slane %v1653, %v2348
      %v2350 = vlaneseq
      %v2351 = vshrl.u32 %v2350, 7
      %v2352 = vsub.s32 0, %v2351
      %v2353 = vrot.slane %v1667, %v2352
      %v2354 = vlaneseq
      %v2355 = vshrl.u32 %v2354, 7
      %v2356 = vsub.s32 0, %v2355
      %v2357 = vrot.slane %v1675, %v2356
      %v2358 = vlaneseq
      %v2359 = vshrl.u32 %v2358, 7
      %v2360 = vsub.s32 0, %v2359
      %v2361 = vrot.slane %v1677, %v2360
      %v2362 = vlaneseq
      %v2363 = vshrl.u32 %v2362, 7
      %v2364 = vsub.s32 0, %v2363
      %v2365 = vrot.slane %v1660, %v2364
      %v2366 = vlaneseq
      %v2367 = vshrl.u32 %v2366, 7
      %v2368 = vsub.s32 0, %v2367
      %v2369 = vrot.slane %v1674, %v2368
      %v2370 = vlaneseq
      %v2371 = vshrl.u32 %v2370, 7
      %v2372 = vsub.s32 0, %v2371
      %v2373 = vrot.slane %v1676, %v2372
      %v2374 = vlaneseq
      %v2375 = vshrl.u32 %v2374, 7
      %v2376 = vsub.s32 0, %v2375
      %v2377 = vrot.slane %v1678, %v2376
      %v2378 = vlaneseq
      %v2379 = vshrl.u32 %v2378, 7
      %v2380 = vsub.s32 0, %v2379
      %v2381 = vrot.slane %v1702, %v2380
      %v2382 = vlaneseq
      %v2383 = vshrl.u32 %v2382, 7
      %v2384 = vsub.s32 0, %v2383
      %v2385 = vrot.slane %v1716, %v2384
      %v2386 = vlaneseq
      %v2387 = vshrl.u32 %v2386, 7
      %v2388 = vsub.s32 0, %v2387
      %v2389 = vrot.slane %v1724, %v2388
      %v2390 = vlaneseq
      %v2391 = vshrl.u32 %v2390, 7
      %v2392 = vsub.s32 0, %v2391
      %v2393 = vrot.slane %v1726, %v2392
      %v2394 = vlaneseq
      %v2395 = vshrl.u32 %v2394, 7
      %v2396 = vsub.s32 0, %v2395
      %v2397 = vrot.slane %v1709, %v2396
      %v2398 = vlaneseq
      %v2399 = vshrl.u32 %v2398, 7
      %v2400 = vsub.s32 0, %v2399
      %v2401 = vrot.slane %v1723, %v2400
      %v2402 = vlaneseq
      %v2403 = vshrl.u32 %v2402, 7
      %v2404 = vsub.s32 0, %v2403
      %v2405 = vrot.slane %v1725, %v2404
      %v2406 = vlaneseq
      %v2407 = vshrl.u32 %v2406, 7
      %v2408 = vsub.s32 0, %v2407
      %v2409 = vrot.slane %v1727, %v2408
      %v2410 = vlaneseq
      %v2411 = vshrl.u32 %v2410, 7
      %v2412 = vsub.s32 0, %v2411
      %v2413 = vrot.slane %v1751, %v2412
      %v2414 = vlaneseq
      %v2415 = vshrl.u32 %v2414, 7
      %v2416 = vsub.s32 0, %v2415
      %v2417 = vrot.slane %v1765, %v2416
      %v2418 = vlaneseq
      %v2419 = vshrl.u32 %v2418, 7
      %v2420 = vsub.s32 0, %v2419
      %v2421 = vrot.slane %v1773, %v2420
      %v2422 = vlaneseq
      %v2423 = vshrl.u32 %v2422, 7
      %v2424 = vsub.s32 0, %v2423
      %v2425 = vrot.slane %v1775, %v2424
      %v2426 = vlaneseq
      %v2427 = vshrl.u32 %v2426, 7
      %v2428 = vsub.s32 0, %v2427
      %v2429 = vrot.slane %v1758, %v2428
      %v2430 = vlaneseq
      %v2431 = vshrl.u32 %v2430, 7
      %v2432 = vsub.s32 0, %v2431
      %v2433 = vrot.slane %v1772, %v2432
      %v2434 = vlaneseq
      %v2435 = vshrl.u32 %v2434, 7
      %v2436 = vsub.s32 0, %v2435
      %v2437 = vrot.slane %v1774, %v2436
      %v2438 = vlaneseq
      %v2439 = vshrl.u32 %v2438, 7
      %v2440 = vsub.s32 0, %v2439
      %v2441 = vrot.slane %v1776, %v2440
      %v2442 = vlaneseq
      %v2443 = vshrl.u32 %v2442, 7
      %v2444 = vsub.s32 0, %v2443
      %v2445 = vrot.slane %v1800, %v2444
      %v2446 = vlaneseq
      %v2447 = vshrl.u32 %v2446, 7
      %v2448 = vsub.s32 0, %v2447
      %v2449 = vrot.slane %v1814, %v2448
      %v2450 = vlaneseq
      %v2451 = vshrl.u32 %v2450, 7
      %v2452 = vsub.s32 0, %v2451
      %v2453 = vrot.slane %v1822, %v2452
      %v2454 = vlaneseq
      %v2455 = vshrl.u32 %v2454, 7
      %v2456 = vsub.s32 0, %v2455
      %v2457 = vrot.slane %v1824, %v2456
      %v2458 = vlaneseq
      %v2459 = vshrl.u32 %v2458, 7
      %v2460 = vsub.s32 0, %v2459
      %v2461 = vrot.slane %v1807, %v2460
      %v2462 = vlaneseq
      %v2463 = vshrl.u32 %v2462, 7
      %v2464 = vsub.s32 0, %v2463
      %v2465 = vrot.slane %v1821, %v2464
      %v2466 = vlaneseq
      %v2467 = vshrl.u32 %v2466, 7
      %v2468 = vsub.s32 0, %v2467
      %v2469 = vrot.slane %v1823, %v2468
      %v2470 = vlaneseq
      %v2471 = vshrl.u32 %v2470, 7
      %v2472 = vsub.s32 0, %v2471
      %v2473 = vrot.slane %v1825, %v2472
      %v2474 = vlaneseq
      %v2475 = vshrl.u32 %v2474, 7
      %v2476 = vsub.s32 0, %v2475
      %v2477 = vrot.slane %v1849, %v2476
      %v2478 = vlaneseq
      %v2479 = vshrl.u32 %v2478, 7
      %v2480 = vsub.s32 0, %v2479
      %v2481 = vrot.slane %v1863, %v2480
      %v2482 = vlaneseq
      %v2483 = vshrl.u32 %v2482, 7
      %v2484 = vsub.s32 0, %v2483
      %v2485 = vrot.slane %v1871, %v2484
      %v2486 = vlaneseq
      %v2487 = vshrl.u32 %v2486, 7
      %v2488 = vsub.s32 0, %v2487
      %v2489 = vrot.slane %v1873, %v2488
      %v2490 = vlaneseq
      %v2491 = vshrl.u32 %v2490, 7
      %v2492 = vsub.s32 0, %v2491
      %v2493 = vrot.slane %v1856, %v2492
      %v2494 = vlaneseq
      %v2495 = vshrl.u32 %v2494, 7
      %v2496 = vsub.s32 0, %v2495
      %v2497 = vrot.slane %v1870, %v2496
      %v2498 = vlaneseq
      %v2499 = vshrl.u32 %v2498, 7
      %v2500 = vsub.s32 0, %v2499
      %v2501 = vrot.slane %v1872, %v2500
      %v2502 = vlaneseq
      %v2503 = vshrl.u32 %v2502, 7
      %v2504 = vsub.s32 0, %v2503
      %v2505 = vrot.slane %v1874, %v2504
      %v2506 = vlaneseq
      %v2507 = vshrl.u32 %v2506, 7
      %v2508 = vsub.s32 0, %v2507
      %v2509 = vrot.slane %v1898, %v2508
      %v2510 = vlaneseq
      %v2511 = vshrl.u32 %v2510, 7
      %v2512 = vsub.s32 0, %v2511
      %v2513 = vrot.slane %v1912, %v2512
      %v2514 = vlaneseq
      %v2515 = vshrl.u32 %v2514, 7
      %v2516 = vsub.s32 0, %v2515
      %v2517 = vrot.slane %v1920, %v2516
      %v2518 = vlaneseq
      %v2519 = vshrl.u32 %v2518, 7
      %v2520 = vsub.s32 0, %v2519
      %v2521 = vrot.slane %v1922, %v2520
      %v2522 = vlaneseq
      %v2523 = vshrl.u32 %v2522, 7
      %v2524 = vsub.s32 0, %v2523
      %v2525 = vrot.slane %v1905, %v2524
      %v2526 = vlaneseq
      %v2527 = vshrl.u32 %v2526, 7
      %v2528 = vsub.s32 0, %v2527
      %v2529 = vrot.slane %v1919, %v2528
      %v2530 = vlaneseq
      %v2531 = vshrl.u32 %v2530, 7
      %v2532 = vsub.s32 0, %v2531
      %v2533 = vrot.slane %v1921, %v2532
      %v2534 = vlaneseq
      %v2535 = vshrl.u32 %v2534, 7
      %v2536 = vsub.s32 0, %v2535
      %v2537 = vrot.slane %v1923, %v2536
      %v2538 = vlaneseq
      %v2539 = vshrl.u32 %v2538, 7
      %v2540 = vsub.s32 0, %v2539
      %v2541 = vrot.slane %v1947, %v2540
      %v2542 = vlaneseq
      %v2543 = vshrl.u32 %v2542, 7
      %v2544 = vsub.s32 0, %v2543
      %v2545 = vrot.slane %v1961, %v2544
      %v2546 = vlaneseq
      %v2547 = vshrl.u32 %v2546, 7
      %v2548 = vsub.s32 0, %v2547
      %v2549 = vrot.slane %v1969, %v2548
      %v2550 = vlaneseq
      %v2551 = vshrl.u32 %v2550, 7
      %v2552 = vsub.s32 0, %v2551
      %v2553 = vrot.slane %v1971, %v2552
      %v2554 = vlaneseq
      %v2555 = vshrl.u32 %v2554, 7
      %v2556 = vsub.s32 0, %v2555
      %v2557 = vrot.slane %v1954, %v2556
      %v2558 = vlaneseq
      %v2559 = vshrl.u32 %v2558, 7
      %v2560 = vsub.s32 0, %v2559
      %v2561 = vrot.slane %v1968, %v2560
      %v2562 = vlaneseq
      %v2563 = vshrl.u32 %v2562, 7
      %v2564 = vsub.s32 0, %v2563
      %v2565 = vrot.slane %v1970, %v2564
      %v2566 = vlaneseq
      %v2567 = vshrl.u32 %v2566, 7
      %v2568 = vsub.s32 0, %v2567
      %v2569 = vrot.slane %v1972, %v2568
      %v2570 = vlaneseq
      %v2571 = vshrl.u32 %v2570, 7
      %v2572 = vsub.s32 0, %v2571
      %v2573 = vrot.slane %v1996, %v2572
      %v2574 = vlaneseq
      %v2575 = vshrl.u32 %v2574, 7
      %v2576 = vsub.s32 0, %v2575
      %v2577 = vrot.slane %v2010, %v2576
      %v2578 = vlaneseq
      %v2579 = vshrl.u32 %v2578, 7
      %v2580 = vsub.s32 0, %v2579
      %v2581 = vrot.slane %v2018, %v2580
      %v2582 = vlaneseq
      %v2583 = vshrl.u32 %v2582, 7
      %v2584 = vsub.s32 0, %v2583
      %v2585 = vrot.slane %v2020, %v2584
      %v2586 = vlaneseq
      %v2587 = vshrl.u32 %v2586, 7
      %v2588 = vsub.s32 0, %v2587
      %v2589 = vrot.slane %v2003, %v2588
      %v2590 = vlaneseq
      %v2591 = vshrl.u32 %v2590, 7
      %v2592 = vsub.s32 0, %v2591
      %v2593 = vrot.slane %v2017, %v2592
      %v2594 = vlaneseq
      %v2595 = vshrl.u32 %v2594, 7
      %v2596 = vsub.s32 0, %v2595
      %v2597 = vrot.slane %v2019, %v2596
      %v2598 = vlaneseq
      %v2599 = vshrl.u32 %v2598, 7
      %v2600 = vsub.s32 0, %v2599
      %v2601 = vrot.slane %v2021, %v2600
      %v2602 = vlaneseq
      %v2603 = vshrl.u32 %v2602, 7
      %v2604 = vsub.s32 0, %v2603
      %v2605 = vrot.slane %v2045, %v2604
      %v2606 = vlaneseq
      %v2607 = vshrl.u32 %v2606, 7
      %v2608 = vsub.s32 0, %v2607
      %v2609 = vrot.slane %v2059, %v2608
      %v2610 = vlaneseq
      %v2611 = vshrl.u32 %v2610, 7
      %v2612 = vsub.s32 0, %v2611
      %v2613 = vrot.slane %v2067, %v2612
      %v2614 = vlaneseq
      %v2615 = vshrl.u32 %v2614, 7
      %v2616 = vsub.s32 0, %v2615
      %v2617 = vrot.slane %v2069, %v2616
      %v2618 = vlaneseq
      %v2619 = vshrl.u32 %v2618, 7
      %v2620 = vsub.s32 0, %v2619
      %v2621 = vrot.slane %v2052, %v2620
      %v2622 = vlaneseq
      %v2623 = vshrl.u32 %v2622, 7
      %v2624 = vsub.s32 0, %v2623
      %v2625 = vrot.slane %v2066, %v2624
      %v2626 = vlaneseq
      %v2627 = vshrl.u32 %v2626, 7
      %v2628 = vsub.s32 0, %v2627
      %v2629 = vrot.slane %v2068, %v2628
      %v2630 = vlaneseq
      %v2631 = vshrl.u32 %v2630, 7
      %v2632 = vsub.s32 0, %v2631
      %v2633 = vrot.slane %v2070, %v2632
      %v2634 = vlaneseq
      %v2635 = vshrl.u32 %v2634, 7
      %v2636 = vsub.s32 0, %v2635
      %v2637 = vrot.slane %v2094, %v2636
      %v2638 = vlaneseq
      %v2639 = vshrl.u32 %v2638, 7
      %v2640 = vsub.s32 0, %v2639
      %v2641 = vrot.slane %v2108, %v2640
      %v2642 = vlaneseq
      %v2643 = vshrl.u32 %v2642, 7
      %v2644 = vsub.s32 0, %v2643
      %v2645 = vrot.slane %v2116, %v2644
      %v2646 = vlaneseq
      %v2647 = vshrl.u32 %v2646, 7
      %v2648 = vsub.s32 0, %v2647
      %v2649 = vrot.slane %v2118, %v2648
      %v2650 = vlaneseq
      %v2651 = vshrl.u32 %v2650, 7
      %v2652 = vsub.s32 0, %v2651
      %v2653 = vrot.slane %v2101, %v2652
      %v2654 = vlaneseq
      %v2655 = vshrl.u32 %v2654, 7
      %v2656 = vsub.s32 0, %v2655
      %v2657 = vrot.slane %v2115, %v2656
      %v2658 = vlaneseq
      %v2659 = vshrl.u32 %v2658, 7
      %v2660 = vsub.s32 0, %v2659
      %v2661 = vrot.slane %v2117, %v2660
      %v2662 = vlaneseq
      %v2663 = vshrl.u32 %v2662, 7
      %v2664 = vsub.s32 0, %v2663
      %v2665 = vrot.slane %v2119, %v2664
      %v2666 = vlaneseq
      %v2667 = vshrl.u32 %v2666, 7
      %v2668 = vsub.s32 0, %v2667
      %v2669 = vrot.slane %v2143, %v2668
      %v2670 = vlaneseq
      %v2671 = vshrl.u32 %v2670, 7
      %v2672 = vsub.s32 0, %v2671
      %v2673 = vrot.slane %v2157, %v2672
      %v2674 = vlaneseq
      %v2675 = vshrl.u32 %v2674, 7
      %v2676 = vsub.s32 0, %v2675
      %v2677 = vrot.slane %v2165, %v2676
      %v2678 = vlaneseq
      %v2679 = vshrl.u32 %v2678, 7
      %v2680 = vsub.s32 0, %v2679
      %v2681 = vrot.slane %v2167, %v2680
      %v2682 = vlaneseq
      %v2683 = vshrl.u32 %v2682, 7
      %v2684 = vsub.s32 0, %v2683
      %v2685 = vrot.slane %v2150, %v2684
      %v2686 = vlaneseq
      %v2687 = vshrl.u32 %v2686, 7
      %v2688 = vsub.s32 0, %v2687
      %v2689 = vrot.slane %v2164, %v2688
      %v2690 = vlaneseq
      %v2691 = vshrl.u32 %v2690, 7
      %v2692 = vsub.s32 0, %v2691
      %v2693 = vrot.slane %v2166, %v2692
      %v2694 = vlaneseq
      %v2695 = vshrl.u32 %v2694, 7
      %v2696 = vsub.s32 0, %v2695
      %v2697 = vrot.slane %v2168, %v2696
      %v2698 = vlaneseq
      %v2699 = vshrl.u32 %v2698, 7
      %v2700 = vsub.s32 0, %v2699
      %v2701 = vrot.slane %v2192, %v2700
      %v2702 = vlaneseq
      %v2703 = vshrl.u32 %v2702, 7
      %v2704 = vsub.s32 0, %v2703
      %v2705 = vrot.slane %v2206, %v2704
      %v2706 = vlaneseq
      %v2707 = vshrl.u32 %v2706, 7
      %v2708 = vsub.s32 0, %v2707
      %v2709 = vrot.slane %v2214, %v2708
      %v2710 = vlaneseq
      %v2711 = vshrl.u32 %v2710, 7
      %v2712 = vsub.s32 0, %v2711
      %v2713 = vrot.slane %v2216, %v2712
      %v2714 = vlaneseq
      %v2715 = vshrl.u32 %v2714, 7
      %v2716 = vsub.s32 0, %v2715
      %v2717 = vrot.slane %v2199, %v2716
      %v2718 = vlaneseq
      %v2719 = vshrl.u32 %v2718, 7
      %v2720 = vsub.s32 0, %v2719
      %v2721 = vrot.slane %v2213, %v2720
      %v2722 = vlaneseq
      %v2723 = vshrl.u32 %v2722, 7
      %v2724 = vsub.s32 0, %v2723
      %v2725 = vrot.slane %v2215, %v2724
      %v2726 = vlaneseq
      %v2727 = vshrl.u32 %v2726, 7
      %v2728 = vsub.s32 0, %v2727
      %v2729 = vrot.slane %v2217, %v2728
      %v2858 = vsel %vm344, %v529, %v2221
      %v2859 = vsel %vm344, %v543, %v2225
      %v2860 = vsel %vm344, %v551, %v2229
      %v2861 = vsel %vm344, %v553, %v2233
      %v2862 = vsel %vm344, %v536, %v2237
      %v2863 = vsel %vm344, %v550, %v2241
      %v2864 = vsel %vm344, %v552, %v2245
      %v2865 = vsel %vm344, %v554, %v2249
      %v2866 = vsel %vm344, %v578, %v2253
      %v2867 = vsel %vm344, %v592, %v2257
      %v2868 = vsel %vm344, %v600, %v2261
      %v2869 = vsel %vm344, %v602, %v2265
      %v2870 = vsel %vm344, %v585, %v2269
      %v2871 = vsel %vm344, %v599, %v2273
      %v2872 = vsel %vm344, %v601, %v2277
      %v2873 = vsel %vm344, %v603, %v2281
      %v2874 = vsel %vm344, %v627, %v2285
      %v2875 = vsel %vm344, %v641, %v2289
      %v2876 = vsel %vm344, %v649, %v2293
      %v2877 = vsel %vm344, %v651, %v2297
      %v2878 = vsel %vm344, %v634, %v2301
      %v2879 = vsel %vm344, %v648, %v2305
      %v2880 = vsel %vm344, %v650, %v2309
      %v2881 = vsel %vm344, %v652, %v2313
      %v2882 = vsel %vm344, %v676, %v2317
      %v2883 = vsel %vm344, %v690, %v2321
      %v2884 = vsel %vm344, %v698, %v2325
      %v2885 = vsel %vm344, %v700, %v2329
      %v2886 = vsel %vm344, %v683, %v2333
      %v2887 = vsel %vm344, %v697, %v2337
      %v2888 = vsel %vm344, %v699, %v2341
      %v2889 = vsel %vm344, %v701, %v2345
      %v2890 = vsel %vm344, %v725, %v2349
      %v2891 = vsel %vm344, %v739, %v2353
      %v2892 = vsel %vm344, %v747, %v2357
      %v2893 = vsel %vm344, %v749, %v2361
      %v2894 = vsel %vm344, %v732, %v2365
      %v2895 = vsel %vm344, %v746, %v2369
      %v2896 = vsel %vm344, %v748, %v2373
      %v2897 = vsel %vm344, %v750, %v2377
      %v2898 = vsel %vm344, %v774, %v2381
      %v2899 = vsel %vm344, %v788, %v2385
      %v2900 = vsel %vm344, %v796, %v2389
      %v2901 = vsel %vm344, %v798, %v2393
      %v2902 = vsel %vm344, %v781, %v2397
      %v2903 = vsel %vm344, %v795, %v2401
      %v2904 = vsel %vm344, %v797, %v2405
      %v2905 = vsel %vm344, %v799, %v2409
      %v2906 = vsel %vm344, %v823, %v2413
      %v2907 = vsel %vm344, %v837, %v2417
      %v2908 = vsel %vm344, %v845, %v2421
      %v2909 = vsel %vm344, %v847, %v2425
      %v2910 = vsel %vm344, %v830, %v2429
      %v2911 = vsel %vm344, %v844, %v2433
      %v2912 = vsel %vm344, %v846, %v2437
      %v2913 = vsel %vm344, %v848, %v2441
      %v2914 = vsel %vm344, %v872, %v2445
      %v2915 = vsel %vm344, %v886, %v2449
      %v2916 = vsel %vm344, %v894, %v2453
      %v2917 = vsel %vm344, %v896, %v2457
      %v2918 = vsel %vm344, %v879, %v2461
      %v2919 = vsel %vm344, %v893, %v2465
      %v2920 = vsel %vm344, %v895, %v2469
      %v2921 = vsel %vm344, %v897, %v2473
      %v2922 = vsel %vm344, %v921, %v2477
      %v2923 = vsel %vm344, %v935, %v2481
      %v2924 = vsel %vm344, %v943, %v2485
      %v2925 = vsel %vm344, %v945, %v2489
      %v2926 = vsel %vm344, %v928, %v2493
      %v2927 = vsel %vm344, %v942, %v2497
      %v2928 = vsel %vm344, %v944, %v2501
      %v2929 = vsel %vm344, %v946, %v2505
      %v2930 = vsel %vm344, %v970, %v2509
      %v2931 = vsel %vm344, %v984, %v2513
      %v2932 = vsel %vm344, %v992, %v2517
      %v2933 = vsel %vm344, %v994, %v2521
      %v2934 = vsel %vm344, %v977, %v2525
      %v2935 = vsel %vm344, %v991, %v2529
      %v2936 = vsel %vm344, %v993, %v2533
      %v2937 = vsel %vm344, %v995, %v2537
      %v2938 = vsel %vm344, %v1019, %v2541
      %v2939 = vsel %vm344, %v1033, %v2545
      %v2940 = vsel %vm344, %v1041, %v2549
      %v2941 = vsel %vm344, %v1043, %v2553
      %v2942 = vsel %vm344, %v1026, %v2557
      %v2943 = vsel %vm344, %v1040, %v2561
      %v2944 = vsel %vm344, %v1042, %v2565
      %v2945 = vsel %vm344, %v1044, %v2569
      %v2946 = vsel %vm344, %v1068, %v2573
      %v2947 = vsel %vm344, %v1082, %v2577
      %v2948 = vsel %vm344, %v1090, %v2581
      %v2949 = vsel %vm344, %v1092, %v2585
      %v2950 = vsel %vm344, %v1075, %v2589
      %v2951 = vsel %vm344, %v1089, %v2593
      %v2952 = vsel %vm344, %v1091, %v2597
      %v2953 = vsel %vm344, %v1093, %v2601
      %v2954 = vsel %vm344, %v1117, %v2605
      %v2955 = vsel %vm344, %v1131, %v2609
      %v2956 = vsel %vm344, %v1139, %v2613
      %v2957 = vsel %vm344, %v1141, %v2617
      %v2958 = vsel %vm344, %v1124, %v2621
      %v2959 = vsel %vm344, %v1138, %v2625
      %v2960 = vsel %vm344, %v1140, %v2629
      %v2961 = vsel %vm344, %v1142, %v2633
      %v2962 = vsel %vm344, %v1166, %v2637
      %v2963 = vsel %vm344, %v1180, %v2641
      %v2964 = vsel %vm344, %v1188, %v2645
      %v2965 = vsel %vm344, %v1190, %v2649
      %v2966 = vsel %vm344, %v1173, %v2653
      %v2967 = vsel %vm344, %v1187, %v2657
      %v2968 = vsel %vm344, %v1189, %v2661
      %v2969 = vsel %vm344, %v1191, %v2665
      %v2970 = vsel %vm344, %v1215, %v2669
      %v2971 = vsel %vm344, %v1229, %v2673
      %v2972 = vsel %vm344, %v1237, %v2677
      %v2973 = vsel %vm344, %v1239, %v2681
      %v2974 = vsel %vm344, %v1222, %v2685
      %v2975 = vsel %vm344, %v1236, %v2689
      %v2976 = vsel %vm344, %v1238, %v2693
      %v2977 = vsel %vm344, %v1240, %v2697
      %v2978 = vsel %vm344, %v1264, %v2701
      %v2979 = vsel %vm344, %v1278, %v2705
      %v2980 = vsel %vm344, %v1286, %v2709
      %v2981 = vsel %vm344, %v1288, %v2713
      %v2982 = vsel %vm344, %v1271, %v2717
      %v2983 = vsel %vm344, %v1285, %v2721
      %v2984 = vsel %vm344, %v1287, %v2725
      %v2985 = vsel %vm344, %v1289, %v2729
      %v2986 = vpack.c.bf16 %v2858, %v2858
      %v2987 = vpack.c.bf16 %v2859, %v2859
      %v2988 = vpack.c.bf16 %v2860, %v2860
      %v2989 = vpack.c.bf16 %v2861, %v2861
      %v2990 = vpack.c.bf16 %v2862, %v2862
      %v2991 = vpack.c.bf16 %v2863, %v2863
      %v2992 = vpack.c.bf16 %v2864, %v2864
      %v2993 = vpack.c.bf16 %v2865, %v2865
      %v2994 = vpack.c.bf16 %v2866, %v2866
      %v2995 = vpack.c.bf16 %v2867, %v2867
      %v2996 = vpack.c.bf16 %v2868, %v2868
      %v2997 = vpack.c.bf16 %v2869, %v2869
      %v2998 = vpack.c.bf16 %v2870, %v2870
      %v2999 = vpack.c.bf16 %v2871, %v2871
      %v3000 = vpack.c.bf16 %v2872, %v2872
      %v3001 = vpack.c.bf16 %v2873, %v2873
      %v3002 = vpack.c.bf16 %v2874, %v2874
      %v3003 = vpack.c.bf16 %v2875, %v2875
      %v3004 = vpack.c.bf16 %v2876, %v2876
      %v3005 = vpack.c.bf16 %v2877, %v2877
      %v3006 = vpack.c.bf16 %v2878, %v2878
      %v3007 = vpack.c.bf16 %v2879, %v2879
      %v3008 = vpack.c.bf16 %v2880, %v2880
      %v3009 = vpack.c.bf16 %v2881, %v2881
      %v3010 = vpack.c.bf16 %v2882, %v2882
      %v3011 = vpack.c.bf16 %v2883, %v2883
      %v3012 = vpack.c.bf16 %v2884, %v2884
      %v3013 = vpack.c.bf16 %v2885, %v2885
      %v3014 = vpack.c.bf16 %v2886, %v2886
      %v3015 = vpack.c.bf16 %v2887, %v2887
      %v3016 = vpack.c.bf16 %v2888, %v2888
      %v3017 = vpack.c.bf16 %v2889, %v2889
      %v3018 = vpack.c.bf16 %v2890, %v2890
      %v3019 = vpack.c.bf16 %v2891, %v2891
      %v3020 = vpack.c.bf16 %v2892, %v2892
      %v3021 = vpack.c.bf16 %v2893, %v2893
      %v3022 = vpack.c.bf16 %v2894, %v2894
      %v3023 = vpack.c.bf16 %v2895, %v2895
      %v3024 = vpack.c.bf16 %v2896, %v2896
      %v3025 = vpack.c.bf16 %v2897, %v2897
      %v3026 = vpack.c.bf16 %v2898, %v2898
      %v3027 = vpack.c.bf16 %v2899, %v2899
      %v3028 = vpack.c.bf16 %v2900, %v2900
      %v3029 = vpack.c.bf16 %v2901, %v2901
      %v3030 = vpack.c.bf16 %v2902, %v2902
      %v3031 = vpack.c.bf16 %v2903, %v2903
      %v3032 = vpack.c.bf16 %v2904, %v2904
      %v3033 = vpack.c.bf16 %v2905, %v2905
      %v3034 = vpack.c.bf16 %v2906, %v2906
      %v3035 = vpack.c.bf16 %v2907, %v2907
      %v3036 = vpack.c.bf16 %v2908, %v2908
      %v3037 = vpack.c.bf16 %v2909, %v2909
      %v3038 = vpack.c.bf16 %v2910, %v2910
      %v3039 = vpack.c.bf16 %v2911, %v2911
      %v3040 = vpack.c.bf16 %v2912, %v2912
      %v3041 = vpack.c.bf16 %v2913, %v2913
      %v3042 = vpack.c.bf16 %v2914, %v2914
      %v3043 = vpack.c.bf16 %v2915, %v2915
      %v3044 = vpack.c.bf16 %v2916, %v2916
      %v3045 = vpack.c.bf16 %v2917, %v2917
      %v3046 = vpack.c.bf16 %v2918, %v2918
      %v3047 = vpack.c.bf16 %v2919, %v2919
      %v3048 = vpack.c.bf16 %v2920, %v2920
      %v3049 = vpack.c.bf16 %v2921, %v2921
      %v3050 = vpack.c.bf16 %v2922, %v2922
      %v3051 = vpack.c.bf16 %v2923, %v2923
      %v3052 = vpack.c.bf16 %v2924, %v2924
      %v3053 = vpack.c.bf16 %v2925, %v2925
      %v3054 = vpack.c.bf16 %v2926, %v2926
      %v3055 = vpack.c.bf16 %v2927, %v2927
      %v3056 = vpack.c.bf16 %v2928, %v2928
      %v3057 = vpack.c.bf16 %v2929, %v2929
      %v3058 = vpack.c.bf16 %v2930, %v2930
      %v3059 = vpack.c.bf16 %v2931, %v2931
      %v3060 = vpack.c.bf16 %v2932, %v2932
      %v3061 = vpack.c.bf16 %v2933, %v2933
      %v3062 = vpack.c.bf16 %v2934, %v2934
      %v3063 = vpack.c.bf16 %v2935, %v2935
      %v3064 = vpack.c.bf16 %v2936, %v2936
      %v3065 = vpack.c.bf16 %v2937, %v2937
      %v3066 = vpack.c.bf16 %v2938, %v2938
      %v3067 = vpack.c.bf16 %v2939, %v2939
      %v3068 = vpack.c.bf16 %v2940, %v2940
      %v3069 = vpack.c.bf16 %v2941, %v2941
      %v3070 = vpack.c.bf16 %v2942, %v2942
      %v3071 = vpack.c.bf16 %v2943, %v2943
      %v3072 = vpack.c.bf16 %v2944, %v2944
      %v3073 = vpack.c.bf16 %v2945, %v2945
      %v3074 = vpack.c.bf16 %v2946, %v2946
      %v3075 = vpack.c.bf16 %v2947, %v2947
      %v3076 = vpack.c.bf16 %v2948, %v2948
      %v3077 = vpack.c.bf16 %v2949, %v2949
      %v3078 = vpack.c.bf16 %v2950, %v2950
      %v3079 = vpack.c.bf16 %v2951, %v2951
      %v3080 = vpack.c.bf16 %v2952, %v2952
      %v3081 = vpack.c.bf16 %v2953, %v2953
      %v3082 = vpack.c.bf16 %v2954, %v2954
      %v3083 = vpack.c.bf16 %v2955, %v2955
      %v3084 = vpack.c.bf16 %v2956, %v2956
      %v3085 = vpack.c.bf16 %v2957, %v2957
      %v3086 = vpack.c.bf16 %v2958, %v2958
      %v3087 = vpack.c.bf16 %v2959, %v2959
      %v3088 = vpack.c.bf16 %v2960, %v2960
      %v3089 = vpack.c.bf16 %v2961, %v2961
      %v3090 = vpack.c.bf16 %v2962, %v2962
      %v3091 = vpack.c.bf16 %v2963, %v2963
      %v3092 = vpack.c.bf16 %v2964, %v2964
      %v3093 = vpack.c.bf16 %v2965, %v2965
      %v3094 = vpack.c.bf16 %v2966, %v2966
      %v3095 = vpack.c.bf16 %v2967, %v2967
      %v3096 = vpack.c.bf16 %v2968, %v2968
      %v3097 = vpack.c.bf16 %v2969, %v2969
      %v3098 = vpack.c.bf16 %v2970, %v2970
      %v3099 = vpack.c.bf16 %v2971, %v2971
      %v3100 = vpack.c.bf16 %v2972, %v2972
      %v3101 = vpack.c.bf16 %v2973, %v2973
      %v3102 = vpack.c.bf16 %v2974, %v2974
      %v3103 = vpack.c.bf16 %v2975, %v2975
      %v3104 = vpack.c.bf16 %v2976, %v2976
      %v3105 = vpack.c.bf16 %v2977, %v2977
      %v3106 = vpack.c.bf16 %v2978, %v2978
      %v3107 = vpack.c.bf16 %v2979, %v2979
      %v3108 = vpack.c.bf16 %v2980, %v2980
      %v3109 = vpack.c.bf16 %v2981, %v2981
      %v3110 = vpack.c.bf16 %v2982, %v2982
      %v3111 = vpack.c.bf16 %v2983, %v2983
      %v3112 = vpack.c.bf16 %v2984, %v2984
      %v3113 = vpack.c.bf16 %v2985, %v2985
      %vm3114 = vcmask 253952
      %3115 = vst.msk [vmem:[%s206] sm:$0x1] %vm3114, %v2986
      %3116 = vst.msk [vmem:[%s206 + $0x1] sm:$0x1] %vm3114, %v2987
      %3117 = vst.msk [vmem:[%s206 + $0x2] sm:$0x1] %vm3114, %v2988
      %3118 = vst.msk [vmem:[%s206 + $0x3] sm:$0x1] %vm3114, %v2989
      %3119 = vst.msk [vmem:[%s206 + $0x4] sm:$0x1] %vm3114, %v2990
      %3120 = vst.msk [vmem:[%s206 + $0x5] sm:$0x1] %vm3114, %v2991
      %3121 = vst.msk [vmem:[%s206 + $0x6] sm:$0x1] %vm3114, %v2992
      %3122 = vst.msk [vmem:[%s206 + $0x7] sm:$0x1] %vm3114, %v2993
      %3123 = vst.msk [vmem:[%s206 + $0x8] sm:$0x1] %vm3114, %v2994
      %3124 = vst.msk [vmem:[%s206 + $0x9] sm:$0x1] %vm3114, %v2995
      %3125 = vst.msk [vmem:[%s206 + $0xa] sm:$0x1] %vm3114, %v2996
      %3126 = vst.msk [vmem:[%s206 + $0xb] sm:$0x1] %vm3114, %v2997
      %3127 = vst.msk [vmem:[%s206 + $0xc] sm:$0x1] %vm3114, %v2998
      %3128 = vst.msk [vmem:[%s206 + $0xd] sm:$0x1] %vm3114, %v2999
      %3129 = vst.msk [vmem:[%s206 + $0xe] sm:$0x1] %vm3114, %v3000
      %3130 = vst.msk [vmem:[%s206 + $0xf] sm:$0x1] %vm3114, %v3001
      %3131 = vst.msk [vmem:[%s206 + $0x10] sm:$0x1] %vm3114, %v3002
      %3132 = vst.msk [vmem:[%s206 + $0x11] sm:$0x1] %vm3114, %v3003
      %3133 = vst.msk [vmem:[%s206 + $0x12] sm:$0x1] %vm3114, %v3004
      %3134 = vst.msk [vmem:[%s206 + $0x13] sm:$0x1] %vm3114, %v3005
      %3135 = vst.msk [vmem:[%s206 + $0x14] sm:$0x1] %vm3114, %v3006
      %3136 = vst.msk [vmem:[%s206 + $0x15] sm:$0x1] %vm3114, %v3007
      %3137 = vst.msk [vmem:[%s206 + $0x16] sm:$0x1] %vm3114, %v3008
      %3138 = vst.msk [vmem:[%s206 + $0x17] sm:$0x1] %vm3114, %v3009
      %3139 = vst.msk [vmem:[%s206 + $0x18] sm:$0x1] %vm3114, %v3010
      %3140 = vst.msk [vmem:[%s206 + $0x19] sm:$0x1] %vm3114, %v3011
      %3141 = vst.msk [vmem:[%s206 + $0x1a] sm:$0x1] %vm3114, %v3012
      %3142 = vst.msk [vmem:[%s206 + $0x1b] sm:$0x1] %vm3114, %v3013
      %3143 = vst.msk [vmem:[%s206 + $0x1c] sm:$0x1] %vm3114, %v3014
      %3144 = vst.msk [vmem:[%s206 + $0x1d] sm:$0x1] %vm3114, %v3015
      %3145 = vst.msk [vmem:[%s206 + $0x1e] sm:$0x1] %vm3114, %v3016
      %3146 = vst.msk [vmem:[%s206 + $0x1f] sm:$0x1] %vm3114, %v3017
      %3147 = vst.msk [vmem:[%s206 + $0x20] sm:$0x1] %vm3114, %v3018
      %3148 = vst.msk [vmem:[%s206 + $0x21] sm:$0x1] %vm3114, %v3019
      %3149 = vst.msk [vmem:[%s206 + $0x22] sm:$0x1] %vm3114, %v3020
      %3150 = vst.msk [vmem:[%s206 + $0x23] sm:$0x1] %vm3114, %v3021
      %3151 = vst.msk [vmem:[%s206 + $0x24] sm:$0x1] %vm3114, %v3022
      %3152 = vst.msk [vmem:[%s206 + $0x25] sm:$0x1] %vm3114, %v3023
      %3153 = vst.msk [vmem:[%s206 + $0x26] sm:$0x1] %vm3114, %v3024
      %3154 = vst.msk [vmem:[%s206 + $0x27] sm:$0x1] %vm3114, %v3025
      %3155 = vst.msk [vmem:[%s206 + $0x28] sm:$0x1] %vm3114, %v3026
      %3156 = vst.msk [vmem:[%s206 + $0x29] sm:$0x1] %vm3114, %v3027
      %3157 = vst.msk [vmem:[%s206 + $0x2a] sm:$0x1] %vm3114, %v3028
      %3158 = vst.msk [vmem:[%s206 + $0x2b] sm:$0x1] %vm3114, %v3029
      %3159 = vst.msk [vmem:[%s206 + $0x2c] sm:$0x1] %vm3114, %v3030
      %3160 = vst.msk [vmem:[%s206 + $0x2d] sm:$0x1] %vm3114, %v3031
      %3161 = vst.msk [vmem:[%s206 + $0x2e] sm:$0x1] %vm3114, %v3032
      %3162 = vst.msk [vmem:[%s206 + $0x2f] sm:$0x1] %vm3114, %v3033
      %3163 = vst.msk [vmem:[%s206 + $0x30] sm:$0x1] %vm3114, %v3034
      %3164 = vst.msk [vmem:[%s206 + $0x31] sm:$0x1] %vm3114, %v3035
      %3165 = vst.msk [vmem:[%s206 + $0x32] sm:$0x1] %vm3114, %v3036
      %3166 = vst.msk [vmem:[%s206 + $0x33] sm:$0x1] %vm3114, %v3037
      %3167 = vst.msk [vmem:[%s206 + $0x34] sm:$0x1] %vm3114, %v3038
      %3168 = vst.msk [vmem:[%s206 + $0x35] sm:$0x1] %vm3114, %v3039
      %3169 = vst.msk [vmem:[%s206 + $0x36] sm:$0x1] %vm3114, %v3040
      %3170 = vst.msk [vmem:[%s206 + $0x37] sm:$0x1] %vm3114, %v3041
      %3171 = vst.msk [vmem:[%s206 + $0x38] sm:$0x1] %vm3114, %v3042
      %3172 = vst.msk [vmem:[%s206 + $0x39] sm:$0x1] %vm3114, %v3043
      %3173 = vst.msk [vmem:[%s206 + $0x3a] sm:$0x1] %vm3114, %v3044
      %3174 = vst.msk [vmem:[%s206 + $0x3b] sm:$0x1] %vm3114, %v3045
      %3175 = vst.msk [vmem:[%s206 + $0x3c] sm:$0x1] %vm3114, %v3046
      %3176 = vst.msk [vmem:[%s206 + $0x3d] sm:$0x1] %vm3114, %v3047
      %3177 = vst.msk [vmem:[%s206 + $0x3e] sm:$0x1] %vm3114, %v3048
      %3178 = vst.msk [vmem:[%s206 + $0x3f] sm:$0x1] %vm3114, %v3049
      %3179 = vst.msk [vmem:[%s206 + $0x40] sm:$0x1] %vm3114, %v3050
      %3180 = vst.msk [vmem:[%s206 + $0x41] sm:$0x1] %vm3114, %v3051
      %3181 = vst.msk [vmem:[%s206 + $0x42] sm:$0x1] %vm3114, %v3052
      %3182 = vst.msk [vmem:[%s206 + $0x43] sm:$0x1] %vm3114, %v3053
      %3183 = vst.msk [vmem:[%s206 + $0x44] sm:$0x1] %vm3114, %v3054
      %3184 = vst.msk [vmem:[%s206 + $0x45] sm:$0x1] %vm3114, %v3055
      %3185 = vst.msk [vmem:[%s206 + $0x46] sm:$0x1] %vm3114, %v3056
      %3186 = vst.msk [vmem:[%s206 + $0x47] sm:$0x1] %vm3114, %v3057
      %3187 = vst.msk [vmem:[%s206 + $0x48] sm:$0x1] %vm3114, %v3058
      %3188 = vst.msk [vmem:[%s206 + $0x49] sm:$0x1] %vm3114, %v3059
      %3189 = vst.msk [vmem:[%s206 + $0x4a] sm:$0x1] %vm3114, %v3060
      %3190 = vst.msk [vmem:[%s206 + $0x4b] sm:$0x1] %vm3114, %v3061
      %3191 = vst.msk [vmem:[%s206 + $0x4c] sm:$0x1] %vm3114, %v3062
      %3192 = vst.msk [vmem:[%s206 + $0x4d] sm:$0x1] %vm3114, %v3063
      %3193 = vst.msk [vmem:[%s206 + $0x4e] sm:$0x1] %vm3114, %v3064
      %3194 = vst.msk [vmem:[%s206 + $0x4f] sm:$0x1] %vm3114, %v3065
      %3195 = vst.msk [vmem:[%s206 + $0x50] sm:$0x1] %vm3114, %v3066
      %3196 = vst.msk [vmem:[%s206 + $0x51] sm:$0x1] %vm3114, %v3067
      %3197 = vst.msk [vmem:[%s206 + $0x52] sm:$0x1] %vm3114, %v3068
      %3198 = vst.msk [vmem:[%s206 + $0x53] sm:$0x1] %vm3114, %v3069
      %3199 = vst.msk [vmem:[%s206 + $0x54] sm:$0x1] %vm3114, %v3070
      %3200 = vst.msk [vmem:[%s206 + $0x55] sm:$0x1] %vm3114, %v3071
      %3201 = vst.msk [vmem:[%s206 + $0x56] sm:$0x1] %vm3114, %v3072
      %3202 = vst.msk [vmem:[%s206 + $0x57] sm:$0x1] %vm3114, %v3073
      %3203 = vst.msk [vmem:[%s206 + $0x58] sm:$0x1] %vm3114, %v3074
      %3204 = vst.msk [vmem:[%s206 + $0x59] sm:$0x1] %vm3114, %v3075
      %3205 = vst.msk [vmem:[%s206 + $0x5a] sm:$0x1] %vm3114, %v3076
      %3206 = vst.msk [vmem:[%s206 + $0x5b] sm:$0x1] %vm3114, %v3077
      %3207 = vst.msk [vmem:[%s206 + $0x5c] sm:$0x1] %vm3114, %v3078
      %3208 = vst.msk [vmem:[%s206 + $0x5d] sm:$0x1] %vm3114, %v3079
      %3209 = vst.msk [vmem:[%s206 + $0x5e] sm:$0x1] %vm3114, %v3080
      %3210 = vst.msk [vmem:[%s206 + $0x5f] sm:$0x1] %vm3114, %v3081
      %3211 = vst.msk [vmem:[%s206 + $0x60] sm:$0x1] %vm3114, %v3082
      %3212 = vst.msk [vmem:[%s206 + $0x61] sm:$0x1] %vm3114, %v3083
      %3213 = vst.msk [vmem:[%s206 + $0x62] sm:$0x1] %vm3114, %v3084
      %3214 = vst.msk [vmem:[%s206 + $0x63] sm:$0x1] %vm3114, %v3085
      %3215 = vst.msk [vmem:[%s206 + $0x64] sm:$0x1] %vm3114, %v3086
      %3216 = vst.msk [vmem:[%s206 + $0x65] sm:$0x1] %vm3114, %v3087
      %3217 = vst.msk [vmem:[%s206 + $0x66] sm:$0x1] %vm3114, %v3088
      %3218 = vst.msk [vmem:[%s206 + $0x67] sm:$0x1] %vm3114, %v3089
      %3219 = vst.msk [vmem:[%s206 + $0x68] sm:$0x1] %vm3114, %v3090
      %3220 = vst.msk [vmem:[%s206 + $0x69] sm:$0x1] %vm3114, %v3091
      %3221 = vst.msk [vmem:[%s206 + $0x6a] sm:$0x1] %vm3114, %v3092
      %3222 = vst.msk [vmem:[%s206 + $0x6b] sm:$0x1] %vm3114, %v3093
      %3223 = vst.msk [vmem:[%s206 + $0x6c] sm:$0x1] %vm3114, %v3094
      %3224 = vst.msk [vmem:[%s206 + $0x6d] sm:$0x1] %vm3114, %v3095
      %3225 = vst.msk [vmem:[%s206 + $0x6e] sm:$0x1] %vm3114, %v3096
      %3226 = vst.msk [vmem:[%s206 + $0x6f] sm:$0x1] %vm3114, %v3097
      %3227 = vst.msk [vmem:[%s206 + $0x70] sm:$0x1] %vm3114, %v3098
      %3228 = vst.msk [vmem:[%s206 + $0x71] sm:$0x1] %vm3114, %v3099
      %3229 = vst.msk [vmem:[%s206 + $0x72] sm:$0x1] %vm3114, %v3100
      %3230 = vst.msk [vmem:[%s206 + $0x73] sm:$0x1] %vm3114, %v3101
      %3231 = vst.msk [vmem:[%s206 + $0x74] sm:$0x1] %vm3114, %v3102
      %3232 = vst.msk [vmem:[%s206 + $0x75] sm:$0x1] %vm3114, %v3103
      %3233 = vst.msk [vmem:[%s206 + $0x76] sm:$0x1] %vm3114, %v3104
      %3234 = vst.msk [vmem:[%s206 + $0x77] sm:$0x1] %vm3114, %v3105
      %3235 = vst.msk [vmem:[%s206 + $0x78] sm:$0x1] %vm3114, %v3106
      %3236 = vst.msk [vmem:[%s206 + $0x79] sm:$0x1] %vm3114, %v3107
      %3237 = vst.msk [vmem:[%s206 + $0x7a] sm:$0x1] %vm3114, %v3108
      %3238 = vst.msk [vmem:[%s206 + $0x7b] sm:$0x1] %vm3114, %v3109
      %3239 = vst.msk [vmem:[%s206 + $0x7c] sm:$0x1] %vm3114, %v3110
      %3240 = vst.msk [vmem:[%s206 + $0x7d] sm:$0x1] %vm3114, %v3111
      %3241 = vst.msk [vmem:[%s206 + $0x7e] sm:$0x1] %vm3114, %v3112
      %3242 = vst.msk [vmem:[%s206 + $0x7f] sm:$0x1] %vm3114, %v3113
      %s3243 = smul.u32 8, %s19
      %p3244 = scmp.lt.s32.totalorder %s18, 1
      %s3245 = scalar_select %p3244, %s18, 1
      %p3246 = scmp.lt.s32.totalorder %s3243, 7
      %s3247 = scalar_select %p3246, %s3243, 7
      %s3248 = smul.addr %s3247, 16
      %s3249 = smul.addr %s3245, 128
      %s3250 = sadd.s32 %s3248, %s3249
      %s3251 = scalar_lea.vmem %s3, %s3250
      // Predicated region
      $region33: #{unet_struc_forward.22} parent=31 // pred_check
        %p3252 = pneg %p116
      $region34: #{unet_struc_forward.22} parent=31 // pred_check_branch
        %3254 = sbr.rel (%p3252) target = $region36
      $region35: #{unet_struc_forward.22} parent=31 // pred_region
        %s3255 = smul.u32 8, %s19
      $region36: #{unet_struc_forward.22} parent=31 // pred_fallthru
        _
    $region32: #{unet_struc_forward.22} parent=5 // pred_fallthru
      _
    %p3256 = scmp.le.s32.totalorder 2, %s9
    // Predicated region
    $region37: #{unet_struc_forward.22} parent=5 // pred_check
      %p3257 = pneg %p3256
    $region38: #{unet_struc_forward.22} parent=5 // pred_check_branch
      %3259 = sbr.rel (%p3257) target = $region40
    $region39: #{unet_struc_forward.22} parent=5 // pred_region
      %s3260 = ssub.s32 %s9, 2
      // Predicated region
      $region41: #{unet_struc_forward.22} parent=39 // pred_check
        %p3261 = pneg %p122
      $region42: #{unet_struc_forward.22} parent=39 // pred_check_branch
        %3263 = sbr.rel (%p3261) target = $region44
      $region43: #{unet_struc_forward.22} parent=39 // pred_region
        %s3264 = smul.u32 8, %s21
        %p3265 = scmp.lt.s32.totalorder %s20, 1
        %s3266 = scalar_select %p3265, %s20, 1
        %p3267 = scmp.lt.s32.totalorder %s3264, 7
        %s3268 = scalar_select %p3267, %s3264, 7
        %s3269 = smul.addr %s3268, 16
        %s3270 = smul.addr %s3266, 128
        %s3271 = sadd.s32 %s3269, %s3270
        %s3272 = scalar_lea.vmem %s3, %s3271
      $region44: #{unet_struc_forward.22} parent=39 // pred_fallthru
        _
    $region40: #{unet_struc_forward.22} parent=5 // pred_fallthru
      _
  $region6: #{unet_struc_forward.22} parent=0 // loop_footer
    %s13 = sadd.s32 1, %s9
  $region7: #{unet_struc_forward.22} parent=0 // loop_footer_branch
    %8 = sbr.rel target = $region3
  $region8: #{unet_struc_forward.22} parent=0 // loop_exit
    _

// kernel: unet_struc_forward.23
$region0: #{unet_struc_forward.23}
  #allocation0 [shape = 'u32[]', space=smem, size = 0x4, offset = 0x4, fixed_abs, tag = 'smem constant byte address 0x4 - core index']
  #allocation1 [shape = 'u32[144,128]{1,0:T(1,128)}', space=vmem, size = 0x12000, scoped, tag = 'internal scratch']
  %s0 = inlined_call_operand.vmem [shape: bf16[2,8,8,288], index: 0, kind: input, shape index: {}]
  %s1 = inlined_call_operand.vmem [shape: bf16[288,32], index: 1, kind: input, shape index: {}]
  %s2 = inlined_call_operand.vmem [shape: f32[2,8,8,32], index: 2, kind: output, shape index: {0}]
  %s3 = inlined_call_operand.vmem [shape: f32[2,1,2,32], index: 3, kind: output, shape index: {1}]
  %4 = xla_tuple %s2, %s3
  %s5 = sld [smem:[#allocation0]]
  $region49: #{unet_struc_forward.23} parent=0
    _
  %s7 = ssub.s32 1, %s5
  %s8 = scalar_select 0, %s7, %s5
  loop: start=0, step=1, limit=4
  $region2: #{unet_struc_forward.23} parent=0 // loop_pre_header
    _
  $region3: #{unet_struc_forward.23} parent=0 // loop_header
    %s10 = sphi 0, %s14
    %p11 = scmp.ge.s32.totalorder %s10, 4
    %s17 = sphi 0, %s29
    %s18 = sphi 0, %s25
    %s19 = sphi 0, %s17
    %s20 = sphi 0, %s18
    %s21 = sphi 0, %s19
    %s22 = sphi 0, %s20
    %s34 = sphi 0, %s36
    %s37 = sphi 0, %s34
    %s38 = sphi 0, %s37
    %s54 = sphi 0, %s38
    %s58 = sphi 0, %s58
    %s60 = sphi 0, %s58
    %s61 = sphi 0, %s60
    %s75 = sphi 0, %s61
    %s83 = sphi 0, %s85
    %s86 = sphi 0, %s83
    %s87 = sphi 0, %s86
    %s103 = sphi 0, %s87
    %s111 = sphi 0, %s113
    %s114 = sphi 0, %s111
    %s115 = sphi 0, %s114
    %s131 = sphi 0, %s115
  $region4: #{unet_struc_forward.23} parent=0 // loop_header_branch
    %13 = sbr.rel (%p11) target = $region8
  $region5: #{unet_struc_forward.23} parent=0 // loop_body
    %s15 = ssub.s32 %s10, 1
    %s16 = ssub.s32 %s10, 2
    %s23 = sadd.s32 1, %s18
    %p24 = scmp.ge.s32.totalorder %s23, 1
    %s25 = scalar_select %p24, 0, %s23
    %s26 = sadd.s32 1, %s17
    %s27 = scalar_select %p24, %s26, %s17
    %p28 = scmp.ge.s32.totalorder %s27, 2
    %s29 = scalar_select %p28, 0, %s27
    %s30 = ssub.s32 %s17, %s29
    %s31 = ssub.s32 %s18, %s25
    %s32 = sor.u32 %s30, %s31
    %p33 = scmp.eq.s32.totalorder %s32, 0
    %s35 = sadd.s32 %s34, 1
    %s36 = scalar_select %p33, %s34, %s35
    %p39 = pneg %p33
    %p40 = scmp.eq.s32.totalorder %s10, 1
    %p41 = por %p39, %p40
    %p42 = scmp.ne.s32.totalorder %s34, %s37
    %p43 = scmp.eq.s32.totalorder %s10, 0
    %p44 = por %p42, %p43
    %p45 = scmp.ne.s32.totalorder %s34, %s37
    %p46 = scmp.eq.s32.totalorder %s15, 1
    %p47 = por %p45, %p46
    %p48 = scmp.ne.s32.totalorder %s37, %s38
    %p49 = scmp.eq.s32.totalorder %s15, 0
    %p50 = por %p48, %p49
    %p51 = scmp.ne.s32.totalorder %s37, %s38
    %p52 = scmp.eq.s32.totalorder %s16, 1
    %p53 = por %p51, %p52
    %p55 = scmp.ne.s32.totalorder %s38, %s54
    %p56 = scmp.eq.s32.totalorder %s16, 0
    %p57 = por %p55, %p56
    %s59 = sadd.s32 %s58, 1
    %p62 = scmp.eq.s32.totalorder %s10, 1
    %p63 = scmp.ne.s32.totalorder %s58, %s60
    %p64 = scmp.eq.s32.totalorder %s10, 0
    %p65 = por %p63, %p64
    %p66 = scmp.ne.s32.totalorder %s58, %s60
    %p67 = scmp.eq.s32.totalorder %s15, 1
    %p68 = por %p66, %p67
    %p69 = scmp.ne.s32.totalorder %s60, %s61
    %p70 = scmp.eq.s32.totalorder %s15, 0
    %p71 = por %p69, %p70
    %p72 = scmp.ne.s32.totalorder %s60, %s61
    %p73 = scmp.eq.s32.totalorder %s16, 1
    %p74 = por %p72, %p73
    %p76 = scmp.ne.s32.totalorder %s61, %s75
    %p77 = scmp.eq.s32.totalorder %s16, 0
    %p78 = por %p76, %p77
    %s79 = ssub.s32 %s17, %s29
    %s80 = ssub.s32 %s18, %s25
    %s81 = sor.u32 %s79, %s80
    %p82 = scmp.eq.s32.totalorder %s81, 0
    %s84 = sadd.s32 %s83, 1
    %s85 = scalar_select %p82, %s83, %s84
    %p88 = pneg %p82
    %p89 = scmp.eq.s32.totalorder %s10, 1
    %p90 = por %p88, %p89
    %p91 = scmp.ne.s32.totalorder %s83, %s86
    %p92 = scmp.eq.s32.totalorder %s10, 0
    %p93 = por %p91, %p92
    %p94 = scmp.ne.s32.totalorder %s83, %s86
    %p95 = scmp.eq.s32.totalorder %s15, 1
    %p96 = por %p94, %p95
    %p97 = scmp.ne.s32.totalorder %s86, %s87
    %p98 = scmp.eq.s32.totalorder %s15, 0
    %p99 = por %p97, %p98
    %p100 = scmp.ne.s32.totalorder %s86, %s87
    %p101 = scmp.eq.s32.totalorder %s16, 1
    %p102 = por %p100, %p101
    %p104 = scmp.ne.s32.totalorder %s87, %s103
    %p105 = scmp.eq.s32.totalorder %s16, 0
    %p106 = por %p104, %p105
    %s107 = ssub.s32 %s17, %s29
    %s108 = ssub.s32 %s18, %s25
    %s109 = sor.u32 %s107, %s108
    %p110 = scmp.eq.s32.totalorder %s109, 0
    %s112 = sadd.s32 %s111, 1
    %s113 = scalar_select %p110, %s111, %s112
    %p116 = pneg %p110
    %p117 = scmp.eq.s32.totalorder %s10, 1
    %p118 = por %p116, %p117
    %p119 = scmp.ne.s32.totalorder %s111, %s114
    %p120 = scmp.eq.s32.totalorder %s10, 0
    %p121 = por %p119, %p120
    %p122 = scmp.ne.s32.totalorder %s111, %s114
    %p123 = scmp.eq.s32.totalorder %s15, 1
    %p124 = por %p122, %p123
    %p125 = scmp.ne.s32.totalorder %s114, %s115
    %p126 = scmp.eq.s32.totalorder %s15, 0
    %p127 = por %p125, %p126
    %p128 = scmp.ne.s32.totalorder %s114, %s115
    %p129 = scmp.eq.s32.totalorder %s16, 1
    %p130 = por %p128, %p129
    %p132 = scmp.ne.s32.totalorder %s115, %s131
    %p133 = scmp.eq.s32.totalorder %s16, 0
    %p134 = por %p132, %p133
    %p135 = scmp.le.s32.totalorder 1, %s10
    %p136 = scmp.lt.s32.totalorder %s10, 3
    %p137 = pnand %p135, %p136
    %p138 = pneg %p137
    // Predicated region
    $region9: #{unet_struc_forward.23} parent=5 // pred_check
      _
    $region10: #{unet_struc_forward.23} parent=5 // pred_check_branch
      %140 = sbr.rel (%p137) target = $region12
    $region11: #{unet_struc_forward.23} parent=5 // pred_region
      %s141 = ssub.s32 %s10, 1
      // Predicated region
      $region13: #{unet_struc_forward.23} parent=11 // pred_check
        %p142 = pneg %p71
      $region14: #{unet_struc_forward.23} parent=11 // pred_check_branch
        %144 = sbr.rel (%p142) target = $region16
      $region15: #{unet_struc_forward.23} parent=11 // pred_region
        _
      $region16: #{unet_struc_forward.23} parent=11 // pred_fallthru
        _
    $region12: #{unet_struc_forward.23} parent=5 // pred_fallthru
      _
    %p145 = scmp.lt.s32.totalorder %s10, 2
    // Predicated region
    $region17: #{unet_struc_forward.23} parent=5 // pred_check
      %p146 = pneg %p145
    $region18: #{unet_struc_forward.23} parent=5 // pred_check_branch
      %148 = sbr.rel (%p146) target = $region20
    $region19: #{unet_struc_forward.23} parent=5 // pred_region
      // Predicated region
      $region21: #{unet_struc_forward.23} parent=19 // pred_check
        %p149 = pneg %p44
      $region22: #{unet_struc_forward.23} parent=19 // pred_check_branch
        %151 = sbr.rel (%p149) target = $region24
      $region23: #{unet_struc_forward.23} parent=19 // pred_region
        %s152 = smul.u32 8, %s18
        %p153 = scmp.lt.s32.totalorder %s17, 1
        %s154 = scalar_select %p153, %s17, 1
        %p155 = scmp.lt.s32.totalorder %s152, 7
        %s156 = scalar_select %p155, %s152, 7
        %s157 = smul.addr %s156, 3
        %s158 = smul.addr %s154, 24
        %s159 = sadd.s32 %s157, %s158
        %s160 = smul.addr %s159, 4
        %s161 = scalar_lea.vmem %s0, %s160
        %s162 = smul.u32 8, %s18
      $region24: #{unet_struc_forward.23} parent=19 // pred_fallthru
        _
    $region20: #{unet_struc_forward.23} parent=5 // pred_fallthru
      _
    %p163 = scmp.le.s32.totalorder 1, %s10
    %p164 = scmp.lt.s32.totalorder %s10, 3
    %p165 = pnand %p163, %p164
    %p166 = pneg %p165
    // Predicated region
    $region25: #{unet_struc_forward.23} parent=5 // pred_check
      _
    $region26: #{unet_struc_forward.23} parent=5 // pred_check_branch
      %168 = sbr.rel (%p165) target = $region28
    $region27: #{unet_struc_forward.23} parent=5 // pred_region
      %s169 = ssub.s32 %s10, 1
      %s170 = smul.u32 8, %s20
      %p171 = scmp.lt.s32.totalorder %s19, 1
      %s172 = scalar_select %p171, %s19, 1
      %p173 = scmp.lt.s32.totalorder %s170, 7
      %s174 = scalar_select %p173, %s170, 7
      %s175 = smul.addr %s174, 3
      %s176 = smul.addr %s172, 24
      %s177 = sadd.s32 %s175, %s176
      %s178 = smul.addr %s177, 4
      %s179 = scalar_lea.vmem %s0, %s178
      %p180 = pneg %p50
      %p181 = pneg %p47
      %p182 = pneg %p71
      %p183 = pneg %p68
      %p184 = pneg %p99
      %p185 = pneg %p96
      %s186 = smul.u32 8, %s20
      %p187 = scmp.lt.s32.totalorder %s19, 1
      %s188 = scalar_select %p187, %s19, 1
      %p189 = scmp.lt.s32.totalorder %s186, 7
      %s190 = scalar_select %p189, %s186, 7
      %s191 = smul.addr %s188, 8
      %s192 = sadd.s32 %s190, %s191
      %s193 = smul.addr %s192, 8
      %s194 = scalar_lea.vmem %s2, %s193
      %p195 = pneg %p127
      %p196 = pneg %p124
      %p197 = scmp.lt.s32.totalorder %s19, 1
      %s198 = scalar_select %p197, %s19, 1
      %p199 = scmp.lt.s32.totalorder %s20, 0
      %s200 = scalar_select %p199, %s20, 0
      %s201 = sadd.s32 %s200, %s198
      %s202 = smul.addr %s201, 2
      %s203 = scalar_lea.vmem %s3, %s202
      %s204 = smul.u32 8, %s20
      %p205 = scmp.lt.s32.totalorder %s19, 1
      %s206 = scalar_select %p205, %s19, 1
      %p207 = scmp.lt.s32.totalorder %s204, 7
      %s208 = scalar_select %p207, %s204, 7
      %s209 = smul.addr %s208, 3
      %s210 = smul.addr %s206, 24
      %s211 = sadd.s32 %s209, %s210
      %s212 = smul.addr %s211, 4
      %s213 = scalar_lea.vmem %s0, %s212
      %s214 = smul.u32 8, %s20
      %s215 = smul.u32 8, %s20
      %p216 = scmp.lt.s32.totalorder %s19, 1
      %s217 = scalar_select %p216, %s19, 1
      %p218 = scmp.lt.s32.totalorder %s215, 7
      %s219 = scalar_select %p218, %s215, 7
      %s220 = smul.addr %s217, 8
      %s221 = sadd.s32 %s219, %s220
      %s222 = smul.addr %s221, 8
      %s223 = scalar_lea.vmem %s2, %s222
      %s224 = smul.u32 8, %s20
      %p225 = scmp.lt.s32.totalorder %s19, 1
      %s226 = scalar_select %p225, %s19, 1
      %p227 = scmp.lt.s32.totalorder %s20, 0
      %s228 = scalar_select %p227, %s20, 0
      %s229 = sadd.s32 %s228, %s226
      %s230 = smul.addr %s229, 2
      %s231 = scalar_lea.vmem %s3, %s230
      %v233 = vld [vmem:[%s213] sm:$0xff]
      %v234 = vld [vmem:[%s213 + $0x8] sm:$0xf]
      %v235 = vld [vmem:[%s213 + $0xc] sm:$0xff]
      %v236 = vld [vmem:[%s213 + $0x14] sm:$0xf]
      %v237 = vld [vmem:[%s213 + $0x18] sm:$0xff]
      %v238 = vld [vmem:[%s213 + $0x20] sm:$0xf]
      %v239 = vld [vmem:[%s213 + $0x24] sm:$0xff]
      %v240 = vld [vmem:[%s213 + $0x2c] sm:$0xf]
      %v241 = vld [vmem:[%s213 + $0x30] sm:$0xff]
      %v242 = vld [vmem:[%s213 + $0x38] sm:$0xf]
      %v243 = vld [vmem:[%s213 + $0x3c] sm:$0xff]
      %v244 = vld [vmem:[%s213 + $0x44] sm:$0xf]
      %v245 = vld [vmem:[%s213 + $0x48] sm:$0xff]
      %v246 = vld [vmem:[%s213 + $0x50] sm:$0xf]
      %v247 = vld [vmem:[%s213 + $0x54] sm:$0xff]
      %v248 = vld [vmem:[%s213 + $0x5c] sm:$0xf]
      %v249 = vld [vmem:[%s1] sm:$0xf]
      %v250 = vld [vmem:[%s1 + $0x4] sm:$0xf]
      %v251 = vld [vmem:[%s1 + $0x8] sm:$0xf]
      %v252 = vld [vmem:[%s1 + $0xc] sm:$0xf]
      %v253 = vld [vmem:[%s1 + $0x10] sm:$0xf]
      %v254 = vld [vmem:[%s1 + $0x14] sm:$0xf]
      %v255 = vld [vmem:[%s1 + $0x18] sm:$0xf]
      %v256 = vld [vmem:[%s1 + $0x1c] sm:$0xf]
      %v257 = vld [vmem:[%s1 + $0x20] sm:$0xf]
      %v258 = vld [vmem:[%s1 + $0x24] sm:$0xf]
      %v259 = vld [vmem:[%s1 + $0x28] sm:$0xf]
      %v260 = vld [vmem:[%s1 + $0x2c] sm:$0xf]
      %v261 = vld [vmem:[%s1 + $0x30] sm:$0xf]
      %v262 = vld [vmem:[%s1 + $0x34] sm:$0xf]
      %v263 = vld [vmem:[%s1 + $0x38] sm:$0xf]
      %v264 = vld [vmem:[%s1 + $0x3c] sm:$0xf]
      %v265 = vld [vmem:[%s1 + $0x40] sm:$0xf]
      %v266 = vld [vmem:[%s1 + $0x44] sm:$0xf]
      %v267 = vld [vmem:[%s1 + $0x48] sm:$0xf]
      %v268 = vld [vmem:[%s1 + $0x4c] sm:$0xf]
      %v269 = vld [vmem:[%s1 + $0x50] sm:$0xf]
      %v270 = vld [vmem:[%s1 + $0x54] sm:$0xf]
      %v271 = vld [vmem:[%s1 + $0x58] sm:$0xf]
      %v272 = vld [vmem:[%s1 + $0x5c] sm:$0xf]
      %v273 = vld [vmem:[%s1 + $0x60] sm:$0xf]
      %v274 = vld [vmem:[%s1 + $0x64] sm:$0xf]
      %v275 = vld [vmem:[%s1 + $0x68] sm:$0xf]
      %v276 = vld [vmem:[%s1 + $0x6c] sm:$0xf]
      %v277 = vld [vmem:[%s1 + $0x70] sm:$0xf]
      %v278 = vld [vmem:[%s1 + $0x74] sm:$0xf]
      %v279 = vld [vmem:[%s1 + $0x78] sm:$0xf]
      %v280 = vld [vmem:[%s1 + $0x7c] sm:$0xf]
      %v281 = vld [vmem:[%s1 + $0x80] sm:$0xf]
      %v282 = vld [vmem:[%s1 + $0x84] sm:$0xf]
      %v283 = vld [vmem:[%s1 + $0x88] sm:$0xf]
      %v284 = vld [vmem:[%s1 + $0x8c] sm:$0xf]
      %v301 = vunpack.c.l.b16 %v233
      %v302 = vunpack.c.h.b16 %v233
      %v303 = vunpack.c.l.b16 %v234
      %v304 = vunpack.c.l.b16 %v235
      %v305 = vunpack.c.h.b16 %v235
      %v306 = vunpack.c.l.b16 %v236
      %v307 = vunpack.c.l.b16 %v237
      %v308 = vunpack.c.h.b16 %v237
      %v309 = vunpack.c.l.b16 %v238
      %v310 = vunpack.c.l.b16 %v239
      %v311 = vunpack.c.h.b16 %v239
      %v312 = vunpack.c.l.b16 %v240
      %v313 = vunpack.c.l.b16 %v241
      %v314 = vunpack.c.h.b16 %v241
      %v315 = vunpack.c.l.b16 %v242
      %v316 = vunpack.c.l.b16 %v243
      %v317 = vunpack.c.h.b16 %v243
      %v318 = vunpack.c.l.b16 %v244
      %v319 = vunpack.c.l.b16 %v245
      %v320 = vunpack.c.h.b16 %v245
      %v321 = vunpack.c.l.b16 %v246
      %v322 = vunpack.c.l.b16 %v247
      %v323 = vunpack.c.h.b16 %v247
      %v324 = vunpack.c.l.b16 %v248
      %v325 = vpack.c.b16 %v304, %v301
      %v326 = vpack.c.b16 %v305, %v302
      %v327 = vpack.c.b16 %v306, %v303
      %v328 = vpack.c.b16 %v310, %v307
      %v329 = vpack.c.b16 %v311, %v308
      %v330 = vpack.c.b16 %v312, %v309
      %v331 = vpack.c.b16 %v316, %v313
      %v332 = vpack.c.b16 %v317, %v314
      %v333 = vpack.c.b16 %v318, %v315
      %v334 = vpack.c.b16 %v322, %v319
      %v335 = vpack.c.b16 %v323, %v320
      %v336 = vpack.c.b16 %v324, %v321
      %v381 = vunpack.c.l.b16 %v249
      %v382 = vunpack.c.l.b16 %v250
      %v383 = vunpack.c.l.b16 %v251
      %v384 = vunpack.c.l.b16 %v252
      %v385 = vunpack.c.l.b16 %v253
      %v386 = vunpack.c.l.b16 %v254
      %v387 = vunpack.c.l.b16 %v255
      %v388 = vunpack.c.l.b16 %v256
      %v389 = vunpack.c.l.b16 %v257
      %v390 = vunpack.c.l.b16 %v258
      %v391 = vunpack.c.l.b16 %v259
      %v392 = vunpack.c.l.b16 %v260
      %v393 = vunpack.c.l.b16 %v261
      %v394 = vunpack.c.l.b16 %v262
      %v395 = vunpack.c.l.b16 %v263
      %v396 = vunpack.c.l.b16 %v264
      %v397 = vunpack.c.l.b16 %v265
      %v398 = vunpack.c.l.b16 %v266
      %v399 = vunpack.c.l.b16 %v267
      %v400 = vunpack.c.l.b16 %v268
      %v401 = vunpack.c.l.b16 %v269
      %v402 = vunpack.c.l.b16 %v270
      %v403 = vunpack.c.l.b16 %v271
      %v404 = vunpack.c.l.b16 %v272
      %v405 = vunpack.c.l.b16 %v273
      %v406 = vunpack.c.l.b16 %v274
      %v407 = vunpack.c.l.b16 %v275
      %v408 = vunpack.c.l.b16 %v276
      %v409 = vunpack.c.l.b16 %v277
      %v410 = vunpack.c.l.b16 %v278
      %v411 = vunpack.c.l.b16 %v279
      %v412 = vunpack.c.l.b16 %v280
      %v413 = vunpack.c.l.b16 %v281
      %v414 = vunpack.c.l.b16 %v282
      %v415 = vunpack.c.l.b16 %v283
      %v416 = vunpack.c.l.b16 %v284
      %v417 = vpack.c.b16 %v382, %v381
      %v418 = vpack.c.b16 %v384, %v383
      %v419 = vpack.c.b16 %v386, %v385
      %v420 = vpack.c.b16 %v388, %v387
      %v421 = vpack.c.b16 %v390, %v389
      %v422 = vpack.c.b16 %v392, %v391
      %v423 = vpack.c.b16 %v394, %v393
      %v424 = vpack.c.b16 %v396, %v395
      %v425 = vpack.c.b16 %v398, %v397
      %v426 = vpack.c.b16 %v400, %v399
      %v427 = vpack.c.b16 %v402, %v401
      %v428 = vpack.c.b16 %v404, %v403
      %v429 = vpack.c.b16 %v406, %v405
      %v430 = vpack.c.b16 %v408, %v407
      %v431 = vpack.c.b16 %v410, %v409
      %v432 = vpack.c.b16 %v412, %v411
      %v433 = vpack.c.b16 %v414, %v413
      %v434 = vpack.c.b16 %v416, %v415
      %vm453 = vcmask 261120
      %v455 = vsel %vm453, %v327, 0
      %v458 = vsel %vm453, %v330, 0
      %v461 = vsel %vm453, %v333, 0
      %v464 = vsel %vm453, %v336, 0
      %466 = vmatprep.subr.bf16.mxu0 0
      %467 = vmatpush1.bf16.msra.mxu0 %v417
      %468 = vmatprep.subr.bf16.mxu0 0
      %469 = vmatpush1.bf16.msra.mxu0 %v418
      %470 = vmatprep.subr.bf16.mxu0 0
      %471 = vmatpush1.bf16.msra.mxu0 %v419
      %472 = vmatprep.subr.bf16.mxu0 0
      %473 = vmatpush1.bf16.msra.mxu0 %v420
      %474 = vmatprep.subr.bf16.mxu0 0
      %475 = vmatpush1.bf16.msra.mxu0 %v421
      %476 = vmatprep.subr.bf16.mxu0 0
      %477 = vmatpush1.bf16.msra.mxu0 %v422
      %478 = vmatprep.subr.bf16.mxu0 0
      %479 = vmatpush1.bf16.msra.mxu0 %v423
      %480 = vmatprep.subr.bf16.mxu0 0
      %481 = vmatpush1.bf16.msra.mxu0 %v424
      %482 = vmatprep.subr.bf16.mxu0 0
      %483 = vmatpush1.bf16.msra.mxu0 %v425
      %484 = vmatprep.subr.bf16.mxu0 0
      %485 = vmatpush1.bf16.msra.mxu0 %v426
      %486 = vmatprep.subr.bf16.mxu0 0
      %487 = vmatpush1.bf16.msra.mxu0 %v427
      %488 = vmatprep.subr.bf16.mxu0 0
      %489 = vmatpush1.bf16.msra.mxu0 %v428
      %490 = vmatprep.subr.bf16.mxu0 0
      %491 = vmatpush1.bf16.msra.mxu0 %v429
      %492 = vmatprep.subr.bf16.mxu0 0
      %493 = vmatpush1.bf16.msra.mxu0 %v430
      %494 = vmatprep.subr.bf16.mxu0 0
      %495 = vmatpush1.bf16.msra.mxu0 %v431
      %496 = vmatprep.subr.bf16.mxu0 0
      %497 = vmatpush1.bf16.msra.mxu0 %v432
      %498 = vmatprep.mubr.bf16.mxu0 %v326
      %499 = vmatmul.mubr.bf16.gmra.mrb[0].mxu0 %v325
      %v500 = vpop.f32.mrb[0].mxu0
      %v501 = vadd.f32 0.0, %v500
      %v502 = vpop.f32.mrb[0].mxu0
      %v503 = vpop.f32.mrb[0].mxu0
      %v504 = vadd.f32 0.0, %v503
      %v505 = vpop.f32.mrb[0].mxu0
      %506 = vmatprep.mubr.bf16.mxu0 %v329
      %507 = vmatmul.mubr.bf16.gmra.mrb[0].mxu0 %v328
      %v508 = vpop.f32.mrb[0].mxu0
      %v509 = vadd.f32 0.0, %v508
      %v510 = vpop.f32.mrb[0].mxu0
      %v511 = vpop.f32.mrb[0].mxu0
      %v512 = vadd.f32 0.0, %v511
      %v513 = vpop.f32.mrb[0].mxu0
      %514 = vmatprep.mubr.bf16.mxu0 %v332
      %515 = vmatmul.mubr.bf16.gmra.mrb[0].mxu0 %v331
      %v516 = vpop.f32.mrb[0].mxu0
      %v517 = vadd.f32 0.0, %v516
      %v518 = vpop.f32.mrb[0].mxu0
      %v519 = vpop.f32.mrb[0].mxu0
      %v520 = vadd.f32 0.0, %v519
      %v521 = vpop.f32.mrb[0].mxu0
      %522 = vmatprep.mubr.bf16.mxu0 %v335
      %523 = vmatmul.mubr.bf16.gmra.mrb[0].mxu0 %v334
      %v524 = vpop.f32.mrb[0].mxu0
      %v525 = vadd.f32 0.0, %v524
      %v526 = vpop.f32.mrb[0].mxu0
      %v527 = vpop.f32.mrb[0].mxu0
      %v528 = vadd.f32 0.0, %v527
      %v529 = vpop.f32.mrb[0].mxu0
      %530 = vdwg.mxu0
      %531 = vmatprep.subr.bf16.mxu0 0
      %532 = vmatpush1.bf16.msra.mxu0 %v433
      %533 = vmatprep.subr.bf16.mxu0 0
      %534 = vmatpush1.bf16.msra.mxu0 %v434
      %535 = vmatprep.subr.bf16.mxu0 0
      %536 = vmatpush1.bf16.msra.mxu0 0
      %537 = vmatprep.subr.bf16.mxu0 0
      %538 = vmatpush1.bf16.msra.mxu0 0
      %539 = vmatprep.subr.bf16.mxu0 0
      %540 = vmatpush1.bf16.msra.mxu0 0
      %541 = vmatprep.subr.bf16.mxu0 0
      %542 = vmatpush1.bf16.msra.mxu0 0
      %543 = vmatprep.subr.bf16.mxu0 0
      %544 = vmatpush1.bf16.msra.mxu0 0
      %545 = vmatprep.subr.bf16.mxu0 0
      %546 = vmatpush1.bf16.msra.mxu0 0
      %547 = vmatprep.subr.bf16.mxu0 0
      %548 = vmatpush1.bf16.msra.mxu0 0
      %549 = vmatprep.subr.bf16.mxu0 0
      %550 = vmatpush1.bf16.msra.mxu0 0
      %551 = vmatprep.subr.bf16.mxu0 0
      %552 = vmatpush1.bf16.msra.mxu0 0
      %553 = vmatprep.subr.bf16.mxu0 0
      %554 = vmatpush1.bf16.msra.mxu0 0
      %555 = vmatprep.subr.bf16.mxu0 0
      %556 = vmatpush1.bf16.msra.mxu0 0
      %557 = vmatprep.subr.bf16.mxu0 0
      %558 = vmatpush1.bf16.msra.mxu0 0
      %559 = vmatprep.subr.bf16.mxu0 0
      %560 = vmatpush1.bf16.msra.mxu0 0
      %561 = vmatprep.subr.bf16.mxu0 0
      %562 = vmatpush1.bf16.msra.mxu0 0
      %563 = vmatprep.mubr.bf16.mxu0 0
      %564 = vmatmul.mubr.bf16.gmra.mrb[0].mxu0 %v455
      %v565 = vpop.f32.mrb[0].mxu0
      %v566 = vadd.f32 %v501, %v565
      %v567 = vpop.f32.mrb[0].mxu0
      %v568 = vpop.f32.mrb[0].mxu0
      %v569 = vadd.f32 %v504, %v568
      %v570 = vpop.f32.mrb[0].mxu0
      %571 = vmatprep.mubr.bf16.mxu0 0
      %572 = vmatmul.mubr.bf16.gmra.mrb[0].mxu0 %v458
      %v573 = vpop.f32.mrb[0].mxu0
      %v574 = vadd.f32 %v509, %v573
      %v575 = vpop.f32.mrb[0].mxu0
      %v576 = vpop.f32.mrb[0].mxu0
      %v577 = vadd.f32 %v512, %v576
      %v578 = vpop.f32.mrb[0].mxu0
      %579 = vmatprep.mubr.bf16.mxu0 0
      %580 = vmatmul.mubr.bf16.gmra.mrb[0].mxu0 %v461
      %v581 = vpop.f32.mrb[0].mxu0
      %v582 = vadd.f32 %v517, %v581
      %v583 = vpop.f32.mrb[0].mxu0
      %v584 = vpop.f32.mrb[0].mxu0
      %v585 = vadd.f32 %v520, %v584
      %v586 = vpop.f32.mrb[0].mxu0
      %587 = vmatprep.mubr.bf16.mxu0 0
      %588 = vmatmul.mubr.bf16.gmra.mrb[0].mxu0 %v464
      %v589 = vpop.f32.mrb[0].mxu0
      %v590 = vadd.f32 %v525, %v589
      %v591 = vpop.f32.mrb[0].mxu0
      %v592 = vpop.f32.mrb[0].mxu0
      %v593 = vadd.f32 %v528, %v592
      %v594 = vpop.f32.mrb[0].mxu0
      %595 = vdwg.mxu0
      %v596 = vsel %vm453, %v566, 0.0
      %v597 = vsel %vm453, %v569, 0.0
      %v598 = vadd.f32 %v596, %v597
      %v599 = vsel %vm453, %v574, 0.0
      %v600 = vadd.f32 %v598, %v599
      %v601 = vsel %vm453, %v577, 0.0
      %v602 = vadd.f32 %v600, %v601
      %v603 = vsel %vm453, %v582, 0.0
      %v604 = vadd.f32 %v602, %v603
      %v605 = vsel %vm453, %v585, 0.0
      %v606 = vadd.f32 %v604, %v605
      %v607 = vsel %vm453, %v590, 0.0
      %v608 = vadd.f32 %v606, %v607
      %v609 = vsel %vm453, %v593, 0.0
      %v610 = vadd.f32 %v608, %v609
      %v611 = vrot.slane %v610, 4
      %v612 = vadd.f32 %v610, %v611
      %v613 = vrot.slane %v612, 2
      %v614 = vadd.f32 %v612, %v613
      %v615 = vrot.slane %v614, 1
      %v616 = vadd.f32 %v614, %v615
      %v617 = vmul.f32 %v566, %v566
      %v618 = vmul.f32 %v569, %v569
      %v619 = vmul.f32 %v574, %v574
      %v620 = vmul.f32 %v577, %v577
      %v621 = vmul.f32 %v582, %v582
      %v622 = vmul.f32 %v585, %v585
      %v623 = vmul.f32 %v590, %v590
      %v624 = vmul.f32 %v593, %v593
      %v625 = vsel %vm453, %v617, 0.0
      %v626 = vsel %vm453, %v618, 0.0
      %v627 = vadd.f32 %v625, %v626
      %v628 = vsel %vm453, %v619, 0.0
      %v629 = vadd.f32 %v627, %v628
      %v630 = vsel %vm453, %v620, 0.0
      %v631 = vadd.f32 %v629, %v630
      %v632 = vsel %vm453, %v621, 0.0
      %v633 = vadd.f32 %v631, %v632
      %v634 = vsel %vm453, %v622, 0.0
      %v635 = vadd.f32 %v633, %v634
      %v636 = vsel %vm453, %v623, 0.0
      %v637 = vadd.f32 %v635, %v636
      %v638 = vsel %vm453, %v624, 0.0
      %v639 = vadd.f32 %v637, %v638
      %v640 = vrot.slane %v639, 4
      %v641 = vadd.f32 %v639, %v640
      %v642 = vrot.slane %v641, 2
      %v643 = vadd.f32 %v641, %v642
      %v644 = vrot.slane %v643, 1
      %v645 = vadd.f32 %v643, %v644
      %vm646 = vcmask 1040384
      %v647 = vsel %vm646, %v616, %v645
      %vm648 = vcmask 254976
      %649 = vst.msk [vmem:[%s231] sm:$0x3] %vm648, %v647
      %650 = vst.msk [vmem:[%s223] sm:$0xff] %vm453, %v566
      %651 = vst.msk [vmem:[%s223 + $0x8] sm:$0xff] %vm453, %v569
      %652 = vst.msk [vmem:[%s223 + $0x10] sm:$0xff] %vm453, %v574
      %653 = vst.msk [vmem:[%s223 + $0x18] sm:$0xff] %vm453, %v577
      %654 = vst.msk [vmem:[%s223 + $0x20] sm:$0xff] %vm453, %v582
      %655 = vst.msk [vmem:[%s223 + $0x28] sm:$0xff] %vm453, %v585
      %656 = vst.msk [vmem:[%s223 + $0x30] sm:$0xff] %vm453, %v590
      %657 = vst.msk [vmem:[%s223 + $0x38] sm:$0xff] %vm453, %v593
      %s658 = smul.u32 8, %s20
      %p659 = scmp.lt.s32.totalorder %s19, 1
      %s660 = scalar_select %p659, %s19, 1
      %p661 = scmp.lt.s32.totalorder %s658, 7
      %s662 = scalar_select %p661, %s658, 7
      %s663 = smul.addr %s660, 8
      %s664 = sadd.s32 %s662, %s663
      %s665 = smul.addr %s664, 8
      %s666 = scalar_lea.vmem %s2, %s665
      %p667 = scmp.lt.s32.totalorder %s19, 1
      %s668 = scalar_select %p667, %s19, 1
      %p669 = scmp.lt.s32.totalorder %s20, 0
      %s670 = scalar_select %p669, %s20, 0
      %s671 = sadd.s32 %s670, %s668
      %s672 = smul.addr %s671, 2
      %s673 = scalar_lea.vmem %s3, %s672
      // Predicated region
      $region29: #{unet_struc_forward.23} parent=27 // pred_check
        %p674 = pneg %p96
      $region30: #{unet_struc_forward.23} parent=27 // pred_check_branch
        %676 = sbr.rel (%p674) target = $region32
      $region31: #{unet_struc_forward.23} parent=27 // pred_region
        %s677 = smul.u32 8, %s20
      $region32: #{unet_struc_forward.23} parent=27 // pred_fallthru
        _
      // Predicated region
      $region33: #{unet_struc_forward.23} parent=27 // pred_check
        %p678 = pneg %p124
      $region34: #{unet_struc_forward.23} parent=27 // pred_check_branch
        %680 = sbr.rel (%p678) target = $region36
      $region35: #{unet_struc_forward.23} parent=27 // pred_region
        _
      $region36: #{unet_struc_forward.23} parent=27 // pred_fallthru
        _
    $region28: #{unet_struc_forward.23} parent=5 // pred_fallthru
      _
    %p681 = scmp.le.s32.totalorder 2, %s10
    // Predicated region
    $region37: #{unet_struc_forward.23} parent=5 // pred_check
      %p682 = pneg %p681
    $region38: #{unet_struc_forward.23} parent=5 // pred_check_branch
      %684 = sbr.rel (%p682) target = $region40
    $region39: #{unet_struc_forward.23} parent=5 // pred_region
      %s685 = ssub.s32 %s10, 2
      // Predicated region
      $region41: #{unet_struc_forward.23} parent=39 // pred_check
        %p686 = pneg %p102
      $region42: #{unet_struc_forward.23} parent=39 // pred_check_branch
        %688 = sbr.rel (%p686) target = $region44
      $region43: #{unet_struc_forward.23} parent=39 // pred_region
        %s689 = smul.u32 8, %s22
        %p690 = scmp.lt.s32.totalorder %s21, 1
        %s691 = scalar_select %p690, %s21, 1
        %p692 = scmp.lt.s32.totalorder %s689, 7
        %s693 = scalar_select %p692, %s689, 7
        %s694 = smul.addr %s691, 8
        %s695 = sadd.s32 %s693, %s694
        %s696 = smul.addr %s695, 8
        %s697 = scalar_lea.vmem %s2, %s696
      $region44: #{unet_struc_forward.23} parent=39 // pred_fallthru
        _
      // Predicated region
      $region45: #{unet_struc_forward.23} parent=39 // pred_check
        %p698 = pneg %p130
      $region46: #{unet_struc_forward.23} parent=39 // pred_check_branch
        %700 = sbr.rel (%p698) target = $region48
      $region47: #{unet_struc_forward.23} parent=39 // pred_region
        %p701 = scmp.lt.s32.totalorder %s21, 1
        %s702 = scalar_select %p701, %s21, 1
        %p703 = scmp.lt.s32.totalorder %s22, 0
        %s704 = scalar_select %p703, %s22, 0
        %s705 = sadd.s32 %s704, %s702
        %s706 = smul.addr %s705, 2
        %s707 = scalar_lea.vmem %s3, %s706
      $region48: #{unet_struc_forward.23} parent=39 // pred_fallthru
        _
    $region40: #{unet_struc_forward.23} parent=5 // pred_fallthru
      _
  $region6: #{unet_struc_forward.23} parent=0 // loop_footer
    %s14 = sadd.s32 1, %s10
  $region7: #{unet_struc_forward.23} parent=0 // loop_footer_branch
    %9 = sbr.rel target = $region3
  $region8: #{unet_struc_forward.23} parent=0 // loop_exit
    _

// kernel: unet_struc_forward.28
$region0: #{unet_struc_forward.28}
  #allocation0 [shape = 'u32[]', space=smem, size = 0x4, offset = 0x4, fixed_abs, tag = 'smem constant byte address 0x4 - core index']
  #allocation1 [shape = 'u32[144,128]{1,0:T(1,128)}', space=vmem, size = 0x12000, scoped, tag = 'internal scratch']
  %s0 = inlined_call_operand.vmem [shape: f32[2,16,16,32], index: 0, kind: input, shape index: {}]
  %s1 = inlined_call_operand.vmem [shape: f32[1,1,1,32], index: 1, kind: input, shape index: {}]
  %s2 = inlined_call_operand.vmem [shape: f32[1,1,1,32], index: 2, kind: input, shape index: {}]
  %s3 = inlined_call_operand.vmem [shape: bf16[2,16,16,32], index: 3, kind: output, shape index: {}]
  %s4 = sld [smem:[#allocation0]]
  $region45: #{unet_struc_forward.28} parent=0
    _
  %s6 = ssub.s32 1, %s4
  %s7 = scalar_select 0, %s6, %s4
  loop: start=0, step=1, limit=6
  $region2: #{unet_struc_forward.28} parent=0 // loop_pre_header
    _
  $region3: #{unet_struc_forward.28} parent=0 // loop_header
    %s9 = sphi 0, %s13
    %p10 = scmp.ge.s32.totalorder %s9, 6
    %s16 = sphi 0, %s28
    %s17 = sphi 0, %s24
    %s18 = sphi 0, %s16
    %s19 = sphi 0, %s17
    %s20 = sphi 0, %s18
    %s21 = sphi 0, %s19
    %s33 = sphi 0, %s35
    %s36 = sphi 0, %s33
    %s37 = sphi 0, %s36
    %s53 = sphi 0, %s37
    %s57 = sphi 0, %s57
    %s59 = sphi 0, %s57
    %s60 = sphi 0, %s59
    %s74 = sphi 0, %s60
    %s78 = sphi 0, %s78
    %s80 = sphi 0, %s78
    %s81 = sphi 0, %s80
    %s95 = sphi 0, %s81
    %s103 = sphi 0, %s105
    %s106 = sphi 0, %s103
    %s107 = sphi 0, %s106
    %s123 = sphi 0, %s107
  $region4: #{unet_struc_forward.28} parent=0 // loop_header_branch
    %12 = sbr.rel (%p10) target = $region8
  $region5: #{unet_struc_forward.28} parent=0 // loop_body
    %s14 = ssub.s32 %s9, 1
    %s15 = ssub.s32 %s9, 2
    %s22 = sadd.s32 1, %s17
    %p23 = scmp.ge.s32.totalorder %s22, 2
    %s24 = scalar_select %p23, 0, %s22
    %s25 = sadd.s32 1, %s16
    %s26 = scalar_select %p23, %s25, %s16
    %p27 = scmp.ge.s32.totalorder %s26, 2
    %s28 = scalar_select %p27, 0, %s26
    %s29 = ssub.s32 %s16, %s28
    %s30 = ssub.s32 %s17, %s24
    %s31 = sor.u32 %s29, %s30
    %p32 = scmp.eq.s32.totalorder %s31, 0
    %s34 = sadd.s32 %s33, 1
    %s35 = scalar_select %p32, %s33, %s34
    %p38 = pneg %p32
    %p39 = scmp.eq.s32.totalorder %s9, 3
    %p40 = por %p38, %p39
    %p41 = scmp.ne.s32.totalorder %s33, %s36
    %p42 = scmp.eq.s32.totalorder %s9, 0
    %p43 = por %p41, %p42
    %p44 = scmp.ne.s32.totalorder %s33, %s36
    %p45 = scmp.eq.s32.totalorder %s14, 3
    %p46 = por %p44, %p45
    %p47 = scmp.ne.s32.totalorder %s36, %s37
    %p48 = scmp.eq.s32.totalorder %s14, 0
    %p49 = por %p47, %p48
    %p50 = scmp.ne.s32.totalorder %s36, %s37
    %p51 = scmp.eq.s32.totalorder %s15, 3
    %p52 = por %p50, %p51
    %p54 = scmp.ne.s32.totalorder %s37, %s53
    %p55 = scmp.eq.s32.totalorder %s15, 0
    %p56 = por %p54, %p55
    %s58 = sadd.s32 %s57, 1
    %p61 = scmp.eq.s32.totalorder %s9, 3
    %p62 = scmp.ne.s32.totalorder %s57, %s59
    %p63 = scmp.eq.s32.totalorder %s9, 0
    %p64 = por %p62, %p63
    %p65 = scmp.ne.s32.totalorder %s57, %s59
    %p66 = scmp.eq.s32.totalorder %s14, 3
    %p67 = por %p65, %p66
    %p68 = scmp.ne.s32.totalorder %s59, %s60
    %p69 = scmp.eq.s32.totalorder %s14, 0
    %p70 = por %p68, %p69
    %p71 = scmp.ne.s32.totalorder %s59, %s60
    %p72 = scmp.eq.s32.totalorder %s15, 3
    %p73 = por %p71, %p72
    %p75 = scmp.ne.s32.totalorder %s60, %s74
    %p76 = scmp.eq.s32.totalorder %s15, 0
    %p77 = por %p75, %p76
    %s79 = sadd.s32 %s78, 1
    %p82 = scmp.eq.s32.totalorder %s9, 3
    %p83 = scmp.ne.s32.totalorder %s78, %s80
    %p84 = scmp.eq.s32.totalorder %s9, 0
    %p85 = por %p83, %p84
    %p86 = scmp.ne.s32.totalorder %s78, %s80
    %p87 = scmp.eq.s32.totalorder %s14, 3
    %p88 = por %p86, %p87
    %p89 = scmp.ne.s32.totalorder %s80, %s81
    %p90 = scmp.eq.s32.totalorder %s14, 0
    %p91 = por %p89, %p90
    %p92 = scmp.ne.s32.totalorder %s80, %s81
    %p93 = scmp.eq.s32.totalorder %s15, 3
    %p94 = por %p92, %p93
    %p96 = scmp.ne.s32.totalorder %s81, %s95
    %p97 = scmp.eq.s32.totalorder %s15, 0
    %p98 = por %p96, %p97
    %s99 = ssub.s32 %s16, %s28
    %s100 = ssub.s32 %s17, %s24
    %s101 = sor.u32 %s99, %s100
    %p102 = scmp.eq.s32.totalorder %s101, 0
    %s104 = sadd.s32 %s103, 1
    %s105 = scalar_select %p102, %s103, %s104
    %p108 = pneg %p102
    %p109 = scmp.eq.s32.totalorder %s9, 3
    %p110 = por %p108, %p109
    %p111 = scmp.ne.s32.totalorder %s103, %s106
    %p112 = scmp.eq.s32.totalorder %s9, 0
    %p113 = por %p111, %p112
    %p114 = scmp.ne.s32.totalorder %s103, %s106
    %p115 = scmp.eq.s32.totalorder %s14, 3
    %p116 = por %p114, %p115
    %p117 = scmp.ne.s32.totalorder %s106, %s107
    %p118 = scmp.eq.s32.totalorder %s14, 0
    %p119 = por %p117, %p118
    %p120 = scmp.ne.s32.totalorder %s106, %s107
    %p121 = scmp.eq.s32.totalorder %s15, 3
    %p122 = por %p120, %p121
    %p124 = scmp.ne.s32.totalorder %s107, %s123
    %p125 = scmp.eq.s32.totalorder %s15, 0
    %p126 = por %p124, %p125
    %p127 = scmp.le.s32.totalorder 1, %s9
    %p128 = scmp.lt.s32.totalorder %s9, 5
    %p129 = pnand %p127, %p128
    %p130 = pneg %p129
    // Predicated region
    $region9: #{unet_struc_forward.28} parent=5 // pred_check
      _
    $region10: #{unet_struc_forward.28} parent=5 // pred_check_branch
      %132 = sbr.rel (%p129) target = $region12
    $region11: #{unet_struc_forward.28} parent=5 // pred_region
      %s133 = ssub.s32 %s9, 1
      // Predicated region
      $region13: #{unet_struc_forward.28} parent=11 // pred_check
        %p134 = pneg %p70
      $region14: #{unet_struc_forward.28} parent=11 // pred_check_branch
        %136 = sbr.rel (%p134) target = $region16
      $region15: #{unet_struc_forward.28} parent=11 // pred_region
        _
      $region16: #{unet_struc_forward.28} parent=11 // pred_fallthru
        _
      // Predicated region
      $region17: #{unet_struc_forward.28} parent=11 // pred_check
        %p137 = pneg %p91
      $region18: #{unet_struc_forward.28} parent=11 // pred_check_branch
        %139 = sbr.rel (%p137) target = $region20
      $region19: #{unet_struc_forward.28} parent=11 // pred_region
        _
      $region20: #{unet_struc_forward.28} parent=11 // pred_fallthru
        _
    $region12: #{unet_struc_forward.28} parent=5 // pred_fallthru
      _
    %p140 = scmp.lt.s32.totalorder %s9, 4
    // Predicated region
    $region21: #{unet_struc_forward.28} parent=5 // pred_check
      %p141 = pneg %p140
    $region22: #{unet_struc_forward.28} parent=5 // pred_check_branch
      %143 = sbr.rel (%p141) target = $region24
    $region23: #{unet_struc_forward.28} parent=5 // pred_region
      // Predicated region
      $region25: #{unet_struc_forward.28} parent=23 // pred_check
        %p144 = pneg %p43
      $region26: #{unet_struc_forward.28} parent=23 // pred_check_branch
        %146 = sbr.rel (%p144) target = $region28
      $region27: #{unet_struc_forward.28} parent=23 // pred_region
        %s147 = smul.u32 8, %s17
        %p148 = scmp.lt.s32.totalorder %s16, 1
        %s149 = scalar_select %p148, %s16, 1
        %p150 = scmp.lt.s32.totalorder %s147, 15
        %s151 = scalar_select %p150, %s147, 15
        %s152 = smul.addr %s151, 2
        %s153 = smul.addr %s149, 32
        %s154 = sadd.s32 %s152, %s153
        %s155 = smul.addr %s154, 8
        %s156 = scalar_lea.vmem %s0, %s155
        %s157 = smul.u32 8, %s17
      $region28: #{unet_struc_forward.28} parent=23 // pred_fallthru
        _
    $region24: #{unet_struc_forward.28} parent=5 // pred_fallthru
      _
    %p158 = scmp.le.s32.totalorder 1, %s9
    %p159 = scmp.lt.s32.totalorder %s9, 5
    %p160 = pnand %p158, %p159
    %p161 = pneg %p160
    // Predicated region
    $region29: #{unet_struc_forward.28} parent=5 // pred_check
      _
    $region30: #{unet_struc_forward.28} parent=5 // pred_check_branch
      %163 = sbr.rel (%p160) target = $region32
    $region31: #{unet_struc_forward.28} parent=5 // pred_region
      %s164 = ssub.s32 %s9, 1
      %s165 = smul.u32 8, %s19
      %p166 = scmp.lt.s32.totalorder %s18, 1
      %s167 = scalar_select %p166, %s18, 1
      %p168 = scmp.lt.s32.totalorder %s165, 15
      %s169 = scalar_select %p168, %s165, 15
      %s170 = smul.addr %s169, 2
      %s171 = smul.addr %s167, 32
      %s172 = sadd.s32 %s170, %s171
      %s173 = smul.addr %s172, 8
      %s174 = scalar_lea.vmem %s0, %s173
      %p175 = pneg %p49
      %p176 = pneg %p46
      %p177 = pneg %p70
      %p178 = pneg %p67
      %p179 = pneg %p91
      %p180 = pneg %p88
      %p181 = pneg %p119
      %p182 = pneg %p116
      %s183 = smul.u32 8, %s19
      %p184 = scmp.lt.s32.totalorder %s18, 1
      %s185 = scalar_select %p184, %s18, 1
      %p186 = scmp.lt.s32.totalorder %s183, 15
      %s187 = scalar_select %p186, %s183, 15
      %s188 = smul.addr %s187, 2
      %s189 = smul.addr %s185, 32
      %s190 = sadd.s32 %s188, %s189
      %s191 = smul.addr %s190, 4
      %s192 = scalar_lea.vmem %s3, %s191
      %s193 = smul.u32 8, %s19
      %p194 = scmp.lt.s32.totalorder %s18, 1
      %s195 = scalar_select %p194, %s18, 1
      %p196 = scmp.lt.s32.totalorder %s193, 15
      %s197 = scalar_select %p196, %s193, 15
      %s198 = smul.addr %s197, 2
      %s199 = smul.addr %s195, 32
      %s200 = sadd.s32 %s198, %s199
      %s201 = smul.addr %s200, 8
      %s202 = scalar_lea.vmem %s0, %s201
      %s203 = smul.u32 8, %s19
      %s204 = smul.u32 8, %s19
      %p205 = scmp.lt.s32.totalorder %s18, 1
      %s206 = scalar_select %p205, %s18, 1
      %p207 = scmp.lt.s32.totalorder %s204, 15
      %s208 = scalar_select %p207, %s204, 15
      %s209 = smul.addr %s208, 2
      %s210 = smul.addr %s206, 32
      %s211 = sadd.s32 %s209, %s210
      %s212 = smul.addr %s211, 4
      %s213 = scalar_lea.vmem %s3, %s212
      %s214 = smul.u32 8, %s19
      %v215 = vld [vmem:[%s202] sm:$0xff]
      %v216 = vld [vmem:[%s202 + $0x8] sm:$0xff]
      %v217 = vld [vmem:[%s202 + $0x10] sm:$0xff]
      %v218 = vld [vmem:[%s202 + $0x18] sm:$0xff]
      %v219 = vld [vmem:[%s202 + $0x20] sm:$0xff]
      %v220 = vld [vmem:[%s202 + $0x28] sm:$0xff]
      %v221 = vld [vmem:[%s202 + $0x30] sm:$0xff]
      %v222 = vld [vmem:[%s202 + $0x38] sm:$0xff]
      %v223 = vld [vmem:[%s202 + $0x40] sm:$0xff]
      %v224 = vld [vmem:[%s202 + $0x48] sm:$0xff]
      %v225 = vld [vmem:[%s202 + $0x50] sm:$0xff]
      %v226 = vld [vmem:[%s202 + $0x58] sm:$0xff]
      %v227 = vld [vmem:[%s202 + $0x60] sm:$0xff]
      %v228 = vld [vmem:[%s202 + $0x68] sm:$0xff]
      %v229 = vld [vmem:[%s202 + $0x70] sm:$0xff]
      %v230 = vld [vmem:[%s202 + $0x78] sm:$0xff]
      %v231 = vld [vmem:[%s1] sm:$0x1]
      %v233 = vlaneseq
      %v234 = vshrl.u32 %v233, 7
      %v235 = vsub.s32 0, %v234
      %v236 = vrot.slane %v231, %v235
      %v238 = vmul.f32 %v215, %v236
      %v239 = vmul.f32 %v216, %v236
      %v240 = vmul.f32 %v217, %v236
      %v241 = vmul.f32 %v218, %v236
      %v242 = vmul.f32 %v219, %v236
      %v243 = vmul.f32 %v220, %v236
      %v244 = vmul.f32 %v221, %v236
      %v245 = vmul.f32 %v222, %v236
      %v246 = vmul.f32 %v223, %v236
      %v247 = vmul.f32 %v224, %v236
      %v248 = vmul.f32 %v225, %v236
      %v249 = vmul.f32 %v226, %v236
      %v250 = vmul.f32 %v227, %v236
      %v251 = vmul.f32 %v228, %v236
      %v252 = vmul.f32 %v229, %v236
      %v253 = vmul.f32 %v230, %v236
      %v254 = vld [vmem:[%s2] sm:$0x1]
      %v256 = vlaneseq
      %v257 = vshrl.u32 %v256, 7
      %v258 = vsub.s32 0, %v257
      %v259 = vrot.slane %v254, %v258
      %v261 = vadd.f32 %v238, %v259
      %v262 = vadd.f32 %v239, %v259
      %v263 = vadd.f32 %v240, %v259
      %v264 = vadd.f32 %v241, %v259
      %v265 = vadd.f32 %v242, %v259
      %v266 = vadd.f32 %v243, %v259
      %v267 = vadd.f32 %v244, %v259
      %v268 = vadd.f32 %v245, %v259
      %v269 = vadd.f32 %v246, %v259
      %v270 = vadd.f32 %v247, %v259
      %v271 = vadd.f32 %v248, %v259
      %v272 = vadd.f32 %v249, %v259
      %v273 = vadd.f32 %v250, %v259
      %v274 = vadd.f32 %v251, %v259
      %v275 = vadd.f32 %v252, %v259
      %v276 = vadd.f32 %v253, %v259
      %v277 = vmax.f32 %v261, 0.0
      %v278 = vmax.f32 %v262, 0.0
      %v279 = vmax.f32 %v263, 0.0
      %v280 = vmax.f32 %v264, 0.0
      %v281 = vmax.f32 %v265, 0.0
      %v282 = vmax.f32 %v266, 0.0
      %v283 = vmax.f32 %v267, 0.0
      %v284 = vmax.f32 %v268, 0.0
      %v285 = vmax.f32 %v269, 0.0
      %v286 = vmax.f32 %v270, 0.0
      %v287 = vmax.f32 %v271, 0.0
      %v288 = vmax.f32 %v272, 0.0
      %v289 = vmax.f32 %v273, 0.0
      %v290 = vmax.f32 %v274, 0.0
      %v291 = vmax.f32 %v275, 0.0
      %v292 = vmax.f32 %v276, 0.0
      %v293 = vpack.c.bf16 %v278, %v277
      %v294 = vpack.c.bf16 %v280, %v279
      %v295 = vpack.c.bf16 %v282, %v281
      %v296 = vpack.c.bf16 %v284, %v283
      %v297 = vpack.c.bf16 %v286, %v285
      %v298 = vpack.c.bf16 %v288, %v287
      %v299 = vpack.c.bf16 %v290, %v289
      %v300 = vpack.c.bf16 %v292, %v291
      %v309 = vunpack.c.l.b16 %v293
      %v310 = vunpack.c.h.b16 %v293
      %v311 = vunpack.c.l.b16 %v294
      %v312 = vunpack.c.h.b16 %v294
      %v313 = vunpack.c.l.b16 %v295
      %v314 = vunpack.c.h.b16 %v295
      %v315 = vunpack.c.l.b16 %v296
      %v316 = vunpack.c.h.b16 %v296
      %v317 = vunpack.c.l.b16 %v297
      %v318 = vunpack.c.h.b16 %v297
      %v319 = vunpack.c.l.b16 %v298
      %v320 = vunpack.c.h.b16 %v298
      %v321 = vunpack.c.l.b16 %v299
      %v322 = vunpack.c.h.b16 %v299
      %v323 = vunpack.c.l.b16 %v300
      %v324 = vunpack.c.h.b16 %v300
      %v325 = vpack.c.b16 %v309, %v309
      %v326 = vpack.c.b16 %v310, %v310
      %v327 = vpack.c.b16 %v311, %v311
      %v328 = vpack.c.b16 %v312, %v312
      %v329 = vpack.c.b16 %v313, %v313
      %v330 = vpack.c.b16 %v314, %v314
      %v331 = vpack.c.b16 %v315, %v315
      %v332 = vpack.c.b16 %v316, %v316
      %v333 = vpack.c.b16 %v317, %v317
      %v334 = vpack.c.b16 %v318, %v318
      %v335 = vpack.c.b16 %v319, %v319
      %v336 = vpack.c.b16 %v320, %v320
      %v337 = vpack.c.b16 %v321, %v321
      %v338 = vpack.c.b16 %v322, %v322
      %v339 = vpack.c.b16 %v323, %v323
      %v340 = vpack.c.b16 %v324, %v324
      %vm357 = vcmask 257024
      %358 = vst.msk [vmem:[%s213] sm:$0xf] %vm357, %v325
      %359 = vst.msk [vmem:[%s213 + $0x4] sm:$0xf] %vm357, %v326
      %360 = vst.msk [vmem:[%s213 + $0x8] sm:$0xf] %vm357, %v327
      %361 = vst.msk [vmem:[%s213 + $0xc] sm:$0xf] %vm357, %v328
      %362 = vst.msk [vmem:[%s213 + $0x10] sm:$0xf] %vm357, %v329
      %363 = vst.msk [vmem:[%s213 + $0x14] sm:$0xf] %vm357, %v330
      %364 = vst.msk [vmem:[%s213 + $0x18] sm:$0xf] %vm357, %v331
      %365 = vst.msk [vmem:[%s213 + $0x1c] sm:$0xf] %vm357, %v332
      %366 = vst.msk [vmem:[%s213 + $0x20] sm:$0xf] %vm357, %v333
      %367 = vst.msk [vmem:[%s213 + $0x24] sm:$0xf] %vm357, %v334
      %368 = vst.msk [vmem:[%s213 + $0x28] sm:$0xf] %vm357, %v335
      %369 = vst.msk [vmem:[%s213 + $0x2c] sm:$0xf] %vm357, %v336
      %370 = vst.msk [vmem:[%s213 + $0x30] sm:$0xf] %vm357, %v337
      %371 = vst.msk [vmem:[%s213 + $0x34] sm:$0xf] %vm357, %v338
      %372 = vst.msk [vmem:[%s213 + $0x38] sm:$0xf] %vm357, %v339
      %373 = vst.msk [vmem:[%s213 + $0x3c] sm:$0xf] %vm357, %v340
      %s374 = smul.u32 8, %s19
      %p375 = scmp.lt.s32.totalorder %s18, 1
      %s376 = scalar_select %p375, %s18, 1
      %p377 = scmp.lt.s32.totalorder %s374, 15
      %s378 = scalar_select %p377, %s374, 15
      %s379 = smul.addr %s378, 2
      %s380 = smul.addr %s376, 32
      %s381 = sadd.s32 %s379, %s380
      %s382 = smul.addr %s381, 4
      %s383 = scalar_lea.vmem %s3, %s382
      // Predicated region
      $region33: #{unet_struc_forward.28} parent=31 // pred_check
        %p384 = pneg %p116
      $region34: #{unet_struc_forward.28} parent=31 // pred_check_branch
        %386 = sbr.rel (%p384) target = $region36
      $region35: #{unet_struc_forward.28} parent=31 // pred_region
        %s387 = smul.u32 8, %s19
      $region36: #{unet_struc_forward.28} parent=31 // pred_fallthru
        _
    $region32: #{unet_struc_forward.28} parent=5 // pred_fallthru
      _
    %p388 = scmp.le.s32.totalorder 2, %s9
    // Predicated region
    $region37: #{unet_struc_forward.28} parent=5 // pred_check
      %p389 = pneg %p388
    $region38: #{unet_struc_forward.28} parent=5 // pred_check_branch
      %391 = sbr.rel (%p389) target = $region40
    $region39: #{unet_struc_forward.28} parent=5 // pred_region
      %s392 = ssub.s32 %s9, 2
      // Predicated region
      $region41: #{unet_struc_forward.28} parent=39 // pred_check
        %p393 = pneg %p122
      $region42: #{unet_struc_forward.28} parent=39 // pred_check_branch
        %395 = sbr.rel (%p393) target = $region44
      $region43: #{unet_struc_forward.28} parent=39 // pred_region
        %s396 = smul.u32 8, %s21
        %p397 = scmp.lt.s32.totalorder %s20, 1
        %s398 = scalar_select %p397, %s20, 1
        %p399 = scmp.lt.s32.totalorder %s396, 15
        %s400 = scalar_select %p399, %s396, 15
        %s401 = smul.addr %s400, 2
        %s402 = smul.addr %s398, 32
        %s403 = sadd.s32 %s401, %s402
        %s404 = smul.addr %s403, 4
        %s405 = scalar_lea.vmem %s3, %s404
      $region44: #{unet_struc_forward.28} parent=39 // pred_fallthru
        _
    $region40: #{unet_struc_forward.28} parent=5 // pred_fallthru
      _
  $region6: #{unet_struc_forward.28} parent=0 // loop_footer
    %s13 = sadd.s32 1, %s9
  $region7: #{unet_struc_forward.28} parent=0 // loop_footer_branch
    %8 = sbr.rel target = $region3
  $region8: #{unet_struc_forward.28} parent=0 // loop_exit
    _

// kernel: unet_struc_forward.27
$region0: #{unet_struc_forward.27}
  #allocation0 [shape = 'u32[]', space=smem, size = 0x4, offset = 0x4, fixed_abs, tag = 'smem constant byte address 0x4 - core index']
  #allocation1 [shape = 'u32[144,128]{1,0:T(1,128)}', space=vmem, size = 0x12000, scoped, tag = 'internal scratch']
  %s0 = inlined_call_operand.vmem [shape: bf16[2,2,10,18,32], index: 0, kind: input, shape index: {}]
  %s1 = inlined_call_operand.vmem [shape: bf16[288,32], index: 1, kind: input, shape index: {}]
  %s2 = inlined_call_operand.vmem [shape: f32[2,16,16,32], index: 2, kind: output, shape index: {0}]
  %s3 = inlined_call_operand.vmem [shape: f32[2,2,2,32], index: 3, kind: output, shape index: {1}]
  %4 = xla_tuple %s2, %s3
  %s5 = sld [smem:[#allocation0]]
  $region49: #{unet_struc_forward.27} parent=0
    _
  %s7 = ssub.s32 1, %s5
  %s8 = scalar_select 0, %s7, %s5
  loop: start=0, step=1, limit=6
  $region2: #{unet_struc_forward.27} parent=0 // loop_pre_header
    _
  $region3: #{unet_struc_forward.27} parent=0 // loop_header
    %s10 = sphi 0, %s14
    %p11 = scmp.ge.s32.totalorder %s10, 6
    %s17 = sphi 0, %s29
    %s18 = sphi 0, %s25
    %s19 = sphi 0, %s17
    %s20 = sphi 0, %s18
    %s21 = sphi 0, %s19
    %s22 = sphi 0, %s20
    %s34 = sphi 0, %s36
    %s37 = sphi 0, %s34
    %s38 = sphi 0, %s37
    %s54 = sphi 0, %s38
    %s58 = sphi 0, %s58
    %s60 = sphi 0, %s58
    %s61 = sphi 0, %s60
    %s75 = sphi 0, %s61
    %s83 = sphi 0, %s85
    %s86 = sphi 0, %s83
    %s87 = sphi 0, %s86
    %s103 = sphi 0, %s87
    %s111 = sphi 0, %s113
    %s114 = sphi 0, %s111
    %s115 = sphi 0, %s114
    %s131 = sphi 0, %s115
  $region4: #{unet_struc_forward.27} parent=0 // loop_header_branch
    %13 = sbr.rel (%p11) target = $region8
  $region5: #{unet_struc_forward.27} parent=0 // loop_body
    %s15 = ssub.s32 %s10, 1
    %s16 = ssub.s32 %s10, 2
    %s23 = sadd.s32 1, %s18
    %p24 = scmp.ge.s32.totalorder %s23, 2
    %s25 = scalar_select %p24, 0, %s23
    %s26 = sadd.s32 1, %s17
    %s27 = scalar_select %p24, %s26, %s17
    %p28 = scmp.ge.s32.totalorder %s27, 2
    %s29 = scalar_select %p28, 0, %s27
    %s30 = ssub.s32 %s17, %s29
    %s31 = ssub.s32 %s18, %s25
    %s32 = sor.u32 %s30, %s31
    %p33 = scmp.eq.s32.totalorder %s32, 0
    %s35 = sadd.s32 %s34, 1
    %s36 = scalar_select %p33, %s34, %s35
    %p39 = pneg %p33
    %p40 = scmp.eq.s32.totalorder %s10, 3
    %p41 = por %p39, %p40
    %p42 = scmp.ne.s32.totalorder %s34, %s37
    %p43 = scmp.eq.s32.totalorder %s10, 0
    %p44 = por %p42, %p43
    %p45 = scmp.ne.s32.totalorder %s34, %s37
    %p46 = scmp.eq.s32.totalorder %s15, 3
    %p47 = por %p45, %p46
    %p48 = scmp.ne.s32.totalorder %s37, %s38
    %p49 = scmp.eq.s32.totalorder %s15, 0
    %p50 = por %p48, %p49
    %p51 = scmp.ne.s32.totalorder %s37, %s38
    %p52 = scmp.eq.s32.totalorder %s16, 3
    %p53 = por %p51, %p52
    %p55 = scmp.ne.s32.totalorder %s38, %s54
    %p56 = scmp.eq.s32.totalorder %s16, 0
    %p57 = por %p55, %p56
    %s59 = sadd.s32 %s58, 1
    %p62 = scmp.eq.s32.totalorder %s10, 3
    %p63 = scmp.ne.s32.totalorder %s58, %s60
    %p64 = scmp.eq.s32.totalorder %s10, 0
    %p65 = por %p63, %p64
    %p66 = scmp.ne.s32.totalorder %s58, %s60
    %p67 = scmp.eq.s32.totalorder %s15, 3
    %p68 = por %p66, %p67
    %p69 = scmp.ne.s32.totalorder %s60, %s61
    %p70 = scmp.eq.s32.totalorder %s15, 0
    %p71 = por %p69, %p70
    %p72 = scmp.ne.s32.totalorder %s60, %s61
    %p73 = scmp.eq.s32.totalorder %s16, 3
    %p74 = por %p72, %p73
    %p76 = scmp.ne.s32.totalorder %s61, %s75
    %p77 = scmp.eq.s32.totalorder %s16, 0
    %p78 = por %p76, %p77
    %s79 = ssub.s32 %s17, %s29
    %s80 = ssub.s32 %s18, %s25
    %s81 = sor.u32 %s79, %s80
    %p82 = scmp.eq.s32.totalorder %s81, 0
    %s84 = sadd.s32 %s83, 1
    %s85 = scalar_select %p82, %s83, %s84
    %p88 = pneg %p82
    %p89 = scmp.eq.s32.totalorder %s10, 3
    %p90 = por %p88, %p89
    %p91 = scmp.ne.s32.totalorder %s83, %s86
    %p92 = scmp.eq.s32.totalorder %s10, 0
    %p93 = por %p91, %p92
    %p94 = scmp.ne.s32.totalorder %s83, %s86
    %p95 = scmp.eq.s32.totalorder %s15, 3
    %p96 = por %p94, %p95
    %p97 = scmp.ne.s32.totalorder %s86, %s87
    %p98 = scmp.eq.s32.totalorder %s15, 0
    %p99 = por %p97, %p98
    %p100 = scmp.ne.s32.totalorder %s86, %s87
    %p101 = scmp.eq.s32.totalorder %s16, 3
    %p102 = por %p100, %p101
    %p104 = scmp.ne.s32.totalorder %s87, %s103
    %p105 = scmp.eq.s32.totalorder %s16, 0
    %p106 = por %p104, %p105
    %s107 = ssub.s32 %s17, %s29
    %s108 = ssub.s32 %s18, %s25
    %s109 = sor.u32 %s107, %s108
    %p110 = scmp.eq.s32.totalorder %s109, 0
    %s112 = sadd.s32 %s111, 1
    %s113 = scalar_select %p110, %s111, %s112
    %p116 = pneg %p110
    %p117 = scmp.eq.s32.totalorder %s10, 3
    %p118 = por %p116, %p117
    %p119 = scmp.ne.s32.totalorder %s111, %s114
    %p120 = scmp.eq.s32.totalorder %s10, 0
    %p121 = por %p119, %p120
    %p122 = scmp.ne.s32.totalorder %s111, %s114
    %p123 = scmp.eq.s32.totalorder %s15, 3
    %p124 = por %p122, %p123
    %p125 = scmp.ne.s32.totalorder %s114, %s115
    %p126 = scmp.eq.s32.totalorder %s15, 0
    %p127 = por %p125, %p126
    %p128 = scmp.ne.s32.totalorder %s114, %s115
    %p129 = scmp.eq.s32.totalorder %s16, 3
    %p130 = por %p128, %p129
    %p132 = scmp.ne.s32.totalorder %s115, %s131
    %p133 = scmp.eq.s32.totalorder %s16, 0
    %p134 = por %p132, %p133
    %p135 = scmp.le.s32.totalorder 1, %s10
    %p136 = scmp.lt.s32.totalorder %s10, 5
    %p137 = pnand %p135, %p136
    %p138 = pneg %p137
    // Predicated region
    $region9: #{unet_struc_forward.27} parent=5 // pred_check
      _
    $region10: #{unet_struc_forward.27} parent=5 // pred_check_branch
      %140 = sbr.rel (%p137) target = $region12
    $region11: #{unet_struc_forward.27} parent=5 // pred_region
      %s141 = ssub.s32 %s10, 1
      // Predicated region
      $region13: #{unet_struc_forward.27} parent=11 // pred_check
        %p142 = pneg %p71
      $region14: #{unet_struc_forward.27} parent=11 // pred_check_branch
        %144 = sbr.rel (%p142) target = $region16
      $region15: #{unet_struc_forward.27} parent=11 // pred_region
        _
      $region16: #{unet_struc_forward.27} parent=11 // pred_fallthru
        _
    $region12: #{unet_struc_forward.27} parent=5 // pred_fallthru
      _
    %p145 = scmp.lt.s32.totalorder %s10, 4
    // Predicated region
    $region17: #{unet_struc_forward.27} parent=5 // pred_check
      %p146 = pneg %p145
    $region18: #{unet_struc_forward.27} parent=5 // pred_check_branch
      %148 = sbr.rel (%p146) target = $region20
    $region19: #{unet_struc_forward.27} parent=5 // pred_region
      // Predicated region
      $region21: #{unet_struc_forward.27} parent=19 // pred_check
        %p149 = pneg %p44
      $region22: #{unet_struc_forward.27} parent=19 // pred_check_branch
        %151 = sbr.rel (%p149) target = $region24
      $region23: #{unet_struc_forward.27} parent=19 // pred_region
        %p152 = scmp.lt.s32.totalorder %s17, 1
        %s153 = scalar_select %p152, %s17, 1
        %p154 = scmp.lt.s32.totalorder %s18, 1
        %s155 = scalar_select %p154, %s18, 1
        %s156 = smul.addr %s155, 30
        %s157 = smul.addr %s153, 60
        %s158 = sadd.s32 %s156, %s157
        %s159 = smul.addr %s158, 4
        %s160 = scalar_lea.vmem %s0, %s159
      $region24: #{unet_struc_forward.27} parent=19 // pred_fallthru
        _
    $region20: #{unet_struc_forward.27} parent=5 // pred_fallthru
      _
    %p161 = scmp.le.s32.totalorder 1, %s10
    %p162 = scmp.lt.s32.totalorder %s10, 5
    %p163 = pnand %p161, %p162
    %p164 = pneg %p163
    // Predicated region
    $region25: #{unet_struc_forward.27} parent=5 // pred_check
      _
    $region26: #{unet_struc_forward.27} parent=5 // pred_check_branch
      %166 = sbr.rel (%p163) target = $region28
    $region27: #{unet_struc_forward.27} parent=5 // pred_region
      %s167 = ssub.s32 %s10, 1
      %p168 = scmp.lt.s32.totalorder %s19, 1
      %s169 = scalar_select %p168, %s19, 1
      %p170 = scmp.lt.s32.totalorder %s20, 1
      %s171 = scalar_select %p170, %s20, 1
      %s172 = smul.addr %s171, 30
      %s173 = smul.addr %s169, 60
      %s174 = sadd.s32 %s172, %s173
      %s175 = smul.addr %s174, 4
      %s176 = scalar_lea.vmem %s0, %s175
      %p177 = pneg %p50
      %p178 = pneg %p47
      %p179 = pneg %p71
      %p180 = pneg %p68
      %p181 = pneg %p99
      %p182 = pneg %p96
      %s183 = smul.u32 8, %s20
      %p184 = scmp.lt.s32.totalorder %s19, 1
      %s185 = scalar_select %p184, %s19, 1
      %p186 = scmp.lt.s32.totalorder %s183, 15
      %s187 = scalar_select %p186, %s183, 15
      %s188 = smul.addr %s187, 2
      %s189 = smul.addr %s185, 32
      %s190 = sadd.s32 %s188, %s189
      %s191 = smul.addr %s190, 8
      %s192 = scalar_lea.vmem %s2, %s191
      %p193 = pneg %p127
      %p194 = pneg %p124
      %p195 = scmp.lt.s32.totalorder %s19, 1
      %s196 = scalar_select %p195, %s19, 1
      %p197 = scmp.lt.s32.totalorder %s20, 1
      %s198 = scalar_select %p197, %s20, 1
      %s199 = smul.addr %s196, 2
      %s200 = sadd.s32 %s198, %s199
      %s201 = smul.addr %s200, 2
      %s202 = scalar_lea.vmem %s3, %s201
      %p203 = scmp.lt.s32.totalorder %s19, 1
      %s204 = scalar_select %p203, %s19, 1
      %p205 = scmp.lt.s32.totalorder %s20, 1
      %s206 = scalar_select %p205, %s20, 1
      %s207 = smul.addr %s206, 30
      %s208 = smul.addr %s204, 60
      %s209 = sadd.s32 %s207, %s208
      %s210 = smul.addr %s209, 4
      %s211 = scalar_lea.vmem %s0, %s210
      %s212 = smul.u32 8, %s20
      %p213 = scmp.lt.s32.totalorder %s19, 1
      %s214 = scalar_select %p213, %s19, 1
      %p215 = scmp.lt.s32.totalorder %s212, 15
      %s216 = scalar_select %p215, %s212, 15
      %s217 = smul.addr %s216, 2
      %s218 = smul.addr %s214, 32
      %s219 = sadd.s32 %s217, %s218
      %s220 = smul.addr %s219, 8
      %s221 = scalar_lea.vmem %s2, %s220
      %s222 = smul.u32 8, %s20
      %p223 = scmp.lt.s32.totalorder %s19, 1
      %s224 = scalar_select %p223, %s19, 1
      %p225 = scmp.lt.s32.totalorder %s20, 1
      %s226 = scalar_select %p225, %s20, 1
      %s227 = smul.addr %s224, 2
      %s228 = sadd.s32 %s226, %s227
      %s229 = smul.addr %s228, 2
      %s230 = scalar_lea.vmem %s3, %s229
      %v232 = vld [vmem:[%s211] sm:$0xf]
      %v233 = vld [vmem:[%s211 + $0x4] sm:$0xf]
      %v234 = vld [vmem:[%s211 + $0x8] sm:$0x1]
      %v235 = vld [vmem:[%s211 + $0xc] sm:$0xf]
      %v236 = vld [vmem:[%s211 + $0x10] sm:$0xf]
      %v237 = vld [vmem:[%s211 + $0x14] sm:$0x1]
      %v238 = vld [vmem:[%s211 + $0x18] sm:$0xf]
      %v239 = vld [vmem:[%s211 + $0x1c] sm:$0xf]
      %v240 = vld [vmem:[%s211 + $0x20] sm:$0x1]
      %v241 = vld [vmem:[%s211 + $0x24] sm:$0xf]
      %v242 = vld [vmem:[%s211 + $0x28] sm:$0xf]
      %v243 = vld [vmem:[%s211 + $0x2c] sm:$0x1]
      %v244 = vld [vmem:[%s211 + $0x30] sm:$0xf]
      %v245 = vld [vmem:[%s211 + $0x34] sm:$0xf]
      %v246 = vld [vmem:[%s211 + $0x38] sm:$0x1]
      %v247 = vld [vmem:[%s211 + $0x3c] sm:$0xf]
      %v248 = vld [vmem:[%s211 + $0x40] sm:$0xf]
      %v249 = vld [vmem:[%s211 + $0x44] sm:$0x1]
      %v250 = vld [vmem:[%s211 + $0x48] sm:$0xf]
      %v251 = vld [vmem:[%s211 + $0x4c] sm:$0xf]
      %v252 = vld [vmem:[%s211 + $0x50] sm:$0x1]
      %v253 = vld [vmem:[%s211 + $0x54] sm:$0xf]
      %v254 = vld [vmem:[%s211 + $0x58] sm:$0xf]
      %v255 = vld [vmem:[%s211 + $0x5c] sm:$0x1]
      %v256 = vld [vmem:[%s211 + $0x60] sm:$0xf]
      %v257 = vld [vmem:[%s211 + $0x64] sm:$0xf]
      %v258 = vld [vmem:[%s211 + $0x68] sm:$0x1]
      %v259 = vld [vmem:[%s211 + $0x6c] sm:$0xf]
      %v260 = vld [vmem:[%s211 + $0x70] sm:$0xf]
      %v261 = vld [vmem:[%s211 + $0x74] sm:$0x1]
      %v278 = vunpack.c.l.b16 %v232
      %v279 = vunpack.c.l.b16 %v233
      %v280 = vunpack.c.l.b16 %v235
      %v281 = vunpack.c.l.b16 %v236
      %v282 = vunpack.c.l.b16 %v238
      %v283 = vunpack.c.l.b16 %v239
      %v284 = vunpack.c.l.b16 %v241
      %v285 = vunpack.c.l.b16 %v242
      %v286 = vunpack.c.l.b16 %v244
      %v287 = vunpack.c.l.b16 %v245
      %v288 = vunpack.c.l.b16 %v247
      %v289 = vunpack.c.l.b16 %v248
      %v290 = vunpack.c.l.b16 %v250
      %v291 = vunpack.c.l.b16 %v251
      %v292 = vunpack.c.l.b16 %v253
      %v293 = vunpack.c.l.b16 %v254
      %v294 = vpack.c.b16 %v279, %v278
      %v295 = vpack.c.b16 %v281, %v280
      %v296 = vpack.c.b16 %v283, %v282
      %v297 = vpack.c.b16 %v285, %v284
      %v298 = vpack.c.b16 %v287, %v286
      %v299 = vpack.c.b16 %v289, %v288
      %v300 = vpack.c.b16 %v291, %v290
      %v301 = vpack.c.b16 %v293, %v292
      %v310 = vunpack.c.l.b16 %v234
      %v311 = vunpack.c.l.b16 %v237
      %v312 = vunpack.c.l.b16 %v240
      %v313 = vunpack.c.l.b16 %v243
      %v314 = vunpack.c.l.b16 %v246
      %v315 = vunpack.c.l.b16 %v249
      %v316 = vunpack.c.l.b16 %v252
      %v317 = vunpack.c.l.b16 %v255
      %v318 = vpack.c.b16 %v310, %v310
      %v319 = vpack.c.b16 %v311, %v311
      %v320 = vpack.c.b16 %v312, %v312
      %v321 = vpack.c.b16 %v313, %v313
      %v322 = vpack.c.b16 %v314, %v314
      %v323 = vpack.c.b16 %v315, %v315
      %v324 = vpack.c.b16 %v316, %v316
      %v325 = vpack.c.b16 %v317, %v317
      %vm326 = vsmask.f32 7424
      %v328 = vshrl.u32 %v294, 16
      %v330 = vshll.u32 %v294, 16
      %v332 = vrot.slane %v330, 1
      %v333 = vor.u32 %v328, %v332
      %v335 = vshll.u32 %v318, 16
      %v337 = vrot.slane %v335, 1
      %v338 = vsel %vm326, %v333, %v337
      %v340 = vshrl.u32 %v295, 16
      %v342 = vshll.u32 %v295, 16
      %v344 = vrot.slane %v342, 1
      %v345 = vor.u32 %v340, %v344
      %v347 = vshll.u32 %v319, 16
      %v349 = vrot.slane %v347, 1
      %v350 = vsel %vm326, %v345, %v349
      %v352 = vshrl.u32 %v296, 16
      %v354 = vshll.u32 %v296, 16
      %v356 = vrot.slane %v354, 1
      %v357 = vor.u32 %v352, %v356
      %v359 = vshll.u32 %v320, 16
      %v361 = vrot.slane %v359, 1
      %v362 = vsel %vm326, %v357, %v361
      %v364 = vshrl.u32 %v297, 16
      %v366 = vshll.u32 %v297, 16
      %v368 = vrot.slane %v366, 1
      %v369 = vor.u32 %v364, %v368
      %v371 = vshll.u32 %v321, 16
      %v373 = vrot.slane %v371, 1
      %v374 = vsel %vm326, %v369, %v373
      %v376 = vshrl.u32 %v298, 16
      %v378 = vshll.u32 %v298, 16
      %v380 = vrot.slane %v378, 1
      %v381 = vor.u32 %v376, %v380
      %v383 = vshll.u32 %v322, 16
      %v385 = vrot.slane %v383, 1
      %v386 = vsel %vm326, %v381, %v385
      %v388 = vshrl.u32 %v299, 16
      %v390 = vshll.u32 %v299, 16
      %v392 = vrot.slane %v390, 1
      %v393 = vor.u32 %v388, %v392
      %v395 = vshll.u32 %v323, 16
      %v397 = vrot.slane %v395, 1
      %v398 = vsel %vm326, %v393, %v397
      %v400 = vshrl.u32 %v300, 16
      %v402 = vshll.u32 %v300, 16
      %v404 = vrot.slane %v402, 1
      %v405 = vor.u32 %v400, %v404
      %v407 = vshll.u32 %v324, 16
      %v409 = vrot.slane %v407, 1
      %v410 = vsel %vm326, %v405, %v409
      %v412 = vshrl.u32 %v301, 16
      %v414 = vshll.u32 %v301, 16
      %v416 = vrot.slane %v414, 1
      %v417 = vor.u32 %v412, %v416
      %v419 = vshll.u32 %v325, 16
      %v421 = vrot.slane %v419, 1
      %v422 = vsel %vm326, %v417, %v421
      %423 = vrot.lane.b32.xlu0 %v338, 32
      %v424 = vpop.permute.xlu0 %423
      %425 = vrot.lane.b32.xlu0 %v350, 32
      %v426 = vpop.permute.xlu0 %425
      %427 = vrot.lane.b32.xlu0 %v362, 32
      %v428 = vpop.permute.xlu0 %427
      %429 = vrot.lane.b32.xlu0 %v374, 32
      %v430 = vpop.permute.xlu0 %429
      %431 = vrot.lane.b32.xlu0 %v386, 32
      %v432 = vpop.permute.xlu0 %431
      %433 = vrot.lane.b32.xlu0 %v398, 32
      %v434 = vpop.permute.xlu0 %433
      %435 = vrot.lane.b32.xlu0 %v410, 32
      %v436 = vpop.permute.xlu0 %435
      %437 = vrot.lane.b32.xlu0 %v422, 32
      %v438 = vpop.permute.xlu0 %437
      %vm439 = vcmask 1046528
      %v440 = vrot.slane %v294, 1
      %v441 = vrot.slane %v318, 1
      %v442 = vsel %vm439, %v440, %v441
      %v443 = vrot.slane %v295, 1
      %v444 = vrot.slane %v319, 1
      %v445 = vsel %vm439, %v443, %v444
      %v446 = vrot.slane %v296, 1
      %v447 = vrot.slane %v320, 1
      %v448 = vsel %vm439, %v446, %v447
      %v449 = vrot.slane %v297, 1
      %v450 = vrot.slane %v321, 1
      %v451 = vsel %vm439, %v449, %v450
      %v452 = vrot.slane %v298, 1
      %v453 = vrot.slane %v322, 1
      %v454 = vsel %vm439, %v452, %v453
      %v455 = vrot.slane %v299, 1
      %v456 = vrot.slane %v323, 1
      %v457 = vsel %vm439, %v455, %v456
      %v458 = vrot.slane %v300, 1
      %v459 = vrot.slane %v324, 1
      %v460 = vsel %vm439, %v458, %v459
      %v461 = vrot.slane %v301, 1
      %v462 = vrot.slane %v325, 1
      %v463 = vsel %vm439, %v461, %v462
      %464 = vrot.lane.b32.xlu0 %v442, 64
      %v465 = vpop.permute.xlu0 %464
      %466 = vrot.lane.b32.xlu0 %v445, 64
      %v467 = vpop.permute.xlu0 %466
      %468 = vrot.lane.b32.xlu0 %v448, 64
      %v469 = vpop.permute.xlu0 %468
      %470 = vrot.lane.b32.xlu0 %v451, 64
      %v471 = vpop.permute.xlu0 %470
      %472 = vrot.lane.b32.xlu0 %v454, 64
      %v473 = vpop.permute.xlu0 %472
      %474 = vrot.lane.b32.xlu0 %v457, 64
      %v475 = vpop.permute.xlu0 %474
      %476 = vrot.lane.b32.xlu0 %v460, 64
      %v477 = vpop.permute.xlu0 %476
      %478 = vrot.lane.b32.xlu0 %v463, 64
      %v479 = vpop.permute.xlu0 %478
      %v482 = vunpack.c.l.b16 %v256
      %v483 = vunpack.c.l.b16 %v257
      %v484 = vpack.c.b16 %v483, %v482
      %485 = vrot.lane.b32.xlu0 %v295, 96
      %v486 = vpop.permute.xlu0 %485
      %487 = vrot.lane.b32.xlu0 %v296, 96
      %v488 = vpop.permute.xlu0 %487
      %489 = vrot.lane.b32.xlu0 %v297, 96
      %v490 = vpop.permute.xlu0 %489
      %491 = vrot.lane.b32.xlu0 %v298, 96
      %v492 = vpop.permute.xlu0 %491
      %493 = vrot.lane.b32.xlu0 %v299, 96
      %v494 = vpop.permute.xlu0 %493
      %495 = vrot.lane.b32.xlu0 %v300, 96
      %v496 = vpop.permute.xlu0 %495
      %497 = vrot.lane.b32.xlu0 %v301, 96
      %v498 = vpop.permute.xlu0 %497
      %499 = vrot.lane.b32.xlu0 %v484, 96
      %v500 = vpop.permute.xlu0 %499
      %v502 = vunpack.c.l.b16 %v258
      %v503 = vpack.c.b16 %v502, %v502
      %v505 = vshrl.u32 %v484, 16
      %v507 = vshll.u32 %v484, 16
      %v509 = vrot.slane %v507, 1
      %v510 = vor.u32 %v505, %v509
      %v512 = vshll.u32 %v503, 16
      %v514 = vrot.slane %v512, 1
      %v515 = vsel %vm326, %v510, %v514
      %v516 = vrot.slane %v484, 1
      %v517 = vrot.slane %v503, 1
      %v518 = vsel %vm439, %v516, %v517
      %519 = vrot.lane.b32.xlu0 %v445, 32
      %v520 = vpop.permute.xlu0 %519
      %521 = vrot.lane.b32.xlu0 %v448, 32
      %v522 = vpop.permute.xlu0 %521
      %523 = vrot.lane.b32.xlu0 %v451, 32
      %v524 = vpop.permute.xlu0 %523
      %525 = vrot.lane.b32.xlu0 %v454, 32
      %v526 = vpop.permute.xlu0 %525
      %527 = vrot.lane.b32.xlu0 %v457, 32
      %v528 = vpop.permute.xlu0 %527
      %529 = vrot.lane.b32.xlu0 %v460, 32
      %v530 = vpop.permute.xlu0 %529
      %531 = vrot.lane.b32.xlu0 %v463, 32
      %v532 = vpop.permute.xlu0 %531
      %533 = vrot.lane.b32.xlu0 %v518, 32
      %v534 = vpop.permute.xlu0 %533
      %v537 = vunpack.c.l.b16 %v259
      %v538 = vunpack.c.l.b16 %v260
      %v539 = vpack.c.b16 %v538, %v537
      %540 = vrot.lane.b32.xlu0 %v296, 64
      %v541 = vpop.permute.xlu0 %540
      %542 = vrot.lane.b32.xlu0 %v297, 64
      %v543 = vpop.permute.xlu0 %542
      %544 = vrot.lane.b32.xlu0 %v298, 64
      %v545 = vpop.permute.xlu0 %544
      %546 = vrot.lane.b32.xlu0 %v299, 64
      %v547 = vpop.permute.xlu0 %546
      %548 = vrot.lane.b32.xlu0 %v300, 64
      %v549 = vpop.permute.xlu0 %548
      %550 = vrot.lane.b32.xlu0 %v301, 64
      %v551 = vpop.permute.xlu0 %550
      %552 = vrot.lane.b32.xlu0 %v484, 64
      %v553 = vpop.permute.xlu0 %552
      %554 = vrot.lane.b32.xlu0 %v539, 64
      %v555 = vpop.permute.xlu0 %554
      %v557 = vunpack.c.l.b16 %v261
      %v558 = vpack.c.b16 %v557, %v557
      %v560 = vshrl.u32 %v539, 16
      %v562 = vshll.u32 %v539, 16
      %v564 = vrot.slane %v562, 1
      %v565 = vor.u32 %v560, %v564
      %v567 = vshll.u32 %v558, 16
      %v569 = vrot.slane %v567, 1
      %v570 = vsel %vm326, %v565, %v569
      %571 = vrot.lane.b32.xlu0 %v362, 96
      %v572 = vpop.permute.xlu0 %571
      %573 = vrot.lane.b32.xlu0 %v374, 96
      %v574 = vpop.permute.xlu0 %573
      %575 = vrot.lane.b32.xlu0 %v386, 96
      %v576 = vpop.permute.xlu0 %575
      %577 = vrot.lane.b32.xlu0 %v398, 96
      %v578 = vpop.permute.xlu0 %577
      %579 = vrot.lane.b32.xlu0 %v410, 96
      %v580 = vpop.permute.xlu0 %579
      %581 = vrot.lane.b32.xlu0 %v422, 96
      %v582 = vpop.permute.xlu0 %581
      %583 = vrot.lane.b32.xlu0 %v515, 96
      %v584 = vpop.permute.xlu0 %583
      %585 = vrot.lane.b32.xlu0 %v570, 96
      %v586 = vpop.permute.xlu0 %585
      %v587 = vrot.slane %v539, 1
      %v588 = vrot.slane %v558, 1
      %v589 = vsel %vm439, %v587, %v588
      %vm590 = vcmask 261120
      %v592 = vsel %vm590, %v294, %v424
      %v594 = vsel %vm590, %v295, %v426
      %v596 = vsel %vm590, %v296, %v428
      %v598 = vsel %vm590, %v297, %v430
      %v600 = vsel %vm590, %v298, %v432
      %v602 = vsel %vm590, %v299, %v434
      %v604 = vsel %vm590, %v300, %v436
      %v606 = vsel %vm590, %v301, %v438
      %vm607 = vcmask 523264
      %v609 = vsel %vm607, %v592, %v465
      %v611 = vsel %vm607, %v594, %v467
      %v613 = vsel %vm607, %v596, %v469
      %v615 = vsel %vm607, %v598, %v471
      %v617 = vsel %vm607, %v600, %v473
      %v619 = vsel %vm607, %v602, %v475
      %v621 = vsel %vm607, %v604, %v477
      %v623 = vsel %vm607, %v606, %v479
      %vm624 = vcmask 785408
      %v626 = vsel %vm624, %v609, %v486
      %v629 = vsel %vm624, %v611, %v488
      %v632 = vsel %vm624, %v613, %v490
      %v635 = vsel %vm624, %v615, %v492
      %v638 = vsel %vm624, %v617, %v494
      %v641 = vsel %vm624, %v619, %v496
      %v644 = vsel %vm624, %v621, %v498
      %v647 = vsel %vm624, %v623, %v500
      %v651 = vsel %vm590, %v350, %v520
      %v654 = vsel %vm590, %v362, %v522
      %v657 = vsel %vm590, %v374, %v524
      %v660 = vsel %vm590, %v386, %v526
      %v663 = vsel %vm590, %v398, %v528
      %v666 = vsel %vm590, %v410, %v530
      %v669 = vsel %vm590, %v422, %v532
      %v672 = vsel %vm590, %v515, %v534
      %v674 = vsel %vm607, %v651, %v541
      %v676 = vsel %vm607, %v654, %v543
      %v678 = vsel %vm607, %v657, %v545
      %v680 = vsel %vm607, %v660, %v547
      %v682 = vsel %vm607, %v663, %v549
      %v684 = vsel %vm607, %v666, %v551
      %v686 = vsel %vm607, %v669, %v553
      %v688 = vsel %vm607, %v672, %v555
      %v690 = vsel %vm624, %v674, %v572
      %v693 = vsel %vm624, %v676, %v574
      %v696 = vsel %vm624, %v678, %v576
      %v699 = vsel %vm624, %v680, %v578
      %v702 = vsel %vm624, %v682, %v580
      %v705 = vsel %vm624, %v684, %v582
      %v708 = vsel %vm624, %v686, %v584
      %v711 = vsel %vm624, %v688, %v586
      %v713 = vld [vmem:[%s1] sm:$0xf]
      %v714 = vld [vmem:[%s1 + $0x4] sm:$0xf]
      %v715 = vld [vmem:[%s1 + $0x8] sm:$0xf]
      %v716 = vld [vmem:[%s1 + $0xc] sm:$0xf]
      %v717 = vld [vmem:[%s1 + $0x10] sm:$0xf]
      %v718 = vld [vmem:[%s1 + $0x14] sm:$0xf]
      %v719 = vld [vmem:[%s1 + $0x18] sm:$0xf]
      %v720 = vld [vmem:[%s1 + $0x1c] sm:$0xf]
      %v721 = vld [vmem:[%s1 + $0x20] sm:$0xf]
      %v722 = vld [vmem:[%s1 + $0x24] sm:$0xf]
      %v723 = vld [vmem:[%s1 + $0x28] sm:$0xf]
      %v724 = vld [vmem:[%s1 + $0x2c] sm:$0xf]
      %v725 = vld [vmem:[%s1 + $0x30] sm:$0xf]
      %v726 = vld [vmem:[%s1 + $0x34] sm:$0xf]
      %v727 = vld [vmem:[%s1 + $0x38] sm:$0xf]
      %v728 = vld [vmem:[%s1 + $0x3c] sm:$0xf]
      %v729 = vld [vmem:[%s1 + $0x40] sm:$0xf]
      %v730 = vld [vmem:[%s1 + $0x44] sm:$0xf]
      %v731 = vld [vmem:[%s1 + $0x48] sm:$0xf]
      %v732 = vld [vmem:[%s1 + $0x4c] sm:$0xf]
      %v733 = vld [vmem:[%s1 + $0x50] sm:$0xf]
      %v734 = vld [vmem:[%s1 + $0x54] sm:$0xf]
      %v735 = vld [vmem:[%s1 + $0x58] sm:$0xf]
      %v736 = vld [vmem:[%s1 + $0x5c] sm:$0xf]
      %v737 = vld [vmem:[%s1 + $0x60] sm:$0xf]
      %v738 = vld [vmem:[%s1 + $0x64] sm:$0xf]
      %v739 = vld [vmem:[%s1 + $0x68] sm:$0xf]
      %v740 = vld [vmem:[%s1 + $0x6c] sm:$0xf]
      %v741 = vld [vmem:[%s1 + $0x70] sm:$0xf]
      %v742 = vld [vmem:[%s1 + $0x74] sm:$0xf]
      %v743 = vld [vmem:[%s1 + $0x78] sm:$0xf]
      %v744 = vld [vmem:[%s1 + $0x7c] sm:$0xf]
      %v745 = vld [vmem:[%s1 + $0x80] sm:$0xf]
      %v746 = vld [vmem:[%s1 + $0x84] sm:$0xf]
      %v747 = vld [vmem:[%s1 + $0x88] sm:$0xf]
      %v748 = vld [vmem:[%s1 + $0x8c] sm:$0xf]
      %v785 = vunpack.c.l.b16 %v713
      %v786 = vunpack.c.l.b16 %v714
      %v787 = vunpack.c.l.b16 %v715
      %v788 = vunpack.c.l.b16 %v716
      %v789 = vunpack.c.l.b16 %v717
      %v790 = vunpack.c.l.b16 %v718
      %v791 = vunpack.c.l.b16 %v719
      %v792 = vunpack.c.l.b16 %v720
      %v793 = vunpack.c.l.b16 %v721
      %v794 = vunpack.c.l.b16 %v722
      %v795 = vunpack.c.l.b16 %v723
      %v796 = vunpack.c.l.b16 %v724
      %v797 = vunpack.c.l.b16 %v725
      %v798 = vunpack.c.l.b16 %v726
      %v799 = vunpack.c.l.b16 %v727
      %v800 = vunpack.c.l.b16 %v728
      %v801 = vunpack.c.l.b16 %v729
      %v802 = vunpack.c.l.b16 %v730
      %v803 = vunpack.c.l.b16 %v731
      %v804 = vunpack.c.l.b16 %v732
      %v805 = vunpack.c.l.b16 %v733
      %v806 = vunpack.c.l.b16 %v734
      %v807 = vunpack.c.l.b16 %v735
      %v808 = vunpack.c.l.b16 %v736
      %v809 = vunpack.c.l.b16 %v737
      %v810 = vunpack.c.l.b16 %v738
      %v811 = vunpack.c.l.b16 %v739
      %v812 = vunpack.c.l.b16 %v740
      %v813 = vunpack.c.l.b16 %v741
      %v814 = vunpack.c.l.b16 %v742
      %v815 = vunpack.c.l.b16 %v743
      %v816 = vunpack.c.l.b16 %v744
      %v817 = vunpack.c.l.b16 %v745
      %v818 = vunpack.c.l.b16 %v746
      %v819 = vunpack.c.l.b16 %v747
      %v820 = vunpack.c.l.b16 %v748
      %v821 = vpack.c.b16 %v786, %v785
      %v822 = vpack.c.b16 %v788, %v787
      %v823 = vpack.c.b16 %v790, %v789
      %v824 = vpack.c.b16 %v792, %v791
      %v825 = vpack.c.b16 %v794, %v793
      %v826 = vpack.c.b16 %v796, %v795
      %v827 = vpack.c.b16 %v798, %v797
      %v828 = vpack.c.b16 %v800, %v799
      %v829 = vpack.c.b16 %v802, %v801
      %v830 = vpack.c.b16 %v804, %v803
      %v831 = vpack.c.b16 %v806, %v805
      %v832 = vpack.c.b16 %v808, %v807
      %v833 = vpack.c.b16 %v810, %v809
      %v834 = vpack.c.b16 %v812, %v811
      %v835 = vpack.c.b16 %v814, %v813
      %v836 = vpack.c.b16 %v816, %v815
      %v837 = vpack.c.b16 %v818, %v817
      %v838 = vpack.c.b16 %v820, %v819
      %v858 = vsel %vm590, %v448, 0
      %v861 = vsel %vm590, %v451, 0
      %v864 = vsel %vm590, %v454, 0
      %v867 = vsel %vm590, %v457, 0
      %v870 = vsel %vm590, %v460, 0
      %v873 = vsel %vm590, %v463, 0
      %v876 = vsel %vm590, %v518, 0
      %v879 = vsel %vm590, %v589, 0
      %881 = vmatprep.subr.bf16.mxu0 0
      %882 = vmatpush1.bf16.msra.mxu0 %v821
      %883 = vmatprep.subr.bf16.mxu0 0
      %884 = vmatpush1.bf16.msra.mxu0 %v822
      %885 = vmatprep.subr.bf16.mxu0 0
      %886 = vmatpush1.bf16.msra.mxu0 %v823
      %887 = vmatprep.subr.bf16.mxu0 0
      %888 = vmatpush1.bf16.msra.mxu0 %v824
      %889 = vmatprep.subr.bf16.mxu0 0
      %890 = vmatpush1.bf16.msra.mxu0 %v825
      %891 = vmatprep.subr.bf16.mxu0 0
      %892 = vmatpush1.bf16.msra.mxu0 %v826
      %893 = vmatprep.subr.bf16.mxu0 0
      %894 = vmatpush1.bf16.msra.mxu0 %v827
      %895 = vmatprep.subr.bf16.mxu0 0
      %896 = vmatpush1.bf16.msra.mxu0 %v828
      %897 = vmatprep.subr.bf16.mxu0 0
      %898 = vmatpush1.bf16.msra.mxu0 %v829
      %899 = vmatprep.subr.bf16.mxu0 0
      %900 = vmatpush1.bf16.msra.mxu0 %v830
      %901 = vmatprep.subr.bf16.mxu0 0
      %902 = vmatpush1.bf16.msra.mxu0 %v831
      %903 = vmatprep.subr.bf16.mxu0 0
      %904 = vmatpush1.bf16.msra.mxu0 %v832
      %905 = vmatprep.subr.bf16.mxu0 0
      %906 = vmatpush1.bf16.msra.mxu0 %v833
      %907 = vmatprep.subr.bf16.mxu0 0
      %908 = vmatpush1.bf16.msra.mxu0 %v834
      %909 = vmatprep.subr.bf16.mxu0 0
      %910 = vmatpush1.bf16.msra.mxu0 %v835
      %911 = vmatprep.subr.bf16.mxu0 0
      %912 = vmatpush1.bf16.msra.mxu0 %v836
      %913 = vmatprep.mubr.bf16.mxu0 %v690
      %914 = vmatmul.mubr.bf16.gmra.mrb[0].mxu0 %v626
      %v915 = vpop.f32.mrb[0].mxu0
      %v916 = vadd.f32 0.0, %v915
      %v917 = vpop.f32.mrb[0].mxu0
      %v918 = vpop.f32.mrb[0].mxu0
      %v919 = vadd.f32 0.0, %v918
      %v920 = vpop.f32.mrb[0].mxu0
      %921 = vmatprep.mubr.bf16.mxu0 %v693
      %922 = vmatmul.mubr.bf16.gmra.mrb[0].mxu0 %v629
      %v923 = vpop.f32.mrb[0].mxu0
      %v924 = vadd.f32 0.0, %v923
      %v925 = vpop.f32.mrb[0].mxu0
      %v926 = vpop.f32.mrb[0].mxu0
      %v927 = vadd.f32 0.0, %v926
      %v928 = vpop.f32.mrb[0].mxu0
      %929 = vmatprep.mubr.bf16.mxu0 %v696
      %930 = vmatmul.mubr.bf16.gmra.mrb[0].mxu0 %v632
      %v931 = vpop.f32.mrb[0].mxu0
      %v932 = vadd.f32 0.0, %v931
      %v933 = vpop.f32.mrb[0].mxu0
      %v934 = vpop.f32.mrb[0].mxu0
      %v935 = vadd.f32 0.0, %v934
      %v936 = vpop.f32.mrb[0].mxu0
      %937 = vmatprep.mubr.bf16.mxu0 %v699
      %938 = vmatmul.mubr.bf16.gmra.mrb[0].mxu0 %v635
      %v939 = vpop.f32.mrb[0].mxu0
      %v940 = vadd.f32 0.0, %v939
      %v941 = vpop.f32.mrb[0].mxu0
      %v942 = vpop.f32.mrb[0].mxu0
      %v943 = vadd.f32 0.0, %v942
      %v944 = vpop.f32.mrb[0].mxu0
      %945 = vmatprep.mubr.bf16.mxu0 %v702
      %946 = vmatmul.mubr.bf16.gmra.mrb[0].mxu0 %v638
      %v947 = vpop.f32.mrb[0].mxu0
      %v948 = vadd.f32 0.0, %v947
      %v949 = vpop.f32.mrb[0].mxu0
      %v950 = vpop.f32.mrb[0].mxu0
      %v951 = vadd.f32 0.0, %v950
      %v952 = vpop.f32.mrb[0].mxu0
      %953 = vmatprep.mubr.bf16.mxu0 %v705
      %954 = vmatmul.mubr.bf16.gmra.mrb[0].mxu0 %v641
      %v955 = vpop.f32.mrb[0].mxu0
      %v956 = vadd.f32 0.0, %v955
      %v957 = vpop.f32.mrb[0].mxu0
      %v958 = vpop.f32.mrb[0].mxu0
      %v959 = vadd.f32 0.0, %v958
      %v960 = vpop.f32.mrb[0].mxu0
      %961 = vmatprep.mubr.bf16.mxu0 %v708
      %962 = vmatmul.mubr.bf16.gmra.mrb[0].mxu0 %v644
      %v963 = vpop.f32.mrb[0].mxu0
      %v964 = vadd.f32 0.0, %v963
      %v965 = vpop.f32.mrb[0].mxu0
      %v966 = vpop.f32.mrb[0].mxu0
      %v967 = vadd.f32 0.0, %v966
      %v968 = vpop.f32.mrb[0].mxu0
      %969 = vmatprep.mubr.bf16.mxu0 %v711
      %970 = vmatmul.mubr.bf16.gmra.mrb[0].mxu0 %v647
      %v971 = vpop.f32.mrb[0].mxu0
      %v972 = vadd.f32 0.0, %v971
      %v973 = vpop.f32.mrb[0].mxu0
      %v974 = vpop.f32.mrb[0].mxu0
      %v975 = vadd.f32 0.0, %v974
      %v976 = vpop.f32.mrb[0].mxu0
      %977 = vdwg.mxu0
      %978 = vmatprep.subr.bf16.mxu0 0
      %979 = vmatpush1.bf16.msra.mxu0 %v837
      %980 = vmatprep.subr.bf16.mxu0 0
      %981 = vmatpush1.bf16.msra.mxu0 %v838
      %982 = vmatprep.subr.bf16.mxu0 0
      %983 = vmatpush1.bf16.msra.mxu0 0
      %984 = vmatprep.subr.bf16.mxu0 0
      %985 = vmatpush1.bf16.msra.mxu0 0
      %986 = vmatprep.subr.bf16.mxu0 0
      %987 = vmatpush1.bf16.msra.mxu0 0
      %988 = vmatprep.subr.bf16.mxu0 0
      %989 = vmatpush1.bf16.msra.mxu0 0
      %990 = vmatprep.subr.bf16.mxu0 0
      %991 = vmatpush1.bf16.msra.mxu0 0
      %992 = vmatprep.subr.bf16.mxu0 0
      %993 = vmatpush1.bf16.msra.mxu0 0
      %994 = vmatprep.subr.bf16.mxu0 0
      %995 = vmatpush1.bf16.msra.mxu0 0
      %996 = vmatprep.subr.bf16.mxu0 0
      %997 = vmatpush1.bf16.msra.mxu0 0
      %998 = vmatprep.subr.bf16.mxu0 0
      %999 = vmatpush1.bf16.msra.mxu0 0
      %1000 = vmatprep.subr.bf16.mxu0 0
      %1001 = vmatpush1.bf16.msra.mxu0 0
      %1002 = vmatprep.subr.bf16.mxu0 0
      %1003 = vmatpush1.bf16.msra.mxu0 0
      %1004 = vmatprep.subr.bf16.mxu0 0
      %1005 = vmatpush1.bf16.msra.mxu0 0
      %1006 = vmatprep.subr.bf16.mxu0 0
      %1007 = vmatpush1.bf16.msra.mxu0 0
      %1008 = vmatprep.subr.bf16.mxu0 0
      %1009 = vmatpush1.bf16.msra.mxu0 0
      %1010 = vmatprep.mubr.bf16.mxu0 0
      %1011 = vmatmul.mubr.bf16.gmra.mrb[0].mxu0 %v858
      %v1012 = vpop.f32.mrb[0].mxu0
      %v1013 = vadd.f32 %v916, %v1012
      %v1014 = vpop.f32.mrb[0].mxu0
      %v1015 = vpop.f32.mrb[0].mxu0
      %v1016 = vadd.f32 %v919, %v1015
      %v1017 = vpop.f32.mrb[0].mxu0
      %1018 = vmatprep.mubr.bf16.mxu0 0
      %1019 = vmatmul.mubr.bf16.gmra.mrb[0].mxu0 %v861
      %v1020 = vpop.f32.mrb[0].mxu0
      %v1021 = vadd.f32 %v924, %v1020
      %v1022 = vpop.f32.mrb[0].mxu0
      %v1023 = vpop.f32.mrb[0].mxu0
      %v1024 = vadd.f32 %v927, %v1023
      %v1025 = vpop.f32.mrb[0].mxu0
      %1026 = vmatprep.mubr.bf16.mxu0 0
      %1027 = vmatmul.mubr.bf16.gmra.mrb[0].mxu0 %v864
      %v1028 = vpop.f32.mrb[0].mxu0
      %v1029 = vadd.f32 %v932, %v1028
      %v1030 = vpop.f32.mrb[0].mxu0
      %v1031 = vpop.f32.mrb[0].mxu0
      %v1032 = vadd.f32 %v935, %v1031
      %v1033 = vpop.f32.mrb[0].mxu0
      %1034 = vmatprep.mubr.bf16.mxu0 0
      %1035 = vmatmul.mubr.bf16.gmra.mrb[0].mxu0 %v867
      %v1036 = vpop.f32.mrb[0].mxu0
      %v1037 = vadd.f32 %v940, %v1036
      %v1038 = vpop.f32.mrb[0].mxu0
      %v1039 = vpop.f32.mrb[0].mxu0
      %v1040 = vadd.f32 %v943, %v1039
      %v1041 = vpop.f32.mrb[0].mxu0
      %1042 = vmatprep.mubr.bf16.mxu0 0
      %1043 = vmatmul.mubr.bf16.gmra.mrb[0].mxu0 %v870
      %v1044 = vpop.f32.mrb[0].mxu0
      %v1045 = vadd.f32 %v948, %v1044
      %v1046 = vpop.f32.mrb[0].mxu0
      %v1047 = vpop.f32.mrb[0].mxu0
      %v1048 = vadd.f32 %v951, %v1047
      %v1049 = vpop.f32.mrb[0].mxu0
      %1050 = vmatprep.mubr.bf16.mxu0 0
      %1051 = vmatmul.mubr.bf16.gmra.mrb[0].mxu0 %v873
      %v1052 = vpop.f32.mrb[0].mxu0
      %v1053 = vadd.f32 %v956, %v1052
      %v1054 = vpop.f32.mrb[0].mxu0
      %v1055 = vpop.f32.mrb[0].mxu0
      %v1056 = vadd.f32 %v959, %v1055
      %v1057 = vpop.f32.mrb[0].mxu0
      %1058 = vmatprep.mubr.bf16.mxu0 0
      %1059 = vmatmul.mubr.bf16.gmra.mrb[0].mxu0 %v876
      %v1060 = vpop.f32.mrb[0].mxu0
      %v1061 = vadd.f32 %v964, %v1060
      %v1062 = vpop.f32.mrb[0].mxu0
      %v1063 = vpop.f32.mrb[0].mxu0
      %v1064 = vadd.f32 %v967, %v1063
      %v1065 = vpop.f32.mrb[0].mxu0
      %1066 = vmatprep.mubr.bf16.mxu0 0
      %1067 = vmatmul.mubr.bf16.gmra.mrb[0].mxu0 %v879
      %v1068 = vpop.f32.mrb[0].mxu0
      %v1069 = vadd.f32 %v972, %v1068
      %v1070 = vpop.f32.mrb[0].mxu0
      %v1071 = vpop.f32.mrb[0].mxu0
      %v1072 = vadd.f32 %v975, %v1071
      %v1073 = vpop.f32.mrb[0].mxu0
      %1074 = vdwg.mxu0
      %v1075 = vsel %vm590, %v1013, 0.0
      %v1076 = vsel %vm590, %v1016, 0.0
      %v1077 = vadd.f32 %v1075, %v1076
      %v1078 = vsel %vm590, %v1021, 0.0
      %v1079 = vadd.f32 %v1077, %v1078
      %v1080 = vsel %vm590, %v1024, 0.0
      %v1081 = vadd.f32 %v1079, %v1080
      %v1082 = vsel %vm590, %v1029, 0.0
      %v1083 = vadd.f32 %v1081, %v1082
      %v1084 = vsel %vm590, %v1032, 0.0
      %v1085 = vadd.f32 %v1083, %v1084
      %v1086 = vsel %vm590, %v1037, 0.0
      %v1087 = vadd.f32 %v1085, %v1086
      %v1088 = vsel %vm590, %v1040, 0.0
      %v1089 = vadd.f32 %v1087, %v1088
      %v1090 = vsel %vm590, %v1045, 0.0
      %v1091 = vadd.f32 %v1089, %v1090
      %v1092 = vsel %vm590, %v1048, 0.0
      %v1093 = vadd.f32 %v1091, %v1092
      %v1094 = vsel %vm590, %v1053, 0.0
      %v1095 = vadd.f32 %v1093, %v1094
      %v1096 = vsel %vm590, %v1056, 0.0
      %v1097 = vadd.f32 %v1095, %v1096
      %v1098 = vsel %vm590, %v1061, 0.0
      %v1099 = vadd.f32 %v1097, %v1098
      %v1100 = vsel %vm590, %v1064, 0.0
      %v1101 = vadd.f32 %v1099, %v1100
      %v1102 = vsel %vm590, %v1069, 0.0
      %v1103 = vadd.f32 %v1101, %v1102
      %v1104 = vsel %vm590, %v1072, 0.0
      %v1105 = vadd.f32 %v1103, %v1104
      %v1106 = vrot.slane %v1105, 4
      %v1107 = vadd.f32 %v1105, %v1106
      %v1108 = vrot.slane %v1107, 2
      %v1109 = vadd.f32 %v1107, %v1108
      %v1110 = vrot.slane %v1109, 1
      %v1111 = vadd.f32 %v1109, %v1110
      %v1112 = vmul.f32 %v1013, %v1013
      %v1113 = vmul.f32 %v1016, %v1016
      %v1114 = vmul.f32 %v1021, %v1021
      %v1115 = vmul.f32 %v1024, %v1024
      %v1116 = vmul.f32 %v1029, %v1029
      %v1117 = vmul.f32 %v1032, %v1032
      %v1118 = vmul.f32 %v1037, %v1037
      %v1119 = vmul.f32 %v1040, %v1040
      %v1120 = vmul.f32 %v1045, %v1045
      %v1121 = vmul.f32 %v1048, %v1048
      %v1122 = vmul.f32 %v1053, %v1053
      %v1123 = vmul.f32 %v1056, %v1056
      %v1124 = vmul.f32 %v1061, %v1061
      %v1125 = vmul.f32 %v1064, %v1064
      %v1126 = vmul.f32 %v1069, %v1069
      %v1127 = vmul.f32 %v1072, %v1072
      %v1128 = vsel %vm590, %v1112, 0.0
      %v1129 = vsel %vm590, %v1113, 0.0
      %v1130 = vadd.f32 %v1128, %v1129
      %v1131 = vsel %vm590, %v1114, 0.0
      %v1132 = vadd.f32 %v1130, %v1131
      %v1133 = vsel %vm590, %v1115, 0.0
      %v1134 = vadd.f32 %v1132, %v1133
      %v1135 = vsel %vm590, %v1116, 0.0
      %v1136 = vadd.f32 %v1134, %v1135
      %v1137 = vsel %vm590, %v1117, 0.0
      %v1138 = vadd.f32 %v1136, %v1137
      %v1139 = vsel %vm590, %v1118, 0.0
      %v1140 = vadd.f32 %v1138, %v1139
      %v1141 = vsel %vm590, %v1119, 0.0
      %v1142 = vadd.f32 %v1140, %v1141
      %v1143 = vsel %vm590, %v1120, 0.0
      %v1144 = vadd.f32 %v1142, %v1143
      %v1145 = vsel %vm590, %v1121, 0.0
      %v1146 = vadd.f32 %v1144, %v1145
      %v1147 = vsel %vm590, %v1122, 0.0
      %v1148 = vadd.f32 %v1146, %v1147
      %v1149 = vsel %vm590, %v1123, 0.0
      %v1150 = vadd.f32 %v1148, %v1149
      %v1151 = vsel %vm590, %v1124, 0.0
      %v1152 = vadd.f32 %v1150, %v1151
      %v1153 = vsel %vm590, %v1125, 0.0
      %v1154 = vadd.f32 %v1152, %v1153
      %v1155 = vsel %vm590, %v1126, 0.0
      %v1156 = vadd.f32 %v1154, %v1155
      %v1157 = vsel %vm590, %v1127, 0.0
      %v1158 = vadd.f32 %v1156, %v1157
      %v1159 = vrot.slane %v1158, 4
      %v1160 = vadd.f32 %v1158, %v1159
      %v1161 = vrot.slane %v1160, 2
      %v1162 = vadd.f32 %v1160, %v1161
      %v1163 = vrot.slane %v1162, 1
      %v1164 = vadd.f32 %v1162, %v1163
      %vm1165 = vcmask 1040384
      %v1166 = vsel %vm1165, %v1111, %v1164
      %vm1167 = vcmask 254976
      %1168 = vst.msk [vmem:[%s230] sm:$0x3] %vm1167, %v1166
      %1169 = vst.msk [vmem:[%s221] sm:$0xff] %vm590, %v1013
      %1170 = vst.msk [vmem:[%s221 + $0x8] sm:$0xff] %vm590, %v1016
      %1171 = vst.msk [vmem:[%s221 + $0x10] sm:$0xff] %vm590, %v1021
      %1172 = vst.msk [vmem:[%s221 + $0x18] sm:$0xff] %vm590, %v1024
      %1173 = vst.msk [vmem:[%s221 + $0x20] sm:$0xff] %vm590, %v1029
      %1174 = vst.msk [vmem:[%s221 + $0x28] sm:$0xff] %vm590, %v1032
      %1175 = vst.msk [vmem:[%s221 + $0x30] sm:$0xff] %vm590, %v1037
      %1176 = vst.msk [vmem:[%s221 + $0x38] sm:$0xff] %vm590, %v1040
      %1177 = vst.msk [vmem:[%s221 + $0x40] sm:$0xff] %vm590, %v1045
      %1178 = vst.msk [vmem:[%s221 + $0x48] sm:$0xff] %vm590, %v1048
      %1179 = vst.msk [vmem:[%s221 + $0x50] sm:$0xff] %vm590, %v1053
      %1180 = vst.msk [vmem:[%s221 + $0x58] sm:$0xff] %vm590, %v1056
      %1181 = vst.msk [vmem:[%s221 + $0x60] sm:$0xff] %vm590, %v1061
      %1182 = vst.msk [vmem:[%s221 + $0x68] sm:$0xff] %vm590, %v1064
      %1183 = vst.msk [vmem:[%s221 + $0x70] sm:$0xff] %vm590, %v1069
      %1184 = vst.msk [vmem:[%s221 + $0x78] sm:$0xff] %vm590, %v1072
      %s1185 = smul.u32 8, %s20
      %p1186 = scmp.lt.s32.totalorder %s19, 1
      %s1187 = scalar_select %p1186, %s19, 1
      %p1188 = scmp.lt.s32.totalorder %s1185, 15
      %s1189 = scalar_select %p1188, %s1185, 15
      %s1190 = smul.addr %s1189, 2
      %s1191 = smul.addr %s1187, 32
      %s1192 = sadd.s32 %s1190, %s1191
      %s1193 = smul.addr %s1192, 8
      %s1194 = scalar_lea.vmem %s2, %s1193
      %p1195 = scmp.lt.s32.totalorder %s19, 1
      %s1196 = scalar_select %p1195, %s19, 1
      %p1197 = scmp.lt.s32.totalorder %s20, 1
      %s1198 = scalar_select %p1197, %s20, 1
      %s1199 = smul.addr %s1196, 2
      %s1200 = sadd.s32 %s1198, %s1199
      %s1201 = smul.addr %s1200, 2
      %s1202 = scalar_lea.vmem %s3, %s1201
      // Predicated region
      $region29: #{unet_struc_forward.27} parent=27 // pred_check
        %p1203 = pneg %p96
      $region30: #{unet_struc_forward.27} parent=27 // pred_check_branch
        %1205 = sbr.rel (%p1203) target = $region32
      $region31: #{unet_struc_forward.27} parent=27 // pred_region
        %s1206 = smul.u32 8, %s20
      $region32: #{unet_struc_forward.27} parent=27 // pred_fallthru
        _
      // Predicated region
      $region33: #{unet_struc_forward.27} parent=27 // pred_check
        %p1207 = pneg %p124
      $region34: #{unet_struc_forward.27} parent=27 // pred_check_branch
        %1209 = sbr.rel (%p1207) target = $region36
      $region35: #{unet_struc_forward.27} parent=27 // pred_region
        _
      $region36: #{unet_struc_forward.27} parent=27 // pred_fallthru
        _
    $region28: #{unet_struc_forward.27} parent=5 // pred_fallthru
      _
    %p1210 = scmp.le.s32.totalorder 2, %s10
    // Predicated region
    $region37: #{unet_struc_forward.27} parent=5 // pred_check
      %p1211 = pneg %p1210
    $region38: #{unet_struc_forward.27} parent=5 // pred_check_branch
      %1213 = sbr.rel (%p1211) target = $region40
    $region39: #{unet_struc_forward.27} parent=5 // pred_region
      %s1214 = ssub.s32 %s10, 2
      // Predicated region
      $region41: #{unet_struc_forward.27} parent=39 // pred_check
        %p1215 = pneg %p102
      $region42: #{unet_struc_forward.27} parent=39 // pred_check_branch
        %1217 = sbr.rel (%p1215) target = $region44
      $region43: #{unet_struc_forward.27} parent=39 // pred_region
        %s1218 = smul.u32 8, %s22
        %p1219 = scmp.lt.s32.totalorder %s21, 1
        %s1220 = scalar_select %p1219, %s21, 1
        %p1221 = scmp.lt.s32.totalorder %s1218, 15
        %s1222 = scalar_select %p1221, %s1218, 15
        %s1223 = smul.addr %s1222, 2
        %s1224 = smul.addr %s1220, 32
        %s1225 = sadd.s32 %s1223, %s1224
        %s1226 = smul.addr %s1225, 8
        %s1227 = scalar_lea.vmem %s2, %s1226
      $region44: #{unet_struc_forward.27} parent=39 // pred_fallthru
        _
      // Predicated region
      $region45: #{unet_struc_forward.27} parent=39 // pred_check
        %p1228 = pneg %p130
      $region46: #{unet_struc_forward.27} parent=39 // pred_check_branch
        %1230 = sbr.rel (%p1228) target = $region48
      $region47: #{unet_struc_forward.27} parent=39 // pred_region
        %p1231 = scmp.lt.s32.totalorder %s21, 1
        %s1232 = scalar_select %p1231, %s21, 1
        %p1233 = scmp.lt.s32.totalorder %s22, 1
        %s1234 = scalar_select %p1233, %s22, 1
        %s1235 = smul.addr %s1232, 2
        %s1236 = sadd.s32 %s1234, %s1235
        %s1237 = smul.addr %s1236, 2
        %s1238 = scalar_lea.vmem %s3, %s1237
      $region48: #{unet_struc_forward.27} parent=39 // pred_fallthru
        _
    $region40: #{unet_struc_forward.27} parent=5 // pred_fallthru
      _
  $region6: #{unet_struc_forward.27} parent=0 // loop_footer
    %s14 = sadd.s32 1, %s10
  $region7: #{unet_struc_forward.27} parent=0 // loop_footer_branch
    %9 = sbr.rel target = $region3
  $region8: #{unet_struc_forward.27} parent=0 // loop_exit
    _

// kernel: unet_struc_forward.37
$region0: #{unet_struc_forward.37}
  #allocation0 [shape = 'u32[]', space=smem, size = 0x4, offset = 0x4, fixed_abs, tag = 'smem constant byte address 0x4 - core index']
  #allocation1 [shape = 'u32[144,128]{1,0:T(1,128)}', space=vmem, size = 0x12000, scoped, tag = 'internal scratch']
  %s0 = inlined_call_operand.vmem [shape: bf16[2,2,10,18,32], index: 0, kind: input, shape index: {}]
  %s1 = inlined_call_operand.vmem [shape: bf16[288,128], index: 1, kind: input, shape index: {}]
  %s2 = inlined_call_operand.vmem [shape: f32[1,128], index: 2, kind: input, shape index: {}]
  %s3 = inlined_call_operand.vmem [shape: f32[2,16,16,128], index: 3, kind: output, shape index: {}]
  %s4 = sld [smem:[#allocation0]]
  $region45: #{unet_struc_forward.37} parent=0
    _
  %s6 = ssub.s32 1, %s4
  %s7 = scalar_select 0, %s6, %s4
  loop: start=0, step=1, limit=6
  $region2: #{unet_struc_forward.37} parent=0 // loop_pre_header
    _
  $region3: #{unet_struc_forward.37} parent=0 // loop_header
    %s9 = sphi 0, %s13
    %p10 = scmp.ge.s32.totalorder %s9, 6
    %s16 = sphi 0, %s28
    %s17 = sphi 0, %s24
    %s18 = sphi 0, %s16
    %s19 = sphi 0, %s17
    %s20 = sphi 0, %s18
    %s21 = sphi 0, %s19
    %s33 = sphi 0, %s35
    %s36 = sphi 0, %s33
    %s37 = sphi 0, %s36
    %s53 = sphi 0, %s37
    %s57 = sphi 0, %s57
    %s59 = sphi 0, %s57
    %s60 = sphi 0, %s59
    %s74 = sphi 0, %s60
    %s78 = sphi 0, %s78
    %s80 = sphi 0, %s78
    %s81 = sphi 0, %s80
    %s95 = sphi 0, %s81
    %s103 = sphi 0, %s105
    %s106 = sphi 0, %s103
    %s107 = sphi 0, %s106
    %s123 = sphi 0, %s107
  $region4: #{unet_struc_forward.37} parent=0 // loop_header_branch
    %12 = sbr.rel (%p10) target = $region8
  $region5: #{unet_struc_forward.37} parent=0 // loop_body
    %s14 = ssub.s32 %s9, 1
    %s15 = ssub.s32 %s9, 2
    %s22 = sadd.s32 1, %s17
    %p23 = scmp.ge.s32.totalorder %s22, 2
    %s24 = scalar_select %p23, 0, %s22
    %s25 = sadd.s32 1, %s16
    %s26 = scalar_select %p23, %s25, %s16
    %p27 = scmp.ge.s32.totalorder %s26, 2
    %s28 = scalar_select %p27, 0, %s26
    %s29 = ssub.s32 %s16, %s28
    %s30 = ssub.s32 %s17, %s24
    %s31 = sor.u32 %s29, %s30
    %p32 = scmp.eq.s32.totalorder %s31, 0
    %s34 = sadd.s32 %s33, 1
    %s35 = scalar_select %p32, %s33, %s34
    %p38 = pneg %p32
    %p39 = scmp.eq.s32.totalorder %s9, 3
    %p40 = por %p38, %p39
    %p41 = scmp.ne.s32.totalorder %s33, %s36
    %p42 = scmp.eq.s32.totalorder %s9, 0
    %p43 = por %p41, %p42
    %p44 = scmp.ne.s32.totalorder %s33, %s36
    %p45 = scmp.eq.s32.totalorder %s14, 3
    %p46 = por %p44, %p45
    %p47 = scmp.ne.s32.totalorder %s36, %s37
    %p48 = scmp.eq.s32.totalorder %s14, 0
    %p49 = por %p47, %p48
    %p50 = scmp.ne.s32.totalorder %s36, %s37
    %p51 = scmp.eq.s32.totalorder %s15, 3
    %p52 = por %p50, %p51
    %p54 = scmp.ne.s32.totalorder %s37, %s53
    %p55 = scmp.eq.s32.totalorder %s15, 0
    %p56 = por %p54, %p55
    %s58 = sadd.s32 %s57, 1
    %p61 = scmp.eq.s32.totalorder %s9, 3
    %p62 = scmp.ne.s32.totalorder %s57, %s59
    %p63 = scmp.eq.s32.totalorder %s9, 0
    %p64 = por %p62, %p63
    %p65 = scmp.ne.s32.totalorder %s57, %s59
    %p66 = scmp.eq.s32.totalorder %s14, 3
    %p67 = por %p65, %p66
    %p68 = scmp.ne.s32.totalorder %s59, %s60
    %p69 = scmp.eq.s32.totalorder %s14, 0
    %p70 = por %p68, %p69
    %p71 = scmp.ne.s32.totalorder %s59, %s60
    %p72 = scmp.eq.s32.totalorder %s15, 3
    %p73 = por %p71, %p72
    %p75 = scmp.ne.s32.totalorder %s60, %s74
    %p76 = scmp.eq.s32.totalorder %s15, 0
    %p77 = por %p75, %p76
    %s79 = sadd.s32 %s78, 1
    %p82 = scmp.eq.s32.totalorder %s9, 3
    %p83 = scmp.ne.s32.totalorder %s78, %s80
    %p84 = scmp.eq.s32.totalorder %s9, 0
    %p85 = por %p83, %p84
    %p86 = scmp.ne.s32.totalorder %s78, %s80
    %p87 = scmp.eq.s32.totalorder %s14, 3
    %p88 = por %p86, %p87
    %p89 = scmp.ne.s32.totalorder %s80, %s81
    %p90 = scmp.eq.s32.totalorder %s14, 0
    %p91 = por %p89, %p90
    %p92 = scmp.ne.s32.totalorder %s80, %s81
    %p93 = scmp.eq.s32.totalorder %s15, 3
    %p94 = por %p92, %p93
    %p96 = scmp.ne.s32.totalorder %s81, %s95
    %p97 = scmp.eq.s32.totalorder %s15, 0
    %p98 = por %p96, %p97
    %s99 = ssub.s32 %s16, %s28
    %s100 = ssub.s32 %s17, %s24
    %s101 = sor.u32 %s99, %s100
    %p102 = scmp.eq.s32.totalorder %s101, 0
    %s104 = sadd.s32 %s103, 1
    %s105 = scalar_select %p102, %s103, %s104
    %p108 = pneg %p102
    %p109 = scmp.eq.s32.totalorder %s9, 3
    %p110 = por %p108, %p109
    %p111 = scmp.ne.s32.totalorder %s103, %s106
    %p112 = scmp.eq.s32.totalorder %s9, 0
    %p113 = por %p111, %p112
    %p114 = scmp.ne.s32.totalorder %s103, %s106
    %p115 = scmp.eq.s32.totalorder %s14, 3
    %p116 = por %p114, %p115
    %p117 = scmp.ne.s32.totalorder %s106, %s107
    %p118 = scmp.eq.s32.totalorder %s14, 0
    %p119 = por %p117, %p118
    %p120 = scmp.ne.s32.totalorder %s106, %s107
    %p121 = scmp.eq.s32.totalorder %s15, 3
    %p122 = por %p120, %p121
    %p124 = scmp.ne.s32.totalorder %s107, %s123
    %p125 = scmp.eq.s32.totalorder %s15, 0
    %p126 = por %p124, %p125
    %p127 = scmp.le.s32.totalorder 1, %s9
    %p128 = scmp.lt.s32.totalorder %s9, 5
    %p129 = pnand %p127, %p128
    %p130 = pneg %p129
    // Predicated region
    $region9: #{unet_struc_forward.37} parent=5 // pred_check
      _
    $region10: #{unet_struc_forward.37} parent=5 // pred_check_branch
      %132 = sbr.rel (%p129) target = $region12
    $region11: #{unet_struc_forward.37} parent=5 // pred_region
      %s133 = ssub.s32 %s9, 1
      // Predicated region
      $region13: #{unet_struc_forward.37} parent=11 // pred_check
        %p134 = pneg %p70
      $region14: #{unet_struc_forward.37} parent=11 // pred_check_branch
        %136 = sbr.rel (%p134) target = $region16
      $region15: #{unet_struc_forward.37} parent=11 // pred_region
        _
      $region16: #{unet_struc_forward.37} parent=11 // pred_fallthru
        _
      // Predicated region
      $region17: #{unet_struc_forward.37} parent=11 // pred_check
        %p137 = pneg %p91
      $region18: #{unet_struc_forward.37} parent=11 // pred_check_branch
        %139 = sbr.rel (%p137) target = $region20
      $region19: #{unet_struc_forward.37} parent=11 // pred_region
        _
      $region20: #{unet_struc_forward.37} parent=11 // pred_fallthru
        _
    $region12: #{unet_struc_forward.37} parent=5 // pred_fallthru
      _
    %p140 = scmp.lt.s32.totalorder %s9, 4
    // Predicated region
    $region21: #{unet_struc_forward.37} parent=5 // pred_check
      %p141 = pneg %p140
    $region22: #{unet_struc_forward.37} parent=5 // pred_check_branch
      %143 = sbr.rel (%p141) target = $region24
    $region23: #{unet_struc_forward.37} parent=5 // pred_region
      // Predicated region
      $region25: #{unet_struc_forward.37} parent=23 // pred_check
        %p144 = pneg %p43
      $region26: #{unet_struc_forward.37} parent=23 // pred_check_branch
        %146 = sbr.rel (%p144) target = $region28
      $region27: #{unet_struc_forward.37} parent=23 // pred_region
        %p147 = scmp.lt.s32.totalorder %s16, 1
        %s148 = scalar_select %p147, %s16, 1
        %p149 = scmp.lt.s32.totalorder %s17, 1
        %s150 = scalar_select %p149, %s17, 1
        %s151 = smul.addr %s150, 30
        %s152 = smul.addr %s148, 60
        %s153 = sadd.s32 %s151, %s152
        %s154 = smul.addr %s153, 4
        %s155 = scalar_lea.vmem %s0, %s154
      $region28: #{unet_struc_forward.37} parent=23 // pred_fallthru
        _
    $region24: #{unet_struc_forward.37} parent=5 // pred_fallthru
      _
    %p156 = scmp.le.s32.totalorder 1, %s9
    %p157 = scmp.lt.s32.totalorder %s9, 5
    %p158 = pnand %p156, %p157
    %p159 = pneg %p158
    // Predicated region
    $region29: #{unet_struc_forward.37} parent=5 // pred_check
      _
    $region30: #{unet_struc_forward.37} parent=5 // pred_check_branch
      %161 = sbr.rel (%p158) target = $region32
    $region31: #{unet_struc_forward.37} parent=5 // pred_region
      %s162 = ssub.s32 %s9, 1
      %p163 = scmp.lt.s32.totalorder %s18, 1
      %s164 = scalar_select %p163, %s18, 1
      %p165 = scmp.lt.s32.totalorder %s19, 1
      %s166 = scalar_select %p165, %s19, 1
      %s167 = smul.addr %s166, 30
      %s168 = smul.addr %s164, 60
      %s169 = sadd.s32 %s167, %s168
      %s170 = smul.addr %s169, 4
      %s171 = scalar_lea.vmem %s0, %s170
      %p172 = pneg %p49
      %p173 = pneg %p46
      %p174 = pneg %p70
      %p175 = pneg %p67
      %p176 = pneg %p91
      %p177 = pneg %p88
      %p178 = pneg %p119
      %p179 = pneg %p116
      %s180 = smul.u32 8, %s19
      %p181 = scmp.lt.s32.totalorder %s18, 1
      %s182 = scalar_select %p181, %s18, 1
      %p183 = scmp.lt.s32.totalorder %s180, 15
      %s184 = scalar_select %p183, %s180, 15
      %s185 = smul.addr %s184, 2
      %s186 = smul.addr %s182, 32
      %s187 = sadd.s32 %s185, %s186
      %s188 = smul.addr %s187, 8
      %s189 = scalar_lea.vmem %s3, %s188
      %p190 = scmp.lt.s32.totalorder %s18, 1
      %s191 = scalar_select %p190, %s18, 1
      %p192 = scmp.lt.s32.totalorder %s19, 1
      %s193 = scalar_select %p192, %s19, 1
      %s194 = smul.addr %s193, 30
      %s195 = smul.addr %s191, 60
      %s196 = sadd.s32 %s194, %s195
      %s197 = smul.addr %s196, 4
      %s198 = scalar_lea.vmem %s0, %s197
      %s199 = smul.u32 8, %s19
      %p200 = scmp.lt.s32.totalorder %s18, 1
      %s201 = scalar_select %p200, %s18, 1
      %p202 = scmp.lt.s32.totalorder %s199, 15
      %s203 = scalar_select %p202, %s199, 15
      %s204 = smul.addr %s203, 2
      %s205 = smul.addr %s201, 32
      %s206 = sadd.s32 %s204, %s205
      %s207 = smul.addr %s206, 8
      %s208 = scalar_lea.vmem %s3, %s207
      %s209 = smul.u32 8, %s19
      %v211 = vld [vmem:[%s198] sm:$0xf]
      %v212 = vld [vmem:[%s198 + $0x4] sm:$0xf]
      %v213 = vld [vmem:[%s198 + $0x8] sm:$0x1]
      %v214 = vld [vmem:[%s198 + $0xc] sm:$0xf]
      %v215 = vld [vmem:[%s198 + $0x10] sm:$0xf]
      %v216 = vld [vmem:[%s198 + $0x14] sm:$0x1]
      %v217 = vld [vmem:[%s198 + $0x18] sm:$0xf]
      %v218 = vld [vmem:[%s198 + $0x1c] sm:$0xf]
      %v219 = vld [vmem:[%s198 + $0x20] sm:$0x1]
      %v220 = vld [vmem:[%s198 + $0x24] sm:$0xf]
      %v221 = vld [vmem:[%s198 + $0x28] sm:$0xf]
      %v222 = vld [vmem:[%s198 + $0x2c] sm:$0x1]
      %v223 = vld [vmem:[%s198 + $0x30] sm:$0xf]
      %v224 = vld [vmem:[%s198 + $0x34] sm:$0xf]
      %v225 = vld [vmem:[%s198 + $0x38] sm:$0x1]
      %v226 = vld [vmem:[%s198 + $0x3c] sm:$0xf]
      %v227 = vld [vmem:[%s198 + $0x40] sm:$0xf]
      %v228 = vld [vmem:[%s198 + $0x44] sm:$0x1]
      %v229 = vld [vmem:[%s198 + $0x48] sm:$0xf]
      %v230 = vld [vmem:[%s198 + $0x4c] sm:$0xf]
      %v231 = vld [vmem:[%s198 + $0x50] sm:$0x1]
      %v232 = vld [vmem:[%s198 + $0x54] sm:$0xf]
      %v233 = vld [vmem:[%s198 + $0x58] sm:$0xf]
      %v234 = vld [vmem:[%s198 + $0x5c] sm:$0x1]
      %v235 = vld [vmem:[%s198 + $0x60] sm:$0xf]
      %v236 = vld [vmem:[%s198 + $0x64] sm:$0xf]
      %v237 = vld [vmem:[%s198 + $0x68] sm:$0x1]
      %v238 = vld [vmem:[%s198 + $0x6c] sm:$0xf]
      %v239 = vld [vmem:[%s198 + $0x70] sm:$0xf]
      %v240 = vld [vmem:[%s198 + $0x74] sm:$0x1]
      %v257 = vunpack.c.l.b16 %v211
      %v258 = vunpack.c.l.b16 %v212
      %v259 = vunpack.c.l.b16 %v214
      %v260 = vunpack.c.l.b16 %v215
      %v261 = vunpack.c.l.b16 %v217
      %v262 = vunpack.c.l.b16 %v218
      %v263 = vunpack.c.l.b16 %v220
      %v264 = vunpack.c.l.b16 %v221
      %v265 = vunpack.c.l.b16 %v223
      %v266 = vunpack.c.l.b16 %v224
      %v267 = vunpack.c.l.b16 %v226
      %v268 = vunpack.c.l.b16 %v227
      %v269 = vunpack.c.l.b16 %v229
      %v270 = vunpack.c.l.b16 %v230
      %v271 = vunpack.c.l.b16 %v232
      %v272 = vunpack.c.l.b16 %v233
      %v273 = vpack.c.b16 %v258, %v257
      %v274 = vpack.c.b16 %v260, %v259
      %v275 = vpack.c.b16 %v262, %v261
      %v276 = vpack.c.b16 %v264, %v263
      %v277 = vpack.c.b16 %v266, %v265
      %v278 = vpack.c.b16 %v268, %v267
      %v279 = vpack.c.b16 %v270, %v269
      %v280 = vpack.c.b16 %v272, %v271
      %v289 = vunpack.c.l.b16 %v213
      %v290 = vunpack.c.l.b16 %v216
      %v291 = vunpack.c.l.b16 %v219
      %v292 = vunpack.c.l.b16 %v222
      %v293 = vunpack.c.l.b16 %v225
      %v294 = vunpack.c.l.b16 %v228
      %v295 = vunpack.c.l.b16 %v231
      %v296 = vunpack.c.l.b16 %v234
      %v297 = vpack.c.b16 %v289, %v289
      %v298 = vpack.c.b16 %v290, %v290
      %v299 = vpack.c.b16 %v291, %v291
      %v300 = vpack.c.b16 %v292, %v292
      %v301 = vpack.c.b16 %v293, %v293
      %v302 = vpack.c.b16 %v294, %v294
      %v303 = vpack.c.b16 %v295, %v295
      %v304 = vpack.c.b16 %v296, %v296
      %vm305 = vsmask.f32 7424
      %v307 = vshrl.u32 %v273, 16
      %v309 = vshll.u32 %v273, 16
      %v311 = vrot.slane %v309, 1
      %v312 = vor.u32 %v307, %v311
      %v314 = vshll.u32 %v297, 16
      %v316 = vrot.slane %v314, 1
      %v317 = vsel %vm305, %v312, %v316
      %v319 = vshrl.u32 %v274, 16
      %v321 = vshll.u32 %v274, 16
      %v323 = vrot.slane %v321, 1
      %v324 = vor.u32 %v319, %v323
      %v326 = vshll.u32 %v298, 16
      %v328 = vrot.slane %v326, 1
      %v329 = vsel %vm305, %v324, %v328
      %v331 = vshrl.u32 %v275, 16
      %v333 = vshll.u32 %v275, 16
      %v335 = vrot.slane %v333, 1
      %v336 = vor.u32 %v331, %v335
      %v338 = vshll.u32 %v299, 16
      %v340 = vrot.slane %v338, 1
      %v341 = vsel %vm305, %v336, %v340
      %v343 = vshrl.u32 %v276, 16
      %v345 = vshll.u32 %v276, 16
      %v347 = vrot.slane %v345, 1
      %v348 = vor.u32 %v343, %v347
      %v350 = vshll.u32 %v300, 16
      %v352 = vrot.slane %v350, 1
      %v353 = vsel %vm305, %v348, %v352
      %v355 = vshrl.u32 %v277, 16
      %v357 = vshll.u32 %v277, 16
      %v359 = vrot.slane %v357, 1
      %v360 = vor.u32 %v355, %v359
      %v362 = vshll.u32 %v301, 16
      %v364 = vrot.slane %v362, 1
      %v365 = vsel %vm305, %v360, %v364
      %v367 = vshrl.u32 %v278, 16
      %v369 = vshll.u32 %v278, 16
      %v371 = vrot.slane %v369, 1
      %v372 = vor.u32 %v367, %v371
      %v374 = vshll.u32 %v302, 16
      %v376 = vrot.slane %v374, 1
      %v377 = vsel %vm305, %v372, %v376
      %v379 = vshrl.u32 %v279, 16
      %v381 = vshll.u32 %v279, 16
      %v383 = vrot.slane %v381, 1
      %v384 = vor.u32 %v379, %v383
      %v386 = vshll.u32 %v303, 16
      %v388 = vrot.slane %v386, 1
      %v389 = vsel %vm305, %v384, %v388
      %v391 = vshrl.u32 %v280, 16
      %v393 = vshll.u32 %v280, 16
      %v395 = vrot.slane %v393, 1
      %v396 = vor.u32 %v391, %v395
      %v398 = vshll.u32 %v304, 16
      %v400 = vrot.slane %v398, 1
      %v401 = vsel %vm305, %v396, %v400
      %402 = vrot.lane.b32.xlu0 %v317, 32
      %v403 = vpop.permute.xlu0 %402
      %404 = vrot.lane.b32.xlu0 %v329, 32
      %v405 = vpop.permute.xlu0 %404
      %406 = vrot.lane.b32.xlu0 %v341, 32
      %v407 = vpop.permute.xlu0 %406
      %408 = vrot.lane.b32.xlu0 %v353, 32
      %v409 = vpop.permute.xlu0 %408
      %410 = vrot.lane.b32.xlu0 %v365, 32
      %v411 = vpop.permute.xlu0 %410
      %412 = vrot.lane.b32.xlu0 %v377, 32
      %v413 = vpop.permute.xlu0 %412
      %414 = vrot.lane.b32.xlu0 %v389, 32
      %v415 = vpop.permute.xlu0 %414
      %416 = vrot.lane.b32.xlu0 %v401, 32
      %v417 = vpop.permute.xlu0 %416
      %vm418 = vcmask 1046528
      %v419 = vrot.slane %v273, 1
      %v420 = vrot.slane %v297, 1
      %v421 = vsel %vm418, %v419, %v420
      %v422 = vrot.slane %v274, 1
      %v423 = vrot.slane %v298, 1
      %v424 = vsel %vm418, %v422, %v423
      %v425 = vrot.slane %v275, 1
      %v426 = vrot.slane %v299, 1
      %v427 = vsel %vm418, %v425, %v426
      %v428 = vrot.slane %v276, 1
      %v429 = vrot.slane %v300, 1
      %v430 = vsel %vm418, %v428, %v429
      %v431 = vrot.slane %v277, 1
      %v432 = vrot.slane %v301, 1
      %v433 = vsel %vm418, %v431, %v432
      %v434 = vrot.slane %v278, 1
      %v435 = vrot.slane %v302, 1
      %v436 = vsel %vm418, %v434, %v435
      %v437 = vrot.slane %v279, 1
      %v438 = vrot.slane %v303, 1
      %v439 = vsel %vm418, %v437, %v438
      %v440 = vrot.slane %v280, 1
      %v441 = vrot.slane %v304, 1
      %v442 = vsel %vm418, %v440, %v441
      %443 = vrot.lane.b32.xlu0 %v421, 64
      %v444 = vpop.permute.xlu0 %443
      %445 = vrot.lane.b32.xlu0 %v424, 64
      %v446 = vpop.permute.xlu0 %445
      %447 = vrot.lane.b32.xlu0 %v427, 64
      %v448 = vpop.permute.xlu0 %447
      %449 = vrot.lane.b32.xlu0 %v430, 64
      %v450 = vpop.permute.xlu0 %449
      %451 = vrot.lane.b32.xlu0 %v433, 64
      %v452 = vpop.permute.xlu0 %451
      %453 = vrot.lane.b32.xlu0 %v436, 64
      %v454 = vpop.permute.xlu0 %453
      %455 = vrot.lane.b32.xlu0 %v439, 64
      %v456 = vpop.permute.xlu0 %455
      %457 = vrot.lane.b32.xlu0 %v442, 64
      %v458 = vpop.permute.xlu0 %457
      %v461 = vunpack.c.l.b16 %v235
      %v462 = vunpack.c.l.b16 %v236
      %v463 = vpack.c.b16 %v462, %v461
      %464 = vrot.lane.b32.xlu0 %v274, 96
      %v465 = vpop.permute.xlu0 %464
      %466 = vrot.lane.b32.xlu0 %v275, 96
      %v467 = vpop.permute.xlu0 %466
      %468 = vrot.lane.b32.xlu0 %v276, 96
      %v469 = vpop.permute.xlu0 %468
      %470 = vrot.lane.b32.xlu0 %v277, 96
      %v471 = vpop.permute.xlu0 %470
      %472 = vrot.lane.b32.xlu0 %v278, 96
      %v473 = vpop.permute.xlu0 %472
      %474 = vrot.lane.b32.xlu0 %v279, 96
      %v475 = vpop.permute.xlu0 %474
      %476 = vrot.lane.b32.xlu0 %v280, 96
      %v477 = vpop.permute.xlu0 %476
      %478 = vrot.lane.b32.xlu0 %v463, 96
      %v479 = vpop.permute.xlu0 %478
      %v481 = vunpack.c.l.b16 %v237
      %v482 = vpack.c.b16 %v481, %v481
      %v484 = vshrl.u32 %v463, 16
      %v486 = vshll.u32 %v463, 16
      %v488 = vrot.slane %v486, 1
      %v489 = vor.u32 %v484, %v488
      %v491 = vshll.u32 %v482, 16
      %v493 = vrot.slane %v491, 1
      %v494 = vsel %vm305, %v489, %v493
      %v495 = vrot.slane %v463, 1
      %v496 = vrot.slane %v482, 1
      %v497 = vsel %vm418, %v495, %v496
      %498 = vrot.lane.b32.xlu0 %v424, 32
      %v499 = vpop.permute.xlu0 %498
      %500 = vrot.lane.b32.xlu0 %v427, 32
      %v501 = vpop.permute.xlu0 %500
      %502 = vrot.lane.b32.xlu0 %v430, 32
      %v503 = vpop.permute.xlu0 %502
      %504 = vrot.lane.b32.xlu0 %v433, 32
      %v505 = vpop.permute.xlu0 %504
      %506 = vrot.lane.b32.xlu0 %v436, 32
      %v507 = vpop.permute.xlu0 %506
      %508 = vrot.lane.b32.xlu0 %v439, 32
      %v509 = vpop.permute.xlu0 %508
      %510 = vrot.lane.b32.xlu0 %v442, 32
      %v511 = vpop.permute.xlu0 %510
      %512 = vrot.lane.b32.xlu0 %v497, 32
      %v513 = vpop.permute.xlu0 %512
      %v516 = vunpack.c.l.b16 %v238
      %v517 = vunpack.c.l.b16 %v239
      %v518 = vpack.c.b16 %v517, %v516
      %519 = vrot.lane.b32.xlu0 %v275, 64
      %v520 = vpop.permute.xlu0 %519
      %521 = vrot.lane.b32.xlu0 %v276, 64
      %v522 = vpop.permute.xlu0 %521
      %523 = vrot.lane.b32.xlu0 %v277, 64
      %v524 = vpop.permute.xlu0 %523
      %525 = vrot.lane.b32.xlu0 %v278, 64
      %v526 = vpop.permute.xlu0 %525
      %527 = vrot.lane.b32.xlu0 %v279, 64
      %v528 = vpop.permute.xlu0 %527
      %529 = vrot.lane.b32.xlu0 %v280, 64
      %v530 = vpop.permute.xlu0 %529
      %531 = vrot.lane.b32.xlu0 %v463, 64
      %v532 = vpop.permute.xlu0 %531
      %533 = vrot.lane.b32.xlu0 %v518, 64
      %v534 = vpop.permute.xlu0 %533
      %v536 = vunpack.c.l.b16 %v240
      %v537 = vpack.c.b16 %v536, %v536
      %v539 = vshrl.u32 %v518, 16
      %v541 = vshll.u32 %v518, 16
      %v543 = vrot.slane %v541, 1
      %v544 = vor.u32 %v539, %v543
      %v546 = vshll.u32 %v537, 16
      %v548 = vrot.slane %v546, 1
      %v549 = vsel %vm305, %v544, %v548
      %550 = vrot.lane.b32.xlu0 %v341, 96
      %v551 = vpop.permute.xlu0 %550
      %552 = vrot.lane.b32.xlu0 %v353, 96
      %v553 = vpop.permute.xlu0 %552
      %554 = vrot.lane.b32.xlu0 %v365, 96
      %v555 = vpop.permute.xlu0 %554
      %556 = vrot.lane.b32.xlu0 %v377, 96
      %v557 = vpop.permute.xlu0 %556
      %558 = vrot.lane.b32.xlu0 %v389, 96
      %v559 = vpop.permute.xlu0 %558
      %560 = vrot.lane.b32.xlu0 %v401, 96
      %v561 = vpop.permute.xlu0 %560
      %562 = vrot.lane.b32.xlu0 %v494, 96
      %v563 = vpop.permute.xlu0 %562
      %564 = vrot.lane.b32.xlu0 %v549, 96
      %v565 = vpop.permute.xlu0 %564
      %v566 = vrot.slane %v518, 1
      %v567 = vrot.slane %v537, 1
      %v568 = vsel %vm418, %v566, %v567
      %vm569 = vcmask 261120
      %v571 = vsel %vm569, %v273, %v403
      %v573 = vsel %vm569, %v274, %v405
      %v575 = vsel %vm569, %v275, %v407
      %v577 = vsel %vm569, %v276, %v409
      %v579 = vsel %vm569, %v277, %v411
      %v581 = vsel %vm569, %v278, %v413
      %v583 = vsel %vm569, %v279, %v415
      %v585 = vsel %vm569, %v280, %v417
      %vm586 = vcmask 523264
      %v588 = vsel %vm586, %v571, %v444
      %v590 = vsel %vm586, %v573, %v446
      %v592 = vsel %vm586, %v575, %v448
      %v594 = vsel %vm586, %v577, %v450
      %v596 = vsel %vm586, %v579, %v452
      %v598 = vsel %vm586, %v581, %v454
      %v600 = vsel %vm586, %v583, %v456
      %v602 = vsel %vm586, %v585, %v458
      %vm603 = vcmask 785408
      %v605 = vsel %vm603, %v588, %v465
      %v608 = vsel %vm603, %v590, %v467
      %v611 = vsel %vm603, %v592, %v469
      %v614 = vsel %vm603, %v594, %v471
      %v617 = vsel %vm603, %v596, %v473
      %v620 = vsel %vm603, %v598, %v475
      %v623 = vsel %vm603, %v600, %v477
      %v626 = vsel %vm603, %v602, %v479
      %v630 = vsel %vm569, %v329, %v499
      %v633 = vsel %vm569, %v341, %v501
      %v636 = vsel %vm569, %v353, %v503
      %v639 = vsel %vm569, %v365, %v505
      %v642 = vsel %vm569, %v377, %v507
      %v645 = vsel %vm569, %v389, %v509
      %v648 = vsel %vm569, %v401, %v511
      %v651 = vsel %vm569, %v494, %v513
      %v653 = vsel %vm586, %v630, %v520
      %v655 = vsel %vm586, %v633, %v522
      %v657 = vsel %vm586, %v636, %v524
      %v659 = vsel %vm586, %v639, %v526
      %v661 = vsel %vm586, %v642, %v528
      %v663 = vsel %vm586, %v645, %v530
      %v665 = vsel %vm586, %v648, %v532
      %v667 = vsel %vm586, %v651, %v534
      %v669 = vsel %vm603, %v653, %v551
      %v672 = vsel %vm603, %v655, %v553
      %v675 = vsel %vm603, %v657, %v555
      %v678 = vsel %vm603, %v659, %v557
      %v681 = vsel %vm603, %v661, %v559
      %v684 = vsel %vm603, %v663, %v561
      %v687 = vsel %vm603, %v665, %v563
      %v690 = vsel %vm603, %v667, %v565
      %v692 = vld [vmem:[%s1] sm:$0xf]
      %v693 = vld [vmem:[%s1 + $0x4] sm:$0xf]
      %v694 = vld [vmem:[%s1 + $0x8] sm:$0xf]
      %v695 = vld [vmem:[%s1 + $0xc] sm:$0xf]
      %v696 = vld [vmem:[%s1 + $0x10] sm:$0xf]
      %v697 = vld [vmem:[%s1 + $0x14] sm:$0xf]
      %v698 = vld [vmem:[%s1 + $0x18] sm:$0xf]
      %v699 = vld [vmem:[%s1 + $0x1c] sm:$0xf]
      %v700 = vld [vmem:[%s1 + $0x20] sm:$0xf]
      %v701 = vld [vmem:[%s1 + $0x24] sm:$0xf]
      %v702 = vld [vmem:[%s1 + $0x28] sm:$0xf]
      %v703 = vld [vmem:[%s1 + $0x2c] sm:$0xf]
      %v704 = vld [vmem:[%s1 + $0x30] sm:$0xf]
      %v705 = vld [vmem:[%s1 + $0x34] sm:$0xf]
      %v706 = vld [vmem:[%s1 + $0x38] sm:$0xf]
      %v707 = vld [vmem:[%s1 + $0x3c] sm:$0xf]
      %v708 = vld [vmem:[%s1 + $0x40] sm:$0xf]
      %v709 = vld [vmem:[%s1 + $0x44] sm:$0xf]
      %v710 = vld [vmem:[%s1 + $0x48] sm:$0xf]
      %v711 = vld [vmem:[%s1 + $0x4c] sm:$0xf]
      %v712 = vld [vmem:[%s1 + $0x50] sm:$0xf]
      %v713 = vld [vmem:[%s1 + $0x54] sm:$0xf]
      %v714 = vld [vmem:[%s1 + $0x58] sm:$0xf]
      %v715 = vld [vmem:[%s1 + $0x5c] sm:$0xf]
      %v716 = vld [vmem:[%s1 + $0x60] sm:$0xf]
      %v717 = vld [vmem:[%s1 + $0x64] sm:$0xf]
      %v718 = vld [vmem:[%s1 + $0x68] sm:$0xf]
      %v719 = vld [vmem:[%s1 + $0x6c] sm:$0xf]
      %v720 = vld [vmem:[%s1 + $0x70] sm:$0xf]
      %v721 = vld [vmem:[%s1 + $0x74] sm:$0xf]
      %v722 = vld [vmem:[%s1 + $0x78] sm:$0xf]
      %v723 = vld [vmem:[%s1 + $0x7c] sm:$0xf]
      %v724 = vld [vmem:[%s1 + $0x80] sm:$0xf]
      %v725 = vld [vmem:[%s1 + $0x84] sm:$0xf]
      %v726 = vld [vmem:[%s1 + $0x88] sm:$0xf]
      %v727 = vld [vmem:[%s1 + $0x8c] sm:$0xf]
      %v728 = vld [vmem:[%s2] sm:$0x1]
      %v730 = vlaneseq
      %v731 = vshrl.u32 %v730, 7
      %v732 = vsub.s32 0, %v731
      %v733 = vrot.slane %v728, %v732
      %v771 = vunpack.c.l.b16 %v692
      %v772 = vunpack.c.l.b16 %v693
      %v773 = vunpack.c.l.b16 %v694
      %v774 = vunpack.c.l.b16 %v695
      %v775 = vunpack.c.l.b16 %v696
      %v776 = vunpack.c.l.b16 %v697
      %v777 = vunpack.c.l.b16 %v698
      %v778 = vunpack.c.l.b16 %v699
      %v779 = vunpack.c.l.b16 %v700
      %v780 = vunpack.c.l.b16 %v701
      %v781 = vunpack.c.l.b16 %v702
      %v782 = vunpack.c.l.b16 %v703
      %v783 = vunpack.c.l.b16 %v704
      %v784 = vunpack.c.l.b16 %v705
      %v785 = vunpack.c.l.b16 %v706
      %v786 = vunpack.c.l.b16 %v707
      %v787 = vunpack.c.l.b16 %v708
      %v788 = vunpack.c.l.b16 %v709
      %v789 = vunpack.c.l.b16 %v710
      %v790 = vunpack.c.l.b16 %v711
      %v791 = vunpack.c.l.b16 %v712
      %v792 = vunpack.c.l.b16 %v713
      %v793 = vunpack.c.l.b16 %v714
      %v794 = vunpack.c.l.b16 %v715
      %v795 = vunpack.c.l.b16 %v716
      %v796 = vunpack.c.l.b16 %v717
      %v797 = vunpack.c.l.b16 %v718
      %v798 = vunpack.c.l.b16 %v719
      %v799 = vunpack.c.l.b16 %v720
      %v800 = vunpack.c.l.b16 %v721
      %v801 = vunpack.c.l.b16 %v722
      %v802 = vunpack.c.l.b16 %v723
      %v803 = vunpack.c.l.b16 %v724
      %v804 = vunpack.c.l.b16 %v725
      %v805 = vunpack.c.l.b16 %v726
      %v806 = vunpack.c.l.b16 %v727
      %v807 = vpack.c.b16 %v772, %v771
      %v808 = vpack.c.b16 %v774, %v773
      %v809 = vpack.c.b16 %v776, %v775
      %v810 = vpack.c.b16 %v778, %v777
      %v811 = vpack.c.b16 %v780, %v779
      %v812 = vpack.c.b16 %v782, %v781
      %v813 = vpack.c.b16 %v784, %v783
      %v814 = vpack.c.b16 %v786, %v785
      %v815 = vpack.c.b16 %v788, %v787
      %v816 = vpack.c.b16 %v790, %v789
      %v817 = vpack.c.b16 %v792, %v791
      %v818 = vpack.c.b16 %v794, %v793
      %v819 = vpack.c.b16 %v796, %v795
      %v820 = vpack.c.b16 %v798, %v797
      %v821 = vpack.c.b16 %v800, %v799
      %v822 = vpack.c.b16 %v802, %v801
      %v823 = vpack.c.b16 %v804, %v803
      %v824 = vpack.c.b16 %v806, %v805
      %v844 = vsel %vm569, %v427, 0
      %v847 = vsel %vm569, %v430, 0
      %v850 = vsel %vm569, %v433, 0
      %v853 = vsel %vm569, %v436, 0
      %v856 = vsel %vm569, %v439, 0
      %v859 = vsel %vm569, %v442, 0
      %v862 = vsel %vm569, %v497, 0
      %v865 = vsel %vm569, %v568, 0
      %867 = vmatprep.subr.bf16.mxu0 0
      %868 = vmatpush1.bf16.msra.mxu0 %v807
      %869 = vmatprep.subr.bf16.mxu0 0
      %870 = vmatpush1.bf16.msra.mxu0 %v808
      %871 = vmatprep.subr.bf16.mxu0 0
      %872 = vmatpush1.bf16.msra.mxu0 %v809
      %873 = vmatprep.subr.bf16.mxu0 0
      %874 = vmatpush1.bf16.msra.mxu0 %v810
      %875 = vmatprep.subr.bf16.mxu0 0
      %876 = vmatpush1.bf16.msra.mxu0 %v811
      %877 = vmatprep.subr.bf16.mxu0 0
      %878 = vmatpush1.bf16.msra.mxu0 %v812
      %879 = vmatprep.subr.bf16.mxu0 0
      %880 = vmatpush1.bf16.msra.mxu0 %v813
      %881 = vmatprep.subr.bf16.mxu0 0
      %882 = vmatpush1.bf16.msra.mxu0 %v814
      %883 = vmatprep.subr.bf16.mxu0 0
      %884 = vmatpush1.bf16.msra.mxu0 %v815
      %885 = vmatprep.subr.bf16.mxu0 0
      %886 = vmatpush1.bf16.msra.mxu0 %v816
      %887 = vmatprep.subr.bf16.mxu0 0
      %888 = vmatpush1.bf16.msra.mxu0 %v817
      %889 = vmatprep.subr.bf16.mxu0 0
      %890 = vmatpush1.bf16.msra.mxu0 %v818
      %891 = vmatprep.subr.bf16.mxu0 0
      %892 = vmatpush1.bf16.msra.mxu0 %v819
      %893 = vmatprep.subr.bf16.mxu0 0
      %894 = vmatpush1.bf16.msra.mxu0 %v820
      %895 = vmatprep.subr.bf16.mxu0 0
      %896 = vmatpush1.bf16.msra.mxu0 %v821
      %897 = vmatprep.subr.bf16.mxu0 0
      %898 = vmatpush1.bf16.msra.mxu0 %v822
      %899 = vmatprep.mubr.bf16.mxu0 %v669
      %900 = vmatmul.mubr.bf16.gmra.mrb[0].mxu0 %v605
      %v901 = vpop.f32.mrb[0].mxu0
      %v902 = vadd.f32 %v733, %v901
      %v903 = vpop.f32.mrb[0].mxu0
      %v904 = vpop.f32.mrb[0].mxu0
      %v905 = vadd.f32 %v733, %v904
      %v906 = vpop.f32.mrb[0].mxu0
      %907 = vmatprep.mubr.bf16.mxu0 %v672
      %908 = vmatmul.mubr.bf16.gmra.mrb[0].mxu0 %v608
      %v909 = vpop.f32.mrb[0].mxu0
      %v910 = vadd.f32 %v733, %v909
      %v911 = vpop.f32.mrb[0].mxu0
      %v912 = vpop.f32.mrb[0].mxu0
      %v913 = vadd.f32 %v733, %v912
      %v914 = vpop.f32.mrb[0].mxu0
      %915 = vmatprep.mubr.bf16.mxu0 %v675
      %916 = vmatmul.mubr.bf16.gmra.mrb[0].mxu0 %v611
      %v917 = vpop.f32.mrb[0].mxu0
      %v918 = vadd.f32 %v733, %v917
      %v919 = vpop.f32.mrb[0].mxu0
      %v920 = vpop.f32.mrb[0].mxu0
      %v921 = vadd.f32 %v733, %v920
      %v922 = vpop.f32.mrb[0].mxu0
      %923 = vmatprep.mubr.bf16.mxu0 %v678
      %924 = vmatmul.mubr.bf16.gmra.mrb[0].mxu0 %v614
      %v925 = vpop.f32.mrb[0].mxu0
      %v926 = vadd.f32 %v733, %v925
      %v927 = vpop.f32.mrb[0].mxu0
      %v928 = vpop.f32.mrb[0].mxu0
      %v929 = vadd.f32 %v733, %v928
      %v930 = vpop.f32.mrb[0].mxu0
      %931 = vmatprep.mubr.bf16.mxu0 %v681
      %932 = vmatmul.mubr.bf16.gmra.mrb[0].mxu0 %v617
      %v933 = vpop.f32.mrb[0].mxu0
      %v934 = vadd.f32 %v733, %v933
      %v935 = vpop.f32.mrb[0].mxu0
      %v936 = vpop.f32.mrb[0].mxu0
      %v937 = vadd.f32 %v733, %v936
      %v938 = vpop.f32.mrb[0].mxu0
      %939 = vmatprep.mubr.bf16.mxu0 %v684
      %940 = vmatmul.mubr.bf16.gmra.mrb[0].mxu0 %v620
      %v941 = vpop.f32.mrb[0].mxu0
      %v942 = vadd.f32 %v733, %v941
      %v943 = vpop.f32.mrb[0].mxu0
      %v944 = vpop.f32.mrb[0].mxu0
      %v945 = vadd.f32 %v733, %v944
      %v946 = vpop.f32.mrb[0].mxu0
      %947 = vmatprep.mubr.bf16.mxu0 %v687
      %948 = vmatmul.mubr.bf16.gmra.mrb[0].mxu0 %v623
      %v949 = vpop.f32.mrb[0].mxu0
      %v950 = vadd.f32 %v733, %v949
      %v951 = vpop.f32.mrb[0].mxu0
      %v952 = vpop.f32.mrb[0].mxu0
      %v953 = vadd.f32 %v733, %v952
      %v954 = vpop.f32.mrb[0].mxu0
      %955 = vmatprep.mubr.bf16.mxu0 %v690
      %956 = vmatmul.mubr.bf16.gmra.mrb[0].mxu0 %v626
      %v957 = vpop.f32.mrb[0].mxu0
      %v958 = vadd.f32 %v733, %v957
      %v959 = vpop.f32.mrb[0].mxu0
      %v960 = vpop.f32.mrb[0].mxu0
      %v961 = vadd.f32 %v733, %v960
      %v962 = vpop.f32.mrb[0].mxu0
      %963 = vdwg.mxu0
      %964 = vmatprep.subr.bf16.mxu0 0
      %965 = vmatpush1.bf16.msra.mxu0 %v823
      %966 = vmatprep.subr.bf16.mxu0 0
      %967 = vmatpush1.bf16.msra.mxu0 %v824
      %968 = vmatprep.subr.bf16.mxu0 0
      %969 = vmatpush1.bf16.msra.mxu0 0
      %970 = vmatprep.subr.bf16.mxu0 0
      %971 = vmatpush1.bf16.msra.mxu0 0
      %972 = vmatprep.subr.bf16.mxu0 0
      %973 = vmatpush1.bf16.msra.mxu0 0
      %974 = vmatprep.subr.bf16.mxu0 0
      %975 = vmatpush1.bf16.msra.mxu0 0
      %976 = vmatprep.subr.bf16.mxu0 0
      %977 = vmatpush1.bf16.msra.mxu0 0
      %978 = vmatprep.subr.bf16.mxu0 0
      %979 = vmatpush1.bf16.msra.mxu0 0
      %980 = vmatprep.subr.bf16.mxu0 0
      %981 = vmatpush1.bf16.msra.mxu0 0
      %982 = vmatprep.subr.bf16.mxu0 0
      %983 = vmatpush1.bf16.msra.mxu0 0
      %984 = vmatprep.subr.bf16.mxu0 0
      %985 = vmatpush1.bf16.msra.mxu0 0
      %986 = vmatprep.subr.bf16.mxu0 0
      %987 = vmatpush1.bf16.msra.mxu0 0
      %988 = vmatprep.subr.bf16.mxu0 0
      %989 = vmatpush1.bf16.msra.mxu0 0
      %990 = vmatprep.subr.bf16.mxu0 0
      %991 = vmatpush1.bf16.msra.mxu0 0
      %992 = vmatprep.subr.bf16.mxu0 0
      %993 = vmatpush1.bf16.msra.mxu0 0
      %994 = vmatprep.subr.bf16.mxu0 0
      %995 = vmatpush1.bf16.msra.mxu0 0
      %996 = vmatprep.mubr.bf16.mxu0 0
      %997 = vmatmul.mubr.bf16.gmra.mrb[0].mxu0 %v844
      %v998 = vpop.f32.mrb[0].mxu0
      %v999 = vadd.f32 %v902, %v998
      %v1000 = vpop.f32.mrb[0].mxu0
      %v1001 = vpop.f32.mrb[0].mxu0
      %v1002 = vadd.f32 %v905, %v1001
      %v1003 = vpop.f32.mrb[0].mxu0
      %1004 = vmatprep.mubr.bf16.mxu0 0
      %1005 = vmatmul.mubr.bf16.gmra.mrb[0].mxu0 %v847
      %v1006 = vpop.f32.mrb[0].mxu0
      %v1007 = vadd.f32 %v910, %v1006
      %v1008 = vpop.f32.mrb[0].mxu0
      %v1009 = vpop.f32.mrb[0].mxu0
      %v1010 = vadd.f32 %v913, %v1009
      %v1011 = vpop.f32.mrb[0].mxu0
      %1012 = vmatprep.mubr.bf16.mxu0 0
      %1013 = vmatmul.mubr.bf16.gmra.mrb[0].mxu0 %v850
      %v1014 = vpop.f32.mrb[0].mxu0
      %v1015 = vadd.f32 %v918, %v1014
      %v1016 = vpop.f32.mrb[0].mxu0
      %v1017 = vpop.f32.mrb[0].mxu0
      %v1018 = vadd.f32 %v921, %v1017
      %v1019 = vpop.f32.mrb[0].mxu0
      %1020 = vmatprep.mubr.bf16.mxu0 0
      %1021 = vmatmul.mubr.bf16.gmra.mrb[0].mxu0 %v853
      %v1022 = vpop.f32.mrb[0].mxu0
      %v1023 = vadd.f32 %v926, %v1022
      %v1024 = vpop.f32.mrb[0].mxu0
      %v1025 = vpop.f32.mrb[0].mxu0
      %v1026 = vadd.f32 %v929, %v1025
      %v1027 = vpop.f32.mrb[0].mxu0
      %1028 = vmatprep.mubr.bf16.mxu0 0
      %1029 = vmatmul.mubr.bf16.gmra.mrb[0].mxu0 %v856
      %v1030 = vpop.f32.mrb[0].mxu0
      %v1031 = vadd.f32 %v934, %v1030
      %v1032 = vpop.f32.mrb[0].mxu0
      %v1033 = vpop.f32.mrb[0].mxu0
      %v1034 = vadd.f32 %v937, %v1033
      %v1035 = vpop.f32.mrb[0].mxu0
      %1036 = vmatprep.mubr.bf16.mxu0 0
      %1037 = vmatmul.mubr.bf16.gmra.mrb[0].mxu0 %v859
      %v1038 = vpop.f32.mrb[0].mxu0
      %v1039 = vadd.f32 %v942, %v1038
      %v1040 = vpop.f32.mrb[0].mxu0
      %v1041 = vpop.f32.mrb[0].mxu0
      %v1042 = vadd.f32 %v945, %v1041
      %v1043 = vpop.f32.mrb[0].mxu0
      %1044 = vmatprep.mubr.bf16.mxu0 0
      %1045 = vmatmul.mubr.bf16.gmra.mrb[0].mxu0 %v862
      %v1046 = vpop.f32.mrb[0].mxu0
      %v1047 = vadd.f32 %v950, %v1046
      %v1048 = vpop.f32.mrb[0].mxu0
      %v1049 = vpop.f32.mrb[0].mxu0
      %v1050 = vadd.f32 %v953, %v1049
      %v1051 = vpop.f32.mrb[0].mxu0
      %1052 = vmatprep.mubr.bf16.mxu0 0
      %1053 = vmatmul.mubr.bf16.gmra.mrb[0].mxu0 %v865
      %v1054 = vpop.f32.mrb[0].mxu0
      %v1055 = vadd.f32 %v958, %v1054
      %v1056 = vpop.f32.mrb[0].mxu0
      %v1057 = vpop.f32.mrb[0].mxu0
      %v1058 = vadd.f32 %v961, %v1057
      %v1059 = vpop.f32.mrb[0].mxu0
      %1060 = vdwg.mxu0
      %v1061 = vxor.u32 %v999, 2147483648
      %v1062 = vxor.u32 %v1002, 2147483648
      %v1063 = vxor.u32 %v1007, 2147483648
      %v1064 = vxor.u32 %v1010, 2147483648
      %v1065 = vxor.u32 %v1015, 2147483648
      %v1066 = vxor.u32 %v1018, 2147483648
      %v1067 = vxor.u32 %v1023, 2147483648
      %v1068 = vxor.u32 %v1026, 2147483648
      %v1069 = vxor.u32 %v1031, 2147483648
      %v1070 = vxor.u32 %v1034, 2147483648
      %v1071 = vxor.u32 %v1039, 2147483648
      %v1072 = vxor.u32 %v1042, 2147483648
      %v1073 = vxor.u32 %v1047, 2147483648
      %v1074 = vxor.u32 %v1050, 2147483648
      %v1075 = vxor.u32 %v1055, 2147483648
      %v1076 = vxor.u32 %v1058, 2147483648
      %v1077 = vmul.f32 %v1061, 1.442695
      %v1078 = vpow.pop %v1077
      %v1079 = vmul.f32 %v1062, 1.442695
      %v1080 = vpow.pop %v1079
      %v1081 = vmul.f32 %v1063, 1.442695
      %v1082 = vpow.pop %v1081
      %v1083 = vmul.f32 %v1064, 1.442695
      %v1084 = vpow.pop %v1083
      %v1085 = vmul.f32 %v1065, 1.442695
      %v1086 = vpow.pop %v1085
      %v1087 = vmul.f32 %v1066, 1.442695
      %v1088 = vpow.pop %v1087
      %v1089 = vmul.f32 %v1067, 1.442695
      %v1090 = vpow.pop %v1089
      %v1091 = vmul.f32 %v1068, 1.442695
      %v1092 = vpow.pop %v1091
      %v1093 = vmul.f32 %v1069, 1.442695
      %v1094 = vpow.pop %v1093
      %v1095 = vmul.f32 %v1070, 1.442695
      %v1096 = vpow.pop %v1095
      %v1097 = vmul.f32 %v1071, 1.442695
      %v1098 = vpow.pop %v1097
      %v1099 = vmul.f32 %v1072, 1.442695
      %v1100 = vpow.pop %v1099
      %v1101 = vmul.f32 %v1073, 1.442695
      %v1102 = vpow.pop %v1101
      %v1103 = vmul.f32 %v1074, 1.442695
      %v1104 = vpow.pop %v1103
      %v1105 = vmul.f32 %v1075, 1.442695
      %v1106 = vpow.pop %v1105
      %v1107 = vmul.f32 %v1076, 1.442695
      %v1108 = vpow.pop %v1107
      %v1109 = vadd.f32 %v1078, 1.0
      %v1110 = vadd.f32 %v1080, 1.0
      %v1111 = vadd.f32 %v1082, 1.0
      %v1112 = vadd.f32 %v1084, 1.0
      %v1113 = vadd.f32 %v1086, 1.0
      %v1114 = vadd.f32 %v1088, 1.0
      %v1115 = vadd.f32 %v1090, 1.0
      %v1116 = vadd.f32 %v1092, 1.0
      %v1117 = vadd.f32 %v1094, 1.0
      %v1118 = vadd.f32 %v1096, 1.0
      %v1119 = vadd.f32 %v1098, 1.0
      %v1120 = vadd.f32 %v1100, 1.0
      %v1121 = vadd.f32 %v1102, 1.0
      %v1122 = vadd.f32 %v1104, 1.0
      %v1123 = vadd.f32 %v1106, 1.0
      %v1124 = vadd.f32 %v1108, 1.0
      %v1125 = vrcp.pop %v1109
      %v1126 = vmul.f32 1.0, %v1125
      %v1127 = vrcp.pop %v1110
      %v1128 = vmul.f32 1.0, %v1127
      %v1129 = vrcp.pop %v1111
      %v1130 = vmul.f32 1.0, %v1129
      %v1131 = vrcp.pop %v1112
      %v1132 = vmul.f32 1.0, %v1131
      %v1133 = vrcp.pop %v1113
      %v1134 = vmul.f32 1.0, %v1133
      %v1135 = vrcp.pop %v1114
      %v1136 = vmul.f32 1.0, %v1135
      %v1137 = vrcp.pop %v1115
      %v1138 = vmul.f32 1.0, %v1137
      %v1139 = vrcp.pop %v1116
      %v1140 = vmul.f32 1.0, %v1139
      %v1141 = vrcp.pop %v1117
      %v1142 = vmul.f32 1.0, %v1141
      %v1143 = vrcp.pop %v1118
      %v1144 = vmul.f32 1.0, %v1143
      %v1145 = vrcp.pop %v1119
      %v1146 = vmul.f32 1.0, %v1145
      %v1147 = vrcp.pop %v1120
      %v1148 = vmul.f32 1.0, %v1147
      %v1149 = vrcp.pop %v1121
      %v1150 = vmul.f32 1.0, %v1149
      %v1151 = vrcp.pop %v1122
      %v1152 = vmul.f32 1.0, %v1151
      %v1153 = vrcp.pop %v1123
      %v1154 = vmul.f32 1.0, %v1153
      %v1155 = vrcp.pop %v1124
      %v1156 = vmul.f32 1.0, %v1155
      %1157 = vst [vmem:[%s208] sm:$0xff] %v1126
      %1158 = vst [vmem:[%s208 + $0x8] sm:$0xff] %v1128
      %1159 = vst [vmem:[%s208 + $0x10] sm:$0xff] %v1130
      %1160 = vst [vmem:[%s208 + $0x18] sm:$0xff] %v1132
      %1161 = vst [vmem:[%s208 + $0x20] sm:$0xff] %v1134
      %1162 = vst [vmem:[%s208 + $0x28] sm:$0xff] %v1136
      %1163 = vst [vmem:[%s208 + $0x30] sm:$0xff] %v1138
      %1164 = vst [vmem:[%s208 + $0x38] sm:$0xff] %v1140
      %1165 = vst [vmem:[%s208 + $0x40] sm:$0xff] %v1142
      %1166 = vst [vmem:[%s208 + $0x48] sm:$0xff] %v1144
      %1167 = vst [vmem:[%s208 + $0x50] sm:$0xff] %v1146
      %1168 = vst [vmem:[%s208 + $0x58] sm:$0xff] %v1148
      %1169 = vst [vmem:[%s208 + $0x60] sm:$0xff] %v1150
      %1170 = vst [vmem:[%s208 + $0x68] sm:$0xff] %v1152
      %1171 = vst [vmem:[%s208 + $0x70] sm:$0xff] %v1154
      %1172 = vst [vmem:[%s208 + $0x78] sm:$0xff] %v1156
      %s1173 = smul.u32 8, %s19
      %p1174 = scmp.lt.s32.totalorder %s18, 1
      %s1175 = scalar_select %p1174, %s18, 1
      %p1176 = scmp.lt.s32.totalorder %s1173, 15
      %s1177 = scalar_select %p1176, %s1173, 15
      %s1178 = smul.addr %s1177, 2
      %s1179 = smul.addr %s1175, 32
      %s1180 = sadd.s32 %s1178, %s1179
      %s1181 = smul.addr %s1180, 8
      %s1182 = scalar_lea.vmem %s3, %s1181
      // Predicated region
      $region33: #{unet_struc_forward.37} parent=31 // pred_check
        %p1183 = pneg %p116
      $region34: #{unet_struc_forward.37} parent=31 // pred_check_branch
        %1185 = sbr.rel (%p1183) target = $region36
      $region35: #{unet_struc_forward.37} parent=31 // pred_region
        %s1186 = smul.u32 8, %s19
      $region36: #{unet_struc_forward.37} parent=31 // pred_fallthru
        _
    $region32: #{unet_struc_forward.37} parent=5 // pred_fallthru
      _
    %p1187 = scmp.le.s32.totalorder 2, %s9
    // Predicated region
    $region37: #{unet_struc_forward.37} parent=5 // pred_check
      %p1188 = pneg %p1187
    $region38: #{unet_struc_forward.37} parent=5 // pred_check_branch
      %1190 = sbr.rel (%p1188) target = $region40
    $region39: #{unet_struc_forward.37} parent=5 // pred_region
      %s1191 = ssub.s32 %s9, 2
      // Predicated region
      $region41: #{unet_struc_forward.37} parent=39 // pred_check
        %p1192 = pneg %p122
      $region42: #{unet_struc_forward.37} parent=39 // pred_check_branch
        %1194 = sbr.rel (%p1192) target = $region44
      $region43: #{unet_struc_forward.37} parent=39 // pred_region
        %s1195 = smul.u32 8, %s21
        %p1196 = scmp.lt.s32.totalorder %s20, 1
        %s1197 = scalar_select %p1196, %s20, 1
        %p1198 = scmp.lt.s32.totalorder %s1195, 15
        %s1199 = scalar_select %p1198, %s1195, 15
        %s1200 = smul.addr %s1199, 2
        %s1201 = smul.addr %s1197, 32
        %s1202 = sadd.s32 %s1200, %s1201
        %s1203 = smul.addr %s1202, 8
        %s1204 = scalar_lea.vmem %s3, %s1203
      $region44: #{unet_struc_forward.37} parent=39 // pred_fallthru
        _
    $region40: #{unet_struc_forward.37} parent=5 // pred_fallthru
      _
  $region6: #{unet_struc_forward.37} parent=0 // loop_footer
    %s13 = sadd.s32 1, %s9
  $region7: #{unet_struc_forward.37} parent=0 // loop_footer_branch
    %8 = sbr.rel target = $region3
  $region8: #{unet_struc_forward.37} parent=0 // loop_exit
    _

// kernel: unet_struc_forward.29
$region0: #{unet_struc_forward.29}
  #allocation0 [shape = 'u32[]', space=smem, size = 0x4, offset = 0x4, fixed_abs, tag = 'smem constant byte address 0x4 - core index']
  #allocation1 [shape = 'u32[144,128]{1,0:T(1,128)}', space=vmem, size = 0x12000, scoped, tag = 'internal scratch']
  %s0 = inlined_call_operand.vmem [shape: bf16[2,2,10,18,32], index: 0, kind: input, shape index: {}]
  %s1 = inlined_call_operand.vmem [shape: bf16[2,2,10,18,32], index: 1, kind: input, shape index: {}]
  %s2 = inlined_call_operand.vmem [shape: bf16[576,32], index: 2, kind: input, shape index: {}]
  %s3 = inlined_call_operand.vmem [shape: f32[2,16,16,32], index: 3, kind: output, shape index: {0}]
  %s4 = inlined_call_operand.vmem [shape: f32[2,2,2,32], index: 4, kind: output, shape index: {1}]
  %5 = xla_tuple %s3, %s4
  %s6 = sld [smem:[#allocation0]]
  $region53: #{unet_struc_forward.29} parent=0
    _
  %s8 = ssub.s32 1, %s6
  %s9 = scalar_select 0, %s8, %s6
  loop: start=0, step=1, limit=6
  $region2: #{unet_struc_forward.29} parent=0 // loop_pre_header
    _
  $region3: #{unet_struc_forward.29} parent=0 // loop_header
    %s11 = sphi 0, %s15
    %p12 = scmp.ge.s32.totalorder %s11, 6
    %s18 = sphi 0, %s30
    %s19 = sphi 0, %s26
    %s20 = sphi 0, %s18
    %s21 = sphi 0, %s19
    %s22 = sphi 0, %s20
    %s23 = sphi 0, %s21
    %s35 = sphi 0, %s37
    %s38 = sphi 0, %s35
    %s39 = sphi 0, %s38
    %s55 = sphi 0, %s39
    %s63 = sphi 0, %s65
    %s66 = sphi 0, %s63
    %s67 = sphi 0, %s66
    %s83 = sphi 0, %s67
    %s87 = sphi 0, %s87
    %s89 = sphi 0, %s87
    %s90 = sphi 0, %s89
    %s104 = sphi 0, %s90
    %s112 = sphi 0, %s114
    %s115 = sphi 0, %s112
    %s116 = sphi 0, %s115
    %s132 = sphi 0, %s116
    %s140 = sphi 0, %s142
    %s143 = sphi 0, %s140
    %s144 = sphi 0, %s143
    %s160 = sphi 0, %s144
  $region4: #{unet_struc_forward.29} parent=0 // loop_header_branch
    %14 = sbr.rel (%p12) target = $region8
  $region5: #{unet_struc_forward.29} parent=0 // loop_body
    %s16 = ssub.s32 %s11, 1
    %s17 = ssub.s32 %s11, 2
    %s24 = sadd.s32 1, %s19
    %p25 = scmp.ge.s32.totalorder %s24, 2
    %s26 = scalar_select %p25, 0, %s24
    %s27 = sadd.s32 1, %s18
    %s28 = scalar_select %p25, %s27, %s18
    %p29 = scmp.ge.s32.totalorder %s28, 2
    %s30 = scalar_select %p29, 0, %s28
    %s31 = ssub.s32 %s18, %s30
    %s32 = ssub.s32 %s19, %s26
    %s33 = sor.u32 %s31, %s32
    %p34 = scmp.eq.s32.totalorder %s33, 0
    %s36 = sadd.s32 %s35, 1
    %s37 = scalar_select %p34, %s35, %s36
    %p40 = pneg %p34
    %p41 = scmp.eq.s32.totalorder %s11, 3
    %p42 = por %p40, %p41
    %p43 = scmp.ne.s32.totalorder %s35, %s38
    %p44 = scmp.eq.s32.totalorder %s11, 0
    %p45 = por %p43, %p44
    %p46 = scmp.ne.s32.totalorder %s35, %s38
    %p47 = scmp.eq.s32.totalorder %s16, 3
    %p48 = por %p46, %p47
    %p49 = scmp.ne.s32.totalorder %s38, %s39
    %p50 = scmp.eq.s32.totalorder %s16, 0
    %p51 = por %p49, %p50
    %p52 = scmp.ne.s32.totalorder %s38, %s39
    %p53 = scmp.eq.s32.totalorder %s17, 3
    %p54 = por %p52, %p53
    %p56 = scmp.ne.s32.totalorder %s39, %s55
    %p57 = scmp.eq.s32.totalorder %s17, 0
    %p58 = por %p56, %p57
    %s59 = ssub.s32 %s18, %s30
    %s60 = ssub.s32 %s19, %s26
    %s61 = sor.u32 %s59, %s60
    %p62 = scmp.eq.s32.totalorder %s61, 0
    %s64 = sadd.s32 %s63, 1
    %s65 = scalar_select %p62, %s63, %s64
    %p68 = pneg %p62
    %p69 = scmp.eq.s32.totalorder %s11, 3
    %p70 = por %p68, %p69
    %p71 = scmp.ne.s32.totalorder %s63, %s66
    %p72 = scmp.eq.s32.totalorder %s11, 0
    %p73 = por %p71, %p72
    %p74 = scmp.ne.s32.totalorder %s63, %s66
    %p75 = scmp.eq.s32.totalorder %s16, 3
    %p76 = por %p74, %p75
    %p77 = scmp.ne.s32.totalorder %s66, %s67
    %p78 = scmp.eq.s32.totalorder %s16, 0
    %p79 = por %p77, %p78
    %p80 = scmp.ne.s32.totalorder %s66, %s67
    %p81 = scmp.eq.s32.totalorder %s17, 3
    %p82 = por %p80, %p81
    %p84 = scmp.ne.s32.totalorder %s67, %s83
    %p85 = scmp.eq.s32.totalorder %s17, 0
    %p86 = por %p84, %p85
    %s88 = sadd.s32 %s87, 1
    %p91 = scmp.eq.s32.totalorder %s11, 3
    %p92 = scmp.ne.s32.totalorder %s87, %s89
    %p93 = scmp.eq.s32.totalorder %s11, 0
    %p94 = por %p92, %p93
    %p95 = scmp.ne.s32.totalorder %s87, %s89
    %p96 = scmp.eq.s32.totalorder %s16, 3
    %p97 = por %p95, %p96
    %p98 = scmp.ne.s32.totalorder %s89, %s90
    %p99 = scmp.eq.s32.totalorder %s16, 0
    %p100 = por %p98, %p99
    %p101 = scmp.ne.s32.totalorder %s89, %s90
    %p102 = scmp.eq.s32.totalorder %s17, 3
    %p103 = por %p101, %p102
    %p105 = scmp.ne.s32.totalorder %s90, %s104
    %p106 = scmp.eq.s32.totalorder %s17, 0
    %p107 = por %p105, %p106
    %s108 = ssub.s32 %s18, %s30
    %s109 = ssub.s32 %s19, %s26
    %s110 = sor.u32 %s108, %s109
    %p111 = scmp.eq.s32.totalorder %s110, 0
    %s113 = sadd.s32 %s112, 1
    %s114 = scalar_select %p111, %s112, %s113
    %p117 = pneg %p111
    %p118 = scmp.eq.s32.totalorder %s11, 3
    %p119 = por %p117, %p118
    %p120 = scmp.ne.s32.totalorder %s112, %s115
    %p121 = scmp.eq.s32.totalorder %s11, 0
    %p122 = por %p120, %p121
    %p123 = scmp.ne.s32.totalorder %s112, %s115
    %p124 = scmp.eq.s32.totalorder %s16, 3
    %p125 = por %p123, %p124
    %p126 = scmp.ne.s32.totalorder %s115, %s116
    %p127 = scmp.eq.s32.totalorder %s16, 0
    %p128 = por %p126, %p127
    %p129 = scmp.ne.s32.totalorder %s115, %s116
    %p130 = scmp.eq.s32.totalorder %s17, 3
    %p131 = por %p129, %p130
    %p133 = scmp.ne.s32.totalorder %s116, %s132
    %p134 = scmp.eq.s32.totalorder %s17, 0
    %p135 = por %p133, %p134
    %s136 = ssub.s32 %s18, %s30
    %s137 = ssub.s32 %s19, %s26
    %s138 = sor.u32 %s136, %s137
    %p139 = scmp.eq.s32.totalorder %s138, 0
    %s141 = sadd.s32 %s140, 1
    %s142 = scalar_select %p139, %s140, %s141
    %p145 = pneg %p139
    %p146 = scmp.eq.s32.totalorder %s11, 3
    %p147 = por %p145, %p146
    %p148 = scmp.ne.s32.totalorder %s140, %s143
    %p149 = scmp.eq.s32.totalorder %s11, 0
    %p150 = por %p148, %p149
    %p151 = scmp.ne.s32.totalorder %s140, %s143
    %p152 = scmp.eq.s32.totalorder %s16, 3
    %p153 = por %p151, %p152
    %p154 = scmp.ne.s32.totalorder %s143, %s144
    %p155 = scmp.eq.s32.totalorder %s16, 0
    %p156 = por %p154, %p155
    %p157 = scmp.ne.s32.totalorder %s143, %s144
    %p158 = scmp.eq.s32.totalorder %s17, 3
    %p159 = por %p157, %p158
    %p161 = scmp.ne.s32.totalorder %s144, %s160
    %p162 = scmp.eq.s32.totalorder %s17, 0
    %p163 = por %p161, %p162
    %p164 = scmp.le.s32.totalorder 1, %s11
    %p165 = scmp.lt.s32.totalorder %s11, 5
    %p166 = pnand %p164, %p165
    %p167 = pneg %p166
    // Predicated region
    $region9: #{unet_struc_forward.29} parent=5 // pred_check
      _
    $region10: #{unet_struc_forward.29} parent=5 // pred_check_branch
      %169 = sbr.rel (%p166) target = $region12
    $region11: #{unet_struc_forward.29} parent=5 // pred_region
      %s170 = ssub.s32 %s11, 1
      // Predicated region
      $region13: #{unet_struc_forward.29} parent=11 // pred_check
        %p171 = pneg %p100
      $region14: #{unet_struc_forward.29} parent=11 // pred_check_branch
        %173 = sbr.rel (%p171) target = $region16
      $region15: #{unet_struc_forward.29} parent=11 // pred_region
        _
      $region16: #{unet_struc_forward.29} parent=11 // pred_fallthru
        _
    $region12: #{unet_struc_forward.29} parent=5 // pred_fallthru
      _
    %p174 = scmp.lt.s32.totalorder %s11, 4
    // Predicated region
    $region17: #{unet_struc_forward.29} parent=5 // pred_check
      %p175 = pneg %p174
    $region18: #{unet_struc_forward.29} parent=5 // pred_check_branch
      %177 = sbr.rel (%p175) target = $region20
    $region19: #{unet_struc_forward.29} parent=5 // pred_region
      // Predicated region
      $region21: #{unet_struc_forward.29} parent=19 // pred_check
        %p178 = pneg %p45
      $region22: #{unet_struc_forward.29} parent=19 // pred_check_branch
        %180 = sbr.rel (%p178) target = $region24
      $region23: #{unet_struc_forward.29} parent=19 // pred_region
        %p181 = scmp.lt.s32.totalorder %s18, 1
        %s182 = scalar_select %p181, %s18, 1
        %p183 = scmp.lt.s32.totalorder %s19, 1
        %s184 = scalar_select %p183, %s19, 1
        %s185 = smul.addr %s184, 30
        %s186 = smul.addr %s182, 60
        %s187 = sadd.s32 %s185, %s186
        %s188 = smul.addr %s187, 4
        %s189 = scalar_lea.vmem %s0, %s188
      $region24: #{unet_struc_forward.29} parent=19 // pred_fallthru
        _
      // Predicated region
      $region25: #{unet_struc_forward.29} parent=19 // pred_check
        %p190 = pneg %p73
      $region26: #{unet_struc_forward.29} parent=19 // pred_check_branch
        %192 = sbr.rel (%p190) target = $region28
      $region27: #{unet_struc_forward.29} parent=19 // pred_region
        %p193 = scmp.lt.s32.totalorder %s18, 1
        %s194 = scalar_select %p193, %s18, 1
        %p195 = scmp.lt.s32.totalorder %s19, 1
        %s196 = scalar_select %p195, %s19, 1
        %s197 = smul.addr %s196, 30
        %s198 = smul.addr %s194, 60
        %s199 = sadd.s32 %s197, %s198
        %s200 = smul.addr %s199, 4
        %s201 = scalar_lea.vmem %s1, %s200
      $region28: #{unet_struc_forward.29} parent=19 // pred_fallthru
        _
    $region20: #{unet_struc_forward.29} parent=5 // pred_fallthru
      _
    %p202 = scmp.le.s32.totalorder 1, %s11
    %p203 = scmp.lt.s32.totalorder %s11, 5
    %p204 = pnand %p202, %p203
    %p205 = pneg %p204
    // Predicated region
    $region29: #{unet_struc_forward.29} parent=5 // pred_check
      _
    $region30: #{unet_struc_forward.29} parent=5 // pred_check_branch
      %207 = sbr.rel (%p204) target = $region32
    $region31: #{unet_struc_forward.29} parent=5 // pred_region
      %s208 = ssub.s32 %s11, 1
      %p209 = scmp.lt.s32.totalorder %s20, 1
      %s210 = scalar_select %p209, %s20, 1
      %p211 = scmp.lt.s32.totalorder %s21, 1
      %s212 = scalar_select %p211, %s21, 1
      %s213 = smul.addr %s212, 30
      %s214 = smul.addr %s210, 60
      %s215 = sadd.s32 %s213, %s214
      %s216 = smul.addr %s215, 4
      %s217 = scalar_lea.vmem %s0, %s216
      %p218 = pneg %p51
      %p219 = pneg %p48
      %p220 = scmp.lt.s32.totalorder %s20, 1
      %s221 = scalar_select %p220, %s20, 1
      %p222 = scmp.lt.s32.totalorder %s21, 1
      %s223 = scalar_select %p222, %s21, 1
      %s224 = smul.addr %s223, 30
      %s225 = smul.addr %s221, 60
      %s226 = sadd.s32 %s224, %s225
      %s227 = smul.addr %s226, 4
      %s228 = scalar_lea.vmem %s1, %s227
      %p229 = pneg %p79
      %p230 = pneg %p76
      %p231 = pneg %p100
      %p232 = pneg %p97
      %p233 = pneg %p128
      %p234 = pneg %p125
      %s235 = smul.u32 8, %s21
      %p236 = scmp.lt.s32.totalorder %s20, 1
      %s237 = scalar_select %p236, %s20, 1
      %p238 = scmp.lt.s32.totalorder %s235, 15
      %s239 = scalar_select %p238, %s235, 15
      %s240 = smul.addr %s239, 2
      %s241 = smul.addr %s237, 32
      %s242 = sadd.s32 %s240, %s241
      %s243 = smul.addr %s242, 8
      %s244 = scalar_lea.vmem %s3, %s243
      %p245 = pneg %p156
      %p246 = pneg %p153
      %p247 = scmp.lt.s32.totalorder %s20, 1
      %s248 = scalar_select %p247, %s20, 1
      %p249 = scmp.lt.s32.totalorder %s21, 1
      %s250 = scalar_select %p249, %s21, 1
      %s251 = smul.addr %s248, 2
      %s252 = sadd.s32 %s250, %s251
      %s253 = smul.addr %s252, 2
      %s254 = scalar_lea.vmem %s4, %s253
      %p255 = scmp.lt.s32.totalorder %s20, 1
      %s256 = scalar_select %p255, %s20, 1
      %p257 = scmp.lt.s32.totalorder %s21, 1
      %s258 = scalar_select %p257, %s21, 1
      %s259 = smul.addr %s258, 30
      %s260 = smul.addr %s256, 60
      %s261 = sadd.s32 %s259, %s260
      %s262 = smul.addr %s261, 4
      %s263 = scalar_lea.vmem %s0, %s262
      %p264 = scmp.lt.s32.totalorder %s20, 1
      %s265 = scalar_select %p264, %s20, 1
      %p266 = scmp.lt.s32.totalorder %s21, 1
      %s267 = scalar_select %p266, %s21, 1
      %s268 = smul.addr %s267, 30
      %s269 = smul.addr %s265, 60
      %s270 = sadd.s32 %s268, %s269
      %s271 = smul.addr %s270, 4
      %s272 = scalar_lea.vmem %s1, %s271
      %s273 = smul.u32 8, %s21
      %p274 = scmp.lt.s32.totalorder %s20, 1
      %s275 = scalar_select %p274, %s20, 1
      %p276 = scmp.lt.s32.totalorder %s273, 15
      %s277 = scalar_select %p276, %s273, 15
      %s278 = smul.addr %s277, 2
      %s279 = smul.addr %s275, 32
      %s280 = sadd.s32 %s278, %s279
      %s281 = smul.addr %s280, 8
      %s282 = scalar_lea.vmem %s3, %s281
      %s283 = smul.u32 8, %s21
      %p284 = scmp.lt.s32.totalorder %s20, 1
      %s285 = scalar_select %p284, %s20, 1
      %p286 = scmp.lt.s32.totalorder %s21, 1
      %s287 = scalar_select %p286, %s21, 1
      %s288 = smul.addr %s285, 2
      %s289 = sadd.s32 %s287, %s288
      %s290 = smul.addr %s289, 2
      %s291 = scalar_lea.vmem %s4, %s290
      %v293 = vld [vmem:[%s263] sm:$0xf]
      %v294 = vld [vmem:[%s263 + $0x4] sm:$0xf]
      %v295 = vld [vmem:[%s263 + $0x8] sm:$0x1]
      %v296 = vld [vmem:[%s263 + $0xc] sm:$0xf]
      %v297 = vld [vmem:[%s263 + $0x10] sm:$0xf]
      %v298 = vld [vmem:[%s263 + $0x14] sm:$0x1]
      %v299 = vld [vmem:[%s263 + $0x18] sm:$0xf]
      %v300 = vld [vmem:[%s263 + $0x1c] sm:$0xf]
      %v301 = vld [vmem:[%s263 + $0x20] sm:$0x1]
      %v302 = vld [vmem:[%s263 + $0x24] sm:$0xf]
      %v303 = vld [vmem:[%s263 + $0x28] sm:$0xf]
      %v304 = vld [vmem:[%s263 + $0x2c] sm:$0x1]
      %v305 = vld [vmem:[%s263 + $0x30] sm:$0xf]
      %v306 = vld [vmem:[%s263 + $0x34] sm:$0xf]
      %v307 = vld [vmem:[%s263 + $0x38] sm:$0x1]
      %v308 = vld [vmem:[%s263 + $0x3c] sm:$0xf]
      %v309 = vld [vmem:[%s263 + $0x40] sm:$0xf]
      %v310 = vld [vmem:[%s263 + $0x44] sm:$0x1]
      %v311 = vld [vmem:[%s263 + $0x48] sm:$0xf]
      %v312 = vld [vmem:[%s263 + $0x4c] sm:$0xf]
      %v313 = vld [vmem:[%s263 + $0x50] sm:$0x1]
      %v314 = vld [vmem:[%s263 + $0x54] sm:$0xf]
      %v315 = vld [vmem:[%s263 + $0x58] sm:$0xf]
      %v316 = vld [vmem:[%s263 + $0x5c] sm:$0x1]
      %v317 = vld [vmem:[%s263 + $0x60] sm:$0xf]
      %v318 = vld [vmem:[%s263 + $0x64] sm:$0xf]
      %v319 = vld [vmem:[%s263 + $0x68] sm:$0x1]
      %v320 = vld [vmem:[%s263 + $0x6c] sm:$0xf]
      %v321 = vld [vmem:[%s263 + $0x70] sm:$0xf]
      %v322 = vld [vmem:[%s263 + $0x74] sm:$0x1]
      %v323 = vld [vmem:[%s272] sm:$0xf]
      %v324 = vld [vmem:[%s272 + $0x4] sm:$0xf]
      %v325 = vld [vmem:[%s272 + $0x8] sm:$0x1]
      %v326 = vld [vmem:[%s272 + $0xc] sm:$0xf]
      %v327 = vld [vmem:[%s272 + $0x10] sm:$0xf]
      %v328 = vld [vmem:[%s272 + $0x14] sm:$0x1]
      %v329 = vld [vmem:[%s272 + $0x18] sm:$0xf]
      %v330 = vld [vmem:[%s272 + $0x1c] sm:$0xf]
      %v331 = vld [vmem:[%s272 + $0x20] sm:$0x1]
      %v332 = vld [vmem:[%s272 + $0x24] sm:$0xf]
      %v333 = vld [vmem:[%s272 + $0x28] sm:$0xf]
      %v334 = vld [vmem:[%s272 + $0x2c] sm:$0x1]
      %v335 = vld [vmem:[%s272 + $0x30] sm:$0xf]
      %v336 = vld [vmem:[%s272 + $0x34] sm:$0xf]
      %v337 = vld [vmem:[%s272 + $0x38] sm:$0x1]
      %v338 = vld [vmem:[%s272 + $0x3c] sm:$0xf]
      %v339 = vld [vmem:[%s272 + $0x40] sm:$0xf]
      %v340 = vld [vmem:[%s272 + $0x44] sm:$0x1]
      %v341 = vld [vmem:[%s272 + $0x48] sm:$0xf]
      %v342 = vld [vmem:[%s272 + $0x4c] sm:$0xf]
      %v343 = vld [vmem:[%s272 + $0x50] sm:$0x1]
      %v344 = vld [vmem:[%s272 + $0x54] sm:$0xf]
      %v345 = vld [vmem:[%s272 + $0x58] sm:$0xf]
      %v346 = vld [vmem:[%s272 + $0x5c] sm:$0x1]
      %v347 = vld [vmem:[%s272 + $0x60] sm:$0xf]
      %v348 = vld [vmem:[%s272 + $0x64] sm:$0xf]
      %v349 = vld [vmem:[%s272 + $0x68] sm:$0x1]
      %v350 = vld [vmem:[%s272 + $0x6c] sm:$0xf]
      %v351 = vld [vmem:[%s272 + $0x70] sm:$0xf]
      %v352 = vld [vmem:[%s272 + $0x74] sm:$0x1]
      %v369 = vunpack.c.l.b16 %v293
      %v370 = vunpack.c.l.b16 %v294
      %v371 = vunpack.c.l.b16 %v296
      %v372 = vunpack.c.l.b16 %v297
      %v373 = vunpack.c.l.b16 %v299
      %v374 = vunpack.c.l.b16 %v300
      %v375 = vunpack.c.l.b16 %v302
      %v376 = vunpack.c.l.b16 %v303
      %v377 = vunpack.c.l.b16 %v305
      %v378 = vunpack.c.l.b16 %v306
      %v379 = vunpack.c.l.b16 %v308
      %v380 = vunpack.c.l.b16 %v309
      %v381 = vunpack.c.l.b16 %v311
      %v382 = vunpack.c.l.b16 %v312
      %v383 = vunpack.c.l.b16 %v314
      %v384 = vunpack.c.l.b16 %v315
      %v385 = vpack.c.b16 %v370, %v369
      %v386 = vpack.c.b16 %v372, %v371
      %v387 = vpack.c.b16 %v374, %v373
      %v388 = vpack.c.b16 %v376, %v375
      %v389 = vpack.c.b16 %v378, %v377
      %v390 = vpack.c.b16 %v380, %v379
      %v391 = vpack.c.b16 %v382, %v381
      %v392 = vpack.c.b16 %v384, %v383
      %v409 = vunpack.c.l.b16 %v323
      %v410 = vunpack.c.l.b16 %v324
      %v411 = vunpack.c.l.b16 %v326
      %v412 = vunpack.c.l.b16 %v327
      %v413 = vunpack.c.l.b16 %v329
      %v414 = vunpack.c.l.b16 %v330
      %v415 = vunpack.c.l.b16 %v332
      %v416 = vunpack.c.l.b16 %v333
      %v417 = vunpack.c.l.b16 %v335
      %v418 = vunpack.c.l.b16 %v336
      %v419 = vunpack.c.l.b16 %v338
      %v420 = vunpack.c.l.b16 %v339
      %v421 = vunpack.c.l.b16 %v341
      %v422 = vunpack.c.l.b16 %v342
      %v423 = vunpack.c.l.b16 %v344
      %v424 = vunpack.c.l.b16 %v345
      %v425 = vpack.c.b16 %v410, %v409
      %v426 = vpack.c.b16 %v412, %v411
      %v427 = vpack.c.b16 %v414, %v413
      %v428 = vpack.c.b16 %v416, %v415
      %v429 = vpack.c.b16 %v418, %v417
      %v430 = vpack.c.b16 %v420, %v419
      %v431 = vpack.c.b16 %v422, %v421
      %v432 = vpack.c.b16 %v424, %v423
      %433 = vrot.lane.b32.xlu0 %v425, 32
      %v434 = vpop.permute.xlu0 %433
      %435 = vrot.lane.b32.xlu0 %v426, 32
      %v436 = vpop.permute.xlu0 %435
      %437 = vrot.lane.b32.xlu0 %v427, 32
      %v438 = vpop.permute.xlu0 %437
      %439 = vrot.lane.b32.xlu0 %v428, 32
      %v440 = vpop.permute.xlu0 %439
      %441 = vrot.lane.b32.xlu0 %v429, 32
      %v442 = vpop.permute.xlu0 %441
      %443 = vrot.lane.b32.xlu0 %v430, 32
      %v444 = vpop.permute.xlu0 %443
      %445 = vrot.lane.b32.xlu0 %v431, 32
      %v446 = vpop.permute.xlu0 %445
      %447 = vrot.lane.b32.xlu0 %v432, 32
      %v448 = vpop.permute.xlu0 %447
      %v457 = vunpack.c.l.b16 %v295
      %v458 = vunpack.c.l.b16 %v298
      %v459 = vunpack.c.l.b16 %v301
      %v460 = vunpack.c.l.b16 %v304
      %v461 = vunpack.c.l.b16 %v307
      %v462 = vunpack.c.l.b16 %v310
      %v463 = vunpack.c.l.b16 %v313
      %v464 = vunpack.c.l.b16 %v316
      %v465 = vpack.c.b16 %v457, %v457
      %v466 = vpack.c.b16 %v458, %v458
      %v467 = vpack.c.b16 %v459, %v459
      %v468 = vpack.c.b16 %v460, %v460
      %v469 = vpack.c.b16 %v461, %v461
      %v470 = vpack.c.b16 %v462, %v462
      %v471 = vpack.c.b16 %v463, %v463
      %v472 = vpack.c.b16 %v464, %v464
      %vm473 = vsmask.f32 7424
      %v475 = vshrl.u32 %v385, 16
      %v477 = vshll.u32 %v385, 16
      %v479 = vrot.slane %v477, 1
      %v480 = vor.u32 %v475, %v479
      %v482 = vshll.u32 %v465, 16
      %v484 = vrot.slane %v482, 1
      %v485 = vsel %vm473, %v480, %v484
      %v487 = vshrl.u32 %v386, 16
      %v489 = vshll.u32 %v386, 16
      %v491 = vrot.slane %v489, 1
      %v492 = vor.u32 %v487, %v491
      %v494 = vshll.u32 %v466, 16
      %v496 = vrot.slane %v494, 1
      %v497 = vsel %vm473, %v492, %v496
      %v499 = vshrl.u32 %v387, 16
      %v501 = vshll.u32 %v387, 16
      %v503 = vrot.slane %v501, 1
      %v504 = vor.u32 %v499, %v503
      %v506 = vshll.u32 %v467, 16
      %v508 = vrot.slane %v506, 1
      %v509 = vsel %vm473, %v504, %v508
      %v511 = vshrl.u32 %v388, 16
      %v513 = vshll.u32 %v388, 16
      %v515 = vrot.slane %v513, 1
      %v516 = vor.u32 %v511, %v515
      %v518 = vshll.u32 %v468, 16
      %v520 = vrot.slane %v518, 1
      %v521 = vsel %vm473, %v516, %v520
      %v523 = vshrl.u32 %v389, 16
      %v525 = vshll.u32 %v389, 16
      %v527 = vrot.slane %v525, 1
      %v528 = vor.u32 %v523, %v527
      %v530 = vshll.u32 %v469, 16
      %v532 = vrot.slane %v530, 1
      %v533 = vsel %vm473, %v528, %v532
      %v535 = vshrl.u32 %v390, 16
      %v537 = vshll.u32 %v390, 16
      %v539 = vrot.slane %v537, 1
      %v540 = vor.u32 %v535, %v539
      %v542 = vshll.u32 %v470, 16
      %v544 = vrot.slane %v542, 1
      %v545 = vsel %vm473, %v540, %v544
      %v547 = vshrl.u32 %v391, 16
      %v549 = vshll.u32 %v391, 16
      %v551 = vrot.slane %v549, 1
      %v552 = vor.u32 %v547, %v551
      %v554 = vshll.u32 %v471, 16
      %v556 = vrot.slane %v554, 1
      %v557 = vsel %vm473, %v552, %v556
      %v559 = vshrl.u32 %v392, 16
      %v561 = vshll.u32 %v392, 16
      %v563 = vrot.slane %v561, 1
      %v564 = vor.u32 %v559, %v563
      %v566 = vshll.u32 %v472, 16
      %v568 = vrot.slane %v566, 1
      %v569 = vsel %vm473, %v564, %v568
      %570 = vrot.lane.b32.xlu0 %v485, 64
      %v571 = vpop.permute.xlu0 %570
      %572 = vrot.lane.b32.xlu0 %v497, 64
      %v573 = vpop.permute.xlu0 %572
      %574 = vrot.lane.b32.xlu0 %v509, 64
      %v575 = vpop.permute.xlu0 %574
      %576 = vrot.lane.b32.xlu0 %v521, 64
      %v577 = vpop.permute.xlu0 %576
      %578 = vrot.lane.b32.xlu0 %v533, 64
      %v579 = vpop.permute.xlu0 %578
      %580 = vrot.lane.b32.xlu0 %v545, 64
      %v581 = vpop.permute.xlu0 %580
      %582 = vrot.lane.b32.xlu0 %v557, 64
      %v583 = vpop.permute.xlu0 %582
      %584 = vrot.lane.b32.xlu0 %v569, 64
      %v585 = vpop.permute.xlu0 %584
      %v594 = vunpack.c.l.b16 %v325
      %v595 = vunpack.c.l.b16 %v328
      %v596 = vunpack.c.l.b16 %v331
      %v597 = vunpack.c.l.b16 %v334
      %v598 = vunpack.c.l.b16 %v337
      %v599 = vunpack.c.l.b16 %v340
      %v600 = vunpack.c.l.b16 %v343
      %v601 = vunpack.c.l.b16 %v346
      %v602 = vpack.c.b16 %v594, %v594
      %v603 = vpack.c.b16 %v595, %v595
      %v604 = vpack.c.b16 %v596, %v596
      %v605 = vpack.c.b16 %v597, %v597
      %v606 = vpack.c.b16 %v598, %v598
      %v607 = vpack.c.b16 %v599, %v599
      %v608 = vpack.c.b16 %v600, %v600
      %v609 = vpack.c.b16 %v601, %v601
      %v611 = vshrl.u32 %v425, 16
      %v613 = vshll.u32 %v425, 16
      %v615 = vrot.slane %v613, 1
      %v616 = vor.u32 %v611, %v615
      %v618 = vshll.u32 %v602, 16
      %v620 = vrot.slane %v618, 1
      %v621 = vsel %vm473, %v616, %v620
      %v623 = vshrl.u32 %v426, 16
      %v625 = vshll.u32 %v426, 16
      %v627 = vrot.slane %v625, 1
      %v628 = vor.u32 %v623, %v627
      %v630 = vshll.u32 %v603, 16
      %v632 = vrot.slane %v630, 1
      %v633 = vsel %vm473, %v628, %v632
      %v635 = vshrl.u32 %v427, 16
      %v637 = vshll.u32 %v427, 16
      %v639 = vrot.slane %v637, 1
      %v640 = vor.u32 %v635, %v639
      %v642 = vshll.u32 %v604, 16
      %v644 = vrot.slane %v642, 1
      %v645 = vsel %vm473, %v640, %v644
      %v647 = vshrl.u32 %v428, 16
      %v649 = vshll.u32 %v428, 16
      %v651 = vrot.slane %v649, 1
      %v652 = vor.u32 %v647, %v651
      %v654 = vshll.u32 %v605, 16
      %v656 = vrot.slane %v654, 1
      %v657 = vsel %vm473, %v652, %v656
      %v659 = vshrl.u32 %v429, 16
      %v661 = vshll.u32 %v429, 16
      %v663 = vrot.slane %v661, 1
      %v664 = vor.u32 %v659, %v663
      %v666 = vshll.u32 %v606, 16
      %v668 = vrot.slane %v666, 1
      %v669 = vsel %vm473, %v664, %v668
      %v671 = vshrl.u32 %v430, 16
      %v673 = vshll.u32 %v430, 16
      %v675 = vrot.slane %v673, 1
      %v676 = vor.u32 %v671, %v675
      %v678 = vshll.u32 %v607, 16
      %v680 = vrot.slane %v678, 1
      %v681 = vsel %vm473, %v676, %v680
      %v683 = vshrl.u32 %v431, 16
      %v685 = vshll.u32 %v431, 16
      %v687 = vrot.slane %v685, 1
      %v688 = vor.u32 %v683, %v687
      %v690 = vshll.u32 %v608, 16
      %v692 = vrot.slane %v690, 1
      %v693 = vsel %vm473, %v688, %v692
      %v695 = vshrl.u32 %v432, 16
      %v697 = vshll.u32 %v432, 16
      %v699 = vrot.slane %v697, 1
      %v700 = vor.u32 %v695, %v699
      %v702 = vshll.u32 %v609, 16
      %v704 = vrot.slane %v702, 1
      %v705 = vsel %vm473, %v700, %v704
      %706 = vrot.lane.b32.xlu0 %v621, 96
      %v707 = vpop.permute.xlu0 %706
      %708 = vrot.lane.b32.xlu0 %v633, 96
      %v709 = vpop.permute.xlu0 %708
      %710 = vrot.lane.b32.xlu0 %v645, 96
      %v711 = vpop.permute.xlu0 %710
      %712 = vrot.lane.b32.xlu0 %v657, 96
      %v713 = vpop.permute.xlu0 %712
      %714 = vrot.lane.b32.xlu0 %v669, 96
      %v715 = vpop.permute.xlu0 %714
      %716 = vrot.lane.b32.xlu0 %v681, 96
      %v717 = vpop.permute.xlu0 %716
      %718 = vrot.lane.b32.xlu0 %v693, 96
      %v719 = vpop.permute.xlu0 %718
      %720 = vrot.lane.b32.xlu0 %v705, 96
      %v721 = vpop.permute.xlu0 %720
      %vm722 = vcmask 1046528
      %v723 = vrot.slane %v385, 1
      %v724 = vrot.slane %v465, 1
      %v725 = vsel %vm722, %v723, %v724
      %v726 = vrot.slane %v386, 1
      %v727 = vrot.slane %v466, 1
      %v728 = vsel %vm722, %v726, %v727
      %v729 = vrot.slane %v387, 1
      %v730 = vrot.slane %v467, 1
      %v731 = vsel %vm722, %v729, %v730
      %v732 = vrot.slane %v388, 1
      %v733 = vrot.slane %v468, 1
      %v734 = vsel %vm722, %v732, %v733
      %v735 = vrot.slane %v389, 1
      %v736 = vrot.slane %v469, 1
      %v737 = vsel %vm722, %v735, %v736
      %v738 = vrot.slane %v390, 1
      %v739 = vrot.slane %v470, 1
      %v740 = vsel %vm722, %v738, %v739
      %v741 = vrot.slane %v391, 1
      %v742 = vrot.slane %v471, 1
      %v743 = vsel %vm722, %v741, %v742
      %v744 = vrot.slane %v392, 1
      %v745 = vrot.slane %v472, 1
      %v746 = vsel %vm722, %v744, %v745
      %v747 = vrot.slane %v425, 1
      %v748 = vrot.slane %v602, 1
      %v749 = vsel %vm722, %v747, %v748
      %v750 = vrot.slane %v426, 1
      %v751 = vrot.slane %v603, 1
      %v752 = vsel %vm722, %v750, %v751
      %v753 = vrot.slane %v427, 1
      %v754 = vrot.slane %v604, 1
      %v755 = vsel %vm722, %v753, %v754
      %v756 = vrot.slane %v428, 1
      %v757 = vrot.slane %v605, 1
      %v758 = vsel %vm722, %v756, %v757
      %v759 = vrot.slane %v429, 1
      %v760 = vrot.slane %v606, 1
      %v761 = vsel %vm722, %v759, %v760
      %v762 = vrot.slane %v430, 1
      %v763 = vrot.slane %v607, 1
      %v764 = vsel %vm722, %v762, %v763
      %v765 = vrot.slane %v431, 1
      %v766 = vrot.slane %v608, 1
      %v767 = vsel %vm722, %v765, %v766
      %v768 = vrot.slane %v432, 1
      %v769 = vrot.slane %v609, 1
      %v770 = vsel %vm722, %v768, %v769
      %771 = vrot.lane.b32.xlu0 %v749, 32
      %v772 = vpop.permute.xlu0 %771
      %773 = vrot.lane.b32.xlu0 %v752, 32
      %v774 = vpop.permute.xlu0 %773
      %775 = vrot.lane.b32.xlu0 %v755, 32
      %v776 = vpop.permute.xlu0 %775
      %777 = vrot.lane.b32.xlu0 %v758, 32
      %v778 = vpop.permute.xlu0 %777
      %779 = vrot.lane.b32.xlu0 %v761, 32
      %v780 = vpop.permute.xlu0 %779
      %781 = vrot.lane.b32.xlu0 %v764, 32
      %v782 = vpop.permute.xlu0 %781
      %783 = vrot.lane.b32.xlu0 %v767, 32
      %v784 = vpop.permute.xlu0 %783
      %785 = vrot.lane.b32.xlu0 %v770, 32
      %v786 = vpop.permute.xlu0 %785
      %v789 = vunpack.c.l.b16 %v317
      %v790 = vunpack.c.l.b16 %v318
      %v791 = vpack.c.b16 %v790, %v789
      %792 = vrot.lane.b32.xlu0 %v386, 64
      %v793 = vpop.permute.xlu0 %792
      %794 = vrot.lane.b32.xlu0 %v387, 64
      %v795 = vpop.permute.xlu0 %794
      %796 = vrot.lane.b32.xlu0 %v388, 64
      %v797 = vpop.permute.xlu0 %796
      %798 = vrot.lane.b32.xlu0 %v389, 64
      %v799 = vpop.permute.xlu0 %798
      %800 = vrot.lane.b32.xlu0 %v390, 64
      %v801 = vpop.permute.xlu0 %800
      %802 = vrot.lane.b32.xlu0 %v391, 64
      %v803 = vpop.permute.xlu0 %802
      %804 = vrot.lane.b32.xlu0 %v392, 64
      %v805 = vpop.permute.xlu0 %804
      %806 = vrot.lane.b32.xlu0 %v791, 64
      %v807 = vpop.permute.xlu0 %806
      %v810 = vunpack.c.l.b16 %v347
      %v811 = vunpack.c.l.b16 %v348
      %v812 = vpack.c.b16 %v811, %v810
      %813 = vrot.lane.b32.xlu0 %v426, 96
      %v814 = vpop.permute.xlu0 %813
      %815 = vrot.lane.b32.xlu0 %v427, 96
      %v816 = vpop.permute.xlu0 %815
      %817 = vrot.lane.b32.xlu0 %v428, 96
      %v818 = vpop.permute.xlu0 %817
      %819 = vrot.lane.b32.xlu0 %v429, 96
      %v820 = vpop.permute.xlu0 %819
      %821 = vrot.lane.b32.xlu0 %v430, 96
      %v822 = vpop.permute.xlu0 %821
      %823 = vrot.lane.b32.xlu0 %v431, 96
      %v824 = vpop.permute.xlu0 %823
      %825 = vrot.lane.b32.xlu0 %v432, 96
      %v826 = vpop.permute.xlu0 %825
      %827 = vrot.lane.b32.xlu0 %v812, 96
      %v828 = vpop.permute.xlu0 %827
      %v830 = vunpack.c.l.b16 %v319
      %v831 = vpack.c.b16 %v830, %v830
      %v833 = vshrl.u32 %v791, 16
      %v835 = vshll.u32 %v791, 16
      %v837 = vrot.slane %v835, 1
      %v838 = vor.u32 %v833, %v837
      %v840 = vshll.u32 %v831, 16
      %v842 = vrot.slane %v840, 1
      %v843 = vsel %vm473, %v838, %v842
      %v845 = vunpack.c.l.b16 %v349
      %v846 = vpack.c.b16 %v845, %v845
      %v848 = vshrl.u32 %v812, 16
      %v850 = vshll.u32 %v812, 16
      %v852 = vrot.slane %v850, 1
      %v853 = vor.u32 %v848, %v852
      %v855 = vshll.u32 %v846, 16
      %v857 = vrot.slane %v855, 1
      %v858 = vsel %vm473, %v853, %v857
      %859 = vrot.lane.b32.xlu0 %v633, 32
      %v860 = vpop.permute.xlu0 %859
      %861 = vrot.lane.b32.xlu0 %v645, 32
      %v862 = vpop.permute.xlu0 %861
      %863 = vrot.lane.b32.xlu0 %v657, 32
      %v864 = vpop.permute.xlu0 %863
      %865 = vrot.lane.b32.xlu0 %v669, 32
      %v866 = vpop.permute.xlu0 %865
      %867 = vrot.lane.b32.xlu0 %v681, 32
      %v868 = vpop.permute.xlu0 %867
      %869 = vrot.lane.b32.xlu0 %v693, 32
      %v870 = vpop.permute.xlu0 %869
      %871 = vrot.lane.b32.xlu0 %v705, 32
      %v872 = vpop.permute.xlu0 %871
      %873 = vrot.lane.b32.xlu0 %v858, 32
      %v874 = vpop.permute.xlu0 %873
      %v875 = vrot.slane %v791, 1
      %v876 = vrot.slane %v831, 1
      %v877 = vsel %vm722, %v875, %v876
      %878 = vrot.lane.b32.xlu0 %v728, 64
      %v879 = vpop.permute.xlu0 %878
      %880 = vrot.lane.b32.xlu0 %v731, 64
      %v881 = vpop.permute.xlu0 %880
      %882 = vrot.lane.b32.xlu0 %v734, 64
      %v883 = vpop.permute.xlu0 %882
      %884 = vrot.lane.b32.xlu0 %v737, 64
      %v885 = vpop.permute.xlu0 %884
      %886 = vrot.lane.b32.xlu0 %v740, 64
      %v887 = vpop.permute.xlu0 %886
      %888 = vrot.lane.b32.xlu0 %v743, 64
      %v889 = vpop.permute.xlu0 %888
      %890 = vrot.lane.b32.xlu0 %v746, 64
      %v891 = vpop.permute.xlu0 %890
      %892 = vrot.lane.b32.xlu0 %v877, 64
      %v893 = vpop.permute.xlu0 %892
      %v894 = vrot.slane %v812, 1
      %v895 = vrot.slane %v846, 1
      %v896 = vsel %vm722, %v894, %v895
      %897 = vrot.lane.b32.xlu0 %v752, 96
      %v898 = vpop.permute.xlu0 %897
      %899 = vrot.lane.b32.xlu0 %v755, 96
      %v900 = vpop.permute.xlu0 %899
      %901 = vrot.lane.b32.xlu0 %v758, 96
      %v902 = vpop.permute.xlu0 %901
      %903 = vrot.lane.b32.xlu0 %v761, 96
      %v904 = vpop.permute.xlu0 %903
      %905 = vrot.lane.b32.xlu0 %v764, 96
      %v906 = vpop.permute.xlu0 %905
      %907 = vrot.lane.b32.xlu0 %v767, 96
      %v908 = vpop.permute.xlu0 %907
      %909 = vrot.lane.b32.xlu0 %v770, 96
      %v910 = vpop.permute.xlu0 %909
      %911 = vrot.lane.b32.xlu0 %v896, 96
      %v912 = vpop.permute.xlu0 %911
      %v915 = vunpack.c.l.b16 %v320
      %v916 = vunpack.c.l.b16 %v321
      %v917 = vpack.c.b16 %v916, %v915
      %v920 = vunpack.c.l.b16 %v350
      %v921 = vunpack.c.l.b16 %v351
      %v922 = vpack.c.b16 %v921, %v920
      %923 = vrot.lane.b32.xlu0 %v812, 32
      %v924 = vpop.permute.xlu0 %923
      %925 = vrot.lane.b32.xlu0 %v922, 32
      %v926 = vpop.permute.xlu0 %925
      %v928 = vunpack.c.l.b16 %v322
      %v929 = vpack.c.b16 %v928, %v928
      %v931 = vshrl.u32 %v917, 16
      %v933 = vshll.u32 %v917, 16
      %v935 = vrot.slane %v933, 1
      %v936 = vor.u32 %v931, %v935
      %v938 = vshll.u32 %v929, 16
      %v940 = vrot.slane %v938, 1
      %v941 = vsel %vm473, %v936, %v940
      %942 = vrot.lane.b32.xlu0 %v843, 64
      %v943 = vpop.permute.xlu0 %942
      %944 = vrot.lane.b32.xlu0 %v941, 64
      %v945 = vpop.permute.xlu0 %944
      %v947 = vunpack.c.l.b16 %v352
      %v948 = vpack.c.b16 %v947, %v947
      %v950 = vshrl.u32 %v922, 16
      %v952 = vshll.u32 %v922, 16
      %v954 = vrot.slane %v952, 1
      %v955 = vor.u32 %v950, %v954
      %v957 = vshll.u32 %v948, 16
      %v959 = vrot.slane %v957, 1
      %v960 = vsel %vm473, %v955, %v959
      %961 = vrot.lane.b32.xlu0 %v858, 96
      %v962 = vpop.permute.xlu0 %961
      %963 = vrot.lane.b32.xlu0 %v960, 96
      %v964 = vpop.permute.xlu0 %963
      %vm965 = vcmask 261120
      %v967 = vsel %vm965, %v385, %v434
      %v969 = vsel %vm965, %v386, %v436
      %v971 = vsel %vm965, %v387, %v438
      %v973 = vsel %vm965, %v388, %v440
      %v975 = vsel %vm965, %v389, %v442
      %v977 = vsel %vm965, %v390, %v444
      %v979 = vsel %vm965, %v391, %v446
      %v981 = vsel %vm965, %v392, %v448
      %vm982 = vcmask 523264
      %v984 = vsel %vm982, %v967, %v571
      %v986 = vsel %vm982, %v969, %v573
      %v988 = vsel %vm982, %v971, %v575
      %v990 = vsel %vm982, %v973, %v577
      %v992 = vsel %vm982, %v975, %v579
      %v994 = vsel %vm982, %v977, %v581
      %v996 = vsel %vm982, %v979, %v583
      %v998 = vsel %vm982, %v981, %v585
      %vm999 = vcmask 785408
      %v1001 = vsel %vm999, %v984, %v707
      %v1004 = vsel %vm999, %v986, %v709
      %v1007 = vsel %vm999, %v988, %v711
      %v1010 = vsel %vm999, %v990, %v713
      %v1013 = vsel %vm999, %v992, %v715
      %v1016 = vsel %vm999, %v994, %v717
      %v1019 = vsel %vm999, %v996, %v719
      %v1022 = vsel %vm999, %v998, %v721
      %v1026 = vsel %vm965, %v725, %v772
      %v1029 = vsel %vm965, %v728, %v774
      %v1032 = vsel %vm965, %v731, %v776
      %v1035 = vsel %vm965, %v734, %v778
      %v1038 = vsel %vm965, %v737, %v780
      %v1041 = vsel %vm965, %v740, %v782
      %v1044 = vsel %vm965, %v743, %v784
      %v1047 = vsel %vm965, %v746, %v786
      %v1049 = vsel %vm982, %v1026, %v793
      %v1051 = vsel %vm982, %v1029, %v795
      %v1053 = vsel %vm982, %v1032, %v797
      %v1055 = vsel %vm982, %v1035, %v799
      %v1057 = vsel %vm982, %v1038, %v801
      %v1059 = vsel %vm982, %v1041, %v803
      %v1061 = vsel %vm982, %v1044, %v805
      %v1063 = vsel %vm982, %v1047, %v807
      %v1065 = vsel %vm999, %v1049, %v814
      %v1068 = vsel %vm999, %v1051, %v816
      %v1071 = vsel %vm999, %v1053, %v818
      %v1074 = vsel %vm999, %v1055, %v820
      %v1077 = vsel %vm999, %v1057, %v822
      %v1080 = vsel %vm999, %v1059, %v824
      %v1083 = vsel %vm999, %v1061, %v826
      %v1086 = vsel %vm999, %v1063, %v828
      %v1090 = vsel %vm965, %v497, %v860
      %v1093 = vsel %vm965, %v509, %v862
      %v1096 = vsel %vm965, %v521, %v864
      %v1099 = vsel %vm965, %v533, %v866
      %v1102 = vsel %vm965, %v545, %v868
      %v1105 = vsel %vm965, %v557, %v870
      %v1108 = vsel %vm965, %v569, %v872
      %v1111 = vsel %vm965, %v843, %v874
      %v1113 = vsel %vm982, %v1090, %v879
      %v1115 = vsel %vm982, %v1093, %v881
      %v1117 = vsel %vm982, %v1096, %v883
      %v1119 = vsel %vm982, %v1099, %v885
      %v1121 = vsel %vm982, %v1102, %v887
      %v1123 = vsel %vm982, %v1105, %v889
      %v1125 = vsel %vm982, %v1108, %v891
      %v1127 = vsel %vm982, %v1111, %v893
      %v1129 = vsel %vm999, %v1113, %v898
      %v1132 = vsel %vm999, %v1115, %v900
      %v1135 = vsel %vm999, %v1117, %v902
      %v1138 = vsel %vm999, %v1119, %v904
      %v1141 = vsel %vm999, %v1121, %v906
      %v1144 = vsel %vm999, %v1123, %v908
      %v1147 = vsel %vm999, %v1125, %v910
      %v1150 = vsel %vm999, %v1127, %v912
      %v1153 = vsel %vm965, %v791, %v924
      %v1155 = vsel %vm965, %v917, %v926
      %v1157 = vsel %vm982, %v1153, %v943
      %v1159 = vsel %vm982, %v1155, %v945
      %v1161 = vsel %vm999, %v1157, %v962
      %v1164 = vsel %vm999, %v1159, %v964
      %1166 = vrot.lane.b32.xlu0 %v604, 32
      %v1167 = vpop.permute.xlu0 %1166
      %1168 = vrot.lane.b32.xlu0 %v605, 32
      %v1169 = vpop.permute.xlu0 %1168
      %1170 = vrot.lane.b32.xlu0 %v606, 32
      %v1171 = vpop.permute.xlu0 %1170
      %1172 = vrot.lane.b32.xlu0 %v607, 32
      %v1173 = vpop.permute.xlu0 %1172
      %1174 = vrot.lane.b32.xlu0 %v608, 32
      %v1175 = vpop.permute.xlu0 %1174
      %1176 = vrot.lane.b32.xlu0 %v609, 32
      %v1177 = vpop.permute.xlu0 %1176
      %1178 = vrot.lane.b32.xlu0 %v846, 32
      %v1179 = vpop.permute.xlu0 %1178
      %1180 = vrot.lane.b32.xlu0 %v948, 32
      %v1181 = vpop.permute.xlu0 %1180
      %v1183 = vsel %vm965, %v467, %v1167
      %v1185 = vsel %vm965, %v468, %v1169
      %v1187 = vsel %vm965, %v469, %v1171
      %v1189 = vsel %vm965, %v470, %v1173
      %v1191 = vsel %vm965, %v471, %v1175
      %v1193 = vsel %vm965, %v472, %v1177
      %v1195 = vsel %vm965, %v831, %v1179
      %v1197 = vsel %vm965, %v929, %v1181
      %v1214 = vrot.slane %v971, 1
      %v1215 = vrot.slane %v1183, 1
      %v1216 = vsel %vm722, %v1214, %v1215
      %v1217 = vrot.slane %v973, 1
      %v1218 = vrot.slane %v1185, 1
      %v1219 = vsel %vm722, %v1217, %v1218
      %v1220 = vrot.slane %v975, 1
      %v1221 = vrot.slane %v1187, 1
      %v1222 = vsel %vm722, %v1220, %v1221
      %v1223 = vrot.slane %v977, 1
      %v1224 = vrot.slane %v1189, 1
      %v1225 = vsel %vm722, %v1223, %v1224
      %v1226 = vrot.slane %v979, 1
      %v1227 = vrot.slane %v1191, 1
      %v1228 = vsel %vm722, %v1226, %v1227
      %v1229 = vrot.slane %v981, 1
      %v1230 = vrot.slane %v1193, 1
      %v1231 = vsel %vm722, %v1229, %v1230
      %v1232 = vrot.slane %v1153, 1
      %v1233 = vrot.slane %v1195, 1
      %v1234 = vsel %vm722, %v1232, %v1233
      %v1235 = vrot.slane %v1155, 1
      %v1236 = vrot.slane %v1197, 1
      %v1237 = vsel %vm722, %v1235, %v1236
      %v1238 = vld [vmem:[%s2] sm:$0xf]
      %v1239 = vld [vmem:[%s2 + $0x4] sm:$0xf]
      %v1240 = vld [vmem:[%s2 + $0x8] sm:$0xf]
      %v1241 = vld [vmem:[%s2 + $0xc] sm:$0xf]
      %v1242 = vld [vmem:[%s2 + $0x10] sm:$0xf]
      %v1243 = vld [vmem:[%s2 + $0x14] sm:$0xf]
      %v1244 = vld [vmem:[%s2 + $0x18] sm:$0xf]
      %v1245 = vld [vmem:[%s2 + $0x1c] sm:$0xf]
      %v1246 = vld [vmem:[%s2 + $0x20] sm:$0xf]
      %v1247 = vld [vmem:[%s2 + $0x24] sm:$0xf]
      %v1248 = vld [vmem:[%s2 + $0x28] sm:$0xf]
      %v1249 = vld [vmem:[%s2 + $0x2c] sm:$0xf]
      %v1250 = vld [vmem:[%s2 + $0x30] sm:$0xf]
      %v1251 = vld [vmem:[%s2 + $0x34] sm:$0xf]
      %v1252 = vld [vmem:[%s2 + $0x38] sm:$0xf]
      %v1253 = vld [vmem:[%s2 + $0x3c] sm:$0xf]
      %v1254 = vld [vmem:[%s2 + $0x40] sm:$0xf]
      %v1255 = vld [vmem:[%s2 + $0x44] sm:$0xf]
      %v1256 = vld [vmem:[%s2 + $0x48] sm:$0xf]
      %v1257 = vld [vmem:[%s2 + $0x4c] sm:$0xf]
      %v1258 = vld [vmem:[%s2 + $0x50] sm:$0xf]
      %v1259 = vld [vmem:[%s2 + $0x54] sm:$0xf]
      %v1260 = vld [vmem:[%s2 + $0x58] sm:$0xf]
      %v1261 = vld [vmem:[%s2 + $0x5c] sm:$0xf]
      %v1262 = vld [vmem:[%s2 + $0x60] sm:$0xf]
      %v1263 = vld [vmem:[%s2 + $0x64] sm:$0xf]
      %v1264 = vld [vmem:[%s2 + $0x68] sm:$0xf]
      %v1265 = vld [vmem:[%s2 + $0x6c] sm:$0xf]
      %v1266 = vld [vmem:[%s2 + $0x70] sm:$0xf]
      %v1267 = vld [vmem:[%s2 + $0x74] sm:$0xf]
      %v1268 = vld [vmem:[%s2 + $0x78] sm:$0xf]
      %v1269 = vld [vmem:[%s2 + $0x7c] sm:$0xf]
      %v1270 = vld [vmem:[%s2 + $0x80] sm:$0xf]
      %v1271 = vld [vmem:[%s2 + $0x84] sm:$0xf]
      %v1272 = vld [vmem:[%s2 + $0x88] sm:$0xf]
      %v1273 = vld [vmem:[%s2 + $0x8c] sm:$0xf]
      %v1274 = vld [vmem:[%s2 + $0x90] sm:$0xf]
      %v1275 = vld [vmem:[%s2 + $0x94] sm:$0xf]
      %v1276 = vld [vmem:[%s2 + $0x98] sm:$0xf]
      %v1277 = vld [vmem:[%s2 + $0x9c] sm:$0xf]
      %v1278 = vld [vmem:[%s2 + $0xa0] sm:$0xf]
      %v1279 = vld [vmem:[%s2 + $0xa4] sm:$0xf]
      %v1280 = vld [vmem:[%s2 + $0xa8] sm:$0xf]
      %v1281 = vld [vmem:[%s2 + $0xac] sm:$0xf]
      %v1282 = vld [vmem:[%s2 + $0xb0] sm:$0xf]
      %v1283 = vld [vmem:[%s2 + $0xb4] sm:$0xf]
      %v1284 = vld [vmem:[%s2 + $0xb8] sm:$0xf]
      %v1285 = vld [vmem:[%s2 + $0xbc] sm:$0xf]
      %v1286 = vld [vmem:[%s2 + $0xc0] sm:$0xf]
      %v1287 = vld [vmem:[%s2 + $0xc4] sm:$0xf]
      %v1288 = vld [vmem:[%s2 + $0xc8] sm:$0xf]
      %v1289 = vld [vmem:[%s2 + $0xcc] sm:$0xf]
      %v1290 = vld [vmem:[%s2 + $0xd0] sm:$0xf]
      %v1291 = vld [vmem:[%s2 + $0xd4] sm:$0xf]
      %v1292 = vld [vmem:[%s2 + $0xd8] sm:$0xf]
      %v1293 = vld [vmem:[%s2 + $0xdc] sm:$0xf]
      %v1294 = vld [vmem:[%s2 + $0xe0] sm:$0xf]
      %v1295 = vld [vmem:[%s2 + $0xe4] sm:$0xf]
      %v1296 = vld [vmem:[%s2 + $0xe8] sm:$0xf]
      %v1297 = vld [vmem:[%s2 + $0xec] sm:$0xf]
      %v1298 = vld [vmem:[%s2 + $0xf0] sm:$0xf]
      %v1299 = vld [vmem:[%s2 + $0xf4] sm:$0xf]
      %v1300 = vld [vmem:[%s2 + $0xf8] sm:$0xf]
      %v1301 = vld [vmem:[%s2 + $0xfc] sm:$0xf]
      %v1302 = vld [vmem:[%s2 + $0x100] sm:$0xf]
      %v1303 = vld [vmem:[%s2 + $0x104] sm:$0xf]
      %v1304 = vld [vmem:[%s2 + $0x108] sm:$0xf]
      %v1305 = vld [vmem:[%s2 + $0x10c] sm:$0xf]
      %v1306 = vld [vmem:[%s2 + $0x110] sm:$0xf]
      %v1307 = vld [vmem:[%s2 + $0x114] sm:$0xf]
      %v1308 = vld [vmem:[%s2 + $0x118] sm:$0xf]
      %v1309 = vld [vmem:[%s2 + $0x11c] sm:$0xf]
      %v1382 = vunpack.c.l.b16 %v1238
      %v1383 = vunpack.c.l.b16 %v1239
      %v1384 = vunpack.c.l.b16 %v1240
      %v1385 = vunpack.c.l.b16 %v1241
      %v1386 = vunpack.c.l.b16 %v1242
      %v1387 = vunpack.c.l.b16 %v1243
      %v1388 = vunpack.c.l.b16 %v1244
      %v1389 = vunpack.c.l.b16 %v1245
      %v1390 = vunpack.c.l.b16 %v1246
      %v1391 = vunpack.c.l.b16 %v1247
      %v1392 = vunpack.c.l.b16 %v1248
      %v1393 = vunpack.c.l.b16 %v1249
      %v1394 = vunpack.c.l.b16 %v1250
      %v1395 = vunpack.c.l.b16 %v1251
      %v1396 = vunpack.c.l.b16 %v1252
      %v1397 = vunpack.c.l.b16 %v1253
      %v1398 = vunpack.c.l.b16 %v1254
      %v1399 = vunpack.c.l.b16 %v1255
      %v1400 = vunpack.c.l.b16 %v1256
      %v1401 = vunpack.c.l.b16 %v1257
      %v1402 = vunpack.c.l.b16 %v1258
      %v1403 = vunpack.c.l.b16 %v1259
      %v1404 = vunpack.c.l.b16 %v1260
      %v1405 = vunpack.c.l.b16 %v1261
      %v1406 = vunpack.c.l.b16 %v1262
      %v1407 = vunpack.c.l.b16 %v1263
      %v1408 = vunpack.c.l.b16 %v1264
      %v1409 = vunpack.c.l.b16 %v1265
      %v1410 = vunpack.c.l.b16 %v1266
      %v1411 = vunpack.c.l.b16 %v1267
      %v1412 = vunpack.c.l.b16 %v1268
      %v1413 = vunpack.c.l.b16 %v1269
      %v1414 = vunpack.c.l.b16 %v1270
      %v1415 = vunpack.c.l.b16 %v1271
      %v1416 = vunpack.c.l.b16 %v1272
      %v1417 = vunpack.c.l.b16 %v1273
      %v1418 = vunpack.c.l.b16 %v1274
      %v1419 = vunpack.c.l.b16 %v1275
      %v1420 = vunpack.c.l.b16 %v1276
      %v1421 = vunpack.c.l.b16 %v1277
      %v1422 = vunpack.c.l.b16 %v1278
      %v1423 = vunpack.c.l.b16 %v1279
      %v1424 = vunpack.c.l.b16 %v1280
      %v1425 = vunpack.c.l.b16 %v1281
      %v1426 = vunpack.c.l.b16 %v1282
      %v1427 = vunpack.c.l.b16 %v1283
      %v1428 = vunpack.c.l.b16 %v1284
      %v1429 = vunpack.c.l.b16 %v1285
      %v1430 = vunpack.c.l.b16 %v1286
      %v1431 = vunpack.c.l.b16 %v1287
      %v1432 = vunpack.c.l.b16 %v1288
      %v1433 = vunpack.c.l.b16 %v1289
      %v1434 = vunpack.c.l.b16 %v1290
      %v1435 = vunpack.c.l.b16 %v1291
      %v1436 = vunpack.c.l.b16 %v1292
      %v1437 = vunpack.c.l.b16 %v1293
      %v1438 = vunpack.c.l.b16 %v1294
      %v1439 = vunpack.c.l.b16 %v1295
      %v1440 = vunpack.c.l.b16 %v1296
      %v1441 = vunpack.c.l.b16 %v1297
      %v1442 = vunpack.c.l.b16 %v1298
      %v1443 = vunpack.c.l.b16 %v1299
      %v1444 = vunpack.c.l.b16 %v1300
      %v1445 = vunpack.c.l.b16 %v1301
      %v1446 = vunpack.c.l.b16 %v1302
      %v1447 = vunpack.c.l.b16 %v1303
      %v1448 = vunpack.c.l.b16 %v1304
      %v1449 = vunpack.c.l.b16 %v1305
      %v1450 = vunpack.c.l.b16 %v1306
      %v1451 = vunpack.c.l.b16 %v1307
      %v1452 = vunpack.c.l.b16 %v1308
      %v1453 = vunpack.c.l.b16 %v1309
      %v1454 = vpack.c.b16 %v1383, %v1382
      %v1455 = vpack.c.b16 %v1385, %v1384
      %v1456 = vpack.c.b16 %v1387, %v1386
      %v1457 = vpack.c.b16 %v1389, %v1388
      %v1458 = vpack.c.b16 %v1391, %v1390
      %v1459 = vpack.c.b16 %v1393, %v1392
      %v1460 = vpack.c.b16 %v1395, %v1394
      %v1461 = vpack.c.b16 %v1397, %v1396
      %v1462 = vpack.c.b16 %v1399, %v1398
      %v1463 = vpack.c.b16 %v1401, %v1400
      %v1464 = vpack.c.b16 %v1403, %v1402
      %v1465 = vpack.c.b16 %v1405, %v1404
      %v1466 = vpack.c.b16 %v1407, %v1406
      %v1467 = vpack.c.b16 %v1409, %v1408
      %v1468 = vpack.c.b16 %v1411, %v1410
      %v1469 = vpack.c.b16 %v1413, %v1412
      %v1470 = vpack.c.b16 %v1415, %v1414
      %v1471 = vpack.c.b16 %v1417, %v1416
      %v1472 = vpack.c.b16 %v1419, %v1418
      %v1473 = vpack.c.b16 %v1421, %v1420
      %v1474 = vpack.c.b16 %v1423, %v1422
      %v1475 = vpack.c.b16 %v1425, %v1424
      %v1476 = vpack.c.b16 %v1427, %v1426
      %v1477 = vpack.c.b16 %v1429, %v1428
      %v1478 = vpack.c.b16 %v1431, %v1430
      %v1479 = vpack.c.b16 %v1433, %v1432
      %v1480 = vpack.c.b16 %v1435, %v1434
      %v1481 = vpack.c.b16 %v1437, %v1436
      %v1482 = vpack.c.b16 %v1439, %v1438
      %v1483 = vpack.c.b16 %v1441, %v1440
      %v1484 = vpack.c.b16 %v1443, %v1442
      %v1485 = vpack.c.b16 %v1445, %v1444
      %v1486 = vpack.c.b16 %v1447, %v1446
      %v1487 = vpack.c.b16 %v1449, %v1448
      %v1488 = vpack.c.b16 %v1451, %v1450
      %v1489 = vpack.c.b16 %v1453, %v1452
      %v1527 = vsel %vm982, %v1216, 0
      %v1530 = vsel %vm982, %v1219, 0
      %v1533 = vsel %vm982, %v1222, 0
      %v1536 = vsel %vm982, %v1225, 0
      %v1539 = vsel %vm982, %v1228, 0
      %v1542 = vsel %vm982, %v1231, 0
      %v1545 = vsel %vm982, %v1234, 0
      %v1548 = vsel %vm982, %v1237, 0
      %1550 = vmatprep.subr.bf16.mxu0 0
      %1551 = vmatpush1.bf16.msra.mxu0 %v1454
      %1552 = vmatprep.subr.bf16.mxu0 0
      %1553 = vmatpush1.bf16.msra.mxu0 %v1455
      %1554 = vmatprep.subr.bf16.mxu0 0
      %1555 = vmatpush1.bf16.msra.mxu0 %v1456
      %1556 = vmatprep.subr.bf16.mxu0 0
      %1557 = vmatpush1.bf16.msra.mxu0 %v1457
      %1558 = vmatprep.subr.bf16.mxu0 0
      %1559 = vmatpush1.bf16.msra.mxu0 %v1458
      %1560 = vmatprep.subr.bf16.mxu0 0
      %1561 = vmatpush1.bf16.msra.mxu0 %v1459
      %1562 = vmatprep.subr.bf16.mxu0 0
      %1563 = vmatpush1.bf16.msra.mxu0 %v1460
      %1564 = vmatprep.subr.bf16.mxu0 0
      %1565 = vmatpush1.bf16.msra.mxu0 %v1461
      %1566 = vmatprep.subr.bf16.mxu0 0
      %1567 = vmatpush1.bf16.msra.mxu0 %v1462
      %1568 = vmatprep.subr.bf16.mxu0 0
      %1569 = vmatpush1.bf16.msra.mxu0 %v1463
      %1570 = vmatprep.subr.bf16.mxu0 0
      %1571 = vmatpush1.bf16.msra.mxu0 %v1464
      %1572 = vmatprep.subr.bf16.mxu0 0
      %1573 = vmatpush1.bf16.msra.mxu0 %v1465
      %1574 = vmatprep.subr.bf16.mxu0 0
      %1575 = vmatpush1.bf16.msra.mxu0 %v1466
      %1576 = vmatprep.subr.bf16.mxu0 0
      %1577 = vmatpush1.bf16.msra.mxu0 %v1467
      %1578 = vmatprep.subr.bf16.mxu0 0
      %1579 = vmatpush1.bf16.msra.mxu0 %v1468
      %1580 = vmatprep.subr.bf16.mxu0 0
      %1581 = vmatpush1.bf16.msra.mxu0 %v1469
      %1582 = vmatprep.mubr.bf16.mxu0 %v1065
      %1583 = vmatmul.mubr.bf16.gmra.mrb[0].mxu0 %v1001
      %v1584 = vpop.f32.mrb[0].mxu0
      %v1585 = vadd.f32 0.0, %v1584
      %v1586 = vpop.f32.mrb[0].mxu0
      %v1587 = vpop.f32.mrb[0].mxu0
      %v1588 = vadd.f32 0.0, %v1587
      %v1589 = vpop.f32.mrb[0].mxu0
      %1590 = vmatprep.mubr.bf16.mxu0 %v1068
      %1591 = vmatmul.mubr.bf16.gmra.mrb[0].mxu0 %v1004
      %v1592 = vpop.f32.mrb[0].mxu0
      %v1593 = vadd.f32 0.0, %v1592
      %v1594 = vpop.f32.mrb[0].mxu0
      %v1595 = vpop.f32.mrb[0].mxu0
      %v1596 = vadd.f32 0.0, %v1595
      %v1597 = vpop.f32.mrb[0].mxu0
      %1598 = vmatprep.mubr.bf16.mxu0 %v1071
      %1599 = vmatmul.mubr.bf16.gmra.mrb[0].mxu0 %v1007
      %v1600 = vpop.f32.mrb[0].mxu0
      %v1601 = vadd.f32 0.0, %v1600
      %v1602 = vpop.f32.mrb[0].mxu0
      %v1603 = vpop.f32.mrb[0].mxu0
      %v1604 = vadd.f32 0.0, %v1603
      %v1605 = vpop.f32.mrb[0].mxu0
      %1606 = vmatprep.mubr.bf16.mxu0 %v1074
      %1607 = vmatmul.mubr.bf16.gmra.mrb[0].mxu0 %v1010
      %v1608 = vpop.f32.mrb[0].mxu0
      %v1609 = vadd.f32 0.0, %v1608
      %v1610 = vpop.f32.mrb[0].mxu0
      %v1611 = vpop.f32.mrb[0].mxu0
      %v1612 = vadd.f32 0.0, %v1611
      %v1613 = vpop.f32.mrb[0].mxu0
      %1614 = vmatprep.mubr.bf16.mxu0 %v1077
      %1615 = vmatmul.mubr.bf16.gmra.mrb[0].mxu0 %v1013
      %v1616 = vpop.f32.mrb[0].mxu0
      %v1617 = vadd.f32 0.0, %v1616
      %v1618 = vpop.f32.mrb[0].mxu0
      %v1619 = vpop.f32.mrb[0].mxu0
      %v1620 = vadd.f32 0.0, %v1619
      %v1621 = vpop.f32.mrb[0].mxu0
      %1622 = vmatprep.mubr.bf16.mxu0 %v1080
      %1623 = vmatmul.mubr.bf16.gmra.mrb[0].mxu0 %v1016
      %v1624 = vpop.f32.mrb[0].mxu0
      %v1625 = vadd.f32 0.0, %v1624
      %v1626 = vpop.f32.mrb[0].mxu0
      %v1627 = vpop.f32.mrb[0].mxu0
      %v1628 = vadd.f32 0.0, %v1627
      %v1629 = vpop.f32.mrb[0].mxu0
      %1630 = vmatprep.mubr.bf16.mxu0 %v1083
      %1631 = vmatmul.mubr.bf16.gmra.mrb[0].mxu0 %v1019
      %v1632 = vpop.f32.mrb[0].mxu0
      %v1633 = vadd.f32 0.0, %v1632
      %v1634 = vpop.f32.mrb[0].mxu0
      %v1635 = vpop.f32.mrb[0].mxu0
      %v1636 = vadd.f32 0.0, %v1635
      %v1637 = vpop.f32.mrb[0].mxu0
      %1638 = vmatprep.mubr.bf16.mxu0 %v1086
      %1639 = vmatmul.mubr.bf16.gmra.mrb[0].mxu0 %v1022
      %v1640 = vpop.f32.mrb[0].mxu0
      %v1641 = vadd.f32 0.0, %v1640
      %v1642 = vpop.f32.mrb[0].mxu0
      %v1643 = vpop.f32.mrb[0].mxu0
      %v1644 = vadd.f32 0.0, %v1643
      %v1645 = vpop.f32.mrb[0].mxu0
      %1646 = vdwg.mxu0
      %1647 = vmatprep.subr.bf16.mxu0 0
      %1648 = vmatpush1.bf16.msra.mxu0 %v1470
      %1649 = vmatprep.subr.bf16.mxu0 0
      %1650 = vmatpush1.bf16.msra.mxu0 %v1471
      %1651 = vmatprep.subr.bf16.mxu0 0
      %1652 = vmatpush1.bf16.msra.mxu0 %v1472
      %1653 = vmatprep.subr.bf16.mxu0 0
      %1654 = vmatpush1.bf16.msra.mxu0 %v1473
      %1655 = vmatprep.subr.bf16.mxu0 0
      %1656 = vmatpush1.bf16.msra.mxu0 %v1474
      %1657 = vmatprep.subr.bf16.mxu0 0
      %1658 = vmatpush1.bf16.msra.mxu0 %v1475
      %1659 = vmatprep.subr.bf16.mxu0 0
      %1660 = vmatpush1.bf16.msra.mxu0 %v1476
      %1661 = vmatprep.subr.bf16.mxu0 0
      %1662 = vmatpush1.bf16.msra.mxu0 %v1477
      %1663 = vmatprep.subr.bf16.mxu0 0
      %1664 = vmatpush1.bf16.msra.mxu0 %v1478
      %1665 = vmatprep.subr.bf16.mxu0 0
      %1666 = vmatpush1.bf16.msra.mxu0 %v1479
      %1667 = vmatprep.subr.bf16.mxu0 0
      %1668 = vmatpush1.bf16.msra.mxu0 %v1480
      %1669 = vmatprep.subr.bf16.mxu0 0
      %1670 = vmatpush1.bf16.msra.mxu0 %v1481
      %1671 = vmatprep.subr.bf16.mxu0 0
      %1672 = vmatpush1.bf16.msra.mxu0 %v1482
      %1673 = vmatprep.subr.bf16.mxu0 0
      %1674 = vmatpush1.bf16.msra.mxu0 %v1483
      %1675 = vmatprep.subr.bf16.mxu0 0
      %1676 = vmatpush1.bf16.msra.mxu0 %v1484
      %1677 = vmatprep.subr.bf16.mxu0 0
      %1678 = vmatpush1.bf16.msra.mxu0 %v1485
      %1679 = vmatprep.mubr.bf16.mxu0 %v1007
      %1680 = vmatmul.mubr.bf16.gmra.mrb[0].mxu0 %v1129
      %v1681 = vpop.f32.mrb[0].mxu0
      %v1682 = vadd.f32 %v1585, %v1681
      %v1683 = vpop.f32.mrb[0].mxu0
      %v1684 = vpop.f32.mrb[0].mxu0
      %v1685 = vadd.f32 %v1588, %v1684
      %v1686 = vpop.f32.mrb[0].mxu0
      %1687 = vmatprep.mubr.bf16.mxu0 %v1010
      %1688 = vmatmul.mubr.bf16.gmra.mrb[0].mxu0 %v1132
      %v1689 = vpop.f32.mrb[0].mxu0
      %v1690 = vadd.f32 %v1593, %v1689
      %v1691 = vpop.f32.mrb[0].mxu0
      %v1692 = vpop.f32.mrb[0].mxu0
      %v1693 = vadd.f32 %v1596, %v1692
      %v1694 = vpop.f32.mrb[0].mxu0
      %1695 = vmatprep.mubr.bf16.mxu0 %v1013
      %1696 = vmatmul.mubr.bf16.gmra.mrb[0].mxu0 %v1135
      %v1697 = vpop.f32.mrb[0].mxu0
      %v1698 = vadd.f32 %v1601, %v1697
      %v1699 = vpop.f32.mrb[0].mxu0
      %v1700 = vpop.f32.mrb[0].mxu0
      %v1701 = vadd.f32 %v1604, %v1700
      %v1702 = vpop.f32.mrb[0].mxu0
      %1703 = vmatprep.mubr.bf16.mxu0 %v1016
      %1704 = vmatmul.mubr.bf16.gmra.mrb[0].mxu0 %v1138
      %v1705 = vpop.f32.mrb[0].mxu0
      %v1706 = vadd.f32 %v1609, %v1705
      %v1707 = vpop.f32.mrb[0].mxu0
      %v1708 = vpop.f32.mrb[0].mxu0
      %v1709 = vadd.f32 %v1612, %v1708
      %v1710 = vpop.f32.mrb[0].mxu0
      %1711 = vmatprep.mubr.bf16.mxu0 %v1019
      %1712 = vmatmul.mubr.bf16.gmra.mrb[0].mxu0 %v1141
      %v1713 = vpop.f32.mrb[0].mxu0
      %v1714 = vadd.f32 %v1617, %v1713
      %v1715 = vpop.f32.mrb[0].mxu0
      %v1716 = vpop.f32.mrb[0].mxu0
      %v1717 = vadd.f32 %v1620, %v1716
      %v1718 = vpop.f32.mrb[0].mxu0
      %1719 = vmatprep.mubr.bf16.mxu0 %v1022
      %1720 = vmatmul.mubr.bf16.gmra.mrb[0].mxu0 %v1144
      %v1721 = vpop.f32.mrb[0].mxu0
      %v1722 = vadd.f32 %v1625, %v1721
      %v1723 = vpop.f32.mrb[0].mxu0
      %v1724 = vpop.f32.mrb[0].mxu0
      %v1725 = vadd.f32 %v1628, %v1724
      %v1726 = vpop.f32.mrb[0].mxu0
      %1727 = vmatprep.mubr.bf16.mxu0 %v1161
      %1728 = vmatmul.mubr.bf16.gmra.mrb[0].mxu0 %v1147
      %v1729 = vpop.f32.mrb[0].mxu0
      %v1730 = vadd.f32 %v1633, %v1729
      %v1731 = vpop.f32.mrb[0].mxu0
      %v1732 = vpop.f32.mrb[0].mxu0
      %v1733 = vadd.f32 %v1636, %v1732
      %v1734 = vpop.f32.mrb[0].mxu0
      %1735 = vmatprep.mubr.bf16.mxu0 %v1164
      %1736 = vmatmul.mubr.bf16.gmra.mrb[0].mxu0 %v1150
      %v1737 = vpop.f32.mrb[0].mxu0
      %v1738 = vadd.f32 %v1641, %v1737
      %v1739 = vpop.f32.mrb[0].mxu0
      %v1740 = vpop.f32.mrb[0].mxu0
      %v1741 = vadd.f32 %v1644, %v1740
      %v1742 = vpop.f32.mrb[0].mxu0
      %1743 = vdwg.mxu0
      %1744 = vmatprep.subr.bf16.mxu0 0
      %1745 = vmatpush1.bf16.msra.mxu0 %v1486
      %1746 = vmatprep.subr.bf16.mxu0 0
      %1747 = vmatpush1.bf16.msra.mxu0 %v1487
      %1748 = vmatprep.subr.bf16.mxu0 0
      %1749 = vmatpush1.bf16.msra.mxu0 %v1488
      %1750 = vmatprep.subr.bf16.mxu0 0
      %1751 = vmatpush1.bf16.msra.mxu0 %v1489
      %1752 = vmatprep.subr.bf16.mxu0 0
      %1753 = vmatpush1.bf16.msra.mxu0 0
      %1754 = vmatprep.subr.bf16.mxu0 0
      %1755 = vmatpush1.bf16.msra.mxu0 0
      %1756 = vmatprep.subr.bf16.mxu0 0
      %1757 = vmatpush1.bf16.msra.mxu0 0
      %1758 = vmatprep.subr.bf16.mxu0 0
      %1759 = vmatpush1.bf16.msra.mxu0 0
      %1760 = vmatprep.subr.bf16.mxu0 0
      %1761 = vmatpush1.bf16.msra.mxu0 0
      %1762 = vmatprep.subr.bf16.mxu0 0
      %1763 = vmatpush1.bf16.msra.mxu0 0
      %1764 = vmatprep.subr.bf16.mxu0 0
      %1765 = vmatpush1.bf16.msra.mxu0 0
      %1766 = vmatprep.subr.bf16.mxu0 0
      %1767 = vmatpush1.bf16.msra.mxu0 0
      %1768 = vmatprep.subr.bf16.mxu0 0
      %1769 = vmatpush1.bf16.msra.mxu0 0
      %1770 = vmatprep.subr.bf16.mxu0 0
      %1771 = vmatpush1.bf16.msra.mxu0 0
      %1772 = vmatprep.subr.bf16.mxu0 0
      %1773 = vmatpush1.bf16.msra.mxu0 0
      %1774 = vmatprep.subr.bf16.mxu0 0
      %1775 = vmatpush1.bf16.msra.mxu0 0
      %1776 = vmatprep.mubr.bf16.mxu0 0
      %1777 = vmatmul.mubr.bf16.gmra.mrb[0].mxu0 %v1527
      %v1778 = vpop.f32.mrb[0].mxu0
      %v1779 = vadd.f32 %v1682, %v1778
      %v1780 = vpop.f32.mrb[0].mxu0
      %v1781 = vpop.f32.mrb[0].mxu0
      %v1782 = vadd.f32 %v1685, %v1781
      %v1783 = vpop.f32.mrb[0].mxu0
      %1784 = vmatprep.mubr.bf16.mxu0 0
      %1785 = vmatmul.mubr.bf16.gmra.mrb[0].mxu0 %v1530
      %v1786 = vpop.f32.mrb[0].mxu0
      %v1787 = vadd.f32 %v1690, %v1786
      %v1788 = vpop.f32.mrb[0].mxu0
      %v1789 = vpop.f32.mrb[0].mxu0
      %v1790 = vadd.f32 %v1693, %v1789
      %v1791 = vpop.f32.mrb[0].mxu0
      %1792 = vmatprep.mubr.bf16.mxu0 0
      %1793 = vmatmul.mubr.bf16.gmra.mrb[0].mxu0 %v1533
      %v1794 = vpop.f32.mrb[0].mxu0
      %v1795 = vadd.f32 %v1698, %v1794
      %v1796 = vpop.f32.mrb[0].mxu0
      %v1797 = vpop.f32.mrb[0].mxu0
      %v1798 = vadd.f32 %v1701, %v1797
      %v1799 = vpop.f32.mrb[0].mxu0
      %1800 = vmatprep.mubr.bf16.mxu0 0
      %1801 = vmatmul.mubr.bf16.gmra.mrb[0].mxu0 %v1536
      %v1802 = vpop.f32.mrb[0].mxu0
      %v1803 = vadd.f32 %v1706, %v1802
      %v1804 = vpop.f32.mrb[0].mxu0
      %v1805 = vpop.f32.mrb[0].mxu0
      %v1806 = vadd.f32 %v1709, %v1805
      %v1807 = vpop.f32.mrb[0].mxu0
      %1808 = vmatprep.mubr.bf16.mxu0 0
      %1809 = vmatmul.mubr.bf16.gmra.mrb[0].mxu0 %v1539
      %v1810 = vpop.f32.mrb[0].mxu0
      %v1811 = vadd.f32 %v1714, %v1810
      %v1812 = vpop.f32.mrb[0].mxu0
      %v1813 = vpop.f32.mrb[0].mxu0
      %v1814 = vadd.f32 %v1717, %v1813
      %v1815 = vpop.f32.mrb[0].mxu0
      %1816 = vmatprep.mubr.bf16.mxu0 0
      %1817 = vmatmul.mubr.bf16.gmra.mrb[0].mxu0 %v1542
      %v1818 = vpop.f32.mrb[0].mxu0
      %v1819 = vadd.f32 %v1722, %v1818
      %v1820 = vpop.f32.mrb[0].mxu0
      %v1821 = vpop.f32.mrb[0].mxu0
      %v1822 = vadd.f32 %v1725, %v1821
      %v1823 = vpop.f32.mrb[0].mxu0
      %1824 = vmatprep.mubr.bf16.mxu0 0
      %1825 = vmatmul.mubr.bf16.gmra.mrb[0].mxu0 %v1545
      %v1826 = vpop.f32.mrb[0].mxu0
      %v1827 = vadd.f32 %v1730, %v1826
      %v1828 = vpop.f32.mrb[0].mxu0
      %v1829 = vpop.f32.mrb[0].mxu0
      %v1830 = vadd.f32 %v1733, %v1829
      %v1831 = vpop.f32.mrb[0].mxu0
      %1832 = vmatprep.mubr.bf16.mxu0 0
      %1833 = vmatmul.mubr.bf16.gmra.mrb[0].mxu0 %v1548
      %v1834 = vpop.f32.mrb[0].mxu0
      %v1835 = vadd.f32 %v1738, %v1834
      %v1836 = vpop.f32.mrb[0].mxu0
      %v1837 = vpop.f32.mrb[0].mxu0
      %v1838 = vadd.f32 %v1741, %v1837
      %v1839 = vpop.f32.mrb[0].mxu0
      %1840 = vdwg.mxu0
      %v1841 = vsel %vm965, %v1779, 0.0
      %v1842 = vsel %vm965, %v1782, 0.0
      %v1843 = vadd.f32 %v1841, %v1842
      %v1844 = vsel %vm965, %v1787, 0.0
      %v1845 = vadd.f32 %v1843, %v1844
      %v1846 = vsel %vm965, %v1790, 0.0
      %v1847 = vadd.f32 %v1845, %v1846
      %v1848 = vsel %vm965, %v1795, 0.0
      %v1849 = vadd.f32 %v1847, %v1848
      %v1850 = vsel %vm965, %v1798, 0.0
      %v1851 = vadd.f32 %v1849, %v1850
      %v1852 = vsel %vm965, %v1803, 0.0
      %v1853 = vadd.f32 %v1851, %v1852
      %v1854 = vsel %vm965, %v1806, 0.0
      %v1855 = vadd.f32 %v1853, %v1854
      %v1856 = vsel %vm965, %v1811, 0.0
      %v1857 = vadd.f32 %v1855, %v1856
      %v1858 = vsel %vm965, %v1814, 0.0
      %v1859 = vadd.f32 %v1857, %v1858
      %v1860 = vsel %vm965, %v1819, 0.0
      %v1861 = vadd.f32 %v1859, %v1860
      %v1862 = vsel %vm965, %v1822, 0.0
      %v1863 = vadd.f32 %v1861, %v1862
      %v1864 = vsel %vm965, %v1827, 0.0
      %v1865 = vadd.f32 %v1863, %v1864
      %v1866 = vsel %vm965, %v1830, 0.0
      %v1867 = vadd.f32 %v1865, %v1866
      %v1868 = vsel %vm965, %v1835, 0.0
      %v1869 = vadd.f32 %v1867, %v1868
      %v1870 = vsel %vm965, %v1838, 0.0
      %v1871 = vadd.f32 %v1869, %v1870
      %v1872 = vrot.slane %v1871, 4
      %v1873 = vadd.f32 %v1871, %v1872
      %v1874 = vrot.slane %v1873, 2
      %v1875 = vadd.f32 %v1873, %v1874
      %v1876 = vrot.slane %v1875, 1
      %v1877 = vadd.f32 %v1875, %v1876
      %v1878 = vmul.f32 %v1779, %v1779
      %v1879 = vmul.f32 %v1782, %v1782
      %v1880 = vmul.f32 %v1787, %v1787
      %v1881 = vmul.f32 %v1790, %v1790
      %v1882 = vmul.f32 %v1795, %v1795
      %v1883 = vmul.f32 %v1798, %v1798
      %v1884 = vmul.f32 %v1803, %v1803
      %v1885 = vmul.f32 %v1806, %v1806
      %v1886 = vmul.f32 %v1811, %v1811
      %v1887 = vmul.f32 %v1814, %v1814
      %v1888 = vmul.f32 %v1819, %v1819
      %v1889 = vmul.f32 %v1822, %v1822
      %v1890 = vmul.f32 %v1827, %v1827
      %v1891 = vmul.f32 %v1830, %v1830
      %v1892 = vmul.f32 %v1835, %v1835
      %v1893 = vmul.f32 %v1838, %v1838
      %v1894 = vsel %vm965, %v1878, 0.0
      %v1895 = vsel %vm965, %v1879, 0.0
      %v1896 = vadd.f32 %v1894, %v1895
      %v1897 = vsel %vm965, %v1880, 0.0
      %v1898 = vadd.f32 %v1896, %v1897
      %v1899 = vsel %vm965, %v1881, 0.0
      %v1900 = vadd.f32 %v1898, %v1899
      %v1901 = vsel %vm965, %v1882, 0.0
      %v1902 = vadd.f32 %v1900, %v1901
      %v1903 = vsel %vm965, %v1883, 0.0
      %v1904 = vadd.f32 %v1902, %v1903
      %v1905 = vsel %vm965, %v1884, 0.0
      %v1906 = vadd.f32 %v1904, %v1905
      %v1907 = vsel %vm965, %v1885, 0.0
      %v1908 = vadd.f32 %v1906, %v1907
      %v1909 = vsel %vm965, %v1886, 0.0
      %v1910 = vadd.f32 %v1908, %v1909
      %v1911 = vsel %vm965, %v1887, 0.0
      %v1912 = vadd.f32 %v1910, %v1911
      %v1913 = vsel %vm965, %v1888, 0.0
      %v1914 = vadd.f32 %v1912, %v1913
      %v1915 = vsel %vm965, %v1889, 0.0
      %v1916 = vadd.f32 %v1914, %v1915
      %v1917 = vsel %vm965, %v1890, 0.0
      %v1918 = vadd.f32 %v1916, %v1917
      %v1919 = vsel %vm965, %v1891, 0.0
      %v1920 = vadd.f32 %v1918, %v1919
      %v1921 = vsel %vm965, %v1892, 0.0
      %v1922 = vadd.f32 %v1920, %v1921
      %v1923 = vsel %vm965, %v1893, 0.0
      %v1924 = vadd.f32 %v1922, %v1923
      %v1925 = vrot.slane %v1924, 4
      %v1926 = vadd.f32 %v1924, %v1925
      %v1927 = vrot.slane %v1926, 2
      %v1928 = vadd.f32 %v1926, %v1927
      %v1929 = vrot.slane %v1928, 1
      %v1930 = vadd.f32 %v1928, %v1929
      %vm1931 = vcmask 1040384
      %v1932 = vsel %vm1931, %v1877, %v1930
      %vm1933 = vcmask 254976
      %1934 = vst.msk [vmem:[%s291] sm:$0x3] %vm1933, %v1932
      %1935 = vst.msk [vmem:[%s282] sm:$0xff] %vm965, %v1779
      %1936 = vst.msk [vmem:[%s282 + $0x8] sm:$0xff] %vm965, %v1782
      %1937 = vst.msk [vmem:[%s282 + $0x10] sm:$0xff] %vm965, %v1787
      %1938 = vst.msk [vmem:[%s282 + $0x18] sm:$0xff] %vm965, %v1790
      %1939 = vst.msk [vmem:[%s282 + $0x20] sm:$0xff] %vm965, %v1795
      %1940 = vst.msk [vmem:[%s282 + $0x28] sm:$0xff] %vm965, %v1798
      %1941 = vst.msk [vmem:[%s282 + $0x30] sm:$0xff] %vm965, %v1803
      %1942 = vst.msk [vmem:[%s282 + $0x38] sm:$0xff] %vm965, %v1806
      %1943 = vst.msk [vmem:[%s282 + $0x40] sm:$0xff] %vm965, %v1811
      %1944 = vst.msk [vmem:[%s282 + $0x48] sm:$0xff] %vm965, %v1814
      %1945 = vst.msk [vmem:[%s282 + $0x50] sm:$0xff] %vm965, %v1819
      %1946 = vst.msk [vmem:[%s282 + $0x58] sm:$0xff] %vm965, %v1822
      %1947 = vst.msk [vmem:[%s282 + $0x60] sm:$0xff] %vm965, %v1827
      %1948 = vst.msk [vmem:[%s282 + $0x68] sm:$0xff] %vm965, %v1830
      %1949 = vst.msk [vmem:[%s282 + $0x70] sm:$0xff] %vm965, %v1835
      %1950 = vst.msk [vmem:[%s282 + $0x78] sm:$0xff] %vm965, %v1838
      %s1951 = smul.u32 8, %s21
      %p1952 = scmp.lt.s32.totalorder %s20, 1
      %s1953 = scalar_select %p1952, %s20, 1
      %p1954 = scmp.lt.s32.totalorder %s1951, 15
      %s1955 = scalar_select %p1954, %s1951, 15
      %s1956 = smul.addr %s1955, 2
      %s1957 = smul.addr %s1953, 32
      %s1958 = sadd.s32 %s1956, %s1957
      %s1959 = smul.addr %s1958, 8
      %s1960 = scalar_lea.vmem %s3, %s1959
      %p1961 = scmp.lt.s32.totalorder %s20, 1
      %s1962 = scalar_select %p1961, %s20, 1
      %p1963 = scmp.lt.s32.totalorder %s21, 1
      %s1964 = scalar_select %p1963, %s21, 1
      %s1965 = smul.addr %s1962, 2
      %s1966 = sadd.s32 %s1964, %s1965
      %s1967 = smul.addr %s1966, 2
      %s1968 = scalar_lea.vmem %s4, %s1967
      // Predicated region
      $region33: #{unet_struc_forward.29} parent=31 // pred_check
        %p1969 = pneg %p125
      $region34: #{unet_struc_forward.29} parent=31 // pred_check_branch
        %1971 = sbr.rel (%p1969) target = $region36
      $region35: #{unet_struc_forward.29} parent=31 // pred_region
        %s1972 = smul.u32 8, %s21
      $region36: #{unet_struc_forward.29} parent=31 // pred_fallthru
        _
      // Predicated region
      $region37: #{unet_struc_forward.29} parent=31 // pred_check
        %p1973 = pneg %p153
      $region38: #{unet_struc_forward.29} parent=31 // pred_check_branch
        %1975 = sbr.rel (%p1973) target = $region40
      $region39: #{unet_struc_forward.29} parent=31 // pred_region
        _
      $region40: #{unet_struc_forward.29} parent=31 // pred_fallthru
        _
    $region32: #{unet_struc_forward.29} parent=5 // pred_fallthru
      _
    %p1976 = scmp.le.s32.totalorder 2, %s11
    // Predicated region
    $region41: #{unet_struc_forward.29} parent=5 // pred_check
      %p1977 = pneg %p1976
    $region42: #{unet_struc_forward.29} parent=5 // pred_check_branch
      %1979 = sbr.rel (%p1977) target = $region44
    $region43: #{unet_struc_forward.29} parent=5 // pred_region
      %s1980 = ssub.s32 %s11, 2
      // Predicated region
      $region45: #{unet_struc_forward.29} parent=43 // pred_check
        %p1981 = pneg %p131
      $region46: #{unet_struc_forward.29} parent=43 // pred_check_branch
        %1983 = sbr.rel (%p1981) target = $region48
      $region47: #{unet_struc_forward.29} parent=43 // pred_region
        %s1984 = smul.u32 8, %s23
        %p1985 = scmp.lt.s32.totalorder %s22, 1
        %s1986 = scalar_select %p1985, %s22, 1
        %p1987 = scmp.lt.s32.totalorder %s1984, 15
        %s1988 = scalar_select %p1987, %s1984, 15
        %s1989 = smul.addr %s1988, 2
        %s1990 = smul.addr %s1986, 32
        %s1991 = sadd.s32 %s1989, %s1990
        %s1992 = smul.addr %s1991, 8
        %s1993 = scalar_lea.vmem %s3, %s1992
      $region48: #{unet_struc_forward.29} parent=43 // pred_fallthru
        _
      // Predicated region
      $region49: #{unet_struc_forward.29} parent=43 // pred_check
        %p1994 = pneg %p159
      $region50: #{unet_struc_forward.29} parent=43 // pred_check_branch
        %1996 = sbr.rel (%p1994) target = $region52
      $region51: #{unet_struc_forward.29} parent=43 // pred_region
        %p1997 = scmp.lt.s32.totalorder %s22, 1
        %s1998 = scalar_select %p1997, %s22, 1
        %p1999 = scmp.lt.s32.totalorder %s23, 1
        %s2000 = scalar_select %p1999, %s23, 1
        %s2001 = smul.addr %s1998, 2
        %s2002 = sadd.s32 %s2000, %s2001
        %s2003 = smul.addr %s2002, 2
        %s2004 = scalar_lea.vmem %s4, %s2003
      $region52: #{unet_struc_forward.29} parent=43 // pred_fallthru
        _
    $region44: #{unet_struc_forward.29} parent=5 // pred_fallthru
      _
  $region6: #{unet_struc_forward.29} parent=0 // loop_footer
    %s15 = sadd.s32 1, %s11
  $region7: #{unet_struc_forward.29} parent=0 // loop_footer_branch
    %10 = sbr.rel target = $region3
  $region8: #{unet_struc_forward.29} parent=0 // loop_exit
    _

</llo_original>
